<compile_context>
chip_gen: v6e
topology: v6e:2x2x1
jax: 0.10.0
libtpu: 0.0.40
codegen_flags: <defaults>
</compile_context>

<pallas_src>
import numpy as np

import jax
import jax.numpy as jnp
from jax.experimental import pallas as pl
from jax.experimental.pallas import tpu as pltpu


# ------------------------------ fused kernel ------------------------------ #

def _encoder_kernel(x_ref, a1_ref, b1_ref, w2_ref, b2_ref, wfc_ref, bfc_ref,
                    o_ref, y1_ref):
    # x_ref  : (30, bt, 30)   zero-padded input rows                    (f32)
    # a1_ref : (90, 512)      conv1 band, row = kh*30 + w, col = p*32+c (bf16)
    # b1_ref : (1, 512)       conv1 bias tiled over columns, 0 in pads  (f32)
    # w2_ref : (3, 512, 448)  conv2 band per kh, row = p*32+ci,
    #                         col = v*64+co                             (bf16)
    # b2_ref : (1, 448)       conv2 bias tiled over the 7 columns       (f32)
    # wfc_ref: (7, 448, F)    fc weight blocked by conv2 output row u   (f32)
    # bfc_ref: (1, F)                                                   (f32)
    # o_ref  : (bt, F)        final features (only HBM writeback)
    # y1_ref : (15, bt, 512)  VMEM scratch: padded conv1 output         (bf16)
    f32 = jnp.float32
    bf16 = jnp.bfloat16

    a1 = a1_ref[...]
    b1 = b1_ref[...]

    # Top padding row for conv2 (left/right lane padding and the interior are
    # fully written by the conv1 loop; the bottom padding row is never read).
    y1_ref[0] = jnp.zeros(y1_ref.shape[1:], bf16)

    # ---- conv1 + ReLU: one banded (bt, 90) @ (90, 512) matmul per output row.
    # The band's zero column-blocks produce conv2's width padding for free, so
    # each store is a full-width (lane-dense, unmasked) 512-lane store.
    for i in range(14):
        rows = jnp.concatenate([x_ref[2 * i + kh] for kh in range(3)],
                               axis=-1)                               # (bt, 90)
        acc = jnp.dot(rows.astype(bf16), a1,
                      preferred_element_type=f32)                     # (bt, 512)
        y1_ref[1 + i] = jnp.maximum(acc + b1, 0.0).astype(bf16)

    # ---- conv2 + ReLU + fc, fused per output row u.
    b2 = b2_ref[...]
    out = jnp.zeros(o_ref.shape, f32)
    for u in range(7):
        acc2 = jnp.dot(y1_ref[2 * u], w2_ref[0],
                       preferred_element_type=f32)                    # (bt, 448)
        acc2 = acc2 + jnp.dot(y1_ref[2 * u + 1], w2_ref[1],
                              preferred_element_type=f32)
        acc2 = acc2 + jnp.dot(y1_ref[2 * u + 2], w2_ref[2],
                              preferred_element_type=f32)
        r2 = jnp.maximum(acc2 + b2, 0.0)                              # (bt, 448)
        out = out + jnp.dot(r2, wfc_ref[u], preferred_element_type=f32)

    o_ref[...] = (out + bfc_ref[...]).astype(o_ref.dtype)


# ------------------------- one-time parameter prep ------------------------- #

def prepare_params(params):
    """Repack PyTorch-layout parameters into kernel operands (host, one time)."""
    w1 = np.asarray(params["w1"], np.float32)        # (32, 1, 3, 3)
    b1 = np.asarray(params["b1"], np.float32)        # (32,)
    w2 = np.asarray(params["w2"], np.float32)        # (64, 32, 3, 3)
    b2 = np.asarray(params["b2"], np.float32)        # (64,)
    wfc = np.asarray(params["w_fc"], np.float32)     # (F, 3136)
    bfc = np.asarray(params["b_fc"], np.float32)     # (F,)
    fdim = wfc.shape[0]

    # conv1 band (90, 512): y1[i, b, p*32+c] = sum_{kh,w} xpad[2i+kh, b, w] *
    # a1[kh*30+w, p*32+c]; padded column p = j+1, columns p=0 and p=15 stay 0
    # (they become conv2's width padding).
    a1 = np.zeros((90, 512), np.float32)
    for kh in range(3):
        for kw in range(3):
            for j in range(14):
                a1[kh * 30 + 2 * j + kw, (j + 1) * 32:(j + 2) * 32] = w1[:, 0, kh, kw]
    b1t = np.zeros((1, 512), np.float32)
    b1t[0, 32:480] = np.tile(b1, 14)

    # conv2 band per kernel row (3, 512, 448): row = p*32 + ci, col = v*64 + co.
    b2m = np.zeros((3, 512, 448), np.float32)
    for kh in range(3):
        for kw in range(3):
            for v in range(7):
                p = 2 * v + kw
                b2m[kh, p * 32:(p + 1) * 32, v * 64:(v + 1) * 64] = w2[:, :, kh, kw].T
    b2t = np.tile(b2, 7).reshape(1, 448)

    # fc weight blocked by conv2 output row u: wfcp[u, v*64+co, f] =
    # wfc[f, co*49 + u*7 + v]  (PyTorch flattens NCHW: index = co*49 + u*7 + v).
    wfcp = np.transpose(wfc.reshape(fdim, 64, 7, 7), (2, 3, 1, 0)).reshape(7, 448, fdim)

    return dict(
        a1=jnp.asarray(a1, jnp.bfloat16),
        b1t=jnp.asarray(b1t, jnp.float32),
        b2m=jnp.asarray(b2m, jnp.bfloat16),
        b2t=jnp.asarray(b2t, jnp.float32),
        wfcp=jnp.asarray(wfcp, jnp.float32),
        bfcr=jnp.asarray(bfc.reshape(1, fdim), jnp.float32),
    )


# --------------------------------- forward --------------------------------- #

def _pick_batch_tile(batch):
    for cand in (128, 64, 32, 16, 8):
        if batch % cand == 0:
            return cand
    return batch  # whole batch in one block (block == full dim, always legal)


@jax.jit
def encoder_forward(prepped, x_nchw):
    batch = x_nchw.shape[0]
    assert x_nchw.shape[1:] == (1, 28, 28), x_nchw.shape
    fdim = prepped["wfcp"].shape[2]

    # (B,1,28,28) -> (H=30, B, W=30): rows leading, batch on sublanes, padded.
    xpad = jnp.pad(jnp.transpose(x_nchw.reshape(batch, 28, 28), (1, 0, 2)),
                   ((1, 1), (0, 0), (1, 1)))

    bt = _pick_batch_tile(batch)
    grid = (batch // bt,)

    flops = batch * (14 * 2 * 90 * 512 + 7 * 3 * 2 * 512 * 448
                     + 7 * 2 * 448 * fdim)
    bytes_accessed = (xpad.size * 4 + prepped["a1"].size * 2 + 512 * 4 +
                      prepped["b2m"].size * 2 + 448 * 4 +
                      prepped["wfcp"].size * 4 + fdim * 4 + batch * fdim * 4)

    return pl.pallas_call(
        _encoder_kernel,
        out_shape=jax.ShapeDtypeStruct((batch, fdim), jnp.float32),
        grid_spec=pltpu.PrefetchScalarGridSpec(
            num_scalar_prefetch=0,
            grid=grid,
            in_specs=[
                pl.BlockSpec((30, bt, 30), lambda ib: (0, ib, 0)),
                pl.BlockSpec((90, 512), lambda ib: (0, 0)),
                pl.BlockSpec((1, 512), lambda ib: (0, 0)),
                pl.BlockSpec((3, 512, 448), lambda ib: (0, 0, 0)),
                pl.BlockSpec((1, 448), lambda ib: (0, 0)),
                pl.BlockSpec((7, 448, fdim), lambda ib: (0, 0, 0)),
                pl.BlockSpec((1, fdim), lambda ib: (0, 0)),
            ],
            out_specs=pl.BlockSpec((bt, fdim), lambda ib: (ib, 0)),
            scratch_shapes=[pltpu.VMEM((15, bt, 512), jnp.bfloat16)],
        ),
        compiler_params=pltpu.CompilerParams(
            dimension_semantics=("parallel",),
            vmem_limit_bytes=32 * 1024 * 1024,
        ),
        cost_estimate=pl.CostEstimate(flops=flops, transcendentals=0,
                                      bytes_accessed=bytes_accessed),
    )(xpad, prepped["a1"], prepped["b1t"], prepped["b2m"], prepped["b2t"],
      prepped["wfcp"], prepped["bfcr"])


# --------------------------- params / reference ---------------------------- #

def init_params(key, feature_dim):
    k1, k2, k3 = jax.random.split(key, 3)
    return dict(
        w1=jax.random.normal(k1, (32, 1, 3, 3), jnp.float32) * 0.1,
        b1=jnp.linspace(-0.1, 0.1, 32).astype(jnp.float32),
        w2=jax.random.normal(k2, (64, 32, 3, 3), jnp.float32) * 0.05,
        b2=jnp.linspace(-0.1, 0.1, 64).astype(jnp.float32),
        w_fc=jax.random.normal(k3, (feature_dim, 64 * 7 * 7), jnp.float32) * 0.02,
        b_fc=jnp.linspace(-0.1, 0.1, feature_dim).astype(jnp.float32),
    )


def encoder_reference(params, x_nchw):
    dn = ("NCHW", "OIHW", "NCHW")
    y = jax.lax.conv_general_dilated(x_nchw, params["w1"], (2, 2),
                                     ((1, 1), (1, 1)), dimension_numbers=dn)
    y = jax.nn.relu(y + params["b1"][None, :, None, None])
    y = jax.lax.conv_general_dilated(y, params["w2"], (2, 2),
                                     ((1, 1), (1, 1)), dimension_numbers=dn)
    y = jax.nn.relu(y + params["b2"][None, :, None, None])
    y = y.reshape(y.shape[0], -1)
    return y @ params["w_fc"].T + params["b_fc"]


if __name__ == "__main__":
    key = jax.random.PRNGKey(0)
    pkey, xkey = jax.random.split(key)

    feature_dim = 32
    params = init_params(pkey, feature_dim)
    prepped = prepare_params(params)   # one-time host-side weight repack

    # fc = Linear(64*7*7, feature_dim) implies 28x28 single-channel input.
    x = jax.random.normal(xkey, (2, 1, 28, 28), jnp.float32)

    out = jax.block_until_ready(encoder_forward(prepped, x))
    assert out.shape == (2, feature_dim), out.shape

    ref = jax.block_until_ready(encoder_reference(params, x))
    err = float(jnp.max(jnp.abs(out - ref)))
    assert jnp.allclose(out, ref, rtol=2e-2, atol=2e-2), err

    print("KERNEL_OK")
</pallas_src>

<mosaic_0001>
module attributes {stable_mosaic.version = 11 : i64} {
  func.func @_encoder_kernel(%arg0: i32, %arg1: memref<30x2x30xf32, #tpu.memory_space<vmem>>, %arg2: memref<90x512xbf16, #tpu.memory_space<vmem>>, %arg3: memref<1x512xf32, #tpu.memory_space<vmem>>, %arg4: memref<3x512x448xbf16, #tpu.memory_space<vmem>>, %arg5: memref<1x448xf32, #tpu.memory_space<vmem>>, %arg6: memref<7x448x32xf32, #tpu.memory_space<vmem>>, %arg7: memref<1x32xf32, #tpu.memory_space<vmem>>, %arg8: memref<2x32xf32, #tpu.memory_space<vmem>>, %arg9: memref<15x2x512xbf16, #tpu.memory_space<vmem>>) attributes {dimension_semantics = [#tpu.dimension_semantics<parallel>], iteration_bounds = array<i64: 1>, scalar_prefetch = 0 : i64, scratch_operands = 1 : i64, tpu.core_type = #tpu.core_type<tc>, window_params = [{transform_indices = @transform_0, window_bounds = array<i64: 30, 2, 30>}, {pipeline_mode = #tpu.pipeline_mode<synchronous>, transform_indices = @transform_1, window_bounds = array<i64: 90, 512>}, {pipeline_mode = #tpu.pipeline_mode<synchronous>, transform_indices = @transform_2, window_bounds = array<i64: 1, 512>}, {pipeline_mode = #tpu.pipeline_mode<synchronous>, transform_indices = @transform_3, window_bounds = array<i64: 3, 512, 448>}, {pipeline_mode = #tpu.pipeline_mode<synchronous>, transform_indices = @transform_4, window_bounds = array<i64: 1, 448>}, {pipeline_mode = #tpu.pipeline_mode<synchronous>, transform_indices = @transform_5, window_bounds = array<i64: 7, 448, 32>}, {pipeline_mode = #tpu.pipeline_mode<synchronous>, transform_indices = @transform_6, window_bounds = array<i64: 1, 32>}, {transform_indices = @transform_7, window_bounds = array<i64: 2, 32>}]} {
    %c0 = arith.constant 0 : index
    %c0_0 = arith.constant 0 : index
    %0 = vector.load %arg2[%c0, %c0_0] : memref<90x512xbf16, #tpu.memory_space<vmem>>, vector<90x512xbf16>
    %c0_1 = arith.constant 0 : index
    %c0_2 = arith.constant 0 : index
    %1 = vector.load %arg3[%c0_1, %c0_2] : memref<1x512xf32, #tpu.memory_space<vmem>>, vector<1x512xf32>
    %cst = arith.constant 0.000000e+00 : bf16
    %2 = vector.broadcast %cst : bf16 to vector<2x512xbf16>
    %c0_3 = arith.constant 0 : index
    %c0_4 = arith.constant 0 : index
    %c0_5 = arith.constant 0 : index
    %3 = vector.load %arg9[%c0_3, %c0_4, %c0_5] : memref<15x2x512xbf16, #tpu.memory_space<vmem>>, vector<1x2x512xbf16>
    %4 = vector.shape_cast %3 : vector<1x2x512xbf16> to vector<2x512xbf16>
    %5 = vector.shape_cast %2 : vector<2x512xbf16> to vector<1x2x512xbf16>
    tpu.vector_store %arg9[%c0_3, %c0_4, %c0_5], %5 {strides = array<i32>} : memref<15x2x512xbf16, #tpu.memory_space<vmem>>, vector<1x2x512xbf16>,
    %c0_6 = arith.constant 0 : index
    %c0_7 = arith.constant 0 : index
    %c0_8 = arith.constant 0 : index
    %6 = vector.load %arg1[%c0_6, %c0_7, %c0_8] : memref<30x2x30xf32, #tpu.memory_space<vmem>>, vector<1x2x30xf32>
    %7 = vector.shape_cast %6 : vector<1x2x30xf32> to vector<2x30xf32>
    %c1 = arith.constant 1 : index
    %c0_9 = arith.constant 0 : index
    %c0_10 = arith.constant 0 : index
    %8 = vector.load %arg1[%c1, %c0_9, %c0_10] : memref<30x2x30xf32, #tpu.memory_space<vmem>>, vector<1x2x30xf32>
    %9 = vector.shape_cast %8 : vector<1x2x30xf32> to vector<2x30xf32>
    %c2 = arith.constant 2 : index
    %c0_11 = arith.constant 0 : index
    %c0_12 = arith.constant 0 : index
    %10 = vector.load %arg1[%c2, %c0_11, %c0_12] : memref<30x2x30xf32, #tpu.memory_space<vmem>>, vector<1x2x30xf32>
    %11 = vector.shape_cast %10 : vector<1x2x30xf32> to vector<2x30xf32>
    %12 = tpu.concatenate %7, %9, %11 in 1 : vector<2x30xf32>, vector<2x30xf32>, vector<2x30xf32> -> vector<2x90xf32>
    %13 = arith.truncf %12 : vector<2x90xf32> to vector<2x90xbf16>
    %cst_13 = arith.constant dense<0.000000e+00> : vector<2x512xf32>
    %14 = tpu.matmul %13, %0, %cst_13 {dimension_numbers = #tpu.dot_dimension_numbers<[1], [0], [0], [1], [0, 0, 1, 1], [], []>} : vector<2x90xbf16>, vector<90x512xbf16>, vector<2x512xf32> -> vector<2x512xf32>
    %15 = vector.broadcast %1 : vector<1x512xf32> to vector<2x512xf32>
    %16 = arith.addf %14, %15 : vector<2x512xf32>
    %cst_14 = arith.constant 0.000000e+00 : f32
    %17 = vector.broadcast %cst_14 : f32 to vector<2x512xf32>
    %18 = arith.maximumf %16, %17 : vector<2x512xf32>
    %19 = arith.truncf %18 : vector<2x512xf32> to vector<2x512xbf16>
    %c1_15 = arith.constant 1 : index
    %c0_16 = arith.constant 0 : index
    %c0_17 = arith.constant 0 : index
    %20 = vector.load %arg9[%c1_15, %c0_16, %c0_17] : memref<15x2x512xbf16, #tpu.memory_space<vmem>>, vector<1x2x512xbf16>
    %21 = vector.shape_cast %20 : vector<1x2x512xbf16> to vector<2x512xbf16>
    %22 = vector.shape_cast %19 : vector<2x512xbf16> to vector<1x2x512xbf16>
    tpu.vector_store %arg9[%c1_15, %c0_16, %c0_17], %22 {strides = array<i32>} : memref<15x2x512xbf16, #tpu.memory_space<vmem>>, vector<1x2x512xbf16>,
    %c2_18 = arith.constant 2 : index
    %c0_19 = arith.constant 0 : index
    %c0_20 = arith.constant 0 : index
    %23 = vector.load %arg1[%c2_18, %c0_19, %c0_20] : memref<30x2x30xf32, #tpu.memory_space<vmem>>, vector<1x2x30xf32>
    %24 = vector.shape_cast %23 : vector<1x2x30xf32> to vector<2x30xf32>
    %c3 = arith.constant 3 : index
    %c0_21 = arith.constant 0 : index
    %c0_22 = arith.constant 0 : index
    %25 = vector.load %arg1[%c3, %c0_21, %c0_22] : memref<30x2x30xf32, #tpu.memory_space<vmem>>, vector<1x2x30xf32>
    %26 = vector.shape_cast %25 : vector<1x2x30xf32> to vector<2x30xf32>
    %c4 = arith.constant 4 : index
    %c0_23 = arith.constant 0 : index
    %c0_24 = arith.constant 0 : index
    %27 = vector.load %arg1[%c4, %c0_23, %c0_24] : memref<30x2x30xf32, #tpu.memory_space<vmem>>, vector<1x2x30xf32>
    %28 = vector.shape_cast %27 : vector<1x2x30xf32> to vector<2x30xf32>
    %29 = tpu.concatenate %24, %26, %28 in 1 : vector<2x30xf32>, vector<2x30xf32>, vector<2x30xf32> -> vector<2x90xf32>
    %30 = arith.truncf %29 : vector<2x90xf32> to vector<2x90xbf16>
    %cst_25 = arith.constant dense<0.000000e+00> : vector<2x512xf32>
    %31 = tpu.matmul %30, %0, %cst_25 {dimension_numbers = #tpu.dot_dimension_numbers<[1], [0], [0], [1], [0, 0, 1, 1], [], []>} : vector<2x90xbf16>, vector<90x512xbf16>, vector<2x512xf32> -> vector<2x512xf32>
    %32 = vector.broadcast %1 : vector<1x512xf32> to vector<2x512xf32>
    %33 = arith.addf %31, %32 : vector<2x512xf32>
    %cst_26 = arith.constant 0.000000e+00 : f32
    %34 = vector.broadcast %cst_26 : f32 to vector<2x512xf32>
    %35 = arith.maximumf %33, %34 : vector<2x512xf32>
    %36 = arith.truncf %35 : vector<2x512xf32> to vector<2x512xbf16>
    %c2_27 = arith.constant 2 : index
    %c0_28 = arith.constant 0 : index
    %c0_29 = arith.constant 0 : index
    %37 = vector.load %arg9[%c2_27, %c0_28, %c0_29] : memref<15x2x512xbf16, #tpu.memory_space<vmem>>, vector<1x2x512xbf16>
    %38 = vector.shape_cast %37 : vector<1x2x512xbf16> to vector<2x512xbf16>
    %39 = vector.shape_cast %36 : vector<2x512xbf16> to vector<1x2x512xbf16>
    tpu.vector_store %arg9[%c2_27, %c0_28, %c0_29], %39 {strides = array<i32>} : memref<15x2x512xbf16, #tpu.memory_space<vmem>>, vector<1x2x512xbf16>,
    %c4_30 = arith.constant 4 : index
    %c0_31 = arith.constant 0 : index
    %c0_32 = arith.constant 0 : index
    %40 = vector.load %arg1[%c4_30, %c0_31, %c0_32] : memref<30x2x30xf32, #tpu.memory_space<vmem>>, vector<1x2x30xf32>
    %41 = vector.shape_cast %40 : vector<1x2x30xf32> to vector<2x30xf32>
    %c5 = arith.constant 5 : index
    %c0_33 = arith.constant 0 : index
    %c0_34 = arith.constant 0 : index
    %42 = vector.load %arg1[%c5, %c0_33, %c0_34] : memref<30x2x30xf32, #tpu.memory_space<vmem>>, vector<1x2x30xf32>
    %43 = vector.shape_cast %42 : vector<1x2x30xf32> to vector<2x30xf32>
    %c6 = arith.constant 6 : index
    %c0_35 = arith.constant 0 : index
    %c0_36 = arith.constant 0 : index
    %44 = vector.load %arg1[%c6, %c0_35, %c0_36] : memref<30x2x30xf32, #tpu.memory_space<vmem>>, vector<1x2x30xf32>
    %45 = vector.shape_cast %44 : vector<1x2x30xf32> to vector<2x30xf32>
    %46 = tpu.concatenate %41, %43, %45 in 1 : vector<2x30xf32>, vector<2x30xf32>, vector<2x30xf32> -> vector<2x90xf32>
    %47 = arith.truncf %46 : vector<2x90xf32> to vector<2x90xbf16>
    %cst_37 = arith.constant dense<0.000000e+00> : vector<2x512xf32>
    %48 = tpu.matmul %47, %0, %cst_37 {dimension_numbers = #tpu.dot_dimension_numbers<[1], [0], [0], [1], [0, 0, 1, 1], [], []>} : vector<2x90xbf16>, vector<90x512xbf16>, vector<2x512xf32> -> vector<2x512xf32>
    %49 = vector.broadcast %1 : vector<1x512xf32> to vector<2x512xf32>
    %50 = arith.addf %48, %49 : vector<2x512xf32>
    %cst_38 = arith.constant 0.000000e+00 : f32
    %51 = vector.broadcast %cst_38 : f32 to vector<2x512xf32>
    %52 = arith.maximumf %50, %51 : vector<2x512xf32>
    %53 = arith.truncf %52 : vector<2x512xf32> to vector<2x512xbf16>
    %c3_39 = arith.constant 3 : index
    %c0_40 = arith.constant 0 : index
    %c0_41 = arith.constant 0 : index
    %54 = vector.load %arg9[%c3_39, %c0_40, %c0_41] : memref<15x2x512xbf16, #tpu.memory_space<vmem>>, vector<1x2x512xbf16>
    %55 = vector.shape_cast %54 : vector<1x2x512xbf16> to vector<2x512xbf16>
    %56 = vector.shape_cast %53 : vector<2x512xbf16> to vector<1x2x512xbf16>
    tpu.vector_store %arg9[%c3_39, %c0_40, %c0_41], %56 {strides = array<i32>} : memref<15x2x512xbf16, #tpu.memory_space<vmem>>, vector<1x2x512xbf16>,
    %c6_42 = arith.constant 6 : index
    %c0_43 = arith.constant 0 : index
    %c0_44 = arith.constant 0 : index
    %57 = vector.load %arg1[%c6_42, %c0_43, %c0_44] : memref<30x2x30xf32, #tpu.memory_space<vmem>>, vector<1x2x30xf32>
    %58 = vector.shape_cast %57 : vector<1x2x30xf32> to vector<2x30xf32>
    %c7 = arith.constant 7 : index
    %c0_45 = arith.constant 0 : index
    %c0_46 = arith.constant 0 : index
    %59 = vector.load %arg1[%c7, %c0_45, %c0_46] : memref<30x2x30xf32, #tpu.memory_space<vmem>>, vector<1x2x30xf32>
    %60 = vector.shape_cast %59 : vector<1x2x30xf32> to vector<2x30xf32>
    %c8 = arith.constant 8 : index
    %c0_47 = arith.constant 0 : index
    %c0_48 = arith.constant 0 : index
    %61 = vector.load %arg1[%c8, %c0_47, %c0_48] : memref<30x2x30xf32, #tpu.memory_space<vmem>>, vector<1x2x30xf32>
    %62 = vector.shape_cast %61 : vector<1x2x30xf32> to vector<2x30xf32>
    %63 = tpu.concatenate %58, %60, %62 in 1 : vector<2x30xf32>, vector<2x30xf32>, vector<2x30xf32> -> vector<2x90xf32>
    %64 = arith.truncf %63 : vector<2x90xf32> to vector<2x90xbf16>
    %cst_49 = arith.constant dense<0.000000e+00> : vector<2x512xf32>
    %65 = tpu.matmul %64, %0, %cst_49 {dimension_numbers = #tpu.dot_dimension_numbers<[1], [0], [0], [1], [0, 0, 1, 1], [], []>} : vector<2x90xbf16>, vector<90x512xbf16>, vector<2x512xf32> -> vector<2x512xf32>
    %66 = vector.broadcast %1 : vector<1x512xf32> to vector<2x512xf32>
    %67 = arith.addf %65, %66 : vector<2x512xf32>
    %cst_50 = arith.constant 0.000000e+00 : f32
    %68 = vector.broadcast %cst_50 : f32 to vector<2x512xf32>
    %69 = arith.maximumf %67, %68 : vector<2x512xf32>
    %70 = arith.truncf %69 : vector<2x512xf32> to vector<2x512xbf16>
    %c4_51 = arith.constant 4 : index
    %c0_52 = arith.constant 0 : index
    %c0_53 = arith.constant 0 : index
    %71 = vector.load %arg9[%c4_51, %c0_52, %c0_53] : memref<15x2x512xbf16, #tpu.memory_space<vmem>>, vector<1x2x512xbf16>
    %72 = vector.shape_cast %71 : vector<1x2x512xbf16> to vector<2x512xbf16>
    %73 = vector.shape_cast %70 : vector<2x512xbf16> to vector<1x2x512xbf16>
    tpu.vector_store %arg9[%c4_51, %c0_52, %c0_53], %73 {strides = array<i32>} : memref<15x2x512xbf16, #tpu.memory_space<vmem>>, vector<1x2x512xbf16>,
    %c8_54 = arith.constant 8 : index
    %c0_55 = arith.constant 0 : index
    %c0_56 = arith.constant 0 : index
    %74 = vector.load %arg1[%c8_54, %c0_55, %c0_56] : memref<30x2x30xf32, #tpu.memory_space<vmem>>, vector<1x2x30xf32>
    %75 = vector.shape_cast %74 : vector<1x2x30xf32> to vector<2x30xf32>
    %c9 = arith.constant 9 : index
    %c0_57 = arith.constant 0 : index
    %c0_58 = arith.constant 0 : index
    %76 = vector.load %arg1[%c9, %c0_57, %c0_58] : memref<30x2x30xf32, #tpu.memory_space<vmem>>, vector<1x2x30xf32>
    %77 = vector.shape_cast %76 : vector<1x2x30xf32> to vector<2x30xf32>
    %c10 = arith.constant 10 : index
    %c0_59 = arith.constant 0 : index
    %c0_60 = arith.constant 0 : index
    %78 = vector.load %arg1[%c10, %c0_59, %c0_60] : memref<30x2x30xf32, #tpu.memory_space<vmem>>, vector<1x2x30xf32>
    %79 = vector.shape_cast %78 : vector<1x2x30xf32> to vector<2x30xf32>
    %80 = tpu.concatenate %75, %77, %79 in 1 : vector<2x30xf32>, vector<2x30xf32>, vector<2x30xf32> -> vector<2x90xf32>
    %81 = arith.truncf %80 : vector<2x90xf32> to vector<2x90xbf16>
    %cst_61 = arith.constant dense<0.000000e+00> : vector<2x512xf32>
    %82 = tpu.matmul %81, %0, %cst_61 {dimension_numbers = #tpu.dot_dimension_numbers<[1], [0], [0], [1], [0, 0, 1, 1], [], []>} : vector<2x90xbf16>, vector<90x512xbf16>, vector<2x512xf32> -> vector<2x512xf32>
    %83 = vector.broadcast %1 : vector<1x512xf32> to vector<2x512xf32>
    %84 = arith.addf %82, %83 : vector<2x512xf32>
    %cst_62 = arith.constant 0.000000e+00 : f32
    %85 = vector.broadcast %cst_62 : f32 to vector<2x512xf32>
    %86 = arith.maximumf %84, %85 : vector<2x512xf32>
    %87 = arith.truncf %86 : vector<2x512xf32> to vector<2x512xbf16>
    %c5_63 = arith.constant 5 : index
    %c0_64 = arith.constant 0 : index
    %c0_65 = arith.constant 0 : index
    %88 = vector.load %arg9[%c5_63, %c0_64, %c0_65] : memref<15x2x512xbf16, #tpu.memory_space<vmem>>, vector<1x2x512xbf16>
    %89 = vector.shape_cast %88 : vector<1x2x512xbf16> to vector<2x512xbf16>
    %90 = vector.shape_cast %87 : vector<2x512xbf16> to vector<1x2x512xbf16>
    tpu.vector_store %arg9[%c5_63, %c0_64, %c0_65], %90 {strides = array<i32>} : memref<15x2x512xbf16, #tpu.memory_space<vmem>>, vector<1x2x512xbf16>,
    %c10_66 = arith.constant 10 : index
    %c0_67 = arith.constant 0 : index
    %c0_68 = arith.constant 0 : index
    %91 = vector.load %arg1[%c10_66, %c0_67, %c0_68] : memref<30x2x30xf32, #tpu.memory_space<vmem>>, vector<1x2x30xf32>
    %92 = vector.shape_cast %91 : vector<1x2x30xf32> to vector<2x30xf32>
    %c11 = arith.constant 11 : index
    %c0_69 = arith.constant 0 : index
    %c0_70 = arith.constant 0 : index
    %93 = vector.load %arg1[%c11, %c0_69, %c0_70] : memref<30x2x30xf32, #tpu.memory_space<vmem>>, vector<1x2x30xf32>
    %94 = vector.shape_cast %93 : vector<1x2x30xf32> to vector<2x30xf32>
    %c12 = arith.constant 12 : index
    %c0_71 = arith.constant 0 : index
    %c0_72 = arith.constant 0 : index
    %95 = vector.load %arg1[%c12, %c0_71, %c0_72] : memref<30x2x30xf32, #tpu.memory_space<vmem>>, vector<1x2x30xf32>
    %96 = vector.shape_cast %95 : vector<1x2x30xf32> to vector<2x30xf32>
    %97 = tpu.concatenate %92, %94, %96 in 1 : vector<2x30xf32>, vector<2x30xf32>, vector<2x30xf32> -> vector<2x90xf32>
    %98 = arith.truncf %97 : vector<2x90xf32> to vector<2x90xbf16>
    %cst_73 = arith.constant dense<0.000000e+00> : vector<2x512xf32>
    %99 = tpu.matmul %98, %0, %cst_73 {dimension_numbers = #tpu.dot_dimension_numbers<[1], [0], [0], [1], [0, 0, 1, 1], [], []>} : vector<2x90xbf16>, vector<90x512xbf16>, vector<2x512xf32> -> vector<2x512xf32>
    %100 = vector.broadcast %1 : vector<1x512xf32> to vector<2x512xf32>
    %101 = arith.addf %99, %100 : vector<2x512xf32>
    %cst_74 = arith.constant 0.000000e+00 : f32
    %102 = vector.broadcast %cst_74 : f32 to vector<2x512xf32>
    %103 = arith.maximumf %101, %102 : vector<2x512xf32>
    %104 = arith.truncf %103 : vector<2x512xf32> to vector<2x512xbf16>
    %c6_75 = arith.constant 6 : index
    %c0_76 = arith.constant 0 : index
    %c0_77 = arith.constant 0 : index
    %105 = vector.load %arg9[%c6_75, %c0_76, %c0_77] : memref<15x2x512xbf16, #tpu.memory_space<vmem>>, vector<1x2x512xbf16>
    %106 = vector.shape_cast %105 : vector<1x2x512xbf16> to vector<2x512xbf16>
    %107 = vector.shape_cast %104 : vector<2x512xbf16> to vector<1x2x512xbf16>
    tpu.vector_store %arg9[%c6_75, %c0_76, %c0_77], %107 {strides = array<i32>} : memref<15x2x512xbf16, #tpu.memory_space<vmem>>, vector<1x2x512xbf16>,
    %c12_78 = arith.constant 12 : index
    %c0_79 = arith.constant 0 : index
    %c0_80 = arith.constant 0 : index
    %108 = vector.load %arg1[%c12_78, %c0_79, %c0_80] : memref<30x2x30xf32, #tpu.memory_space<vmem>>, vector<1x2x30xf32>
    %109 = vector.shape_cast %108 : vector<1x2x30xf32> to vector<2x30xf32>
    %c13 = arith.constant 13 : index
    %c0_81 = arith.constant 0 : index
    %c0_82 = arith.constant 0 : index
    %110 = vector.load %arg1[%c13, %c0_81, %c0_82] : memref<30x2x30xf32, #tpu.memory_space<vmem>>, vector<1x2x30xf32>
    %111 = vector.shape_cast %110 : vector<1x2x30xf32> to vector<2x30xf32>
    %c14 = arith.constant 14 : index
    %c0_83 = arith.constant 0 : index
    %c0_84 = arith.constant 0 : index
    %112 = vector.load %arg1[%c14, %c0_83, %c0_84] : memref<30x2x30xf32, #tpu.memory_space<vmem>>, vector<1x2x30xf32>
    %113 = vector.shape_cast %112 : vector<1x2x30xf32> to vector<2x30xf32>
    %114 = tpu.concatenate %109, %111, %113 in 1 : vector<2x30xf32>, vector<2x30xf32>, vector<2x30xf32> -> vector<2x90xf32>
    %115 = arith.truncf %114 : vector<2x90xf32> to vector<2x90xbf16>
    %cst_85 = arith.constant dense<0.000000e+00> : vector<2x512xf32>
    %116 = tpu.matmul %115, %0, %cst_85 {dimension_numbers = #tpu.dot_dimension_numbers<[1], [0], [0], [1], [0, 0, 1, 1], [], []>} : vector<2x90xbf16>, vector<90x512xbf16>, vector<2x512xf32> -> vector<2x512xf32>
    %117 = vector.broadcast %1 : vector<1x512xf32> to vector<2x512xf32>
    %118 = arith.addf %116, %117 : vector<2x512xf32>
    %cst_86 = arith.constant 0.000000e+00 : f32
    %119 = vector.broadcast %cst_86 : f32 to vector<2x512xf32>
    %120 = arith.maximumf %118, %119 : vector<2x512xf32>
    %121 = arith.truncf %120 : vector<2x512xf32> to vector<2x512xbf16>
    %c7_87 = arith.constant 7 : index
    %c0_88 = arith.constant 0 : index
    %c0_89 = arith.constant 0 : index
    %122 = vector.load %arg9[%c7_87, %c0_88, %c0_89] : memref<15x2x512xbf16, #tpu.memory_space<vmem>>, vector<1x2x512xbf16>
    %123 = vector.shape_cast %122 : vector<1x2x512xbf16> to vector<2x512xbf16>
    %124 = vector.shape_cast %121 : vector<2x512xbf16> to vector<1x2x512xbf16>
    tpu.vector_store %arg9[%c7_87, %c0_88, %c0_89], %124 {strides = array<i32>} : memref<15x2x512xbf16, #tpu.memory_space<vmem>>, vector<1x2x512xbf16>,
    %c14_90 = arith.constant 14 : index
    %c0_91 = arith.constant 0 : index
    %c0_92 = arith.constant 0 : index
    %125 = vector.load %arg1[%c14_90, %c0_91, %c0_92] : memref<30x2x30xf32, #tpu.memory_space<vmem>>, vector<1x2x30xf32>
    %126 = vector.shape_cast %125 : vector<1x2x30xf32> to vector<2x30xf32>
    %c15 = arith.constant 15 : index
    %c0_93 = arith.constant 0 : index
    %c0_94 = arith.constant 0 : index
    %127 = vector.load %arg1[%c15, %c0_93, %c0_94] : memref<30x2x30xf32, #tpu.memory_space<vmem>>, vector<1x2x30xf32>
    %128 = vector.shape_cast %127 : vector<1x2x30xf32> to vector<2x30xf32>
    %c16 = arith.constant 16 : index
    %c0_95 = arith.constant 0 : index
    %c0_96 = arith.constant 0 : index
    %129 = vector.load %arg1[%c16, %c0_95, %c0_96] : memref<30x2x30xf32, #tpu.memory_space<vmem>>, vector<1x2x30xf32>
    %130 = vector.shape_cast %129 : vector<1x2x30xf32> to vector<2x30xf32>
    %131 = tpu.concatenate %126, %128, %130 in 1 : vector<2x30xf32>, vector<2x30xf32>, vector<2x30xf32> -> vector<2x90xf32>
    %132 = arith.truncf %131 : vector<2x90xf32> to vector<2x90xbf16>
    %cst_97 = arith.constant dense<0.000000e+00> : vector<2x512xf32>
    %133 = tpu.matmul %132, %0, %cst_97 {dimension_numbers = #tpu.dot_dimension_numbers<[1], [0], [0], [1], [0, 0, 1, 1], [], []>} : vector<2x90xbf16>, vector<90x512xbf16>, vector<2x512xf32> -> vector<2x512xf32>
    %134 = vector.broadcast %1 : vector<1x512xf32> to vector<2x512xf32>
    %135 = arith.addf %133, %134 : vector<2x512xf32>
    %cst_98 = arith.constant 0.000000e+00 : f32
    %136 = vector.broadcast %cst_98 : f32 to vector<2x512xf32>
    %137 = arith.maximumf %135, %136 : vector<2x512xf32>
    %138 = arith.truncf %137 : vector<2x512xf32> to vector<2x512xbf16>
    %c8_99 = arith.constant 8 : index
    %c0_100 = arith.constant 0 : index
    %c0_101 = arith.constant 0 : index
    %139 = vector.load %arg9[%c8_99, %c0_100, %c0_101] : memref<15x2x512xbf16, #tpu.memory_space<vmem>>, vector<1x2x512xbf16>
    %140 = vector.shape_cast %139 : vector<1x2x512xbf16> to vector<2x512xbf16>
    %141 = vector.shape_cast %138 : vector<2x512xbf16> to vector<1x2x512xbf16>
    tpu.vector_store %arg9[%c8_99, %c0_100, %c0_101], %141 {strides = array<i32>} : memref<15x2x512xbf16, #tpu.memory_space<vmem>>, vector<1x2x512xbf16>,
    %c16_102 = arith.constant 16 : index
    %c0_103 = arith.constant 0 : index
    %c0_104 = arith.constant 0 : index
    %142 = vector.load %arg1[%c16_102, %c0_103, %c0_104] : memref<30x2x30xf32, #tpu.memory_space<vmem>>, vector<1x2x30xf32>
    %143 = vector.shape_cast %142 : vector<1x2x30xf32> to vector<2x30xf32>
    %c17 = arith.constant 17 : index
    %c0_105 = arith.constant 0 : index
    %c0_106 = arith.constant 0 : index
    %144 = vector.load %arg1[%c17, %c0_105, %c0_106] : memref<30x2x30xf32, #tpu.memory_space<vmem>>, vector<1x2x30xf32>
    %145 = vector.shape_cast %144 : vector<1x2x30xf32> to vector<2x30xf32>
    %c18 = arith.constant 18 : index
    %c0_107 = arith.constant 0 : index
    %c0_108 = arith.constant 0 : index
    %146 = vector.load %arg1[%c18, %c0_107, %c0_108] : memref<30x2x30xf32, #tpu.memory_space<vmem>>, vector<1x2x30xf32>
    %147 = vector.shape_cast %146 : vector<1x2x30xf32> to vector<2x30xf32>
    %148 = tpu.concatenate %143, %145, %147 in 1 : vector<2x30xf32>, vector<2x30xf32>, vector<2x30xf32> -> vector<2x90xf32>
    %149 = arith.truncf %148 : vector<2x90xf32> to vector<2x90xbf16>
    %cst_109 = arith.constant dense<0.000000e+00> : vector<2x512xf32>
    %150 = tpu.matmul %149, %0, %cst_109 {dimension_numbers = #tpu.dot_dimension_numbers<[1], [0], [0], [1], [0, 0, 1, 1], [], []>} : vector<2x90xbf16>, vector<90x512xbf16>, vector<2x512xf32> -> vector<2x512xf32>
    %151 = vector.broadcast %1 : vector<1x512xf32> to vector<2x512xf32>
    %152 = arith.addf %150, %151 : vector<2x512xf32>
    %cst_110 = arith.constant 0.000000e+00 : f32
    %153 = vector.broadcast %cst_110 : f32 to vector<2x512xf32>
    %154 = arith.maximumf %152, %153 : vector<2x512xf32>
    %155 = arith.truncf %154 : vector<2x512xf32> to vector<2x512xbf16>
    %c9_111 = arith.constant 9 : index
    %c0_112 = arith.constant 0 : index
    %c0_113 = arith.constant 0 : index
    %156 = vector.load %arg9[%c9_111, %c0_112, %c0_113] : memref<15x2x512xbf16, #tpu.memory_space<vmem>>, vector<1x2x512xbf16>
    %157 = vector.shape_cast %156 : vector<1x2x512xbf16> to vector<2x512xbf16>
    %158 = vector.shape_cast %155 : vector<2x512xbf16> to vector<1x2x512xbf16>
    tpu.vector_store %arg9[%c9_111, %c0_112, %c0_113], %158 {strides = array<i32>} : memref<15x2x512xbf16, #tpu.memory_space<vmem>>, vector<1x2x512xbf16>,
    %c18_114 = arith.constant 18 : index
    %c0_115 = arith.constant 0 : index
    %c0_116 = arith.constant 0 : index
    %159 = vector.load %arg1[%c18_114, %c0_115, %c0_116] : memref<30x2x30xf32, #tpu.memory_space<vmem>>, vector<1x2x30xf32>
    %160 = vector.shape_cast %159 : vector<1x2x30xf32> to vector<2x30xf32>
    %c19 = arith.constant 19 : index
    %c0_117 = arith.constant 0 : index
    %c0_118 = arith.constant 0 : index
    %161 = vector.load %arg1[%c19, %c0_117, %c0_118] : memref<30x2x30xf32, #tpu.memory_space<vmem>>, vector<1x2x30xf32>
    %162 = vector.shape_cast %161 : vector<1x2x30xf32> to vector<2x30xf32>
    %c20 = arith.constant 20 : index
    %c0_119 = arith.constant 0 : index
    %c0_120 = arith.constant 0 : index
    %163 = vector.load %arg1[%c20, %c0_119, %c0_120] : memref<30x2x30xf32, #tpu.memory_space<vmem>>, vector<1x2x30xf32>
    %164 = vector.shape_cast %163 : vector<1x2x30xf32> to vector<2x30xf32>
    %165 = tpu.concatenate %160, %162, %164 in 1 : vector<2x30xf32>, vector<2x30xf32>, vector<2x30xf32> -> vector<2x90xf32>
    %166 = arith.truncf %165 : vector<2x90xf32> to vector<2x90xbf16>
    %cst_121 = arith.constant dense<0.000000e+00> : vector<2x512xf32>
    %167 = tpu.matmul %166, %0, %cst_121 {dimension_numbers = #tpu.dot_dimension_numbers<[1], [0], [0], [1], [0, 0, 1, 1], [], []>} : vector<2x90xbf16>, vector<90x512xbf16>, vector<2x512xf32> -> vector<2x512xf32>
    %168 = vector.broadcast %1 : vector<1x512xf32> to vector<2x512xf32>
    %169 = arith.addf %167, %168 : vector<2x512xf32>
    %cst_122 = arith.constant 0.000000e+00 : f32
    %170 = vector.broadcast %cst_122 : f32 to vector<2x512xf32>
    %171 = arith.maximumf %169, %170 : vector<2x512xf32>
    %172 = arith.truncf %171 : vector<2x512xf32> to vector<2x512xbf16>
    %c10_123 = arith.constant 10 : index
    %c0_124 = arith.constant 0 : index
    %c0_125 = arith.constant 0 : index
    %173 = vector.load %arg9[%c10_123, %c0_124, %c0_125] : memref<15x2x512xbf16, #tpu.memory_space<vmem>>, vector<1x2x512xbf16>
    %174 = vector.shape_cast %173 : vector<1x2x512xbf16> to vector<2x512xbf16>
    %175 = vector.shape_cast %172 : vector<2x512xbf16> to vector<1x2x512xbf16>
    tpu.vector_store %arg9[%c10_123, %c0_124, %c0_125], %175 {strides = array<i32>} : memref<15x2x512xbf16, #tpu.memory_space<vmem>>, vector<1x2x512xbf16>,
    %c20_126 = arith.constant 20 : index
    %c0_127 = arith.constant 0 : index
    %c0_128 = arith.constant 0 : index
    %176 = vector.load %arg1[%c20_126, %c0_127, %c0_128] : memref<30x2x30xf32, #tpu.memory_space<vmem>>, vector<1x2x30xf32>
    %177 = vector.shape_cast %176 : vector<1x2x30xf32> to vector<2x30xf32>
    %c21 = arith.constant 21 : index
    %c0_129 = arith.constant 0 : index
    %c0_130 = arith.constant 0 : index
    %178 = vector.load %arg1[%c21, %c0_129, %c0_130] : memref<30x2x30xf32, #tpu.memory_space<vmem>>, vector<1x2x30xf32>
    %179 = vector.shape_cast %178 : vector<1x2x30xf32> to vector<2x30xf32>
    %c22 = arith.constant 22 : index
    %c0_131 = arith.constant 0 : index
    %c0_132 = arith.constant 0 : index
    %180 = vector.load %arg1[%c22, %c0_131, %c0_132] : memref<30x2x30xf32, #tpu.memory_space<vmem>>, vector<1x2x30xf32>
    %181 = vector.shape_cast %180 : vector<1x2x30xf32> to vector<2x30xf32>
    %182 = tpu.concatenate %177, %179, %181 in 1 : vector<2x30xf32>, vector<2x30xf32>, vector<2x30xf32> -> vector<2x90xf32>
    %183 = arith.truncf %182 : vector<2x90xf32> to vector<2x90xbf16>
    %cst_133 = arith.constant dense<0.000000e+00> : vector<2x512xf32>
    %184 = tpu.matmul %183, %0, %cst_133 {dimension_numbers = #tpu.dot_dimension_numbers<[1], [0], [0], [1], [0, 0, 1, 1], [], []>} : vector<2x90xbf16>, vector<90x512xbf16>, vector<2x512xf32> -> vector<2x512xf32>
    %185 = vector.broadcast %1 : vector<1x512xf32> to vector<2x512xf32>
    %186 = arith.addf %184, %185 : vector<2x512xf32>
    %cst_134 = arith.constant 0.000000e+00 : f32
    %187 = vector.broadcast %cst_134 : f32 to vector<2x512xf32>
    %188 = arith.maximumf %186, %187 : vector<2x512xf32>
    %189 = arith.truncf %188 : vector<2x512xf32> to vector<2x512xbf16>
    %c11_135 = arith.constant 11 : index
    %c0_136 = arith.constant 0 : index
    %c0_137 = arith.constant 0 : index
    %190 = vector.load %arg9[%c11_135, %c0_136, %c0_137] : memref<15x2x512xbf16, #tpu.memory_space<vmem>>, vector<1x2x512xbf16>
    %191 = vector.shape_cast %190 : vector<1x2x512xbf16> to vector<2x512xbf16>
    %192 = vector.shape_cast %189 : vector<2x512xbf16> to vector<1x2x512xbf16>
    tpu.vector_store %arg9[%c11_135, %c0_136, %c0_137], %192 {strides = array<i32>} : memref<15x2x512xbf16, #tpu.memory_space<vmem>>, vector<1x2x512xbf16>,
    %c22_138 = arith.constant 22 : index
    %c0_139 = arith.constant 0 : index
    %c0_140 = arith.constant 0 : index
    %193 = vector.load %arg1[%c22_138, %c0_139, %c0_140] : memref<30x2x30xf32, #tpu.memory_space<vmem>>, vector<1x2x30xf32>
    %194 = vector.shape_cast %193 : vector<1x2x30xf32> to vector<2x30xf32>
    %c23 = arith.constant 23 : index
    %c0_141 = arith.constant 0 : index
    %c0_142 = arith.constant 0 : index
    %195 = vector.load %arg1[%c23, %c0_141, %c0_142] : memref<30x2x30xf32, #tpu.memory_space<vmem>>, vector<1x2x30xf32>
    %196 = vector.shape_cast %195 : vector<1x2x30xf32> to vector<2x30xf32>
    %c24 = arith.constant 24 : index
    %c0_143 = arith.constant 0 : index
    %c0_144 = arith.constant 0 : index
    %197 = vector.load %arg1[%c24, %c0_143, %c0_144] : memref<30x2x30xf32, #tpu.memory_space<vmem>>, vector<1x2x30xf32>
    %198 = vector.shape_cast %197 : vector<1x2x30xf32> to vector<2x30xf32>
    %199 = tpu.concatenate %194, %196, %198 in 1 : vector<2x30xf32>, vector<2x30xf32>, vector<2x30xf32> -> vector<2x90xf32>
    %200 = arith.truncf %199 : vector<2x90xf32> to vector<2x90xbf16>
    %cst_145 = arith.constant dense<0.000000e+00> : vector<2x512xf32>
    %201 = tpu.matmul %200, %0, %cst_145 {dimension_numbers = #tpu.dot_dimension_numbers<[1], [0], [0], [1], [0, 0, 1, 1], [], []>} : vector<2x90xbf16>, vector<90x512xbf16>, vector<2x512xf32> -> vector<2x512xf32>
    %202 = vector.broadcast %1 : vector<1x512xf32> to vector<2x512xf32>
    %203 = arith.addf %201, %202 : vector<2x512xf32>
    %cst_146 = arith.constant 0.000000e+00 : f32
    %204 = vector.broadcast %cst_146 : f32 to vector<2x512xf32>
    %205 = arith.maximumf %203, %204 : vector<2x512xf32>
    %206 = arith.truncf %205 : vector<2x512xf32> to vector<2x512xbf16>
    %c12_147 = arith.constant 12 : index
    %c0_148 = arith.constant 0 : index
    %c0_149 = arith.constant 0 : index
    %207 = vector.load %arg9[%c12_147, %c0_148, %c0_149] : memref<15x2x512xbf16, #tpu.memory_space<vmem>>, vector<1x2x512xbf16>
    %208 = vector.shape_cast %207 : vector<1x2x512xbf16> to vector<2x512xbf16>
    %209 = vector.shape_cast %206 : vector<2x512xbf16> to vector<1x2x512xbf16>
    tpu.vector_store %arg9[%c12_147, %c0_148, %c0_149], %209 {strides = array<i32>} : memref<15x2x512xbf16, #tpu.memory_space<vmem>>, vector<1x2x512xbf16>,
    %c24_150 = arith.constant 24 : index
    %c0_151 = arith.constant 0 : index
    %c0_152 = arith.constant 0 : index
    %210 = vector.load %arg1[%c24_150, %c0_151, %c0_152] : memref<30x2x30xf32, #tpu.memory_space<vmem>>, vector<1x2x30xf32>
    %211 = vector.shape_cast %210 : vector<1x2x30xf32> to vector<2x30xf32>
    %c25 = arith.constant 25 : index
    %c0_153 = arith.constant 0 : index
    %c0_154 = arith.constant 0 : index
    %212 = vector.load %arg1[%c25, %c0_153, %c0_154] : memref<30x2x30xf32, #tpu.memory_space<vmem>>, vector<1x2x30xf32>
    %213 = vector.shape_cast %212 : vector<1x2x30xf32> to vector<2x30xf32>
    %c26 = arith.constant 26 : index
    %c0_155 = arith.constant 0 : index
    %c0_156 = arith.constant 0 : index
    %214 = vector.load %arg1[%c26, %c0_155, %c0_156] : memref<30x2x30xf32, #tpu.memory_space<vmem>>, vector<1x2x30xf32>
    %215 = vector.shape_cast %214 : vector<1x2x30xf32> to vector<2x30xf32>
    %216 = tpu.concatenate %211, %213, %215 in 1 : vector<2x30xf32>, vector<2x30xf32>, vector<2x30xf32> -> vector<2x90xf32>
    %217 = arith.truncf %216 : vector<2x90xf32> to vector<2x90xbf16>
    %cst_157 = arith.constant dense<0.000000e+00> : vector<2x512xf32>
    %218 = tpu.matmul %217, %0, %cst_157 {dimension_numbers = #tpu.dot_dimension_numbers<[1], [0], [0], [1], [0, 0, 1, 1], [], []>} : vector<2x90xbf16>, vector<90x512xbf16>, vector<2x512xf32> -> vector<2x512xf32>
    %219 = vector.broadcast %1 : vector<1x512xf32> to vector<2x512xf32>
    %220 = arith.addf %218, %219 : vector<2x512xf32>
    %cst_158 = arith.constant 0.000000e+00 : f32
    %221 = vector.broadcast %cst_158 : f32 to vector<2x512xf32>
    %222 = arith.maximumf %220, %221 : vector<2x512xf32>
    %223 = arith.truncf %222 : vector<2x512xf32> to vector<2x512xbf16>
    %c13_159 = arith.constant 13 : index
    %c0_160 = arith.constant 0 : index
    %c0_161 = arith.constant 0 : index
    %224 = vector.load %arg9[%c13_159, %c0_160, %c0_161] : memref<15x2x512xbf16, #tpu.memory_space<vmem>>, vector<1x2x512xbf16>
    %225 = vector.shape_cast %224 : vector<1x2x512xbf16> to vector<2x512xbf16>
    %226 = vector.shape_cast %223 : vector<2x512xbf16> to vector<1x2x512xbf16>
    tpu.vector_store %arg9[%c13_159, %c0_160, %c0_161], %226 {strides = array<i32>} : memref<15x2x512xbf16, #tpu.memory_space<vmem>>, vector<1x2x512xbf16>,
    %c26_162 = arith.constant 26 : index
    %c0_163 = arith.constant 0 : index
    %c0_164 = arith.constant 0 : index
    %227 = vector.load %arg1[%c26_162, %c0_163, %c0_164] : memref<30x2x30xf32, #tpu.memory_space<vmem>>, vector<1x2x30xf32>
    %228 = vector.shape_cast %227 : vector<1x2x30xf32> to vector<2x30xf32>
    %c27 = arith.constant 27 : index
    %c0_165 = arith.constant 0 : index
    %c0_166 = arith.constant 0 : index
    %229 = vector.load %arg1[%c27, %c0_165, %c0_166] : memref<30x2x30xf32, #tpu.memory_space<vmem>>, vector<1x2x30xf32>
    %230 = vector.shape_cast %229 : vector<1x2x30xf32> to vector<2x30xf32>
    %c28 = arith.constant 28 : index
    %c0_167 = arith.constant 0 : index
    %c0_168 = arith.constant 0 : index
    %231 = vector.load %arg1[%c28, %c0_167, %c0_168] : memref<30x2x30xf32, #tpu.memory_space<vmem>>, vector<1x2x30xf32>
    %232 = vector.shape_cast %231 : vector<1x2x30xf32> to vector<2x30xf32>
    %233 = tpu.concatenate %228, %230, %232 in 1 : vector<2x30xf32>, vector<2x30xf32>, vector<2x30xf32> -> vector<2x90xf32>
    %234 = arith.truncf %233 : vector<2x90xf32> to vector<2x90xbf16>
    %cst_169 = arith.constant dense<0.000000e+00> : vector<2x512xf32>
    %235 = tpu.matmul %234, %0, %cst_169 {dimension_numbers = #tpu.dot_dimension_numbers<[1], [0], [0], [1], [0, 0, 1, 1], [], []>} : vector<2x90xbf16>, vector<90x512xbf16>, vector<2x512xf32> -> vector<2x512xf32>
    %236 = vector.broadcast %1 : vector<1x512xf32> to vector<2x512xf32>
    %237 = arith.addf %235, %236 : vector<2x512xf32>
    %cst_170 = arith.constant 0.000000e+00 : f32
    %238 = vector.broadcast %cst_170 : f32 to vector<2x512xf32>
    %239 = arith.maximumf %237, %238 : vector<2x512xf32>
    %240 = arith.truncf %239 : vector<2x512xf32> to vector<2x512xbf16>
    %c14_171 = arith.constant 14 : index
    %c0_172 = arith.constant 0 : index
    %c0_173 = arith.constant 0 : index
    %241 = vector.load %arg9[%c14_171, %c0_172, %c0_173] : memref<15x2x512xbf16, #tpu.memory_space<vmem>>, vector<1x2x512xbf16>
    %242 = vector.shape_cast %241 : vector<1x2x512xbf16> to vector<2x512xbf16>
    %243 = vector.shape_cast %240 : vector<2x512xbf16> to vector<1x2x512xbf16>
    tpu.vector_store %arg9[%c14_171, %c0_172, %c0_173], %243 {strides = array<i32>} : memref<15x2x512xbf16, #tpu.memory_space<vmem>>, vector<1x2x512xbf16>,
    %c0_174 = arith.constant 0 : index
    %c0_175 = arith.constant 0 : index
    %244 = vector.load %arg5[%c0_174, %c0_175] : memref<1x448xf32, #tpu.memory_space<vmem>>, vector<1x448xf32>
    %cst_176 = arith.constant 0.000000e+00 : f32
    %245 = vector.broadcast %cst_176 : f32 to vector<2x32xf32>
    %c0_177 = arith.constant 0 : index
    %c0_178 = arith.constant 0 : index
    %c0_179 = arith.constant 0 : index
    %246 = vector.load %arg9[%c0_177, %c0_178, %c0_179] : memref<15x2x512xbf16, #tpu.memory_space<vmem>>, vector<1x2x512xbf16>
    %247 = vector.shape_cast %246 : vector<1x2x512xbf16> to vector<2x512xbf16>
    %c0_180 = arith.constant 0 : index
    %c0_181 = arith.constant 0 : index
    %c0_182 = arith.constant 0 : index
    %248 = vector.load %arg4[%c0_180, %c0_181, %c0_182] : memref<3x512x448xbf16, #tpu.memory_space<vmem>>, vector<1x512x448xbf16>
    %249 = vector.shape_cast %248 : vector<1x512x448xbf16> to vector<512x448xbf16>
    %cst_183 = arith.constant dense<0.000000e+00> : vector<2x448xf32>
    %250 = tpu.matmul %247, %249, %cst_183 {dimension_numbers = #tpu.dot_dimension_numbers<[1], [0], [0], [1], [0, 0, 1, 1], [], []>} : vector<2x512xbf16>, vector<512x448xbf16>, vector<2x448xf32> -> vector<2x448xf32>
    %c1_184 = arith.constant 1 : index
    %c0_185 = arith.constant 0 : index
    %c0_186 = arith.constant 0 : index
    %251 = vector.load %arg9[%c1_184, %c0_185, %c0_186] : memref<15x2x512xbf16, #tpu.memory_space<vmem>>, vector<1x2x512xbf16>
    %252 = vector.shape_cast %251 : vector<1x2x512xbf16> to vector<2x512xbf16>
    %c1_187 = arith.constant 1 : index
    %c0_188 = arith.constant 0 : index
    %c0_189 = arith.constant 0 : index
    %253 = vector.load %arg4[%c1_187, %c0_188, %c0_189] : memref<3x512x448xbf16, #tpu.memory_space<vmem>>, vector<1x512x448xbf16>
    %254 = vector.shape_cast %253 : vector<1x512x448xbf16> to vector<512x448xbf16>
    %cst_190 = arith.constant dense<0.000000e+00> : vector<2x448xf32>
    %255 = tpu.matmul %252, %254, %cst_190 {dimension_numbers = #tpu.dot_dimension_numbers<[1], [0], [0], [1], [0, 0, 1, 1], [], []>} : vector<2x512xbf16>, vector<512x448xbf16>, vector<2x448xf32> -> vector<2x448xf32>
    %256 = arith.addf %250, %255 : vector<2x448xf32>
    %c2_191 = arith.constant 2 : index
    %c0_192 = arith.constant 0 : index
    %c0_193 = arith.constant 0 : index
    %257 = vector.load %arg9[%c2_191, %c0_192, %c0_193] : memref<15x2x512xbf16, #tpu.memory_space<vmem>>, vector<1x2x512xbf16>
    %258 = vector.shape_cast %257 : vector<1x2x512xbf16> to vector<2x512xbf16>
    %c2_194 = arith.constant 2 : index
    %c0_195 = arith.constant 0 : index
    %c0_196 = arith.constant 0 : index
    %259 = vector.load %arg4[%c2_194, %c0_195, %c0_196] : memref<3x512x448xbf16, #tpu.memory_space<vmem>>, vector<1x512x448xbf16>
    %260 = vector.shape_cast %259 : vector<1x512x448xbf16> to vector<512x448xbf16>
    %cst_197 = arith.constant dense<0.000000e+00> : vector<2x448xf32>
    %261 = tpu.matmul %258, %260, %cst_197 {dimension_numbers = #tpu.dot_dimension_numbers<[1], [0], [0], [1], [0, 0, 1, 1], [], []>} : vector<2x512xbf16>, vector<512x448xbf16>, vector<2x448xf32> -> vector<2x448xf32>
    %262 = arith.addf %256, %261 : vector<2x448xf32>
    %263 = vector.broadcast %244 : vector<1x448xf32> to vector<2x448xf32>
    %264 = arith.addf %262, %263 : vector<2x448xf32>
    %cst_198 = arith.constant 0.000000e+00 : f32
    %265 = vector.broadcast %cst_198 : f32 to vector<2x448xf32>
    %266 = arith.maximumf %264, %265 : vector<2x448xf32>
    %c0_199 = arith.constant 0 : index
    %c0_200 = arith.constant 0 : index
    %c0_201 = arith.constant 0 : index
    %267 = vector.load %arg6[%c0_199, %c0_200, %c0_201] : memref<7x448x32xf32, #tpu.memory_space<vmem>>, vector<1x448x32xf32>
    %268 = vector.shape_cast %267 : vector<1x448x32xf32> to vector<448x32xf32>
    %cst_202 = arith.constant dense<0.000000e+00> : vector<2x32xf32>
    %269 = tpu.matmul %266, %268, %cst_202 {dimension_numbers = #tpu.dot_dimension_numbers<[1], [0], [0], [1], [0, 0, 1, 1], [], []>} : vector<2x448xf32>, vector<448x32xf32>, vector<2x32xf32> -> vector<2x32xf32>
    %270 = arith.addf %245, %269 : vector<2x32xf32>
    %c2_203 = arith.constant 2 : index
    %c0_204 = arith.constant 0 : index
    %c0_205 = arith.constant 0 : index
    %271 = vector.load %arg9[%c2_203, %c0_204, %c0_205] : memref<15x2x512xbf16, #tpu.memory_space<vmem>>, vector<1x2x512xbf16>
    %272 = vector.shape_cast %271 : vector<1x2x512xbf16> to vector<2x512xbf16>
    %c0_206 = arith.constant 0 : index
    %c0_207 = arith.constant 0 : index
    %c0_208 = arith.constant 0 : index
    %273 = vector.load %arg4[%c0_206, %c0_207, %c0_208] : memref<3x512x448xbf16, #tpu.memory_space<vmem>>, vector<1x512x448xbf16>
    %274 = vector.shape_cast %273 : vector<1x512x448xbf16> to vector<512x448xbf16>
    %cst_209 = arith.constant dense<0.000000e+00> : vector<2x448xf32>
    %275 = tpu.matmul %272, %274, %cst_209 {dimension_numbers = #tpu.dot_dimension_numbers<[1], [0], [0], [1], [0, 0, 1, 1], [], []>} : vector<2x512xbf16>, vector<512x448xbf16>, vector<2x448xf32> -> vector<2x448xf32>
    %c3_210 = arith.constant 3 : index
    %c0_211 = arith.constant 0 : index
    %c0_212 = arith.constant 0 : index
    %276 = vector.load %arg9[%c3_210, %c0_211, %c0_212] : memref<15x2x512xbf16, #tpu.memory_space<vmem>>, vector<1x2x512xbf16>
    %277 = vector.shape_cast %276 : vector<1x2x512xbf16> to vector<2x512xbf16>
    %c1_213 = arith.constant 1 : index
    %c0_214 = arith.constant 0 : index
    %c0_215 = arith.constant 0 : index
    %278 = vector.load %arg4[%c1_213, %c0_214, %c0_215] : memref<3x512x448xbf16, #tpu.memory_space<vmem>>, vector<1x512x448xbf16>
    %279 = vector.shape_cast %278 : vector<1x512x448xbf16> to vector<512x448xbf16>
    %cst_216 = arith.constant dense<0.000000e+00> : vector<2x448xf32>
    %280 = tpu.matmul %277, %279, %cst_216 {dimension_numbers = #tpu.dot_dimension_numbers<[1], [0], [0], [1], [0, 0, 1, 1], [], []>} : vector<2x512xbf16>, vector<512x448xbf16>, vector<2x448xf32> -> vector<2x448xf32>
    %281 = arith.addf %275, %280 : vector<2x448xf32>
    %c4_217 = arith.constant 4 : index
    %c0_218 = arith.constant 0 : index
    %c0_219 = arith.constant 0 : index
    %282 = vector.load %arg9[%c4_217, %c0_218, %c0_219] : memref<15x2x512xbf16, #tpu.memory_space<vmem>>, vector<1x2x512xbf16>
    %283 = vector.shape_cast %282 : vector<1x2x512xbf16> to vector<2x512xbf16>
    %c2_220 = arith.constant 2 : index
    %c0_221 = arith.constant 0 : index
    %c0_222 = arith.constant 0 : index
    %284 = vector.load %arg4[%c2_220, %c0_221, %c0_222] : memref<3x512x448xbf16, #tpu.memory_space<vmem>>, vector<1x512x448xbf16>
    %285 = vector.shape_cast %284 : vector<1x512x448xbf16> to vector<512x448xbf16>
    %cst_223 = arith.constant dense<0.000000e+00> : vector<2x448xf32>
    %286 = tpu.matmul %283, %285, %cst_223 {dimension_numbers = #tpu.dot_dimension_numbers<[1], [0], [0], [1], [0, 0, 1, 1], [], []>} : vector<2x512xbf16>, vector<512x448xbf16>, vector<2x448xf32> -> vector<2x448xf32>
    %287 = arith.addf %281, %286 : vector<2x448xf32>
    %288 = vector.broadcast %244 : vector<1x448xf32> to vector<2x448xf32>
    %289 = arith.addf %287, %288 : vector<2x448xf32>
    %cst_224 = arith.constant 0.000000e+00 : f32
    %290 = vector.broadcast %cst_224 : f32 to vector<2x448xf32>
    %291 = arith.maximumf %289, %290 : vector<2x448xf32>
    %c1_225 = arith.constant 1 : index
    %c0_226 = arith.constant 0 : index
    %c0_227 = arith.constant 0 : index
    %292 = vector.load %arg6[%c1_225, %c0_226, %c0_227] : memref<7x448x32xf32, #tpu.memory_space<vmem>>, vector<1x448x32xf32>
    %293 = vector.shape_cast %292 : vector<1x448x32xf32> to vector<448x32xf32>
    %cst_228 = arith.constant dense<0.000000e+00> : vector<2x32xf32>
    %294 = tpu.matmul %291, %293, %cst_228 {dimension_numbers = #tpu.dot_dimension_numbers<[1], [0], [0], [1], [0, 0, 1, 1], [], []>} : vector<2x448xf32>, vector<448x32xf32>, vector<2x32xf32> -> vector<2x32xf32>
    %295 = arith.addf %270, %294 : vector<2x32xf32>
    %c4_229 = arith.constant 4 : index
    %c0_230 = arith.constant 0 : index
    %c0_231 = arith.constant 0 : index
    %296 = vector.load %arg9[%c4_229, %c0_230, %c0_231] : memref<15x2x512xbf16, #tpu.memory_space<vmem>>, vector<1x2x512xbf16>
    %297 = vector.shape_cast %296 : vector<1x2x512xbf16> to vector<2x512xbf16>
    %c0_232 = arith.constant 0 : index
    %c0_233 = arith.constant 0 : index
    %c0_234 = arith.constant 0 : index
    %298 = vector.load %arg4[%c0_232, %c0_233, %c0_234] : memref<3x512x448xbf16, #tpu.memory_space<vmem>>, vector<1x512x448xbf16>
    %299 = vector.shape_cast %298 : vector<1x512x448xbf16> to vector<512x448xbf16>
    %cst_235 = arith.constant dense<0.000000e+00> : vector<2x448xf32>
    %300 = tpu.matmul %297, %299, %cst_235 {dimension_numbers = #tpu.dot_dimension_numbers<[1], [0], [0], [1], [0, 0, 1, 1], [], []>} : vector<2x512xbf16>, vector<512x448xbf16>, vector<2x448xf32> -> vector<2x448xf32>
    %c5_236 = arith.constant 5 : index
    %c0_237 = arith.constant 0 : index
    %c0_238 = arith.constant 0 : index
    %301 = vector.load %arg9[%c5_236, %c0_237, %c0_238] : memref<15x2x512xbf16, #tpu.memory_space<vmem>>, vector<1x2x512xbf16>
    %302 = vector.shape_cast %301 : vector<1x2x512xbf16> to vector<2x512xbf16>
    %c1_239 = arith.constant 1 : index
    %c0_240 = arith.constant 0 : index
    %c0_241 = arith.constant 0 : index
    %303 = vector.load %arg4[%c1_239, %c0_240, %c0_241] : memref<3x512x448xbf16, #tpu.memory_space<vmem>>, vector<1x512x448xbf16>
    %304 = vector.shape_cast %303 : vector<1x512x448xbf16> to vector<512x448xbf16>
    %cst_242 = arith.constant dense<0.000000e+00> : vector<2x448xf32>
    %305 = tpu.matmul %302, %304, %cst_242 {dimension_numbers = #tpu.dot_dimension_numbers<[1], [0], [0], [1], [0, 0, 1, 1], [], []>} : vector<2x512xbf16>, vector<512x448xbf16>, vector<2x448xf32> -> vector<2x448xf32>
    %306 = arith.addf %300, %305 : vector<2x448xf32>
    %c6_243 = arith.constant 6 : index
    %c0_244 = arith.constant 0 : index
    %c0_245 = arith.constant 0 : index
    %307 = vector.load %arg9[%c6_243, %c0_244, %c0_245] : memref<15x2x512xbf16, #tpu.memory_space<vmem>>, vector<1x2x512xbf16>
    %308 = vector.shape_cast %307 : vector<1x2x512xbf16> to vector<2x512xbf16>
    %c2_246 = arith.constant 2 : index
    %c0_247 = arith.constant 0 : index
    %c0_248 = arith.constant 0 : index
    %309 = vector.load %arg4[%c2_246, %c0_247, %c0_248] : memref<3x512x448xbf16, #tpu.memory_space<vmem>>, vector<1x512x448xbf16>
    %310 = vector.shape_cast %309 : vector<1x512x448xbf16> to vector<512x448xbf16>
    %cst_249 = arith.constant dense<0.000000e+00> : vector<2x448xf32>
    %311 = tpu.matmul %308, %310, %cst_249 {dimension_numbers = #tpu.dot_dimension_numbers<[1], [0], [0], [1], [0, 0, 1, 1], [], []>} : vector<2x512xbf16>, vector<512x448xbf16>, vector<2x448xf32> -> vector<2x448xf32>
    %312 = arith.addf %306, %311 : vector<2x448xf32>
    %313 = vector.broadcast %244 : vector<1x448xf32> to vector<2x448xf32>
    %314 = arith.addf %312, %313 : vector<2x448xf32>
    %cst_250 = arith.constant 0.000000e+00 : f32
    %315 = vector.broadcast %cst_250 : f32 to vector<2x448xf32>
    %316 = arith.maximumf %314, %315 : vector<2x448xf32>
    %c2_251 = arith.constant 2 : index
    %c0_252 = arith.constant 0 : index
    %c0_253 = arith.constant 0 : index
    %317 = vector.load %arg6[%c2_251, %c0_252, %c0_253] : memref<7x448x32xf32, #tpu.memory_space<vmem>>, vector<1x448x32xf32>
    %318 = vector.shape_cast %317 : vector<1x448x32xf32> to vector<448x32xf32>
    %cst_254 = arith.constant dense<0.000000e+00> : vector<2x32xf32>
    %319 = tpu.matmul %316, %318, %cst_254 {dimension_numbers = #tpu.dot_dimension_numbers<[1], [0], [0], [1], [0, 0, 1, 1], [], []>} : vector<2x448xf32>, vector<448x32xf32>, vector<2x32xf32> -> vector<2x32xf32>
    %320 = arith.addf %295, %319 : vector<2x32xf32>
    %c6_255 = arith.constant 6 : index
    %c0_256 = arith.constant 0 : index
    %c0_257 = arith.constant 0 : index
    %321 = vector.load %arg9[%c6_255, %c0_256, %c0_257] : memref<15x2x512xbf16, #tpu.memory_space<vmem>>, vector<1x2x512xbf16>
    %322 = vector.shape_cast %321 : vector<1x2x512xbf16> to vector<2x512xbf16>
    %c0_258 = arith.constant 0 : index
    %c0_259 = arith.constant 0 : index
    %c0_260 = arith.constant 0 : index
    %323 = vector.load %arg4[%c0_258, %c0_259, %c0_260] : memref<3x512x448xbf16, #tpu.memory_space<vmem>>, vector<1x512x448xbf16>
    %324 = vector.shape_cast %323 : vector<1x512x448xbf16> to vector<512x448xbf16>
    %cst_261 = arith.constant dense<0.000000e+00> : vector<2x448xf32>
    %325 = tpu.matmul %322, %324, %cst_261 {dimension_numbers = #tpu.dot_dimension_numbers<[1], [0], [0], [1], [0, 0, 1, 1], [], []>} : vector<2x512xbf16>, vector<512x448xbf16>, vector<2x448xf32> -> vector<2x448xf32>
    %c7_262 = arith.constant 7 : index
    %c0_263 = arith.constant 0 : index
    %c0_264 = arith.constant 0 : index
    %326 = vector.load %arg9[%c7_262, %c0_263, %c0_264] : memref<15x2x512xbf16, #tpu.memory_space<vmem>>, vector<1x2x512xbf16>
    %327 = vector.shape_cast %326 : vector<1x2x512xbf16> to vector<2x512xbf16>
    %c1_265 = arith.constant 1 : index
    %c0_266 = arith.constant 0 : index
    %c0_267 = arith.constant 0 : index
    %328 = vector.load %arg4[%c1_265, %c0_266, %c0_267] : memref<3x512x448xbf16, #tpu.memory_space<vmem>>, vector<1x512x448xbf16>
    %329 = vector.shape_cast %328 : vector<1x512x448xbf16> to vector<512x448xbf16>
    %cst_268 = arith.constant dense<0.000000e+00> : vector<2x448xf32>
    %330 = tpu.matmul %327, %329, %cst_268 {dimension_numbers = #tpu.dot_dimension_numbers<[1], [0], [0], [1], [0, 0, 1, 1], [], []>} : vector<2x512xbf16>, vector<512x448xbf16>, vector<2x448xf32> -> vector<2x448xf32>
    %331 = arith.addf %325, %330 : vector<2x448xf32>
    %c8_269 = arith.constant 8 : index
    %c0_270 = arith.constant 0 : index
    %c0_271 = arith.constant 0 : index
    %332 = vector.load %arg9[%c8_269, %c0_270, %c0_271] : memref<15x2x512xbf16, #tpu.memory_space<vmem>>, vector<1x2x512xbf16>
    %333 = vector.shape_cast %332 : vector<1x2x512xbf16> to vector<2x512xbf16>
    %c2_272 = arith.constant 2 : index
    %c0_273 = arith.constant 0 : index
    %c0_274 = arith.constant 0 : index
    %334 = vector.load %arg4[%c2_272, %c0_273, %c0_274] : memref<3x512x448xbf16, #tpu.memory_space<vmem>>, vector<1x512x448xbf16>
    %335 = vector.shape_cast %334 : vector<1x512x448xbf16> to vector<512x448xbf16>
    %cst_275 = arith.constant dense<0.000000e+00> : vector<2x448xf32>
    %336 = tpu.matmul %333, %335, %cst_275 {dimension_numbers = #tpu.dot_dimension_numbers<[1], [0], [0], [1], [0, 0, 1, 1], [], []>} : vector<2x512xbf16>, vector<512x448xbf16>, vector<2x448xf32> -> vector<2x448xf32>
    %337 = arith.addf %331, %336 : vector<2x448xf32>
    %338 = vector.broadcast %244 : vector<1x448xf32> to vector<2x448xf32>
    %339 = arith.addf %337, %338 : vector<2x448xf32>
    %cst_276 = arith.constant 0.000000e+00 : f32
    %340 = vector.broadcast %cst_276 : f32 to vector<2x448xf32>
    %341 = arith.maximumf %339, %340 : vector<2x448xf32>
    %c3_277 = arith.constant 3 : index
    %c0_278 = arith.constant 0 : index
    %c0_279 = arith.constant 0 : index
    %342 = vector.load %arg6[%c3_277, %c0_278, %c0_279] : memref<7x448x32xf32, #tpu.memory_space<vmem>>, vector<1x448x32xf32>
    %343 = vector.shape_cast %342 : vector<1x448x32xf32> to vector<448x32xf32>
    %cst_280 = arith.constant dense<0.000000e+00> : vector<2x32xf32>
    %344 = tpu.matmul %341, %343, %cst_280 {dimension_numbers = #tpu.dot_dimension_numbers<[1], [0], [0], [1], [0, 0, 1, 1], [], []>} : vector<2x448xf32>, vector<448x32xf32>, vector<2x32xf32> -> vector<2x32xf32>
    %345 = arith.addf %320, %344 : vector<2x32xf32>
    %c8_281 = arith.constant 8 : index
    %c0_282 = arith.constant 0 : index
    %c0_283 = arith.constant 0 : index
    %346 = vector.load %arg9[%c8_281, %c0_282, %c0_283] : memref<15x2x512xbf16, #tpu.memory_space<vmem>>, vector<1x2x512xbf16>
    %347 = vector.shape_cast %346 : vector<1x2x512xbf16> to vector<2x512xbf16>
    %c0_284 = arith.constant 0 : index
    %c0_285 = arith.constant 0 : index
    %c0_286 = arith.constant 0 : index
    %348 = vector.load %arg4[%c0_284, %c0_285, %c0_286] : memref<3x512x448xbf16, #tpu.memory_space<vmem>>, vector<1x512x448xbf16>
    %349 = vector.shape_cast %348 : vector<1x512x448xbf16> to vector<512x448xbf16>
    %cst_287 = arith.constant dense<0.000000e+00> : vector<2x448xf32>
    %350 = tpu.matmul %347, %349, %cst_287 {dimension_numbers = #tpu.dot_dimension_numbers<[1], [0], [0], [1], [0, 0, 1, 1], [], []>} : vector<2x512xbf16>, vector<512x448xbf16>, vector<2x448xf32> -> vector<2x448xf32>
    %c9_288 = arith.constant 9 : index
    %c0_289 = arith.constant 0 : index
    %c0_290 = arith.constant 0 : index
    %351 = vector.load %arg9[%c9_288, %c0_289, %c0_290] : memref<15x2x512xbf16, #tpu.memory_space<vmem>>, vector<1x2x512xbf16>
    %352 = vector.shape_cast %351 : vector<1x2x512xbf16> to vector<2x512xbf16>
    %c1_291 = arith.constant 1 : index
    %c0_292 = arith.constant 0 : index
    %c0_293 = arith.constant 0 : index
    %353 = vector.load %arg4[%c1_291, %c0_292, %c0_293] : memref<3x512x448xbf16, #tpu.memory_space<vmem>>, vector<1x512x448xbf16>
    %354 = vector.shape_cast %353 : vector<1x512x448xbf16> to vector<512x448xbf16>
    %cst_294 = arith.constant dense<0.000000e+00> : vector<2x448xf32>
    %355 = tpu.matmul %352, %354, %cst_294 {dimension_numbers = #tpu.dot_dimension_numbers<[1], [0], [0], [1], [0, 0, 1, 1], [], []>} : vector<2x512xbf16>, vector<512x448xbf16>, vector<2x448xf32> -> vector<2x448xf32>
    %356 = arith.addf %350, %355 : vector<2x448xf32>
    %c10_295 = arith.constant 10 : index
    %c0_296 = arith.constant 0 : index
    %c0_297 = arith.constant 0 : index
    %357 = vector.load %arg9[%c10_295, %c0_296, %c0_297] : memref<15x2x512xbf16, #tpu.memory_space<vmem>>, vector<1x2x512xbf16>
    %358 = vector.shape_cast %357 : vector<1x2x512xbf16> to vector<2x512xbf16>
    %c2_298 = arith.constant 2 : index
    %c0_299 = arith.constant 0 : index
    %c0_300 = arith.constant 0 : index
    %359 = vector.load %arg4[%c2_298, %c0_299, %c0_300] : memref<3x512x448xbf16, #tpu.memory_space<vmem>>, vector<1x512x448xbf16>
    %360 = vector.shape_cast %359 : vector<1x512x448xbf16> to vector<512x448xbf16>
    %cst_301 = arith.constant dense<0.000000e+00> : vector<2x448xf32>
    %361 = tpu.matmul %358, %360, %cst_301 {dimension_numbers = #tpu.dot_dimension_numbers<[1], [0], [0], [1], [0, 0, 1, 1], [], []>} : vector<2x512xbf16>, vector<512x448xbf16>, vector<2x448xf32> -> vector<2x448xf32>
    %362 = arith.addf %356, %361 : vector<2x448xf32>
    %363 = vector.broadcast %244 : vector<1x448xf32> to vector<2x448xf32>
    %364 = arith.addf %362, %363 : vector<2x448xf32>
    %cst_302 = arith.constant 0.000000e+00 : f32
    %365 = vector.broadcast %cst_302 : f32 to vector<2x448xf32>
    %366 = arith.maximumf %364, %365 : vector<2x448xf32>
    %c4_303 = arith.constant 4 : index
    %c0_304 = arith.constant 0 : index
    %c0_305 = arith.constant 0 : index
    %367 = vector.load %arg6[%c4_303, %c0_304, %c0_305] : memref<7x448x32xf32, #tpu.memory_space<vmem>>, vector<1x448x32xf32>
    %368 = vector.shape_cast %367 : vector<1x448x32xf32> to vector<448x32xf32>
    %cst_306 = arith.constant dense<0.000000e+00> : vector<2x32xf32>
    %369 = tpu.matmul %366, %368, %cst_306 {dimension_numbers = #tpu.dot_dimension_numbers<[1], [0], [0], [1], [0, 0, 1, 1], [], []>} : vector<2x448xf32>, vector<448x32xf32>, vector<2x32xf32> -> vector<2x32xf32>
    %370 = arith.addf %345, %369 : vector<2x32xf32>
    %c10_307 = arith.constant 10 : index
    %c0_308 = arith.constant 0 : index
    %c0_309 = arith.constant 0 : index
    %371 = vector.load %arg9[%c10_307, %c0_308, %c0_309] : memref<15x2x512xbf16, #tpu.memory_space<vmem>>, vector<1x2x512xbf16>
    %372 = vector.shape_cast %371 : vector<1x2x512xbf16> to vector<2x512xbf16>
    %c0_310 = arith.constant 0 : index
    %c0_311 = arith.constant 0 : index
    %c0_312 = arith.constant 0 : index
    %373 = vector.load %arg4[%c0_310, %c0_311, %c0_312] : memref<3x512x448xbf16, #tpu.memory_space<vmem>>, vector<1x512x448xbf16>
    %374 = vector.shape_cast %373 : vector<1x512x448xbf16> to vector<512x448xbf16>
    %cst_313 = arith.constant dense<0.000000e+00> : vector<2x448xf32>
    %375 = tpu.matmul %372, %374, %cst_313 {dimension_numbers = #tpu.dot_dimension_numbers<[1], [0], [0], [1], [0, 0, 1, 1], [], []>} : vector<2x512xbf16>, vector<512x448xbf16>, vector<2x448xf32> -> vector<2x448xf32>
    %c11_314 = arith.constant 11 : index
    %c0_315 = arith.constant 0 : index
    %c0_316 = arith.constant 0 : index
    %376 = vector.load %arg9[%c11_314, %c0_315, %c0_316] : memref<15x2x512xbf16, #tpu.memory_space<vmem>>, vector<1x2x512xbf16>
    %377 = vector.shape_cast %376 : vector<1x2x512xbf16> to vector<2x512xbf16>
    %c1_317 = arith.constant 1 : index
    %c0_318 = arith.constant 0 : index
    %c0_319 = arith.constant 0 : index
    %378 = vector.load %arg4[%c1_317, %c0_318, %c0_319] : memref<3x512x448xbf16, #tpu.memory_space<vmem>>, vector<1x512x448xbf16>
    %379 = vector.shape_cast %378 : vector<1x512x448xbf16> to vector<512x448xbf16>
    %cst_320 = arith.constant dense<0.000000e+00> : vector<2x448xf32>
    %380 = tpu.matmul %377, %379, %cst_320 {dimension_numbers = #tpu.dot_dimension_numbers<[1], [0], [0], [1], [0, 0, 1, 1], [], []>} : vector<2x512xbf16>, vector<512x448xbf16>, vector<2x448xf32> -> vector<2x448xf32>
    %381 = arith.addf %375, %380 : vector<2x448xf32>
    %c12_321 = arith.constant 12 : index
    %c0_322 = arith.constant 0 : index
    %c0_323 = arith.constant 0 : index
    %382 = vector.load %arg9[%c12_321, %c0_322, %c0_323] : memref<15x2x512xbf16, #tpu.memory_space<vmem>>, vector<1x2x512xbf16>
    %383 = vector.shape_cast %382 : vector<1x2x512xbf16> to vector<2x512xbf16>
    %c2_324 = arith.constant 2 : index
    %c0_325 = arith.constant 0 : index
    %c0_326 = arith.constant 0 : index
    %384 = vector.load %arg4[%c2_324, %c0_325, %c0_326] : memref<3x512x448xbf16, #tpu.memory_space<vmem>>, vector<1x512x448xbf16>
    %385 = vector.shape_cast %384 : vector<1x512x448xbf16> to vector<512x448xbf16>
    %cst_327 = arith.constant dense<0.000000e+00> : vector<2x448xf32>
    %386 = tpu.matmul %383, %385, %cst_327 {dimension_numbers = #tpu.dot_dimension_numbers<[1], [0], [0], [1], [0, 0, 1, 1], [], []>} : vector<2x512xbf16>, vector<512x448xbf16>, vector<2x448xf32> -> vector<2x448xf32>
    %387 = arith.addf %381, %386 : vector<2x448xf32>
    %388 = vector.broadcast %244 : vector<1x448xf32> to vector<2x448xf32>
    %389 = arith.addf %387, %388 : vector<2x448xf32>
    %cst_328 = arith.constant 0.000000e+00 : f32
    %390 = vector.broadcast %cst_328 : f32 to vector<2x448xf32>
    %391 = arith.maximumf %389, %390 : vector<2x448xf32>
    %c5_329 = arith.constant 5 : index
    %c0_330 = arith.constant 0 : index
    %c0_331 = arith.constant 0 : index
    %392 = vector.load %arg6[%c5_329, %c0_330, %c0_331] : memref<7x448x32xf32, #tpu.memory_space<vmem>>, vector<1x448x32xf32>
    %393 = vector.shape_cast %392 : vector<1x448x32xf32> to vector<448x32xf32>
    %cst_332 = arith.constant dense<0.000000e+00> : vector<2x32xf32>
    %394 = tpu.matmul %391, %393, %cst_332 {dimension_numbers = #tpu.dot_dimension_numbers<[1], [0], [0], [1], [0, 0, 1, 1], [], []>} : vector<2x448xf32>, vector<448x32xf32>, vector<2x32xf32> -> vector<2x32xf32>
    %395 = arith.addf %370, %394 : vector<2x32xf32>
    %c12_333 = arith.constant 12 : index
    %c0_334 = arith.constant 0 : index
    %c0_335 = arith.constant 0 : index
    %396 = vector.load %arg9[%c12_333, %c0_334, %c0_335] : memref<15x2x512xbf16, #tpu.memory_space<vmem>>, vector<1x2x512xbf16>
    %397 = vector.shape_cast %396 : vector<1x2x512xbf16> to vector<2x512xbf16>
    %c0_336 = arith.constant 0 : index
    %c0_337 = arith.constant 0 : index
    %c0_338 = arith.constant 0 : index
    %398 = vector.load %arg4[%c0_336, %c0_337, %c0_338] : memref<3x512x448xbf16, #tpu.memory_space<vmem>>, vector<1x512x448xbf16>
    %399 = vector.shape_cast %398 : vector<1x512x448xbf16> to vector<512x448xbf16>
    %cst_339 = arith.constant dense<0.000000e+00> : vector<2x448xf32>
    %400 = tpu.matmul %397, %399, %cst_339 {dimension_numbers = #tpu.dot_dimension_numbers<[1], [0], [0], [1], [0, 0, 1, 1], [], []>} : vector<2x512xbf16>, vector<512x448xbf16>, vector<2x448xf32> -> vector<2x448xf32>
    %c13_340 = arith.constant 13 : index
    %c0_341 = arith.constant 0 : index
    %c0_342 = arith.constant 0 : index
    %401 = vector.load %arg9[%c13_340, %c0_341, %c0_342] : memref<15x2x512xbf16, #tpu.memory_space<vmem>>, vector<1x2x512xbf16>
    %402 = vector.shape_cast %401 : vector<1x2x512xbf16> to vector<2x512xbf16>
    %c1_343 = arith.constant 1 : index
    %c0_344 = arith.constant 0 : index
    %c0_345 = arith.constant 0 : index
    %403 = vector.load %arg4[%c1_343, %c0_344, %c0_345] : memref<3x512x448xbf16, #tpu.memory_space<vmem>>, vector<1x512x448xbf16>
    %404 = vector.shape_cast %403 : vector<1x512x448xbf16> to vector<512x448xbf16>
    %cst_346 = arith.constant dense<0.000000e+00> : vector<2x448xf32>
    %405 = tpu.matmul %402, %404, %cst_346 {dimension_numbers = #tpu.dot_dimension_numbers<[1], [0], [0], [1], [0, 0, 1, 1], [], []>} : vector<2x512xbf16>, vector<512x448xbf16>, vector<2x448xf32> -> vector<2x448xf32>
    %406 = arith.addf %400, %405 : vector<2x448xf32>
    %c14_347 = arith.constant 14 : index
    %c0_348 = arith.constant 0 : index
    %c0_349 = arith.constant 0 : index
    %407 = vector.load %arg9[%c14_347, %c0_348, %c0_349] : memref<15x2x512xbf16, #tpu.memory_space<vmem>>, vector<1x2x512xbf16>
    %408 = vector.shape_cast %407 : vector<1x2x512xbf16> to vector<2x512xbf16>
    %c2_350 = arith.constant 2 : index
    %c0_351 = arith.constant 0 : index
    %c0_352 = arith.constant 0 : index
    %409 = vector.load %arg4[%c2_350, %c0_351, %c0_352] : memref<3x512x448xbf16, #tpu.memory_space<vmem>>, vector<1x512x448xbf16>
    %410 = vector.shape_cast %409 : vector<1x512x448xbf16> to vector<512x448xbf16>
    %cst_353 = arith.constant dense<0.000000e+00> : vector<2x448xf32>
    %411 = tpu.matmul %408, %410, %cst_353 {dimension_numbers = #tpu.dot_dimension_numbers<[1], [0], [0], [1], [0, 0, 1, 1], [], []>} : vector<2x512xbf16>, vector<512x448xbf16>, vector<2x448xf32> -> vector<2x448xf32>
    %412 = arith.addf %406, %411 : vector<2x448xf32>
    %413 = vector.broadcast %244 : vector<1x448xf32> to vector<2x448xf32>
    %414 = arith.addf %412, %413 : vector<2x448xf32>
    %cst_354 = arith.constant 0.000000e+00 : f32
    %415 = vector.broadcast %cst_354 : f32 to vector<2x448xf32>
    %416 = arith.maximumf %414, %415 : vector<2x448xf32>
    %c6_355 = arith.constant 6 : index
    %c0_356 = arith.constant 0 : index
    %c0_357 = arith.constant 0 : index
    %417 = vector.load %arg6[%c6_355, %c0_356, %c0_357] : memref<7x448x32xf32, #tpu.memory_space<vmem>>, vector<1x448x32xf32>
    %418 = vector.shape_cast %417 : vector<1x448x32xf32> to vector<448x32xf32>
    %cst_358 = arith.constant dense<0.000000e+00> : vector<2x32xf32>
    %419 = tpu.matmul %416, %418, %cst_358 {dimension_numbers = #tpu.dot_dimension_numbers<[1], [0], [0], [1], [0, 0, 1, 1], [], []>} : vector<2x448xf32>, vector<448x32xf32>, vector<2x32xf32> -> vector<2x32xf32>
    %420 = arith.addf %395, %419 : vector<2x32xf32>
    %c0_359 = arith.constant 0 : index
    %c0_360 = arith.constant 0 : index
    %421 = vector.load %arg7[%c0_359, %c0_360] : memref<1x32xf32, #tpu.memory_space<vmem>>, vector<1x32xf32>
    %422 = vector.broadcast %421 : vector<1x32xf32> to vector<2x32xf32>
    %423 = arith.addf %420, %422 : vector<2x32xf32>
    %c0_361 = arith.constant 0 : index
    %c0_362 = arith.constant 0 : index
    %424 = vector.load %arg8[%c0_361, %c0_362] : memref<2x32xf32, #tpu.memory_space<vmem>>, vector<2x32xf32>
    tpu.vector_store %arg8[%c0_361, %c0_362], %423 {strides = array<i32>} : memref<2x32xf32, #tpu.memory_space<vmem>>, vector<2x32xf32>,
    return
  }
  func.func @transform_0(%arg0: i32) -> (i32, i32, i32) {
    %c0_i32 = arith.constant 0 : i32
    %c0_i32_0 = arith.constant 0 : i32
    %c0_i32_1 = arith.constant 0 : i32
    return %c0_i32, %arg0, %c0_i32_0 : i32, i32, i32
  }
  func.func @transform_1(%arg0: i32) -> (i32, i32) {
    %c0_i32 = arith.constant 0 : i32
    %c0_i32_0 = arith.constant 0 : i32
    %c0_i32_1 = arith.constant 0 : i32
    return %c0_i32, %c0_i32_0 : i32, i32
  }
  func.func @transform_2(%arg0: i32) -> (i32, i32) {
    %c0_i32 = arith.constant 0 : i32
    %c0_i32_0 = arith.constant 0 : i32
    %c0_i32_1 = arith.constant 0 : i32
    return %c0_i32, %c0_i32_0 : i32, i32
  }
  func.func @transform_3(%arg0: i32) -> (i32, i32, i32) {
    %c0_i32 = arith.constant 0 : i32
    %c0_i32_0 = arith.constant 0 : i32
    %c0_i32_1 = arith.constant 0 : i32
    %c0_i32_2 = arith.constant 0 : i32
    return %c0_i32, %c0_i32_0, %c0_i32_1 : i32, i32, i32
  }
  func.func @transform_4(%arg0: i32) -> (i32, i32) {
    %c0_i32 = arith.constant 0 : i32
    %c0_i32_0 = arith.constant 0 : i32
    %c0_i32_1 = arith.constant 0 : i32
    return %c0_i32, %c0_i32_0 : i32, i32
  }
  func.func @transform_5(%arg0: i32) -> (i32, i32, i32) {
    %c0_i32 = arith.constant 0 : i32
    %c0_i32_0 = arith.constant 0 : i32
    %c0_i32_1 = arith.constant 0 : i32
    %c0_i32_2 = arith.constant 0 : i32
    return %c0_i32, %c0_i32_0, %c0_i32_1 : i32, i32, i32
  }
  func.func @transform_6(%arg0: i32) -> (i32, i32) {
    %c0_i32 = arith.constant 0 : i32
    %c0_i32_0 = arith.constant 0 : i32
    %c0_i32_1 = arith.constant 0 : i32
    return %c0_i32, %c0_i32_0 : i32, i32
  }
  func.func @transform_7(%arg0: i32) -> (i32, i32) {
    %c0_i32 = arith.constant 0 : i32
    %c0_i32_0 = arith.constant 0 : i32
    return %arg0, %c0_i32 : i32, i32
  }
}

</mosaic_0001>

<llo_original>
// kernel: encoder_forward.1
$region0: #{encoder_forward.1}
  #allocation0 [shape = 'u32[]', space=smem, size = 0x4, offset = 0x4, fixed_abs, tag = 'smem constant byte address 0x4 - core index']
  #allocation1 [shape = 'u32[144,128]{1,0:T(1,128)}', space=vmem, size = 0x12000, scoped, tag = 'internal scratch']
  #allocation2 [shape = 'bf16[15,2,512]{2,1,0:T(2,128)(2,1)}', space=vmem, size = 0x7800, scoped, tag = 'scratch operand']
  %s0 = inlined_call_operand.vmem [shape: f32[30,2,30], index: 0, kind: input, shape index: {}]
  %s1 = inlined_call_operand.vmem [shape: bf16[90,512], index: 1, kind: input, shape index: {}]
  %s2 = inlined_call_operand.vmem [shape: f32[1,512], index: 2, kind: input, shape index: {}]
  %s3 = inlined_call_operand.vmem [shape: bf16[3,512,448], index: 3, kind: input, shape index: {}]
  %s4 = inlined_call_operand.vmem [shape: f32[1,448], index: 4, kind: input, shape index: {}]
  %s5 = inlined_call_operand.vmem [shape: f32[7,448,32], index: 5, kind: input, shape index: {}]
  %s6 = inlined_call_operand.vmem [shape: f32[1,32], index: 6, kind: input, shape index: {}]
  %s7 = inlined_call_operand.hbm [shape: f32[2,32], index: 7, kind: output, shape index: {}]
  %s8 = sld [smem:[#allocation0]]
  $region38: #{encoder_forward.1} parent=0
    _
  %s10 = ssub.s32 1, %s8
  %s11 = scalar_select 0, %s10, %s8
  $region1: #{encoder_forward.1} parent=0
    #allocation3 [shape = 'u8[1024]{0}', space=vmem, size = 0x400, scoped, tag = 'output window, operand 0, single buffered']
    #allocation4 [shape = 's32[1]{0}', space=sflag, size = 0x4, scoped, tag = 'scoped memory for encoder_forward.1']
    %12 = vsyncpa [#allocation4], 0
    // Predicated region
    $region2: #{encoder_forward.1} parent=1 // pred_check
      _
    $region3: #{encoder_forward.1} parent=1 // pred_check_branch
      %14 = sbr.rel (0) target = $region5
    $region4: #{encoder_forward.1} parent=1 // pred_region
      _
    $region5: #{encoder_forward.1} parent=1 // pred_fallthru
      _
    // Predicated region
    $region6: #{encoder_forward.1} parent=1 // pred_check
      _
    $region7: #{encoder_forward.1} parent=1 // pred_check_branch
      %16 = sbr.rel (0) target = $region9
    $region8: #{encoder_forward.1} parent=1 // pred_region
      _
    $region9: #{encoder_forward.1} parent=1 // pred_fallthru
      _
    // Predicated region
    $region10: #{encoder_forward.1} parent=1 // pred_check
      _
    $region11: #{encoder_forward.1} parent=1 // pred_check_branch
      %18 = sbr.rel (0) target = $region13
    $region12: #{encoder_forward.1} parent=1 // pred_region
      _
    $region13: #{encoder_forward.1} parent=1 // pred_fallthru
      _
    // Predicated region
    $region14: #{encoder_forward.1} parent=1 // pred_check
      _
    $region15: #{encoder_forward.1} parent=1 // pred_check_branch
      %20 = sbr.rel (0) target = $region17
    $region16: #{encoder_forward.1} parent=1 // pred_region
      _
    $region17: #{encoder_forward.1} parent=1 // pred_fallthru
      _
    // Predicated region
    $region18: #{encoder_forward.1} parent=1 // pred_check
      _
    $region19: #{encoder_forward.1} parent=1 // pred_check_branch
      %22 = sbr.rel (0) target = $region21
    $region20: #{encoder_forward.1} parent=1 // pred_region
      _
    $region21: #{encoder_forward.1} parent=1 // pred_fallthru
      _
    // Predicated region
    $region22: #{encoder_forward.1} parent=1 // pred_check
      _
    $region23: #{encoder_forward.1} parent=1 // pred_check_branch
      %24 = sbr.rel (0) target = $region25
    $region24: #{encoder_forward.1} parent=1 // pred_region
      _
    $region25: #{encoder_forward.1} parent=1 // pred_fallthru
      _
    // Predicated region
    $region26: #{encoder_forward.1} parent=1 // pred_check
      _
    $region27: #{encoder_forward.1} parent=1 // pred_check_branch
      %26 = sbr.rel (0) target = $region29
    $region28: #{encoder_forward.1} parent=1 // pred_region
      _
    $region29: #{encoder_forward.1} parent=1 // pred_fallthru
      _
    %v28 = vld [vmem:[%s1] sm:$0xff]
    %v29 = vld [vmem:[%s1 + $0x8] sm:$0xff]
    %v30 = vld [vmem:[%s1 + $0x10] sm:$0xff]
    %v31 = vld [vmem:[%s1 + $0x18] sm:$0xff]
    %v32 = vld [vmem:[%s1 + $0x20] sm:$0xff]
    %v33 = vld [vmem:[%s1 + $0x28] sm:$0xff]
    %v34 = vld [vmem:[%s1 + $0x30] sm:$0xff]
    %v35 = vld [vmem:[%s1 + $0x38] sm:$0xff]
    %v36 = vld [vmem:[%s1 + $0x40] sm:$0xff]
    %v37 = vld [vmem:[%s1 + $0x48] sm:$0xff]
    %v38 = vld [vmem:[%s1 + $0x50] sm:$0xff]
    %v39 = vld [vmem:[%s1 + $0x58] sm:$0xff]
    %v40 = vld [vmem:[%s1 + $0x60] sm:$0xff]
    %v41 = vld [vmem:[%s1 + $0x68] sm:$0xff]
    %v42 = vld [vmem:[%s1 + $0x70] sm:$0xff]
    %v43 = vld [vmem:[%s1 + $0x78] sm:$0xff]
    %v44 = vld [vmem:[%s1 + $0x80] sm:$0xff]
    %v45 = vld [vmem:[%s1 + $0x88] sm:$0xff]
    %v46 = vld [vmem:[%s1 + $0x90] sm:$0xff]
    %v47 = vld [vmem:[%s1 + $0x98] sm:$0xff]
    %v48 = vld [vmem:[%s1 + $0xa0] sm:$0xff]
    %v49 = vld [vmem:[%s1 + $0xa8] sm:$0xff]
    %v50 = vld [vmem:[%s1 + $0xb0] sm:$0x11]
    %v51 = vld [vmem:[%s1 + $0xb8] sm:$0x11]
    %v52 = vld [vmem:[%s2] sm:$0xf]
    %53 = vst [vmem:[#allocation2] sm:$0xf] 0
    %v54 = vld [vmem:[%s0] sm:$0x3]
    %s55 = scalar_lea.vmem %s0, 2
    %v56 = vld [vmem:[%s55] sm:$0x3]
    %s57 = scalar_lea.vmem %s0, 4
    %v58 = vld [vmem:[%s57] sm:$0x3]
    %60 = vrot.lane.b32.xlu0 %v56, 30
    %v61 = vpop.permute.xlu0 %60
    %64 = vrot.lane.b32.xlu0 %v58, 60
    %v65 = vpop.permute.xlu0 %64
    %vm67 = vcmask 244736
    %v68 = vsel %vm67, %v54, %v61
    %vm69 = vcmask 490496
    %v70 = vsel %vm69, %v68, %v65
    %v71 = vpack.c.bf16 %v70, %v70
    %v73 = vlaneseq
    %v74 = vshrl.u32 %v73, 7
    %v75 = vsub.s32 0, %v74
    %v76 = vrot.slane %v52, %v75
    %v77 = vlaneseq
    %v78 = vshrl.u32 %v77, 7
    %v79 = vsub.s32 1, %v78
    %v80 = vrot.slane %v52, %v79
    %v81 = vlaneseq
    %v82 = vshrl.u32 %v81, 7
    %v83 = vsub.s32 2, %v82
    %v84 = vrot.slane %v52, %v83
    %v85 = vlaneseq
    %v86 = vshrl.u32 %v85, 7
    %v87 = vsub.s32 3, %v86
    %v88 = vrot.slane %v52, %v87
    %v117 = vunpack.c.l.b16 %v28
    %v118 = vunpack.c.h.b16 %v28
    %v119 = vunpack.c.l.b16 %v29
    %v120 = vunpack.c.h.b16 %v29
    %v121 = vunpack.c.l.b16 %v30
    %v122 = vunpack.c.h.b16 %v30
    %v123 = vunpack.c.l.b16 %v31
    %v124 = vunpack.c.h.b16 %v31
    %v125 = vunpack.c.l.b16 %v32
    %v126 = vunpack.c.h.b16 %v32
    %v127 = vunpack.c.l.b16 %v33
    %v128 = vunpack.c.h.b16 %v33
    %v129 = vunpack.c.l.b16 %v34
    %v130 = vunpack.c.h.b16 %v34
    %v131 = vunpack.c.l.b16 %v35
    %v132 = vunpack.c.h.b16 %v35
    %v133 = vunpack.c.l.b16 %v36
    %v134 = vunpack.c.h.b16 %v36
    %v135 = vunpack.c.l.b16 %v37
    %v136 = vunpack.c.h.b16 %v37
    %v137 = vunpack.c.l.b16 %v38
    %v138 = vunpack.c.h.b16 %v38
    %v139 = vunpack.c.l.b16 %v39
    %v140 = vunpack.c.h.b16 %v39
    %v141 = vunpack.c.l.b16 %v40
    %v142 = vunpack.c.h.b16 %v40
    %v143 = vunpack.c.l.b16 %v41
    %v144 = vunpack.c.h.b16 %v41
    %v145 = vunpack.c.l.b16 %v42
    %v146 = vunpack.c.h.b16 %v42
    %v147 = vunpack.c.l.b16 %v43
    %v148 = vunpack.c.h.b16 %v43
    %v149 = vunpack.c.l.b16 %v44
    %v150 = vunpack.c.h.b16 %v44
    %v151 = vunpack.c.l.b16 %v45
    %v152 = vunpack.c.h.b16 %v45
    %v153 = vunpack.c.l.b16 %v46
    %v154 = vunpack.c.h.b16 %v46
    %v155 = vunpack.c.l.b16 %v47
    %v156 = vunpack.c.h.b16 %v47
    %v157 = vunpack.c.l.b16 %v48
    %v158 = vunpack.c.h.b16 %v48
    %v159 = vunpack.c.l.b16 %v49
    %v160 = vunpack.c.h.b16 %v49
    %v161 = vunpack.c.l.b16 %v50
    %v162 = vunpack.c.h.b16 %v50
    %v163 = vunpack.c.l.b16 %v51
    %v164 = vunpack.c.h.b16 %v51
    %v165 = vpack.c.b16 %v121, %v117
    %v166 = vpack.c.b16 %v122, %v118
    %v167 = vpack.c.b16 %v123, %v119
    %v168 = vpack.c.b16 %v124, %v120
    %v169 = vpack.c.b16 %v129, %v125
    %v170 = vpack.c.b16 %v130, %v126
    %v171 = vpack.c.b16 %v131, %v127
    %v172 = vpack.c.b16 %v132, %v128
    %v173 = vpack.c.b16 %v137, %v133
    %v174 = vpack.c.b16 %v138, %v134
    %v175 = vpack.c.b16 %v139, %v135
    %v176 = vpack.c.b16 %v140, %v136
    %v177 = vpack.c.b16 %v145, %v141
    %v178 = vpack.c.b16 %v146, %v142
    %v179 = vpack.c.b16 %v147, %v143
    %v180 = vpack.c.b16 %v148, %v144
    %v181 = vpack.c.b16 %v153, %v149
    %v182 = vpack.c.b16 %v154, %v150
    %v183 = vpack.c.b16 %v155, %v151
    %v184 = vpack.c.b16 %v156, %v152
    %v185 = vpack.c.b16 %v161, %v157
    %v186 = vpack.c.b16 %v162, %v158
    %v187 = vpack.c.b16 %v163, %v159
    %v188 = vpack.c.b16 %v164, %v160
    %vm209 = vcmask 736256
    %v211 = vsel %vm209, %v71, 0
    %vm213 = vcmask 1044480
    %v215 = vsel %vm213, %v185, 0
    %v218 = vsel %vm213, %v186, 0
    %v221 = vsel %vm213, %v187, 0
    %v224 = vsel %vm213, %v188, 0
    %226 = vmatprep.subr.bf16.mxu0 0
    %227 = vmatpush1.bf16.msra.mxu0 0
    %228 = vmatprep.subr.bf16.mxu0 0
    %229 = vmatpush1.bf16.msra.mxu0 0
    %230 = vmatprep.subr.bf16.mxu0 %v218
    %231 = vmatpush1.bf16.msra.mxu0 %v215
    %232 = vmatprep.subr.bf16.mxu0 %v182
    %233 = vmatpush1.bf16.msra.mxu0 %v181
    %234 = vmatprep.subr.bf16.mxu0 %v178
    %235 = vmatpush1.bf16.msra.mxu0 %v177
    %236 = vmatprep.subr.bf16.mxu0 %v174
    %237 = vmatpush1.bf16.msra.mxu0 %v173
    %238 = vmatprep.subr.bf16.mxu0 %v170
    %239 = vmatpush1.bf16.msra.mxu0 %v169
    %240 = vmatprep.subr.bf16.mxu0 %v166
    %241 = vmatpush1.bf16.msra.mxu0 %v165
    %242 = vmatprep.subr.bf16.mxu0 0
    %243 = vmatpush2.bf16.msra.mxu0 0
    %244 = vmatprep.subr.bf16.mxu0 0
    %245 = vmatpush2.bf16.msra.mxu0 0
    %246 = vmatprep.subr.bf16.mxu0 0
    %247 = vmatpush2.bf16.msra.mxu0 0
    %248 = vmatprep.subr.bf16.mxu0 0
    %249 = vmatpush2.bf16.msra.mxu0 0
    %250 = vmatprep.subr.bf16.mxu0 0
    %251 = vmatpush2.bf16.msra.mxu0 0
    %252 = vmatprep.subr.bf16.mxu0 0
    %253 = vmatpush2.bf16.msra.mxu0 0
    %254 = vmatprep.subr.bf16.mxu0 0
    %255 = vmatpush2.bf16.msra.mxu0 0
    %256 = vmatprep.subr.bf16.mxu0 0
    %257 = vmatpush2.bf16.msra.mxu0 0
    %258 = vmatprep.mubr.bf16.mxu0 0
    %259 = vmatmul.mubr.bf16.gmra.mxu0 %v211
    %v260 = vpop.f32.mrf.mxu0
    %v261 = vadd.f32 %v76, %v260
    %v262 = vpop.f32.mrf.mxu0
    %v263 = vadd.f32 %v80, %v262
    %v264 = vpop.f32.mrf.mxu0
    %v265 = vpop.f32.mrf.mxu0
    %266 = vdwg.mxu0
    %267 = vmatprep.subr.bf16.mxu0 0
    %268 = vmatpush1.bf16.msra.mxu0 0
    %269 = vmatprep.subr.bf16.mxu0 0
    %270 = vmatpush1.bf16.msra.mxu0 0
    %271 = vmatprep.subr.bf16.mxu0 %v224
    %272 = vmatpush1.bf16.msra.mxu0 %v221
    %273 = vmatprep.subr.bf16.mxu0 %v184
    %274 = vmatpush1.bf16.msra.mxu0 %v183
    %275 = vmatprep.subr.bf16.mxu0 %v180
    %276 = vmatpush1.bf16.msra.mxu0 %v179
    %277 = vmatprep.subr.bf16.mxu0 %v176
    %278 = vmatpush1.bf16.msra.mxu0 %v175
    %279 = vmatprep.subr.bf16.mxu0 %v172
    %280 = vmatpush1.bf16.msra.mxu0 %v171
    %281 = vmatprep.subr.bf16.mxu0 %v168
    %282 = vmatpush1.bf16.msra.mxu0 %v167
    %283 = vmatprep.subr.bf16.mxu0 0
    %284 = vmatpush2.bf16.msra.mxu0 0
    %285 = vmatprep.subr.bf16.mxu0 0
    %286 = vmatpush2.bf16.msra.mxu0 0
    %287 = vmatprep.subr.bf16.mxu0 0
    %288 = vmatpush2.bf16.msra.mxu0 0
    %289 = vmatprep.subr.bf16.mxu0 0
    %290 = vmatpush2.bf16.msra.mxu0 0
    %291 = vmatprep.subr.bf16.mxu0 0
    %292 = vmatpush2.bf16.msra.mxu0 0
    %293 = vmatprep.subr.bf16.mxu0 0
    %294 = vmatpush2.bf16.msra.mxu0 0
    %295 = vmatprep.subr.bf16.mxu0 0
    %296 = vmatpush2.bf16.msra.mxu0 0
    %297 = vmatprep.subr.bf16.mxu0 0
    %298 = vmatpush2.bf16.msra.mxu0 0
    %299 = vmatprep.mubr.bf16.mxu0 0
    %300 = vmatmul.mubr.bf16.gmra.mxu0 %v211
    %v301 = vpop.f32.mrf.mxu0
    %v302 = vadd.f32 %v84, %v301
    %v303 = vpop.f32.mrf.mxu0
    %v304 = vadd.f32 %v88, %v303
    %v305 = vpop.f32.mrf.mxu0
    %v306 = vpop.f32.mrf.mxu0
    %307 = vdwg.mxu0
    %v308 = vmax.f32 %v261, 0.0
    %v309 = vmax.f32 %v263, 0.0
    %v310 = vmax.f32 %v302, 0.0
    %v311 = vmax.f32 %v304, 0.0
    %v312 = vpack.c.bf16 %v308, %v308
    %v313 = vpack.c.bf16 %v309, %v309
    %v314 = vpack.c.bf16 %v310, %v310
    %v315 = vpack.c.bf16 %v311, %v311
    %v320 = vcombine.low %v312, %v313
    %v321 = vcombine.low %v314, %v315
    %v323 = vunpack.c.l.s4 1966171168
    %v324 = vunpack.c.0.s8 %v323
    %v325 = vlaneseq
    %v326 = vshrl.u32 %v325, 7
    %v327 = vsub.s32 %v324, %v326
    %v328 = vrot.slane %v320, %v327
    %v330 = vunpack.c.l.s4 1966171168
    %v331 = vunpack.c.0.s8 %v330
    %v332 = vlaneseq
    %v333 = vshrl.u32 %v332, 7
    %v334 = vsub.s32 %v331, %v333
    %v335 = vrot.slane %v321, %v334
    %v336 = vcombine.low %v328, %v335
    %v338 = vunpack.c.l.s4 1966171168
    %v339 = vunpack.c.0.s8 %v338
    %v340 = vlaneseq
    %v341 = vshrl.u32 %v340, 7
    %v342 = vsub.s32 %v339, %v341
    %v343 = vrot.slane %v336, %v342
    %s345 = scalar_lea.vmem [#allocation2], 4
    %346 = vst [vmem:[%s345] sm:$0xf] %v343
    %v347 = vld [vmem:[%s57] sm:$0x3]
    %s348 = scalar_lea.vmem %s0, 6
    %v349 = vld [vmem:[%s348] sm:$0x3]
    %s350 = scalar_lea.vmem %s0, 8
    %v351 = vld [vmem:[%s350] sm:$0x3]
    %353 = vrot.lane.b32.xlu0 %v349, 30
    %v354 = vpop.permute.xlu0 %353
    %357 = vrot.lane.b32.xlu0 %v351, 60
    %v358 = vpop.permute.xlu0 %357
    %v360 = vsel %vm67, %v347, %v354
    %v361 = vsel %vm69, %v360, %v358
    %v362 = vpack.c.bf16 %v361, %v361
    %v364 = vsel %vm209, %v362, 0
    %366 = vmatprep.subr.bf16.mxu0 0
    %367 = vmatpush1.bf16.msra.mxu0 0
    %368 = vmatprep.subr.bf16.mxu0 0
    %369 = vmatpush1.bf16.msra.mxu0 0
    %370 = vmatprep.subr.bf16.mxu0 %v218
    %371 = vmatpush1.bf16.msra.mxu0 %v215
    %372 = vmatprep.subr.bf16.mxu0 %v182
    %373 = vmatpush1.bf16.msra.mxu0 %v181
    %374 = vmatprep.subr.bf16.mxu0 %v178
    %375 = vmatpush1.bf16.msra.mxu0 %v177
    %376 = vmatprep.subr.bf16.mxu0 %v174
    %377 = vmatpush1.bf16.msra.mxu0 %v173
    %378 = vmatprep.subr.bf16.mxu0 %v170
    %379 = vmatpush1.bf16.msra.mxu0 %v169
    %380 = vmatprep.subr.bf16.mxu0 %v166
    %381 = vmatpush1.bf16.msra.mxu0 %v165
    %382 = vmatprep.subr.bf16.mxu0 0
    %383 = vmatpush2.bf16.msra.mxu0 0
    %384 = vmatprep.subr.bf16.mxu0 0
    %385 = vmatpush2.bf16.msra.mxu0 0
    %386 = vmatprep.subr.bf16.mxu0 0
    %387 = vmatpush2.bf16.msra.mxu0 0
    %388 = vmatprep.subr.bf16.mxu0 0
    %389 = vmatpush2.bf16.msra.mxu0 0
    %390 = vmatprep.subr.bf16.mxu0 0
    %391 = vmatpush2.bf16.msra.mxu0 0
    %392 = vmatprep.subr.bf16.mxu0 0
    %393 = vmatpush2.bf16.msra.mxu0 0
    %394 = vmatprep.subr.bf16.mxu0 0
    %395 = vmatpush2.bf16.msra.mxu0 0
    %396 = vmatprep.subr.bf16.mxu0 0
    %397 = vmatpush2.bf16.msra.mxu0 0
    %398 = vmatprep.mubr.bf16.mxu0 0
    %399 = vmatmul.mubr.bf16.gmra.mxu0 %v364
    %v400 = vpop.f32.mrf.mxu0
    %v401 = vadd.f32 %v76, %v400
    %v402 = vpop.f32.mrf.mxu0
    %v403 = vadd.f32 %v80, %v402
    %v404 = vpop.f32.mrf.mxu0
    %v405 = vpop.f32.mrf.mxu0
    %406 = vdwg.mxu0
    %407 = vmatprep.subr.bf16.mxu0 0
    %408 = vmatpush1.bf16.msra.mxu0 0
    %409 = vmatprep.subr.bf16.mxu0 0
    %410 = vmatpush1.bf16.msra.mxu0 0
    %411 = vmatprep.subr.bf16.mxu0 %v224
    %412 = vmatpush1.bf16.msra.mxu0 %v221
    %413 = vmatprep.subr.bf16.mxu0 %v184
    %414 = vmatpush1.bf16.msra.mxu0 %v183
    %415 = vmatprep.subr.bf16.mxu0 %v180
    %416 = vmatpush1.bf16.msra.mxu0 %v179
    %417 = vmatprep.subr.bf16.mxu0 %v176
    %418 = vmatpush1.bf16.msra.mxu0 %v175
    %419 = vmatprep.subr.bf16.mxu0 %v172
    %420 = vmatpush1.bf16.msra.mxu0 %v171
    %421 = vmatprep.subr.bf16.mxu0 %v168
    %422 = vmatpush1.bf16.msra.mxu0 %v167
    %423 = vmatprep.subr.bf16.mxu0 0
    %424 = vmatpush2.bf16.msra.mxu0 0
    %425 = vmatprep.subr.bf16.mxu0 0
    %426 = vmatpush2.bf16.msra.mxu0 0
    %427 = vmatprep.subr.bf16.mxu0 0
    %428 = vmatpush2.bf16.msra.mxu0 0
    %429 = vmatprep.subr.bf16.mxu0 0
    %430 = vmatpush2.bf16.msra.mxu0 0
    %431 = vmatprep.subr.bf16.mxu0 0
    %432 = vmatpush2.bf16.msra.mxu0 0
    %433 = vmatprep.subr.bf16.mxu0 0
    %434 = vmatpush2.bf16.msra.mxu0 0
    %435 = vmatprep.subr.bf16.mxu0 0
    %436 = vmatpush2.bf16.msra.mxu0 0
    %437 = vmatprep.subr.bf16.mxu0 0
    %438 = vmatpush2.bf16.msra.mxu0 0
    %439 = vmatprep.mubr.bf16.mxu0 0
    %440 = vmatmul.mubr.bf16.gmra.mxu0 %v364
    %v441 = vpop.f32.mrf.mxu0
    %v442 = vadd.f32 %v84, %v441
    %v443 = vpop.f32.mrf.mxu0
    %v444 = vadd.f32 %v88, %v443
    %v445 = vpop.f32.mrf.mxu0
    %v446 = vpop.f32.mrf.mxu0
    %447 = vdwg.mxu0
    %v448 = vmax.f32 %v401, 0.0
    %v449 = vmax.f32 %v403, 0.0
    %v450 = vmax.f32 %v442, 0.0
    %v451 = vmax.f32 %v444, 0.0
    %v452 = vpack.c.bf16 %v448, %v448
    %v453 = vpack.c.bf16 %v449, %v449
    %v454 = vpack.c.bf16 %v450, %v450
    %v455 = vpack.c.bf16 %v451, %v451
    %v460 = vcombine.low %v452, %v453
    %v461 = vcombine.low %v454, %v455
    %v463 = vunpack.c.l.s4 1966171168
    %v464 = vunpack.c.0.s8 %v463
    %v465 = vlaneseq
    %v466 = vshrl.u32 %v465, 7
    %v467 = vsub.s32 %v464, %v466
    %v468 = vrot.slane %v460, %v467
    %v470 = vunpack.c.l.s4 1966171168
    %v471 = vunpack.c.0.s8 %v470
    %v472 = vlaneseq
    %v473 = vshrl.u32 %v472, 7
    %v474 = vsub.s32 %v471, %v473
    %v475 = vrot.slane %v461, %v474
    %v476 = vcombine.low %v468, %v475
    %v478 = vunpack.c.l.s4 1966171168
    %v479 = vunpack.c.0.s8 %v478
    %v480 = vlaneseq
    %v481 = vshrl.u32 %v480, 7
    %v482 = vsub.s32 %v479, %v481
    %v483 = vrot.slane %v476, %v482
    %s485 = scalar_lea.vmem [#allocation2], 8
    %486 = vst [vmem:[%s485] sm:$0xf] %v483
    %v487 = vld [vmem:[%s350] sm:$0x3]
    %s488 = scalar_lea.vmem %s0, 10
    %v489 = vld [vmem:[%s488] sm:$0x3]
    %s490 = scalar_lea.vmem %s0, 12
    %v491 = vld [vmem:[%s490] sm:$0x3]
    %493 = vrot.lane.b32.xlu0 %v489, 30
    %v494 = vpop.permute.xlu0 %493
    %497 = vrot.lane.b32.xlu0 %v491, 60
    %v498 = vpop.permute.xlu0 %497
    %v500 = vsel %vm67, %v487, %v494
    %v501 = vsel %vm69, %v500, %v498
    %v502 = vpack.c.bf16 %v501, %v501
    %v504 = vsel %vm209, %v502, 0
    %506 = vmatprep.subr.bf16.mxu0 0
    %507 = vmatpush1.bf16.msra.mxu0 0
    %508 = vmatprep.subr.bf16.mxu0 0
    %509 = vmatpush1.bf16.msra.mxu0 0
    %510 = vmatprep.subr.bf16.mxu0 %v218
    %511 = vmatpush1.bf16.msra.mxu0 %v215
    %512 = vmatprep.subr.bf16.mxu0 %v182
    %513 = vmatpush1.bf16.msra.mxu0 %v181
    %514 = vmatprep.subr.bf16.mxu0 %v178
    %515 = vmatpush1.bf16.msra.mxu0 %v177
    %516 = vmatprep.subr.bf16.mxu0 %v174
    %517 = vmatpush1.bf16.msra.mxu0 %v173
    %518 = vmatprep.subr.bf16.mxu0 %v170
    %519 = vmatpush1.bf16.msra.mxu0 %v169
    %520 = vmatprep.subr.bf16.mxu0 %v166
    %521 = vmatpush1.bf16.msra.mxu0 %v165
    %522 = vmatprep.subr.bf16.mxu0 0
    %523 = vmatpush2.bf16.msra.mxu0 0
    %524 = vmatprep.subr.bf16.mxu0 0
    %525 = vmatpush2.bf16.msra.mxu0 0
    %526 = vmatprep.subr.bf16.mxu0 0
    %527 = vmatpush2.bf16.msra.mxu0 0
    %528 = vmatprep.subr.bf16.mxu0 0
    %529 = vmatpush2.bf16.msra.mxu0 0
    %530 = vmatprep.subr.bf16.mxu0 0
    %531 = vmatpush2.bf16.msra.mxu0 0
    %532 = vmatprep.subr.bf16.mxu0 0
    %533 = vmatpush2.bf16.msra.mxu0 0
    %534 = vmatprep.subr.bf16.mxu0 0
    %535 = vmatpush2.bf16.msra.mxu0 0
    %536 = vmatprep.subr.bf16.mxu0 0
    %537 = vmatpush2.bf16.msra.mxu0 0
    %538 = vmatprep.mubr.bf16.mxu0 0
    %539 = vmatmul.mubr.bf16.gmra.mxu0 %v504
    %v540 = vpop.f32.mrf.mxu0
    %v541 = vadd.f32 %v76, %v540
    %v542 = vpop.f32.mrf.mxu0
    %v543 = vadd.f32 %v80, %v542
    %v544 = vpop.f32.mrf.mxu0
    %v545 = vpop.f32.mrf.mxu0
    %546 = vdwg.mxu0
    %547 = vmatprep.subr.bf16.mxu0 0
    %548 = vmatpush1.bf16.msra.mxu0 0
    %549 = vmatprep.subr.bf16.mxu0 0
    %550 = vmatpush1.bf16.msra.mxu0 0
    %551 = vmatprep.subr.bf16.mxu0 %v224
    %552 = vmatpush1.bf16.msra.mxu0 %v221
    %553 = vmatprep.subr.bf16.mxu0 %v184
    %554 = vmatpush1.bf16.msra.mxu0 %v183
    %555 = vmatprep.subr.bf16.mxu0 %v180
    %556 = vmatpush1.bf16.msra.mxu0 %v179
    %557 = vmatprep.subr.bf16.mxu0 %v176
    %558 = vmatpush1.bf16.msra.mxu0 %v175
    %559 = vmatprep.subr.bf16.mxu0 %v172
    %560 = vmatpush1.bf16.msra.mxu0 %v171
    %561 = vmatprep.subr.bf16.mxu0 %v168
    %562 = vmatpush1.bf16.msra.mxu0 %v167
    %563 = vmatprep.subr.bf16.mxu0 0
    %564 = vmatpush2.bf16.msra.mxu0 0
    %565 = vmatprep.subr.bf16.mxu0 0
    %566 = vmatpush2.bf16.msra.mxu0 0
    %567 = vmatprep.subr.bf16.mxu0 0
    %568 = vmatpush2.bf16.msra.mxu0 0
    %569 = vmatprep.subr.bf16.mxu0 0
    %570 = vmatpush2.bf16.msra.mxu0 0
    %571 = vmatprep.subr.bf16.mxu0 0
    %572 = vmatpush2.bf16.msra.mxu0 0
    %573 = vmatprep.subr.bf16.mxu0 0
    %574 = vmatpush2.bf16.msra.mxu0 0
    %575 = vmatprep.subr.bf16.mxu0 0
    %576 = vmatpush2.bf16.msra.mxu0 0
    %577 = vmatprep.subr.bf16.mxu0 0
    %578 = vmatpush2.bf16.msra.mxu0 0
    %579 = vmatprep.mubr.bf16.mxu0 0
    %580 = vmatmul.mubr.bf16.gmra.mxu0 %v504
    %v581 = vpop.f32.mrf.mxu0
    %v582 = vadd.f32 %v84, %v581
    %v583 = vpop.f32.mrf.mxu0
    %v584 = vadd.f32 %v88, %v583
    %v585 = vpop.f32.mrf.mxu0
    %v586 = vpop.f32.mrf.mxu0
    %587 = vdwg.mxu0
    %v588 = vmax.f32 %v541, 0.0
    %v589 = vmax.f32 %v543, 0.0
    %v590 = vmax.f32 %v582, 0.0
    %v591 = vmax.f32 %v584, 0.0
    %v592 = vpack.c.bf16 %v588, %v588
    %v593 = vpack.c.bf16 %v589, %v589
    %v594 = vpack.c.bf16 %v590, %v590
    %v595 = vpack.c.bf16 %v591, %v591
    %v600 = vcombine.low %v592, %v593
    %v601 = vcombine.low %v594, %v595
    %v603 = vunpack.c.l.s4 1966171168
    %v604 = vunpack.c.0.s8 %v603
    %v605 = vlaneseq
    %v606 = vshrl.u32 %v605, 7
    %v607 = vsub.s32 %v604, %v606
    %v608 = vrot.slane %v600, %v607
    %v610 = vunpack.c.l.s4 1966171168
    %v611 = vunpack.c.0.s8 %v610
    %v612 = vlaneseq
    %v613 = vshrl.u32 %v612, 7
    %v614 = vsub.s32 %v611, %v613
    %v615 = vrot.slane %v601, %v614
    %v616 = vcombine.low %v608, %v615
    %v618 = vunpack.c.l.s4 1966171168
    %v619 = vunpack.c.0.s8 %v618
    %v620 = vlaneseq
    %v621 = vshrl.u32 %v620, 7
    %v622 = vsub.s32 %v619, %v621
    %v623 = vrot.slane %v616, %v622
    %s625 = scalar_lea.vmem [#allocation2], 12
    %626 = vst [vmem:[%s625] sm:$0xf] %v623
    %v627 = vld [vmem:[%s490] sm:$0x3]
    %s628 = scalar_lea.vmem %s0, 14
    %v629 = vld [vmem:[%s628] sm:$0x3]
    %s630 = scalar_lea.vmem %s0, 16
    %v631 = vld [vmem:[%s630] sm:$0x3]
    %633 = vrot.lane.b32.xlu0 %v629, 30
    %v634 = vpop.permute.xlu0 %633
    %637 = vrot.lane.b32.xlu0 %v631, 60
    %v638 = vpop.permute.xlu0 %637
    %v640 = vsel %vm67, %v627, %v634
    %v641 = vsel %vm69, %v640, %v638
    %v642 = vpack.c.bf16 %v641, %v641
    %v644 = vsel %vm209, %v642, 0
    %646 = vmatprep.subr.bf16.mxu0 0
    %647 = vmatpush1.bf16.msra.mxu0 0
    %648 = vmatprep.subr.bf16.mxu0 0
    %649 = vmatpush1.bf16.msra.mxu0 0
    %650 = vmatprep.subr.bf16.mxu0 %v218
    %651 = vmatpush1.bf16.msra.mxu0 %v215
    %652 = vmatprep.subr.bf16.mxu0 %v182
    %653 = vmatpush1.bf16.msra.mxu0 %v181
    %654 = vmatprep.subr.bf16.mxu0 %v178
    %655 = vmatpush1.bf16.msra.mxu0 %v177
    %656 = vmatprep.subr.bf16.mxu0 %v174
    %657 = vmatpush1.bf16.msra.mxu0 %v173
    %658 = vmatprep.subr.bf16.mxu0 %v170
    %659 = vmatpush1.bf16.msra.mxu0 %v169
    %660 = vmatprep.subr.bf16.mxu0 %v166
    %661 = vmatpush1.bf16.msra.mxu0 %v165
    %662 = vmatprep.subr.bf16.mxu0 0
    %663 = vmatpush2.bf16.msra.mxu0 0
    %664 = vmatprep.subr.bf16.mxu0 0
    %665 = vmatpush2.bf16.msra.mxu0 0
    %666 = vmatprep.subr.bf16.mxu0 0
    %667 = vmatpush2.bf16.msra.mxu0 0
    %668 = vmatprep.subr.bf16.mxu0 0
    %669 = vmatpush2.bf16.msra.mxu0 0
    %670 = vmatprep.subr.bf16.mxu0 0
    %671 = vmatpush2.bf16.msra.mxu0 0
    %672 = vmatprep.subr.bf16.mxu0 0
    %673 = vmatpush2.bf16.msra.mxu0 0
    %674 = vmatprep.subr.bf16.mxu0 0
    %675 = vmatpush2.bf16.msra.mxu0 0
    %676 = vmatprep.subr.bf16.mxu0 0
    %677 = vmatpush2.bf16.msra.mxu0 0
    %678 = vmatprep.mubr.bf16.mxu0 0
    %679 = vmatmul.mubr.bf16.gmra.mxu0 %v644
    %v680 = vpop.f32.mrf.mxu0
    %v681 = vadd.f32 %v76, %v680
    %v682 = vpop.f32.mrf.mxu0
    %v683 = vadd.f32 %v80, %v682
    %v684 = vpop.f32.mrf.mxu0
    %v685 = vpop.f32.mrf.mxu0
    %686 = vdwg.mxu0
    %687 = vmatprep.subr.bf16.mxu0 0
    %688 = vmatpush1.bf16.msra.mxu0 0
    %689 = vmatprep.subr.bf16.mxu0 0
    %690 = vmatpush1.bf16.msra.mxu0 0
    %691 = vmatprep.subr.bf16.mxu0 %v224
    %692 = vmatpush1.bf16.msra.mxu0 %v221
    %693 = vmatprep.subr.bf16.mxu0 %v184
    %694 = vmatpush1.bf16.msra.mxu0 %v183
    %695 = vmatprep.subr.bf16.mxu0 %v180
    %696 = vmatpush1.bf16.msra.mxu0 %v179
    %697 = vmatprep.subr.bf16.mxu0 %v176
    %698 = vmatpush1.bf16.msra.mxu0 %v175
    %699 = vmatprep.subr.bf16.mxu0 %v172
    %700 = vmatpush1.bf16.msra.mxu0 %v171
    %701 = vmatprep.subr.bf16.mxu0 %v168
    %702 = vmatpush1.bf16.msra.mxu0 %v167
    %703 = vmatprep.subr.bf16.mxu0 0
    %704 = vmatpush2.bf16.msra.mxu0 0
    %705 = vmatprep.subr.bf16.mxu0 0
    %706 = vmatpush2.bf16.msra.mxu0 0
    %707 = vmatprep.subr.bf16.mxu0 0
    %708 = vmatpush2.bf16.msra.mxu0 0
    %709 = vmatprep.subr.bf16.mxu0 0
    %710 = vmatpush2.bf16.msra.mxu0 0
    %711 = vmatprep.subr.bf16.mxu0 0
    %712 = vmatpush2.bf16.msra.mxu0 0
    %713 = vmatprep.subr.bf16.mxu0 0
    %714 = vmatpush2.bf16.msra.mxu0 0
    %715 = vmatprep.subr.bf16.mxu0 0
    %716 = vmatpush2.bf16.msra.mxu0 0
    %717 = vmatprep.subr.bf16.mxu0 0
    %718 = vmatpush2.bf16.msra.mxu0 0
    %719 = vmatprep.mubr.bf16.mxu0 0
    %720 = vmatmul.mubr.bf16.gmra.mxu0 %v644
    %v721 = vpop.f32.mrf.mxu0
    %v722 = vadd.f32 %v84, %v721
    %v723 = vpop.f32.mrf.mxu0
    %v724 = vadd.f32 %v88, %v723
    %v725 = vpop.f32.mrf.mxu0
    %v726 = vpop.f32.mrf.mxu0
    %727 = vdwg.mxu0
    %v728 = vmax.f32 %v681, 0.0
    %v729 = vmax.f32 %v683, 0.0
    %v730 = vmax.f32 %v722, 0.0
    %v731 = vmax.f32 %v724, 0.0
    %v732 = vpack.c.bf16 %v728, %v728
    %v733 = vpack.c.bf16 %v729, %v729
    %v734 = vpack.c.bf16 %v730, %v730
    %v735 = vpack.c.bf16 %v731, %v731
    %v740 = vcombine.low %v732, %v733
    %v741 = vcombine.low %v734, %v735
    %v743 = vunpack.c.l.s4 1966171168
    %v744 = vunpack.c.0.s8 %v743
    %v745 = vlaneseq
    %v746 = vshrl.u32 %v745, 7
    %v747 = vsub.s32 %v744, %v746
    %v748 = vrot.slane %v740, %v747
    %v750 = vunpack.c.l.s4 1966171168
    %v751 = vunpack.c.0.s8 %v750
    %v752 = vlaneseq
    %v753 = vshrl.u32 %v752, 7
    %v754 = vsub.s32 %v751, %v753
    %v755 = vrot.slane %v741, %v754
    %v756 = vcombine.low %v748, %v755
    %v758 = vunpack.c.l.s4 1966171168
    %v759 = vunpack.c.0.s8 %v758
    %v760 = vlaneseq
    %v761 = vshrl.u32 %v760, 7
    %v762 = vsub.s32 %v759, %v761
    %v763 = vrot.slane %v756, %v762
    %s765 = scalar_lea.vmem [#allocation2], 16
    %766 = vst [vmem:[%s765] sm:$0xf] %v763
    %v767 = vld [vmem:[%s630] sm:$0x3]
    %s768 = scalar_lea.vmem %s0, 18
    %v769 = vld [vmem:[%s768] sm:$0x3]
    %s770 = scalar_lea.vmem %s0, 20
    %v771 = vld [vmem:[%s770] sm:$0x3]
    %773 = vrot.lane.b32.xlu0 %v769, 30
    %v774 = vpop.permute.xlu0 %773
    %777 = vrot.lane.b32.xlu0 %v771, 60
    %v778 = vpop.permute.xlu0 %777
    %v780 = vsel %vm67, %v767, %v774
    %v781 = vsel %vm69, %v780, %v778
    %v782 = vpack.c.bf16 %v781, %v781
    %v784 = vsel %vm209, %v782, 0
    %786 = vmatprep.subr.bf16.mxu0 0
    %787 = vmatpush1.bf16.msra.mxu0 0
    %788 = vmatprep.subr.bf16.mxu0 0
    %789 = vmatpush1.bf16.msra.mxu0 0
    %790 = vmatprep.subr.bf16.mxu0 %v218
    %791 = vmatpush1.bf16.msra.mxu0 %v215
    %792 = vmatprep.subr.bf16.mxu0 %v182
    %793 = vmatpush1.bf16.msra.mxu0 %v181
    %794 = vmatprep.subr.bf16.mxu0 %v178
    %795 = vmatpush1.bf16.msra.mxu0 %v177
    %796 = vmatprep.subr.bf16.mxu0 %v174
    %797 = vmatpush1.bf16.msra.mxu0 %v173
    %798 = vmatprep.subr.bf16.mxu0 %v170
    %799 = vmatpush1.bf16.msra.mxu0 %v169
    %800 = vmatprep.subr.bf16.mxu0 %v166
    %801 = vmatpush1.bf16.msra.mxu0 %v165
    %802 = vmatprep.subr.bf16.mxu0 0
    %803 = vmatpush2.bf16.msra.mxu0 0
    %804 = vmatprep.subr.bf16.mxu0 0
    %805 = vmatpush2.bf16.msra.mxu0 0
    %806 = vmatprep.subr.bf16.mxu0 0
    %807 = vmatpush2.bf16.msra.mxu0 0
    %808 = vmatprep.subr.bf16.mxu0 0
    %809 = vmatpush2.bf16.msra.mxu0 0
    %810 = vmatprep.subr.bf16.mxu0 0
    %811 = vmatpush2.bf16.msra.mxu0 0
    %812 = vmatprep.subr.bf16.mxu0 0
    %813 = vmatpush2.bf16.msra.mxu0 0
    %814 = vmatprep.subr.bf16.mxu0 0
    %815 = vmatpush2.bf16.msra.mxu0 0
    %816 = vmatprep.subr.bf16.mxu0 0
    %817 = vmatpush2.bf16.msra.mxu0 0
    %818 = vmatprep.mubr.bf16.mxu0 0
    %819 = vmatmul.mubr.bf16.gmra.mxu0 %v784
    %v820 = vpop.f32.mrf.mxu0
    %v821 = vadd.f32 %v76, %v820
    %v822 = vpop.f32.mrf.mxu0
    %v823 = vadd.f32 %v80, %v822
    %v824 = vpop.f32.mrf.mxu0
    %v825 = vpop.f32.mrf.mxu0
    %826 = vdwg.mxu0
    %827 = vmatprep.subr.bf16.mxu0 0
    %828 = vmatpush1.bf16.msra.mxu0 0
    %829 = vmatprep.subr.bf16.mxu0 0
    %830 = vmatpush1.bf16.msra.mxu0 0
    %831 = vmatprep.subr.bf16.mxu0 %v224
    %832 = vmatpush1.bf16.msra.mxu0 %v221
    %833 = vmatprep.subr.bf16.mxu0 %v184
    %834 = vmatpush1.bf16.msra.mxu0 %v183
    %835 = vmatprep.subr.bf16.mxu0 %v180
    %836 = vmatpush1.bf16.msra.mxu0 %v179
    %837 = vmatprep.subr.bf16.mxu0 %v176
    %838 = vmatpush1.bf16.msra.mxu0 %v175
    %839 = vmatprep.subr.bf16.mxu0 %v172
    %840 = vmatpush1.bf16.msra.mxu0 %v171
    %841 = vmatprep.subr.bf16.mxu0 %v168
    %842 = vmatpush1.bf16.msra.mxu0 %v167
    %843 = vmatprep.subr.bf16.mxu0 0
    %844 = vmatpush2.bf16.msra.mxu0 0
    %845 = vmatprep.subr.bf16.mxu0 0
    %846 = vmatpush2.bf16.msra.mxu0 0
    %847 = vmatprep.subr.bf16.mxu0 0
    %848 = vmatpush2.bf16.msra.mxu0 0
    %849 = vmatprep.subr.bf16.mxu0 0
    %850 = vmatpush2.bf16.msra.mxu0 0
    %851 = vmatprep.subr.bf16.mxu0 0
    %852 = vmatpush2.bf16.msra.mxu0 0
    %853 = vmatprep.subr.bf16.mxu0 0
    %854 = vmatpush2.bf16.msra.mxu0 0
    %855 = vmatprep.subr.bf16.mxu0 0
    %856 = vmatpush2.bf16.msra.mxu0 0
    %857 = vmatprep.subr.bf16.mxu0 0
    %858 = vmatpush2.bf16.msra.mxu0 0
    %859 = vmatprep.mubr.bf16.mxu0 0
    %860 = vmatmul.mubr.bf16.gmra.mxu0 %v784
    %v861 = vpop.f32.mrf.mxu0
    %v862 = vadd.f32 %v84, %v861
    %v863 = vpop.f32.mrf.mxu0
    %v864 = vadd.f32 %v88, %v863
    %v865 = vpop.f32.mrf.mxu0
    %v866 = vpop.f32.mrf.mxu0
    %867 = vdwg.mxu0
    %v868 = vmax.f32 %v821, 0.0
    %v869 = vmax.f32 %v823, 0.0
    %v870 = vmax.f32 %v862, 0.0
    %v871 = vmax.f32 %v864, 0.0
    %v872 = vpack.c.bf16 %v868, %v868
    %v873 = vpack.c.bf16 %v869, %v869
    %v874 = vpack.c.bf16 %v870, %v870
    %v875 = vpack.c.bf16 %v871, %v871
    %v880 = vcombine.low %v872, %v873
    %v881 = vcombine.low %v874, %v875
    %v883 = vunpack.c.l.s4 1966171168
    %v884 = vunpack.c.0.s8 %v883
    %v885 = vlaneseq
    %v886 = vshrl.u32 %v885, 7
    %v887 = vsub.s32 %v884, %v886
    %v888 = vrot.slane %v880, %v887
    %v890 = vunpack.c.l.s4 1966171168
    %v891 = vunpack.c.0.s8 %v890
    %v892 = vlaneseq
    %v893 = vshrl.u32 %v892, 7
    %v894 = vsub.s32 %v891, %v893
    %v895 = vrot.slane %v881, %v894
    %v896 = vcombine.low %v888, %v895
    %v898 = vunpack.c.l.s4 1966171168
    %v899 = vunpack.c.0.s8 %v898
    %v900 = vlaneseq
    %v901 = vshrl.u32 %v900, 7
    %v902 = vsub.s32 %v899, %v901
    %v903 = vrot.slane %v896, %v902
    %s905 = scalar_lea.vmem [#allocation2], 20
    %906 = vst [vmem:[%s905] sm:$0xf] %v903
    %v907 = vld [vmem:[%s770] sm:$0x3]
    %s908 = scalar_lea.vmem %s0, 22
    %v909 = vld [vmem:[%s908] sm:$0x3]
    %s910 = scalar_lea.vmem %s0, 24
    %v911 = vld [vmem:[%s910] sm:$0x3]
    %913 = vrot.lane.b32.xlu0 %v909, 30
    %v914 = vpop.permute.xlu0 %913
    %917 = vrot.lane.b32.xlu0 %v911, 60
    %v918 = vpop.permute.xlu0 %917
    %v920 = vsel %vm67, %v907, %v914
    %v921 = vsel %vm69, %v920, %v918
    %v922 = vpack.c.bf16 %v921, %v921
    %v924 = vsel %vm209, %v922, 0
    %926 = vmatprep.subr.bf16.mxu0 0
    %927 = vmatpush1.bf16.msra.mxu0 0
    %928 = vmatprep.subr.bf16.mxu0 0
    %929 = vmatpush1.bf16.msra.mxu0 0
    %930 = vmatprep.subr.bf16.mxu0 %v218
    %931 = vmatpush1.bf16.msra.mxu0 %v215
    %932 = vmatprep.subr.bf16.mxu0 %v182
    %933 = vmatpush1.bf16.msra.mxu0 %v181
    %934 = vmatprep.subr.bf16.mxu0 %v178
    %935 = vmatpush1.bf16.msra.mxu0 %v177
    %936 = vmatprep.subr.bf16.mxu0 %v174
    %937 = vmatpush1.bf16.msra.mxu0 %v173
    %938 = vmatprep.subr.bf16.mxu0 %v170
    %939 = vmatpush1.bf16.msra.mxu0 %v169
    %940 = vmatprep.subr.bf16.mxu0 %v166
    %941 = vmatpush1.bf16.msra.mxu0 %v165
    %942 = vmatprep.subr.bf16.mxu0 0
    %943 = vmatpush2.bf16.msra.mxu0 0
    %944 = vmatprep.subr.bf16.mxu0 0
    %945 = vmatpush2.bf16.msra.mxu0 0
    %946 = vmatprep.subr.bf16.mxu0 0
    %947 = vmatpush2.bf16.msra.mxu0 0
    %948 = vmatprep.subr.bf16.mxu0 0
    %949 = vmatpush2.bf16.msra.mxu0 0
    %950 = vmatprep.subr.bf16.mxu0 0
    %951 = vmatpush2.bf16.msra.mxu0 0
    %952 = vmatprep.subr.bf16.mxu0 0
    %953 = vmatpush2.bf16.msra.mxu0 0
    %954 = vmatprep.subr.bf16.mxu0 0
    %955 = vmatpush2.bf16.msra.mxu0 0
    %956 = vmatprep.subr.bf16.mxu0 0
    %957 = vmatpush2.bf16.msra.mxu0 0
    %958 = vmatprep.mubr.bf16.mxu0 0
    %959 = vmatmul.mubr.bf16.gmra.mxu0 %v924
    %v960 = vpop.f32.mrf.mxu0
    %v961 = vadd.f32 %v76, %v960
    %v962 = vpop.f32.mrf.mxu0
    %v963 = vadd.f32 %v80, %v962
    %v964 = vpop.f32.mrf.mxu0
    %v965 = vpop.f32.mrf.mxu0
    %966 = vdwg.mxu0
    %967 = vmatprep.subr.bf16.mxu0 0
    %968 = vmatpush1.bf16.msra.mxu0 0
    %969 = vmatprep.subr.bf16.mxu0 0
    %970 = vmatpush1.bf16.msra.mxu0 0
    %971 = vmatprep.subr.bf16.mxu0 %v224
    %972 = vmatpush1.bf16.msra.mxu0 %v221
    %973 = vmatprep.subr.bf16.mxu0 %v184
    %974 = vmatpush1.bf16.msra.mxu0 %v183
    %975 = vmatprep.subr.bf16.mxu0 %v180
    %976 = vmatpush1.bf16.msra.mxu0 %v179
    %977 = vmatprep.subr.bf16.mxu0 %v176
    %978 = vmatpush1.bf16.msra.mxu0 %v175
    %979 = vmatprep.subr.bf16.mxu0 %v172
    %980 = vmatpush1.bf16.msra.mxu0 %v171
    %981 = vmatprep.subr.bf16.mxu0 %v168
    %982 = vmatpush1.bf16.msra.mxu0 %v167
    %983 = vmatprep.subr.bf16.mxu0 0
    %984 = vmatpush2.bf16.msra.mxu0 0
    %985 = vmatprep.subr.bf16.mxu0 0
    %986 = vmatpush2.bf16.msra.mxu0 0
    %987 = vmatprep.subr.bf16.mxu0 0
    %988 = vmatpush2.bf16.msra.mxu0 0
    %989 = vmatprep.subr.bf16.mxu0 0
    %990 = vmatpush2.bf16.msra.mxu0 0
    %991 = vmatprep.subr.bf16.mxu0 0
    %992 = vmatpush2.bf16.msra.mxu0 0
    %993 = vmatprep.subr.bf16.mxu0 0
    %994 = vmatpush2.bf16.msra.mxu0 0
    %995 = vmatprep.subr.bf16.mxu0 0
    %996 = vmatpush2.bf16.msra.mxu0 0
    %997 = vmatprep.subr.bf16.mxu0 0
    %998 = vmatpush2.bf16.msra.mxu0 0
    %999 = vmatprep.mubr.bf16.mxu0 0
    %1000 = vmatmul.mubr.bf16.gmra.mxu0 %v924
    %v1001 = vpop.f32.mrf.mxu0
    %v1002 = vadd.f32 %v84, %v1001
    %v1003 = vpop.f32.mrf.mxu0
    %v1004 = vadd.f32 %v88, %v1003
    %v1005 = vpop.f32.mrf.mxu0
    %v1006 = vpop.f32.mrf.mxu0
    %1007 = vdwg.mxu0
    %v1008 = vmax.f32 %v961, 0.0
    %v1009 = vmax.f32 %v963, 0.0
    %v1010 = vmax.f32 %v1002, 0.0
    %v1011 = vmax.f32 %v1004, 0.0
    %v1012 = vpack.c.bf16 %v1008, %v1008
    %v1013 = vpack.c.bf16 %v1009, %v1009
    %v1014 = vpack.c.bf16 %v1010, %v1010
    %v1015 = vpack.c.bf16 %v1011, %v1011
    %v1020 = vcombine.low %v1012, %v1013
    %v1021 = vcombine.low %v1014, %v1015
    %v1023 = vunpack.c.l.s4 1966171168
    %v1024 = vunpack.c.0.s8 %v1023
    %v1025 = vlaneseq
    %v1026 = vshrl.u32 %v1025, 7
    %v1027 = vsub.s32 %v1024, %v1026
    %v1028 = vrot.slane %v1020, %v1027
    %v1030 = vunpack.c.l.s4 1966171168
    %v1031 = vunpack.c.0.s8 %v1030
    %v1032 = vlaneseq
    %v1033 = vshrl.u32 %v1032, 7
    %v1034 = vsub.s32 %v1031, %v1033
    %v1035 = vrot.slane %v1021, %v1034
    %v1036 = vcombine.low %v1028, %v1035
    %v1038 = vunpack.c.l.s4 1966171168
    %v1039 = vunpack.c.0.s8 %v1038
    %v1040 = vlaneseq
    %v1041 = vshrl.u32 %v1040, 7
    %v1042 = vsub.s32 %v1039, %v1041
    %v1043 = vrot.slane %v1036, %v1042
    %s1045 = scalar_lea.vmem [#allocation2], 24
    %1046 = vst [vmem:[%s1045] sm:$0xf] %v1043
    %v1047 = vld [vmem:[%s910] sm:$0x3]
    %s1048 = scalar_lea.vmem %s0, 26
    %v1049 = vld [vmem:[%s1048] sm:$0x3]
    %s1050 = scalar_lea.vmem %s0, 28
    %v1051 = vld [vmem:[%s1050] sm:$0x3]
    %1053 = vrot.lane.b32.xlu0 %v1049, 30
    %v1054 = vpop.permute.xlu0 %1053
    %1057 = vrot.lane.b32.xlu0 %v1051, 60
    %v1058 = vpop.permute.xlu0 %1057
    %v1060 = vsel %vm67, %v1047, %v1054
    %v1061 = vsel %vm69, %v1060, %v1058
    %v1062 = vpack.c.bf16 %v1061, %v1061
    %v1064 = vsel %vm209, %v1062, 0
    %1066 = vmatprep.subr.bf16.mxu0 0
    %1067 = vmatpush1.bf16.msra.mxu0 0
    %1068 = vmatprep.subr.bf16.mxu0 0
    %1069 = vmatpush1.bf16.msra.mxu0 0
    %1070 = vmatprep.subr.bf16.mxu0 %v218
    %1071 = vmatpush1.bf16.msra.mxu0 %v215
    %1072 = vmatprep.subr.bf16.mxu0 %v182
    %1073 = vmatpush1.bf16.msra.mxu0 %v181
    %1074 = vmatprep.subr.bf16.mxu0 %v178
    %1075 = vmatpush1.bf16.msra.mxu0 %v177
    %1076 = vmatprep.subr.bf16.mxu0 %v174
    %1077 = vmatpush1.bf16.msra.mxu0 %v173
    %1078 = vmatprep.subr.bf16.mxu0 %v170
    %1079 = vmatpush1.bf16.msra.mxu0 %v169
    %1080 = vmatprep.subr.bf16.mxu0 %v166
    %1081 = vmatpush1.bf16.msra.mxu0 %v165
    %1082 = vmatprep.subr.bf16.mxu0 0
    %1083 = vmatpush2.bf16.msra.mxu0 0
    %1084 = vmatprep.subr.bf16.mxu0 0
    %1085 = vmatpush2.bf16.msra.mxu0 0
    %1086 = vmatprep.subr.bf16.mxu0 0
    %1087 = vmatpush2.bf16.msra.mxu0 0
    %1088 = vmatprep.subr.bf16.mxu0 0
    %1089 = vmatpush2.bf16.msra.mxu0 0
    %1090 = vmatprep.subr.bf16.mxu0 0
    %1091 = vmatpush2.bf16.msra.mxu0 0
    %1092 = vmatprep.subr.bf16.mxu0 0
    %1093 = vmatpush2.bf16.msra.mxu0 0
    %1094 = vmatprep.subr.bf16.mxu0 0
    %1095 = vmatpush2.bf16.msra.mxu0 0
    %1096 = vmatprep.subr.bf16.mxu0 0
    %1097 = vmatpush2.bf16.msra.mxu0 0
    %1098 = vmatprep.mubr.bf16.mxu0 0
    %1099 = vmatmul.mubr.bf16.gmra.mxu0 %v1064
    %v1100 = vpop.f32.mrf.mxu0
    %v1101 = vadd.f32 %v76, %v1100
    %v1102 = vpop.f32.mrf.mxu0
    %v1103 = vadd.f32 %v80, %v1102
    %v1104 = vpop.f32.mrf.mxu0
    %v1105 = vpop.f32.mrf.mxu0
    %1106 = vdwg.mxu0
    %1107 = vmatprep.subr.bf16.mxu0 0
    %1108 = vmatpush1.bf16.msra.mxu0 0
    %1109 = vmatprep.subr.bf16.mxu0 0
    %1110 = vmatpush1.bf16.msra.mxu0 0
    %1111 = vmatprep.subr.bf16.mxu0 %v224
    %1112 = vmatpush1.bf16.msra.mxu0 %v221
    %1113 = vmatprep.subr.bf16.mxu0 %v184
    %1114 = vmatpush1.bf16.msra.mxu0 %v183
    %1115 = vmatprep.subr.bf16.mxu0 %v180
    %1116 = vmatpush1.bf16.msra.mxu0 %v179
    %1117 = vmatprep.subr.bf16.mxu0 %v176
    %1118 = vmatpush1.bf16.msra.mxu0 %v175
    %1119 = vmatprep.subr.bf16.mxu0 %v172
    %1120 = vmatpush1.bf16.msra.mxu0 %v171
    %1121 = vmatprep.subr.bf16.mxu0 %v168
    %1122 = vmatpush1.bf16.msra.mxu0 %v167
    %1123 = vmatprep.subr.bf16.mxu0 0
    %1124 = vmatpush2.bf16.msra.mxu0 0
    %1125 = vmatprep.subr.bf16.mxu0 0
    %1126 = vmatpush2.bf16.msra.mxu0 0
    %1127 = vmatprep.subr.bf16.mxu0 0
    %1128 = vmatpush2.bf16.msra.mxu0 0
    %1129 = vmatprep.subr.bf16.mxu0 0
    %1130 = vmatpush2.bf16.msra.mxu0 0
    %1131 = vmatprep.subr.bf16.mxu0 0
    %1132 = vmatpush2.bf16.msra.mxu0 0
    %1133 = vmatprep.subr.bf16.mxu0 0
    %1134 = vmatpush2.bf16.msra.mxu0 0
    %1135 = vmatprep.subr.bf16.mxu0 0
    %1136 = vmatpush2.bf16.msra.mxu0 0
    %1137 = vmatprep.subr.bf16.mxu0 0
    %1138 = vmatpush2.bf16.msra.mxu0 0
    %1139 = vmatprep.mubr.bf16.mxu0 0
    %1140 = vmatmul.mubr.bf16.gmra.mxu0 %v1064
    %v1141 = vpop.f32.mrf.mxu0
    %v1142 = vadd.f32 %v84, %v1141
    %v1143 = vpop.f32.mrf.mxu0
    %v1144 = vadd.f32 %v88, %v1143
    %v1145 = vpop.f32.mrf.mxu0
    %v1146 = vpop.f32.mrf.mxu0
    %1147 = vdwg.mxu0
    %v1148 = vmax.f32 %v1101, 0.0
    %v1149 = vmax.f32 %v1103, 0.0
    %v1150 = vmax.f32 %v1142, 0.0
    %v1151 = vmax.f32 %v1144, 0.0
    %v1152 = vpack.c.bf16 %v1148, %v1148
    %v1153 = vpack.c.bf16 %v1149, %v1149
    %v1154 = vpack.c.bf16 %v1150, %v1150
    %v1155 = vpack.c.bf16 %v1151, %v1151
    %v1160 = vcombine.low %v1152, %v1153
    %v1161 = vcombine.low %v1154, %v1155
    %v1163 = vunpack.c.l.s4 1966171168
    %v1164 = vunpack.c.0.s8 %v1163
    %v1165 = vlaneseq
    %v1166 = vshrl.u32 %v1165, 7
    %v1167 = vsub.s32 %v1164, %v1166
    %v1168 = vrot.slane %v1160, %v1167
    %v1170 = vunpack.c.l.s4 1966171168
    %v1171 = vunpack.c.0.s8 %v1170
    %v1172 = vlaneseq
    %v1173 = vshrl.u32 %v1172, 7
    %v1174 = vsub.s32 %v1171, %v1173
    %v1175 = vrot.slane %v1161, %v1174
    %v1176 = vcombine.low %v1168, %v1175
    %v1178 = vunpack.c.l.s4 1966171168
    %v1179 = vunpack.c.0.s8 %v1178
    %v1180 = vlaneseq
    %v1181 = vshrl.u32 %v1180, 7
    %v1182 = vsub.s32 %v1179, %v1181
    %v1183 = vrot.slane %v1176, %v1182
    %s1185 = scalar_lea.vmem [#allocation2], 28
    %1186 = vst [vmem:[%s1185] sm:$0xf] %v1183
    %v1187 = vld [vmem:[%s1050] sm:$0x3]
    %s1188 = scalar_lea.vmem %s0, 30
    %v1189 = vld [vmem:[%s1188] sm:$0x3]
    %s1190 = scalar_lea.vmem %s0, 32
    %v1191 = vld [vmem:[%s1190] sm:$0x3]
    %1193 = vrot.lane.b32.xlu0 %v1189, 30
    %v1194 = vpop.permute.xlu0 %1193
    %1197 = vrot.lane.b32.xlu0 %v1191, 60
    %v1198 = vpop.permute.xlu0 %1197
    %v1200 = vsel %vm67, %v1187, %v1194
    %v1201 = vsel %vm69, %v1200, %v1198
    %v1202 = vpack.c.bf16 %v1201, %v1201
    %v1204 = vsel %vm209, %v1202, 0
    %1206 = vmatprep.subr.bf16.mxu0 0
    %1207 = vmatpush1.bf16.msra.mxu0 0
    %1208 = vmatprep.subr.bf16.mxu0 0
    %1209 = vmatpush1.bf16.msra.mxu0 0
    %1210 = vmatprep.subr.bf16.mxu0 %v218
    %1211 = vmatpush1.bf16.msra.mxu0 %v215
    %1212 = vmatprep.subr.bf16.mxu0 %v182
    %1213 = vmatpush1.bf16.msra.mxu0 %v181
    %1214 = vmatprep.subr.bf16.mxu0 %v178
    %1215 = vmatpush1.bf16.msra.mxu0 %v177
    %1216 = vmatprep.subr.bf16.mxu0 %v174
    %1217 = vmatpush1.bf16.msra.mxu0 %v173
    %1218 = vmatprep.subr.bf16.mxu0 %v170
    %1219 = vmatpush1.bf16.msra.mxu0 %v169
    %1220 = vmatprep.subr.bf16.mxu0 %v166
    %1221 = vmatpush1.bf16.msra.mxu0 %v165
    %1222 = vmatprep.subr.bf16.mxu0 0
    %1223 = vmatpush2.bf16.msra.mxu0 0
    %1224 = vmatprep.subr.bf16.mxu0 0
    %1225 = vmatpush2.bf16.msra.mxu0 0
    %1226 = vmatprep.subr.bf16.mxu0 0
    %1227 = vmatpush2.bf16.msra.mxu0 0
    %1228 = vmatprep.subr.bf16.mxu0 0
    %1229 = vmatpush2.bf16.msra.mxu0 0
    %1230 = vmatprep.subr.bf16.mxu0 0
    %1231 = vmatpush2.bf16.msra.mxu0 0
    %1232 = vmatprep.subr.bf16.mxu0 0
    %1233 = vmatpush2.bf16.msra.mxu0 0
    %1234 = vmatprep.subr.bf16.mxu0 0
    %1235 = vmatpush2.bf16.msra.mxu0 0
    %1236 = vmatprep.subr.bf16.mxu0 0
    %1237 = vmatpush2.bf16.msra.mxu0 0
    %1238 = vmatprep.mubr.bf16.mxu0 0
    %1239 = vmatmul.mubr.bf16.gmra.mxu0 %v1204
    %v1240 = vpop.f32.mrf.mxu0
    %v1241 = vadd.f32 %v76, %v1240
    %v1242 = vpop.f32.mrf.mxu0
    %v1243 = vadd.f32 %v80, %v1242
    %v1244 = vpop.f32.mrf.mxu0
    %v1245 = vpop.f32.mrf.mxu0
    %1246 = vdwg.mxu0
    %1247 = vmatprep.subr.bf16.mxu0 0
    %1248 = vmatpush1.bf16.msra.mxu0 0
    %1249 = vmatprep.subr.bf16.mxu0 0
    %1250 = vmatpush1.bf16.msra.mxu0 0
    %1251 = vmatprep.subr.bf16.mxu0 %v224
    %1252 = vmatpush1.bf16.msra.mxu0 %v221
    %1253 = vmatprep.subr.bf16.mxu0 %v184
    %1254 = vmatpush1.bf16.msra.mxu0 %v183
    %1255 = vmatprep.subr.bf16.mxu0 %v180
    %1256 = vmatpush1.bf16.msra.mxu0 %v179
    %1257 = vmatprep.subr.bf16.mxu0 %v176
    %1258 = vmatpush1.bf16.msra.mxu0 %v175
    %1259 = vmatprep.subr.bf16.mxu0 %v172
    %1260 = vmatpush1.bf16.msra.mxu0 %v171
    %1261 = vmatprep.subr.bf16.mxu0 %v168
    %1262 = vmatpush1.bf16.msra.mxu0 %v167
    %1263 = vmatprep.subr.bf16.mxu0 0
    %1264 = vmatpush2.bf16.msra.mxu0 0
    %1265 = vmatprep.subr.bf16.mxu0 0
    %1266 = vmatpush2.bf16.msra.mxu0 0
    %1267 = vmatprep.subr.bf16.mxu0 0
    %1268 = vmatpush2.bf16.msra.mxu0 0
    %1269 = vmatprep.subr.bf16.mxu0 0
    %1270 = vmatpush2.bf16.msra.mxu0 0
    %1271 = vmatprep.subr.bf16.mxu0 0
    %1272 = vmatpush2.bf16.msra.mxu0 0
    %1273 = vmatprep.subr.bf16.mxu0 0
    %1274 = vmatpush2.bf16.msra.mxu0 0
    %1275 = vmatprep.subr.bf16.mxu0 0
    %1276 = vmatpush2.bf16.msra.mxu0 0
    %1277 = vmatprep.subr.bf16.mxu0 0
    %1278 = vmatpush2.bf16.msra.mxu0 0
    %1279 = vmatprep.mubr.bf16.mxu0 0
    %1280 = vmatmul.mubr.bf16.gmra.mxu0 %v1204
    %v1281 = vpop.f32.mrf.mxu0
    %v1282 = vadd.f32 %v84, %v1281
    %v1283 = vpop.f32.mrf.mxu0
    %v1284 = vadd.f32 %v88, %v1283
    %v1285 = vpop.f32.mrf.mxu0
    %v1286 = vpop.f32.mrf.mxu0
    %1287 = vdwg.mxu0
    %v1288 = vmax.f32 %v1241, 0.0
    %v1289 = vmax.f32 %v1243, 0.0
    %v1290 = vmax.f32 %v1282, 0.0
    %v1291 = vmax.f32 %v1284, 0.0
    %v1292 = vpack.c.bf16 %v1288, %v1288
    %v1293 = vpack.c.bf16 %v1289, %v1289
    %v1294 = vpack.c.bf16 %v1290, %v1290
    %v1295 = vpack.c.bf16 %v1291, %v1291
    %v1300 = vcombine.low %v1292, %v1293
    %v1301 = vcombine.low %v1294, %v1295
    %v1303 = vunpack.c.l.s4 1966171168
    %v1304 = vunpack.c.0.s8 %v1303
    %v1305 = vlaneseq
    %v1306 = vshrl.u32 %v1305, 7
    %v1307 = vsub.s32 %v1304, %v1306
    %v1308 = vrot.slane %v1300, %v1307
    %v1310 = vunpack.c.l.s4 1966171168
    %v1311 = vunpack.c.0.s8 %v1310
    %v1312 = vlaneseq
    %v1313 = vshrl.u32 %v1312, 7
    %v1314 = vsub.s32 %v1311, %v1313
    %v1315 = vrot.slane %v1301, %v1314
    %v1316 = vcombine.low %v1308, %v1315
    %v1318 = vunpack.c.l.s4 1966171168
    %v1319 = vunpack.c.0.s8 %v1318
    %v1320 = vlaneseq
    %v1321 = vshrl.u32 %v1320, 7
    %v1322 = vsub.s32 %v1319, %v1321
    %v1323 = vrot.slane %v1316, %v1322
    %s1325 = scalar_lea.vmem [#allocation2], 32
    %1326 = vst [vmem:[%s1325] sm:$0xf] %v1323
    %v1327 = vld [vmem:[%s1190] sm:$0x3]
    %s1328 = scalar_lea.vmem %s0, 34
    %v1329 = vld [vmem:[%s1328] sm:$0x3]
    %s1330 = scalar_lea.vmem %s0, 36
    %v1331 = vld [vmem:[%s1330] sm:$0x3]
    %1333 = vrot.lane.b32.xlu0 %v1329, 30
    %v1334 = vpop.permute.xlu0 %1333
    %1337 = vrot.lane.b32.xlu0 %v1331, 60
    %v1338 = vpop.permute.xlu0 %1337
    %v1340 = vsel %vm67, %v1327, %v1334
    %v1341 = vsel %vm69, %v1340, %v1338
    %v1342 = vpack.c.bf16 %v1341, %v1341
    %v1344 = vsel %vm209, %v1342, 0
    %1346 = vmatprep.subr.bf16.mxu0 0
    %1347 = vmatpush1.bf16.msra.mxu0 0
    %1348 = vmatprep.subr.bf16.mxu0 0
    %1349 = vmatpush1.bf16.msra.mxu0 0
    %1350 = vmatprep.subr.bf16.mxu0 %v218
    %1351 = vmatpush1.bf16.msra.mxu0 %v215
    %1352 = vmatprep.subr.bf16.mxu0 %v182
    %1353 = vmatpush1.bf16.msra.mxu0 %v181
    %1354 = vmatprep.subr.bf16.mxu0 %v178
    %1355 = vmatpush1.bf16.msra.mxu0 %v177
    %1356 = vmatprep.subr.bf16.mxu0 %v174
    %1357 = vmatpush1.bf16.msra.mxu0 %v173
    %1358 = vmatprep.subr.bf16.mxu0 %v170
    %1359 = vmatpush1.bf16.msra.mxu0 %v169
    %1360 = vmatprep.subr.bf16.mxu0 %v166
    %1361 = vmatpush1.bf16.msra.mxu0 %v165
    %1362 = vmatprep.subr.bf16.mxu0 0
    %1363 = vmatpush2.bf16.msra.mxu0 0
    %1364 = vmatprep.subr.bf16.mxu0 0
    %1365 = vmatpush2.bf16.msra.mxu0 0
    %1366 = vmatprep.subr.bf16.mxu0 0
    %1367 = vmatpush2.bf16.msra.mxu0 0
    %1368 = vmatprep.subr.bf16.mxu0 0
    %1369 = vmatpush2.bf16.msra.mxu0 0
    %1370 = vmatprep.subr.bf16.mxu0 0
    %1371 = vmatpush2.bf16.msra.mxu0 0
    %1372 = vmatprep.subr.bf16.mxu0 0
    %1373 = vmatpush2.bf16.msra.mxu0 0
    %1374 = vmatprep.subr.bf16.mxu0 0
    %1375 = vmatpush2.bf16.msra.mxu0 0
    %1376 = vmatprep.subr.bf16.mxu0 0
    %1377 = vmatpush2.bf16.msra.mxu0 0
    %1378 = vmatprep.mubr.bf16.mxu0 0
    %1379 = vmatmul.mubr.bf16.gmra.mxu0 %v1344
    %v1380 = vpop.f32.mrf.mxu0
    %v1381 = vadd.f32 %v76, %v1380
    %v1382 = vpop.f32.mrf.mxu0
    %v1383 = vadd.f32 %v80, %v1382
    %v1384 = vpop.f32.mrf.mxu0
    %v1385 = vpop.f32.mrf.mxu0
    %1386 = vdwg.mxu0
    %1387 = vmatprep.subr.bf16.mxu0 0
    %1388 = vmatpush1.bf16.msra.mxu0 0
    %1389 = vmatprep.subr.bf16.mxu0 0
    %1390 = vmatpush1.bf16.msra.mxu0 0
    %1391 = vmatprep.subr.bf16.mxu0 %v224
    %1392 = vmatpush1.bf16.msra.mxu0 %v221
    %1393 = vmatprep.subr.bf16.mxu0 %v184
    %1394 = vmatpush1.bf16.msra.mxu0 %v183
    %1395 = vmatprep.subr.bf16.mxu0 %v180
    %1396 = vmatpush1.bf16.msra.mxu0 %v179
    %1397 = vmatprep.subr.bf16.mxu0 %v176
    %1398 = vmatpush1.bf16.msra.mxu0 %v175
    %1399 = vmatprep.subr.bf16.mxu0 %v172
    %1400 = vmatpush1.bf16.msra.mxu0 %v171
    %1401 = vmatprep.subr.bf16.mxu0 %v168
    %1402 = vmatpush1.bf16.msra.mxu0 %v167
    %1403 = vmatprep.subr.bf16.mxu0 0
    %1404 = vmatpush2.bf16.msra.mxu0 0
    %1405 = vmatprep.subr.bf16.mxu0 0
    %1406 = vmatpush2.bf16.msra.mxu0 0
    %1407 = vmatprep.subr.bf16.mxu0 0
    %1408 = vmatpush2.bf16.msra.mxu0 0
    %1409 = vmatprep.subr.bf16.mxu0 0
    %1410 = vmatpush2.bf16.msra.mxu0 0
    %1411 = vmatprep.subr.bf16.mxu0 0
    %1412 = vmatpush2.bf16.msra.mxu0 0
    %1413 = vmatprep.subr.bf16.mxu0 0
    %1414 = vmatpush2.bf16.msra.mxu0 0
    %1415 = vmatprep.subr.bf16.mxu0 0
    %1416 = vmatpush2.bf16.msra.mxu0 0
    %1417 = vmatprep.subr.bf16.mxu0 0
    %1418 = vmatpush2.bf16.msra.mxu0 0
    %1419 = vmatprep.mubr.bf16.mxu0 0
    %1420 = vmatmul.mubr.bf16.gmra.mxu0 %v1344
    %v1421 = vpop.f32.mrf.mxu0
    %v1422 = vadd.f32 %v84, %v1421
    %v1423 = vpop.f32.mrf.mxu0
    %v1424 = vadd.f32 %v88, %v1423
    %v1425 = vpop.f32.mrf.mxu0
    %v1426 = vpop.f32.mrf.mxu0
    %1427 = vdwg.mxu0
    %v1428 = vmax.f32 %v1381, 0.0
    %v1429 = vmax.f32 %v1383, 0.0
    %v1430 = vmax.f32 %v1422, 0.0
    %v1431 = vmax.f32 %v1424, 0.0
    %v1432 = vpack.c.bf16 %v1428, %v1428
    %v1433 = vpack.c.bf16 %v1429, %v1429
    %v1434 = vpack.c.bf16 %v1430, %v1430
    %v1435 = vpack.c.bf16 %v1431, %v1431
    %v1440 = vcombine.low %v1432, %v1433
    %v1441 = vcombine.low %v1434, %v1435
    %v1443 = vunpack.c.l.s4 1966171168
    %v1444 = vunpack.c.0.s8 %v1443
    %v1445 = vlaneseq
    %v1446 = vshrl.u32 %v1445, 7
    %v1447 = vsub.s32 %v1444, %v1446
    %v1448 = vrot.slane %v1440, %v1447
    %v1450 = vunpack.c.l.s4 1966171168
    %v1451 = vunpack.c.0.s8 %v1450
    %v1452 = vlaneseq
    %v1453 = vshrl.u32 %v1452, 7
    %v1454 = vsub.s32 %v1451, %v1453
    %v1455 = vrot.slane %v1441, %v1454
    %v1456 = vcombine.low %v1448, %v1455
    %v1458 = vunpack.c.l.s4 1966171168
    %v1459 = vunpack.c.0.s8 %v1458
    %v1460 = vlaneseq
    %v1461 = vshrl.u32 %v1460, 7
    %v1462 = vsub.s32 %v1459, %v1461
    %v1463 = vrot.slane %v1456, %v1462
    %s1465 = scalar_lea.vmem [#allocation2], 36
    %1466 = vst [vmem:[%s1465] sm:$0xf] %v1463
    %v1467 = vld [vmem:[%s1330] sm:$0x3]
    %s1468 = scalar_lea.vmem %s0, 38
    %v1469 = vld [vmem:[%s1468] sm:$0x3]
    %s1470 = scalar_lea.vmem %s0, 40
    %v1471 = vld [vmem:[%s1470] sm:$0x3]
    %1473 = vrot.lane.b32.xlu0 %v1469, 30
    %v1474 = vpop.permute.xlu0 %1473
    %1477 = vrot.lane.b32.xlu0 %v1471, 60
    %v1478 = vpop.permute.xlu0 %1477
    %v1480 = vsel %vm67, %v1467, %v1474
    %v1481 = vsel %vm69, %v1480, %v1478
    %v1482 = vpack.c.bf16 %v1481, %v1481
    %v1484 = vsel %vm209, %v1482, 0
    %1486 = vmatprep.subr.bf16.mxu0 0
    %1487 = vmatpush1.bf16.msra.mxu0 0
    %1488 = vmatprep.subr.bf16.mxu0 0
    %1489 = vmatpush1.bf16.msra.mxu0 0
    %1490 = vmatprep.subr.bf16.mxu0 %v218
    %1491 = vmatpush1.bf16.msra.mxu0 %v215
    %1492 = vmatprep.subr.bf16.mxu0 %v182
    %1493 = vmatpush1.bf16.msra.mxu0 %v181
    %1494 = vmatprep.subr.bf16.mxu0 %v178
    %1495 = vmatpush1.bf16.msra.mxu0 %v177
    %1496 = vmatprep.subr.bf16.mxu0 %v174
    %1497 = vmatpush1.bf16.msra.mxu0 %v173
    %1498 = vmatprep.subr.bf16.mxu0 %v170
    %1499 = vmatpush1.bf16.msra.mxu0 %v169
    %1500 = vmatprep.subr.bf16.mxu0 %v166
    %1501 = vmatpush1.bf16.msra.mxu0 %v165
    %1502 = vmatprep.subr.bf16.mxu0 0
    %1503 = vmatpush2.bf16.msra.mxu0 0
    %1504 = vmatprep.subr.bf16.mxu0 0
    %1505 = vmatpush2.bf16.msra.mxu0 0
    %1506 = vmatprep.subr.bf16.mxu0 0
    %1507 = vmatpush2.bf16.msra.mxu0 0
    %1508 = vmatprep.subr.bf16.mxu0 0
    %1509 = vmatpush2.bf16.msra.mxu0 0
    %1510 = vmatprep.subr.bf16.mxu0 0
    %1511 = vmatpush2.bf16.msra.mxu0 0
    %1512 = vmatprep.subr.bf16.mxu0 0
    %1513 = vmatpush2.bf16.msra.mxu0 0
    %1514 = vmatprep.subr.bf16.mxu0 0
    %1515 = vmatpush2.bf16.msra.mxu0 0
    %1516 = vmatprep.subr.bf16.mxu0 0
    %1517 = vmatpush2.bf16.msra.mxu0 0
    %1518 = vmatprep.mubr.bf16.mxu0 0
    %1519 = vmatmul.mubr.bf16.gmra.mxu0 %v1484
    %v1520 = vpop.f32.mrf.mxu0
    %v1521 = vadd.f32 %v76, %v1520
    %v1522 = vpop.f32.mrf.mxu0
    %v1523 = vadd.f32 %v80, %v1522
    %v1524 = vpop.f32.mrf.mxu0
    %v1525 = vpop.f32.mrf.mxu0
    %1526 = vdwg.mxu0
    %1527 = vmatprep.subr.bf16.mxu0 0
    %1528 = vmatpush1.bf16.msra.mxu0 0
    %1529 = vmatprep.subr.bf16.mxu0 0
    %1530 = vmatpush1.bf16.msra.mxu0 0
    %1531 = vmatprep.subr.bf16.mxu0 %v224
    %1532 = vmatpush1.bf16.msra.mxu0 %v221
    %1533 = vmatprep.subr.bf16.mxu0 %v184
    %1534 = vmatpush1.bf16.msra.mxu0 %v183
    %1535 = vmatprep.subr.bf16.mxu0 %v180
    %1536 = vmatpush1.bf16.msra.mxu0 %v179
    %1537 = vmatprep.subr.bf16.mxu0 %v176
    %1538 = vmatpush1.bf16.msra.mxu0 %v175
    %1539 = vmatprep.subr.bf16.mxu0 %v172
    %1540 = vmatpush1.bf16.msra.mxu0 %v171
    %1541 = vmatprep.subr.bf16.mxu0 %v168
    %1542 = vmatpush1.bf16.msra.mxu0 %v167
    %1543 = vmatprep.subr.bf16.mxu0 0
    %1544 = vmatpush2.bf16.msra.mxu0 0
    %1545 = vmatprep.subr.bf16.mxu0 0
    %1546 = vmatpush2.bf16.msra.mxu0 0
    %1547 = vmatprep.subr.bf16.mxu0 0
    %1548 = vmatpush2.bf16.msra.mxu0 0
    %1549 = vmatprep.subr.bf16.mxu0 0
    %1550 = vmatpush2.bf16.msra.mxu0 0
    %1551 = vmatprep.subr.bf16.mxu0 0
    %1552 = vmatpush2.bf16.msra.mxu0 0
    %1553 = vmatprep.subr.bf16.mxu0 0
    %1554 = vmatpush2.bf16.msra.mxu0 0
    %1555 = vmatprep.subr.bf16.mxu0 0
    %1556 = vmatpush2.bf16.msra.mxu0 0
    %1557 = vmatprep.subr.bf16.mxu0 0
    %1558 = vmatpush2.bf16.msra.mxu0 0
    %1559 = vmatprep.mubr.bf16.mxu0 0
    %1560 = vmatmul.mubr.bf16.gmra.mxu0 %v1484
    %v1561 = vpop.f32.mrf.mxu0
    %v1562 = vadd.f32 %v84, %v1561
    %v1563 = vpop.f32.mrf.mxu0
    %v1564 = vadd.f32 %v88, %v1563
    %v1565 = vpop.f32.mrf.mxu0
    %v1566 = vpop.f32.mrf.mxu0
    %1567 = vdwg.mxu0
    %v1568 = vmax.f32 %v1521, 0.0
    %v1569 = vmax.f32 %v1523, 0.0
    %v1570 = vmax.f32 %v1562, 0.0
    %v1571 = vmax.f32 %v1564, 0.0
    %v1572 = vpack.c.bf16 %v1568, %v1568
    %v1573 = vpack.c.bf16 %v1569, %v1569
    %v1574 = vpack.c.bf16 %v1570, %v1570
    %v1575 = vpack.c.bf16 %v1571, %v1571
    %v1580 = vcombine.low %v1572, %v1573
    %v1581 = vcombine.low %v1574, %v1575
    %v1583 = vunpack.c.l.s4 1966171168
    %v1584 = vunpack.c.0.s8 %v1583
    %v1585 = vlaneseq
    %v1586 = vshrl.u32 %v1585, 7
    %v1587 = vsub.s32 %v1584, %v1586
    %v1588 = vrot.slane %v1580, %v1587
    %v1590 = vunpack.c.l.s4 1966171168
    %v1591 = vunpack.c.0.s8 %v1590
    %v1592 = vlaneseq
    %v1593 = vshrl.u32 %v1592, 7
    %v1594 = vsub.s32 %v1591, %v1593
    %v1595 = vrot.slane %v1581, %v1594
    %v1596 = vcombine.low %v1588, %v1595
    %v1598 = vunpack.c.l.s4 1966171168
    %v1599 = vunpack.c.0.s8 %v1598
    %v1600 = vlaneseq
    %v1601 = vshrl.u32 %v1600, 7
    %v1602 = vsub.s32 %v1599, %v1601
    %v1603 = vrot.slane %v1596, %v1602
    %s1605 = scalar_lea.vmem [#allocation2], 40
    %1606 = vst [vmem:[%s1605] sm:$0xf] %v1603
    %v1607 = vld [vmem:[%s1470] sm:$0x3]
    %s1608 = scalar_lea.vmem %s0, 42
    %v1609 = vld [vmem:[%s1608] sm:$0x3]
    %s1610 = scalar_lea.vmem %s0, 44
    %v1611 = vld [vmem:[%s1610] sm:$0x3]
    %1613 = vrot.lane.b32.xlu0 %v1609, 30
    %v1614 = vpop.permute.xlu0 %1613
    %1617 = vrot.lane.b32.xlu0 %v1611, 60
    %v1618 = vpop.permute.xlu0 %1617
    %v1620 = vsel %vm67, %v1607, %v1614
    %v1621 = vsel %vm69, %v1620, %v1618
    %v1622 = vpack.c.bf16 %v1621, %v1621
    %v1624 = vsel %vm209, %v1622, 0
    %1626 = vmatprep.subr.bf16.mxu0 0
    %1627 = vmatpush1.bf16.msra.mxu0 0
    %1628 = vmatprep.subr.bf16.mxu0 0
    %1629 = vmatpush1.bf16.msra.mxu0 0
    %1630 = vmatprep.subr.bf16.mxu0 %v218
    %1631 = vmatpush1.bf16.msra.mxu0 %v215
    %1632 = vmatprep.subr.bf16.mxu0 %v182
    %1633 = vmatpush1.bf16.msra.mxu0 %v181
    %1634 = vmatprep.subr.bf16.mxu0 %v178
    %1635 = vmatpush1.bf16.msra.mxu0 %v177
    %1636 = vmatprep.subr.bf16.mxu0 %v174
    %1637 = vmatpush1.bf16.msra.mxu0 %v173
    %1638 = vmatprep.subr.bf16.mxu0 %v170
    %1639 = vmatpush1.bf16.msra.mxu0 %v169
    %1640 = vmatprep.subr.bf16.mxu0 %v166
    %1641 = vmatpush1.bf16.msra.mxu0 %v165
    %1642 = vmatprep.subr.bf16.mxu0 0
    %1643 = vmatpush2.bf16.msra.mxu0 0
    %1644 = vmatprep.subr.bf16.mxu0 0
    %1645 = vmatpush2.bf16.msra.mxu0 0
    %1646 = vmatprep.subr.bf16.mxu0 0
    %1647 = vmatpush2.bf16.msra.mxu0 0
    %1648 = vmatprep.subr.bf16.mxu0 0
    %1649 = vmatpush2.bf16.msra.mxu0 0
    %1650 = vmatprep.subr.bf16.mxu0 0
    %1651 = vmatpush2.bf16.msra.mxu0 0
    %1652 = vmatprep.subr.bf16.mxu0 0
    %1653 = vmatpush2.bf16.msra.mxu0 0
    %1654 = vmatprep.subr.bf16.mxu0 0
    %1655 = vmatpush2.bf16.msra.mxu0 0
    %1656 = vmatprep.subr.bf16.mxu0 0
    %1657 = vmatpush2.bf16.msra.mxu0 0
    %1658 = vmatprep.mubr.bf16.mxu0 0
    %1659 = vmatmul.mubr.bf16.gmra.mxu0 %v1624
    %v1660 = vpop.f32.mrf.mxu0
    %v1661 = vadd.f32 %v76, %v1660
    %v1662 = vpop.f32.mrf.mxu0
    %v1663 = vadd.f32 %v80, %v1662
    %v1664 = vpop.f32.mrf.mxu0
    %v1665 = vpop.f32.mrf.mxu0
    %1666 = vdwg.mxu0
    %1667 = vmatprep.subr.bf16.mxu0 0
    %1668 = vmatpush1.bf16.msra.mxu0 0
    %1669 = vmatprep.subr.bf16.mxu0 0
    %1670 = vmatpush1.bf16.msra.mxu0 0
    %1671 = vmatprep.subr.bf16.mxu0 %v224
    %1672 = vmatpush1.bf16.msra.mxu0 %v221
    %1673 = vmatprep.subr.bf16.mxu0 %v184
    %1674 = vmatpush1.bf16.msra.mxu0 %v183
    %1675 = vmatprep.subr.bf16.mxu0 %v180
    %1676 = vmatpush1.bf16.msra.mxu0 %v179
    %1677 = vmatprep.subr.bf16.mxu0 %v176
    %1678 = vmatpush1.bf16.msra.mxu0 %v175
    %1679 = vmatprep.subr.bf16.mxu0 %v172
    %1680 = vmatpush1.bf16.msra.mxu0 %v171
    %1681 = vmatprep.subr.bf16.mxu0 %v168
    %1682 = vmatpush1.bf16.msra.mxu0 %v167
    %1683 = vmatprep.subr.bf16.mxu0 0
    %1684 = vmatpush2.bf16.msra.mxu0 0
    %1685 = vmatprep.subr.bf16.mxu0 0
    %1686 = vmatpush2.bf16.msra.mxu0 0
    %1687 = vmatprep.subr.bf16.mxu0 0
    %1688 = vmatpush2.bf16.msra.mxu0 0
    %1689 = vmatprep.subr.bf16.mxu0 0
    %1690 = vmatpush2.bf16.msra.mxu0 0
    %1691 = vmatprep.subr.bf16.mxu0 0
    %1692 = vmatpush2.bf16.msra.mxu0 0
    %1693 = vmatprep.subr.bf16.mxu0 0
    %1694 = vmatpush2.bf16.msra.mxu0 0
    %1695 = vmatprep.subr.bf16.mxu0 0
    %1696 = vmatpush2.bf16.msra.mxu0 0
    %1697 = vmatprep.subr.bf16.mxu0 0
    %1698 = vmatpush2.bf16.msra.mxu0 0
    %1699 = vmatprep.mubr.bf16.mxu0 0
    %1700 = vmatmul.mubr.bf16.gmra.mxu0 %v1624
    %v1701 = vpop.f32.mrf.mxu0
    %v1702 = vadd.f32 %v84, %v1701
    %v1703 = vpop.f32.mrf.mxu0
    %v1704 = vadd.f32 %v88, %v1703
    %v1705 = vpop.f32.mrf.mxu0
    %v1706 = vpop.f32.mrf.mxu0
    %1707 = vdwg.mxu0
    %v1708 = vmax.f32 %v1661, 0.0
    %v1709 = vmax.f32 %v1663, 0.0
    %v1710 = vmax.f32 %v1702, 0.0
    %v1711 = vmax.f32 %v1704, 0.0
    %v1712 = vpack.c.bf16 %v1708, %v1708
    %v1713 = vpack.c.bf16 %v1709, %v1709
    %v1714 = vpack.c.bf16 %v1710, %v1710
    %v1715 = vpack.c.bf16 %v1711, %v1711
    %v1720 = vcombine.low %v1712, %v1713
    %v1721 = vcombine.low %v1714, %v1715
    %v1723 = vunpack.c.l.s4 1966171168
    %v1724 = vunpack.c.0.s8 %v1723
    %v1725 = vlaneseq
    %v1726 = vshrl.u32 %v1725, 7
    %v1727 = vsub.s32 %v1724, %v1726
    %v1728 = vrot.slane %v1720, %v1727
    %v1730 = vunpack.c.l.s4 1966171168
    %v1731 = vunpack.c.0.s8 %v1730
    %v1732 = vlaneseq
    %v1733 = vshrl.u32 %v1732, 7
    %v1734 = vsub.s32 %v1731, %v1733
    %v1735 = vrot.slane %v1721, %v1734
    %v1736 = vcombine.low %v1728, %v1735
    %v1738 = vunpack.c.l.s4 1966171168
    %v1739 = vunpack.c.0.s8 %v1738
    %v1740 = vlaneseq
    %v1741 = vshrl.u32 %v1740, 7
    %v1742 = vsub.s32 %v1739, %v1741
    %v1743 = vrot.slane %v1736, %v1742
    %s1745 = scalar_lea.vmem [#allocation2], 44
    %1746 = vst [vmem:[%s1745] sm:$0xf] %v1743
    %v1747 = vld [vmem:[%s1610] sm:$0x3]
    %s1748 = scalar_lea.vmem %s0, 46
    %v1749 = vld [vmem:[%s1748] sm:$0x3]
    %s1750 = scalar_lea.vmem %s0, 48
    %v1751 = vld [vmem:[%s1750] sm:$0x3]
    %1753 = vrot.lane.b32.xlu0 %v1749, 30
    %v1754 = vpop.permute.xlu0 %1753
    %1757 = vrot.lane.b32.xlu0 %v1751, 60
    %v1758 = vpop.permute.xlu0 %1757
    %v1760 = vsel %vm67, %v1747, %v1754
    %v1761 = vsel %vm69, %v1760, %v1758
    %v1762 = vpack.c.bf16 %v1761, %v1761
    %v1764 = vsel %vm209, %v1762, 0
    %1766 = vmatprep.subr.bf16.mxu0 0
    %1767 = vmatpush1.bf16.msra.mxu0 0
    %1768 = vmatprep.subr.bf16.mxu0 0
    %1769 = vmatpush1.bf16.msra.mxu0 0
    %1770 = vmatprep.subr.bf16.mxu0 %v218
    %1771 = vmatpush1.bf16.msra.mxu0 %v215
    %1772 = vmatprep.subr.bf16.mxu0 %v182
    %1773 = vmatpush1.bf16.msra.mxu0 %v181
    %1774 = vmatprep.subr.bf16.mxu0 %v178
    %1775 = vmatpush1.bf16.msra.mxu0 %v177
    %1776 = vmatprep.subr.bf16.mxu0 %v174
    %1777 = vmatpush1.bf16.msra.mxu0 %v173
    %1778 = vmatprep.subr.bf16.mxu0 %v170
    %1779 = vmatpush1.bf16.msra.mxu0 %v169
    %1780 = vmatprep.subr.bf16.mxu0 %v166
    %1781 = vmatpush1.bf16.msra.mxu0 %v165
    %1782 = vmatprep.subr.bf16.mxu0 0
    %1783 = vmatpush2.bf16.msra.mxu0 0
    %1784 = vmatprep.subr.bf16.mxu0 0
    %1785 = vmatpush2.bf16.msra.mxu0 0
    %1786 = vmatprep.subr.bf16.mxu0 0
    %1787 = vmatpush2.bf16.msra.mxu0 0
    %1788 = vmatprep.subr.bf16.mxu0 0
    %1789 = vmatpush2.bf16.msra.mxu0 0
    %1790 = vmatprep.subr.bf16.mxu0 0
    %1791 = vmatpush2.bf16.msra.mxu0 0
    %1792 = vmatprep.subr.bf16.mxu0 0
    %1793 = vmatpush2.bf16.msra.mxu0 0
    %1794 = vmatprep.subr.bf16.mxu0 0
    %1795 = vmatpush2.bf16.msra.mxu0 0
    %1796 = vmatprep.subr.bf16.mxu0 0
    %1797 = vmatpush2.bf16.msra.mxu0 0
    %1798 = vmatprep.mubr.bf16.mxu0 0
    %1799 = vmatmul.mubr.bf16.gmra.mxu0 %v1764
    %v1800 = vpop.f32.mrf.mxu0
    %v1801 = vadd.f32 %v76, %v1800
    %v1802 = vpop.f32.mrf.mxu0
    %v1803 = vadd.f32 %v80, %v1802
    %v1804 = vpop.f32.mrf.mxu0
    %v1805 = vpop.f32.mrf.mxu0
    %1806 = vdwg.mxu0
    %1807 = vmatprep.subr.bf16.mxu0 0
    %1808 = vmatpush1.bf16.msra.mxu0 0
    %1809 = vmatprep.subr.bf16.mxu0 0
    %1810 = vmatpush1.bf16.msra.mxu0 0
    %1811 = vmatprep.subr.bf16.mxu0 %v224
    %1812 = vmatpush1.bf16.msra.mxu0 %v221
    %1813 = vmatprep.subr.bf16.mxu0 %v184
    %1814 = vmatpush1.bf16.msra.mxu0 %v183
    %1815 = vmatprep.subr.bf16.mxu0 %v180
    %1816 = vmatpush1.bf16.msra.mxu0 %v179
    %1817 = vmatprep.subr.bf16.mxu0 %v176
    %1818 = vmatpush1.bf16.msra.mxu0 %v175
    %1819 = vmatprep.subr.bf16.mxu0 %v172
    %1820 = vmatpush1.bf16.msra.mxu0 %v171
    %1821 = vmatprep.subr.bf16.mxu0 %v168
    %1822 = vmatpush1.bf16.msra.mxu0 %v167
    %1823 = vmatprep.subr.bf16.mxu0 0
    %1824 = vmatpush2.bf16.msra.mxu0 0
    %1825 = vmatprep.subr.bf16.mxu0 0
    %1826 = vmatpush2.bf16.msra.mxu0 0
    %1827 = vmatprep.subr.bf16.mxu0 0
    %1828 = vmatpush2.bf16.msra.mxu0 0
    %1829 = vmatprep.subr.bf16.mxu0 0
    %1830 = vmatpush2.bf16.msra.mxu0 0
    %1831 = vmatprep.subr.bf16.mxu0 0
    %1832 = vmatpush2.bf16.msra.mxu0 0
    %1833 = vmatprep.subr.bf16.mxu0 0
    %1834 = vmatpush2.bf16.msra.mxu0 0
    %1835 = vmatprep.subr.bf16.mxu0 0
    %1836 = vmatpush2.bf16.msra.mxu0 0
    %1837 = vmatprep.subr.bf16.mxu0 0
    %1838 = vmatpush2.bf16.msra.mxu0 0
    %1839 = vmatprep.mubr.bf16.mxu0 0
    %1840 = vmatmul.mubr.bf16.gmra.mxu0 %v1764
    %v1841 = vpop.f32.mrf.mxu0
    %v1842 = vadd.f32 %v84, %v1841
    %v1843 = vpop.f32.mrf.mxu0
    %v1844 = vadd.f32 %v88, %v1843
    %v1845 = vpop.f32.mrf.mxu0
    %v1846 = vpop.f32.mrf.mxu0
    %1847 = vdwg.mxu0
    %v1848 = vmax.f32 %v1801, 0.0
    %v1849 = vmax.f32 %v1803, 0.0
    %v1850 = vmax.f32 %v1842, 0.0
    %v1851 = vmax.f32 %v1844, 0.0
    %v1852 = vpack.c.bf16 %v1848, %v1848
    %v1853 = vpack.c.bf16 %v1849, %v1849
    %v1854 = vpack.c.bf16 %v1850, %v1850
    %v1855 = vpack.c.bf16 %v1851, %v1851
    %v1860 = vcombine.low %v1852, %v1853
    %v1861 = vcombine.low %v1854, %v1855
    %v1863 = vunpack.c.l.s4 1966171168
    %v1864 = vunpack.c.0.s8 %v1863
    %v1865 = vlaneseq
    %v1866 = vshrl.u32 %v1865, 7
    %v1867 = vsub.s32 %v1864, %v1866
    %v1868 = vrot.slane %v1860, %v1867
    %v1870 = vunpack.c.l.s4 1966171168
    %v1871 = vunpack.c.0.s8 %v1870
    %v1872 = vlaneseq
    %v1873 = vshrl.u32 %v1872, 7
    %v1874 = vsub.s32 %v1871, %v1873
    %v1875 = vrot.slane %v1861, %v1874
    %v1876 = vcombine.low %v1868, %v1875
    %v1878 = vunpack.c.l.s4 1966171168
    %v1879 = vunpack.c.0.s8 %v1878
    %v1880 = vlaneseq
    %v1881 = vshrl.u32 %v1880, 7
    %v1882 = vsub.s32 %v1879, %v1881
    %v1883 = vrot.slane %v1876, %v1882
    %s1885 = scalar_lea.vmem [#allocation2], 48
    %1886 = vst [vmem:[%s1885] sm:$0xf] %v1883
    %v1887 = vld [vmem:[%s1750] sm:$0x3]
    %s1888 = scalar_lea.vmem %s0, 50
    %v1889 = vld [vmem:[%s1888] sm:$0x3]
    %s1890 = scalar_lea.vmem %s0, 52
    %v1891 = vld [vmem:[%s1890] sm:$0x3]
    %1893 = vrot.lane.b32.xlu0 %v1889, 30
    %v1894 = vpop.permute.xlu0 %1893
    %1897 = vrot.lane.b32.xlu0 %v1891, 60
    %v1898 = vpop.permute.xlu0 %1897
    %v1900 = vsel %vm67, %v1887, %v1894
    %v1901 = vsel %vm69, %v1900, %v1898
    %v1902 = vpack.c.bf16 %v1901, %v1901
    %v1904 = vsel %vm209, %v1902, 0
    %1906 = vmatprep.subr.bf16.mxu0 0
    %1907 = vmatpush1.bf16.msra.mxu0 0
    %1908 = vmatprep.subr.bf16.mxu0 0
    %1909 = vmatpush1.bf16.msra.mxu0 0
    %1910 = vmatprep.subr.bf16.mxu0 %v218
    %1911 = vmatpush1.bf16.msra.mxu0 %v215
    %1912 = vmatprep.subr.bf16.mxu0 %v182
    %1913 = vmatpush1.bf16.msra.mxu0 %v181
    %1914 = vmatprep.subr.bf16.mxu0 %v178
    %1915 = vmatpush1.bf16.msra.mxu0 %v177
    %1916 = vmatprep.subr.bf16.mxu0 %v174
    %1917 = vmatpush1.bf16.msra.mxu0 %v173
    %1918 = vmatprep.subr.bf16.mxu0 %v170
    %1919 = vmatpush1.bf16.msra.mxu0 %v169
    %1920 = vmatprep.subr.bf16.mxu0 %v166
    %1921 = vmatpush1.bf16.msra.mxu0 %v165
    %1922 = vmatprep.subr.bf16.mxu0 0
    %1923 = vmatpush2.bf16.msra.mxu0 0
    %1924 = vmatprep.subr.bf16.mxu0 0
    %1925 = vmatpush2.bf16.msra.mxu0 0
    %1926 = vmatprep.subr.bf16.mxu0 0
    %1927 = vmatpush2.bf16.msra.mxu0 0
    %1928 = vmatprep.subr.bf16.mxu0 0
    %1929 = vmatpush2.bf16.msra.mxu0 0
    %1930 = vmatprep.subr.bf16.mxu0 0
    %1931 = vmatpush2.bf16.msra.mxu0 0
    %1932 = vmatprep.subr.bf16.mxu0 0
    %1933 = vmatpush2.bf16.msra.mxu0 0
    %1934 = vmatprep.subr.bf16.mxu0 0
    %1935 = vmatpush2.bf16.msra.mxu0 0
    %1936 = vmatprep.subr.bf16.mxu0 0
    %1937 = vmatpush2.bf16.msra.mxu0 0
    %1938 = vmatprep.mubr.bf16.mxu0 0
    %1939 = vmatmul.mubr.bf16.gmra.mxu0 %v1904
    %v1940 = vpop.f32.mrf.mxu0
    %v1941 = vadd.f32 %v76, %v1940
    %v1942 = vpop.f32.mrf.mxu0
    %v1943 = vadd.f32 %v80, %v1942
    %v1944 = vpop.f32.mrf.mxu0
    %v1945 = vpop.f32.mrf.mxu0
    %1946 = vdwg.mxu0
    %1947 = vmatprep.subr.bf16.mxu0 0
    %1948 = vmatpush1.bf16.msra.mxu0 0
    %1949 = vmatprep.subr.bf16.mxu0 0
    %1950 = vmatpush1.bf16.msra.mxu0 0
    %1951 = vmatprep.subr.bf16.mxu0 %v224
    %1952 = vmatpush1.bf16.msra.mxu0 %v221
    %1953 = vmatprep.subr.bf16.mxu0 %v184
    %1954 = vmatpush1.bf16.msra.mxu0 %v183
    %1955 = vmatprep.subr.bf16.mxu0 %v180
    %1956 = vmatpush1.bf16.msra.mxu0 %v179
    %1957 = vmatprep.subr.bf16.mxu0 %v176
    %1958 = vmatpush1.bf16.msra.mxu0 %v175
    %1959 = vmatprep.subr.bf16.mxu0 %v172
    %1960 = vmatpush1.bf16.msra.mxu0 %v171
    %1961 = vmatprep.subr.bf16.mxu0 %v168
    %1962 = vmatpush1.bf16.msra.mxu0 %v167
    %1963 = vmatprep.subr.bf16.mxu0 0
    %1964 = vmatpush2.bf16.msra.mxu0 0
    %1965 = vmatprep.subr.bf16.mxu0 0
    %1966 = vmatpush2.bf16.msra.mxu0 0
    %1967 = vmatprep.subr.bf16.mxu0 0
    %1968 = vmatpush2.bf16.msra.mxu0 0
    %1969 = vmatprep.subr.bf16.mxu0 0
    %1970 = vmatpush2.bf16.msra.mxu0 0
    %1971 = vmatprep.subr.bf16.mxu0 0
    %1972 = vmatpush2.bf16.msra.mxu0 0
    %1973 = vmatprep.subr.bf16.mxu0 0
    %1974 = vmatpush2.bf16.msra.mxu0 0
    %1975 = vmatprep.subr.bf16.mxu0 0
    %1976 = vmatpush2.bf16.msra.mxu0 0
    %1977 = vmatprep.subr.bf16.mxu0 0
    %1978 = vmatpush2.bf16.msra.mxu0 0
    %1979 = vmatprep.mubr.bf16.mxu0 0
    %1980 = vmatmul.mubr.bf16.gmra.mxu0 %v1904
    %v1981 = vpop.f32.mrf.mxu0
    %v1982 = vadd.f32 %v84, %v1981
    %v1983 = vpop.f32.mrf.mxu0
    %v1984 = vadd.f32 %v88, %v1983
    %v1985 = vpop.f32.mrf.mxu0
    %v1986 = vpop.f32.mrf.mxu0
    %1987 = vdwg.mxu0
    %v1988 = vmax.f32 %v1941, 0.0
    %v1989 = vmax.f32 %v1943, 0.0
    %v1990 = vmax.f32 %v1982, 0.0
    %v1991 = vmax.f32 %v1984, 0.0
    %v1992 = vpack.c.bf16 %v1988, %v1988
    %v1993 = vpack.c.bf16 %v1989, %v1989
    %v1994 = vpack.c.bf16 %v1990, %v1990
    %v1995 = vpack.c.bf16 %v1991, %v1991
    %v2000 = vcombine.low %v1992, %v1993
    %v2001 = vcombine.low %v1994, %v1995
    %v2003 = vunpack.c.l.s4 1966171168
    %v2004 = vunpack.c.0.s8 %v2003
    %v2005 = vlaneseq
    %v2006 = vshrl.u32 %v2005, 7
    %v2007 = vsub.s32 %v2004, %v2006
    %v2008 = vrot.slane %v2000, %v2007
    %v2010 = vunpack.c.l.s4 1966171168
    %v2011 = vunpack.c.0.s8 %v2010
    %v2012 = vlaneseq
    %v2013 = vshrl.u32 %v2012, 7
    %v2014 = vsub.s32 %v2011, %v2013
    %v2015 = vrot.slane %v2001, %v2014
    %v2016 = vcombine.low %v2008, %v2015
    %v2018 = vunpack.c.l.s4 1966171168
    %v2019 = vunpack.c.0.s8 %v2018
    %v2020 = vlaneseq
    %v2021 = vshrl.u32 %v2020, 7
    %v2022 = vsub.s32 %v2019, %v2021
    %v2023 = vrot.slane %v2016, %v2022
    %s2025 = scalar_lea.vmem [#allocation2], 52
    %2026 = vst [vmem:[%s2025] sm:$0xf] %v2023
    %v2027 = vld [vmem:[%s1890] sm:$0x3]
    %s2028 = scalar_lea.vmem %s0, 54
    %v2029 = vld [vmem:[%s2028] sm:$0x3]
    %s2030 = scalar_lea.vmem %s0, 56
    %v2031 = vld [vmem:[%s2030] sm:$0x3]
    %2033 = vrot.lane.b32.xlu0 %v2029, 30
    %v2034 = vpop.permute.xlu0 %2033
    %2037 = vrot.lane.b32.xlu0 %v2031, 60
    %v2038 = vpop.permute.xlu0 %2037
    %v2040 = vsel %vm67, %v2027, %v2034
    %v2041 = vsel %vm69, %v2040, %v2038
    %v2042 = vpack.c.bf16 %v2041, %v2041
    %v2044 = vsel %vm209, %v2042, 0
    %2046 = vmatprep.subr.bf16.mxu0 0
    %2047 = vmatpush1.bf16.msra.mxu0 0
    %2048 = vmatprep.subr.bf16.mxu0 0
    %2049 = vmatpush1.bf16.msra.mxu0 0
    %2050 = vmatprep.subr.bf16.mxu0 %v218
    %2051 = vmatpush1.bf16.msra.mxu0 %v215
    %2052 = vmatprep.subr.bf16.mxu0 %v182
    %2053 = vmatpush1.bf16.msra.mxu0 %v181
    %2054 = vmatprep.subr.bf16.mxu0 %v178
    %2055 = vmatpush1.bf16.msra.mxu0 %v177
    %2056 = vmatprep.subr.bf16.mxu0 %v174
    %2057 = vmatpush1.bf16.msra.mxu0 %v173
    %2058 = vmatprep.subr.bf16.mxu0 %v170
    %2059 = vmatpush1.bf16.msra.mxu0 %v169
    %2060 = vmatprep.subr.bf16.mxu0 %v166
    %2061 = vmatpush1.bf16.msra.mxu0 %v165
    %2062 = vmatprep.subr.bf16.mxu0 0
    %2063 = vmatpush2.bf16.msra.mxu0 0
    %2064 = vmatprep.subr.bf16.mxu0 0
    %2065 = vmatpush2.bf16.msra.mxu0 0
    %2066 = vmatprep.subr.bf16.mxu0 0
    %2067 = vmatpush2.bf16.msra.mxu0 0
    %2068 = vmatprep.subr.bf16.mxu0 0
    %2069 = vmatpush2.bf16.msra.mxu0 0
    %2070 = vmatprep.subr.bf16.mxu0 0
    %2071 = vmatpush2.bf16.msra.mxu0 0
    %2072 = vmatprep.subr.bf16.mxu0 0
    %2073 = vmatpush2.bf16.msra.mxu0 0
    %2074 = vmatprep.subr.bf16.mxu0 0
    %2075 = vmatpush2.bf16.msra.mxu0 0
    %2076 = vmatprep.subr.bf16.mxu0 0
    %2077 = vmatpush2.bf16.msra.mxu0 0
    %2078 = vmatprep.mubr.bf16.mxu0 0
    %2079 = vmatmul.mubr.bf16.gmra.mxu0 %v2044
    %v2080 = vpop.f32.mrf.mxu0
    %v2081 = vadd.f32 %v76, %v2080
    %v2082 = vpop.f32.mrf.mxu0
    %v2083 = vadd.f32 %v80, %v2082
    %v2084 = vpop.f32.mrf.mxu0
    %v2085 = vpop.f32.mrf.mxu0
    %2086 = vdwg.mxu0
    %2087 = vmatprep.subr.bf16.mxu0 0
    %2088 = vmatpush1.bf16.msra.mxu0 0
    %2089 = vmatprep.subr.bf16.mxu0 0
    %2090 = vmatpush1.bf16.msra.mxu0 0
    %2091 = vmatprep.subr.bf16.mxu0 %v224
    %2092 = vmatpush1.bf16.msra.mxu0 %v221
    %2093 = vmatprep.subr.bf16.mxu0 %v184
    %2094 = vmatpush1.bf16.msra.mxu0 %v183
    %2095 = vmatprep.subr.bf16.mxu0 %v180
    %2096 = vmatpush1.bf16.msra.mxu0 %v179
    %2097 = vmatprep.subr.bf16.mxu0 %v176
    %2098 = vmatpush1.bf16.msra.mxu0 %v175
    %2099 = vmatprep.subr.bf16.mxu0 %v172
    %2100 = vmatpush1.bf16.msra.mxu0 %v171
    %2101 = vmatprep.subr.bf16.mxu0 %v168
    %2102 = vmatpush1.bf16.msra.mxu0 %v167
    %2103 = vmatprep.subr.bf16.mxu0 0
    %2104 = vmatpush2.bf16.msra.mxu0 0
    %2105 = vmatprep.subr.bf16.mxu0 0
    %2106 = vmatpush2.bf16.msra.mxu0 0
    %2107 = vmatprep.subr.bf16.mxu0 0
    %2108 = vmatpush2.bf16.msra.mxu0 0
    %2109 = vmatprep.subr.bf16.mxu0 0
    %2110 = vmatpush2.bf16.msra.mxu0 0
    %2111 = vmatprep.subr.bf16.mxu0 0
    %2112 = vmatpush2.bf16.msra.mxu0 0
    %2113 = vmatprep.subr.bf16.mxu0 0
    %2114 = vmatpush2.bf16.msra.mxu0 0
    %2115 = vmatprep.subr.bf16.mxu0 0
    %2116 = vmatpush2.bf16.msra.mxu0 0
    %2117 = vmatprep.subr.bf16.mxu0 0
    %2118 = vmatpush2.bf16.msra.mxu0 0
    %2119 = vmatprep.mubr.bf16.mxu0 0
    %2120 = vmatmul.mubr.bf16.gmra.mxu0 %v2044
    %v2121 = vpop.f32.mrf.mxu0
    %v2122 = vadd.f32 %v84, %v2121
    %v2123 = vpop.f32.mrf.mxu0
    %v2124 = vadd.f32 %v88, %v2123
    %v2125 = vpop.f32.mrf.mxu0
    %v2126 = vpop.f32.mrf.mxu0
    %2127 = vdwg.mxu0
    %v2128 = vmax.f32 %v2081, 0.0
    %v2129 = vmax.f32 %v2083, 0.0
    %v2130 = vmax.f32 %v2122, 0.0
    %v2131 = vmax.f32 %v2124, 0.0
    %v2132 = vpack.c.bf16 %v2128, %v2128
    %v2133 = vpack.c.bf16 %v2129, %v2129
    %v2134 = vpack.c.bf16 %v2130, %v2130
    %v2135 = vpack.c.bf16 %v2131, %v2131
    %v2140 = vcombine.low %v2132, %v2133
    %v2141 = vcombine.low %v2134, %v2135
    %v2143 = vunpack.c.l.s4 1966171168
    %v2144 = vunpack.c.0.s8 %v2143
    %v2145 = vlaneseq
    %v2146 = vshrl.u32 %v2145, 7
    %v2147 = vsub.s32 %v2144, %v2146
    %v2148 = vrot.slane %v2140, %v2147
    %v2150 = vunpack.c.l.s4 1966171168
    %v2151 = vunpack.c.0.s8 %v2150
    %v2152 = vlaneseq
    %v2153 = vshrl.u32 %v2152, 7
    %v2154 = vsub.s32 %v2151, %v2153
    %v2155 = vrot.slane %v2141, %v2154
    %v2156 = vcombine.low %v2148, %v2155
    %v2158 = vunpack.c.l.s4 1966171168
    %v2159 = vunpack.c.0.s8 %v2158
    %v2160 = vlaneseq
    %v2161 = vshrl.u32 %v2160, 7
    %v2162 = vsub.s32 %v2159, %v2161
    %v2163 = vrot.slane %v2156, %v2162
    %s2165 = scalar_lea.vmem [#allocation2], 56
    %2166 = vst [vmem:[%s2165] sm:$0xf] %v2163
    %v2167 = vld [vmem:[%s4] sm:$0xf]
    %v2168 = vld [vmem:[#allocation2] sm:$0xf]
    %v2169 = vld [vmem:[%s3] sm:$0xff]
    %v2170 = vld [vmem:[%s3 + $0x8] sm:$0xff]
    %v2171 = vld [vmem:[%s3 + $0x10] sm:$0xff]
    %v2172 = vld [vmem:[%s3 + $0x18] sm:$0xff]
    %v2173 = vld [vmem:[%s3 + $0x20] sm:$0xff]
    %v2174 = vld [vmem:[%s3 + $0x28] sm:$0xff]
    %v2175 = vld [vmem:[%s3 + $0x30] sm:$0xff]
    %v2176 = vld [vmem:[%s3 + $0x38] sm:$0xff]
    %v2177 = vld [vmem:[%s3 + $0x40] sm:$0xff]
    %v2178 = vld [vmem:[%s3 + $0x48] sm:$0xff]
    %v2179 = vld [vmem:[%s3 + $0x50] sm:$0xff]
    %v2180 = vld [vmem:[%s3 + $0x58] sm:$0xff]
    %v2181 = vld [vmem:[%s3 + $0x60] sm:$0xff]
    %v2182 = vld [vmem:[%s3 + $0x68] sm:$0xff]
    %v2183 = vld [vmem:[%s3 + $0x70] sm:$0xff]
    %v2184 = vld [vmem:[%s3 + $0x78] sm:$0xff]
    %v2185 = vld [vmem:[%s3 + $0x80] sm:$0xff]
    %v2186 = vld [vmem:[%s3 + $0x88] sm:$0xff]
    %v2187 = vld [vmem:[%s3 + $0x90] sm:$0xff]
    %v2188 = vld [vmem:[%s3 + $0x98] sm:$0xff]
    %v2189 = vld [vmem:[%s3 + $0xa0] sm:$0xff]
    %v2190 = vld [vmem:[%s3 + $0xa8] sm:$0xff]
    %v2191 = vld [vmem:[%s3 + $0xb0] sm:$0xff]
    %v2192 = vld [vmem:[%s3 + $0xb8] sm:$0xff]
    %v2193 = vld [vmem:[%s3 + $0xc0] sm:$0xff]
    %v2194 = vld [vmem:[%s3 + $0xc8] sm:$0xff]
    %v2195 = vld [vmem:[%s3 + $0xd0] sm:$0xff]
    %v2196 = vld [vmem:[%s3 + $0xd8] sm:$0xff]
    %v2197 = vld [vmem:[%s3 + $0xe0] sm:$0xff]
    %v2198 = vld [vmem:[%s3 + $0xe8] sm:$0xff]
    %v2199 = vld [vmem:[%s3 + $0xf0] sm:$0xff]
    %v2200 = vld [vmem:[%s3 + $0xf8] sm:$0xff]
    %v2201 = vld [vmem:[%s3 + $0x100] sm:$0xff]
    %v2202 = vld [vmem:[%s3 + $0x108] sm:$0xff]
    %v2203 = vld [vmem:[%s3 + $0x110] sm:$0xff]
    %v2204 = vld [vmem:[%s3 + $0x118] sm:$0xff]
    %v2205 = vld [vmem:[%s3 + $0x120] sm:$0xff]
    %v2206 = vld [vmem:[%s3 + $0x128] sm:$0xff]
    %v2207 = vld [vmem:[%s3 + $0x130] sm:$0xff]
    %v2208 = vld [vmem:[%s3 + $0x138] sm:$0xff]
    %v2209 = vld [vmem:[%s3 + $0x140] sm:$0xff]
    %v2210 = vld [vmem:[%s3 + $0x148] sm:$0xff]
    %v2211 = vld [vmem:[%s3 + $0x150] sm:$0xff]
    %v2212 = vld [vmem:[%s3 + $0x158] sm:$0xff]
    %v2213 = vld [vmem:[%s3 + $0x160] sm:$0xff]
    %v2214 = vld [vmem:[%s3 + $0x168] sm:$0xff]
    %v2215 = vld [vmem:[%s3 + $0x170] sm:$0xff]
    %v2216 = vld [vmem:[%s3 + $0x178] sm:$0xff]
    %v2217 = vld [vmem:[%s3 + $0x180] sm:$0xff]
    %v2218 = vld [vmem:[%s3 + $0x188] sm:$0xff]
    %v2219 = vld [vmem:[%s3 + $0x190] sm:$0xff]
    %v2220 = vld [vmem:[%s3 + $0x198] sm:$0xff]
    %v2221 = vld [vmem:[%s3 + $0x1a0] sm:$0xff]
    %v2222 = vld [vmem:[%s3 + $0x1a8] sm:$0xff]
    %v2223 = vld [vmem:[%s3 + $0x1b0] sm:$0xff]
    %v2224 = vld [vmem:[%s3 + $0x1b8] sm:$0xff]
    %v2225 = vld [vmem:[%s3 + $0x1c0] sm:$0xff]
    %v2226 = vld [vmem:[%s3 + $0x1c8] sm:$0xff]
    %v2227 = vld [vmem:[%s3 + $0x1d0] sm:$0xff]
    %v2228 = vld [vmem:[%s3 + $0x1d8] sm:$0xff]
    %v2229 = vld [vmem:[%s3 + $0x1e0] sm:$0xff]
    %v2230 = vld [vmem:[%s3 + $0x1e8] sm:$0xff]
    %v2231 = vld [vmem:[%s3 + $0x1f0] sm:$0xff]
    %v2232 = vld [vmem:[%s3 + $0x1f8] sm:$0xff]
    %v2233 = vld [vmem:[%s3 + $0x200] sm:$0xff]
    %v2234 = vld [vmem:[%s3 + $0x208] sm:$0xff]
    %v2235 = vld [vmem:[%s3 + $0x210] sm:$0xff]
    %v2236 = vld [vmem:[%s3 + $0x218] sm:$0xff]
    %v2237 = vld [vmem:[%s3 + $0x220] sm:$0xff]
    %v2238 = vld [vmem:[%s3 + $0x228] sm:$0xff]
    %v2239 = vld [vmem:[%s3 + $0x230] sm:$0xff]
    %v2240 = vld [vmem:[%s3 + $0x238] sm:$0xff]
    %v2241 = vld [vmem:[%s3 + $0x240] sm:$0xff]
    %v2242 = vld [vmem:[%s3 + $0x248] sm:$0xff]
    %v2243 = vld [vmem:[%s3 + $0x250] sm:$0xff]
    %v2244 = vld [vmem:[%s3 + $0x258] sm:$0xff]
    %v2245 = vld [vmem:[%s3 + $0x260] sm:$0xff]
    %v2246 = vld [vmem:[%s3 + $0x268] sm:$0xff]
    %v2247 = vld [vmem:[%s3 + $0x270] sm:$0xff]
    %v2248 = vld [vmem:[%s3 + $0x278] sm:$0xff]
    %v2249 = vld [vmem:[%s3 + $0x280] sm:$0xff]
    %v2250 = vld [vmem:[%s3 + $0x288] sm:$0xff]
    %v2251 = vld [vmem:[%s3 + $0x290] sm:$0xff]
    %v2252 = vld [vmem:[%s3 + $0x298] sm:$0xff]
    %v2253 = vld [vmem:[%s3 + $0x2a0] sm:$0xff]
    %v2254 = vld [vmem:[%s3 + $0x2a8] sm:$0xff]
    %v2255 = vld [vmem:[%s3 + $0x2b0] sm:$0xff]
    %v2256 = vld [vmem:[%s3 + $0x2b8] sm:$0xff]
    %v2257 = vld [vmem:[%s3 + $0x2c0] sm:$0xff]
    %v2258 = vld [vmem:[%s3 + $0x2c8] sm:$0xff]
    %v2259 = vld [vmem:[%s3 + $0x2d0] sm:$0xff]
    %v2260 = vld [vmem:[%s3 + $0x2d8] sm:$0xff]
    %v2261 = vld [vmem:[%s3 + $0x2e0] sm:$0xff]
    %v2262 = vld [vmem:[%s3 + $0x2e8] sm:$0xff]
    %v2263 = vld [vmem:[%s3 + $0x2f0] sm:$0xff]
    %v2264 = vld [vmem:[%s3 + $0x2f8] sm:$0xff]
    %v2265 = vld [vmem:[%s3 + $0x300] sm:$0xff]
    %v2266 = vld [vmem:[%s3 + $0x308] sm:$0xff]
    %v2267 = vld [vmem:[%s3 + $0x310] sm:$0xff]
    %v2268 = vld [vmem:[%s3 + $0x318] sm:$0xff]
    %v2269 = vld [vmem:[%s3 + $0x320] sm:$0xff]
    %v2270 = vld [vmem:[%s3 + $0x328] sm:$0xff]
    %v2271 = vld [vmem:[%s3 + $0x330] sm:$0xff]
    %v2272 = vld [vmem:[%s3 + $0x338] sm:$0xff]
    %v2273 = vld [vmem:[%s3 + $0x340] sm:$0xff]
    %v2274 = vld [vmem:[%s3 + $0x348] sm:$0xff]
    %v2275 = vld [vmem:[%s3 + $0x350] sm:$0xff]
    %v2276 = vld [vmem:[%s3 + $0x358] sm:$0xff]
    %v2277 = vld [vmem:[%s3 + $0x360] sm:$0xff]
    %v2278 = vld [vmem:[%s3 + $0x368] sm:$0xff]
    %v2279 = vld [vmem:[%s3 + $0x370] sm:$0xff]
    %v2280 = vld [vmem:[%s3 + $0x378] sm:$0xff]
    %v2281 = vld [vmem:[%s3 + $0x380] sm:$0xff]
    %v2282 = vld [vmem:[%s3 + $0x388] sm:$0xff]
    %v2283 = vld [vmem:[%s3 + $0x390] sm:$0xff]
    %v2284 = vld [vmem:[%s3 + $0x398] sm:$0xff]
    %v2285 = vld [vmem:[%s3 + $0x3a0] sm:$0xff]
    %v2286 = vld [vmem:[%s3 + $0x3a8] sm:$0xff]
    %v2287 = vld [vmem:[%s3 + $0x3b0] sm:$0xff]
    %v2288 = vld [vmem:[%s3 + $0x3b8] sm:$0xff]
    %v2289 = vld [vmem:[%s3 + $0x3c0] sm:$0xff]
    %v2290 = vld [vmem:[%s3 + $0x3c8] sm:$0xff]
    %v2291 = vld [vmem:[%s3 + $0x3d0] sm:$0xff]
    %v2292 = vld [vmem:[%s3 + $0x3d8] sm:$0xff]
    %v2293 = vld [vmem:[%s3 + $0x3e0] sm:$0xff]
    %v2294 = vld [vmem:[%s3 + $0x3e8] sm:$0xff]
    %v2295 = vld [vmem:[%s3 + $0x3f0] sm:$0xff]
    %v2296 = vld [vmem:[%s3 + $0x3f8] sm:$0xff]
    %v2297 = vld [vmem:[%s345] sm:$0xf]
    %s2298 = scalar_lea.vmem %s3, 1024
    %v2299 = vld [vmem:[%s2298] sm:$0xff]
    %v2300 = vld [vmem:[%s2298 + $0x8] sm:$0xff]
    %v2301 = vld [vmem:[%s2298 + $0x10] sm:$0xff]
    %v2302 = vld [vmem:[%s2298 + $0x18] sm:$0xff]
    %v2303 = vld [vmem:[%s2298 + $0x20] sm:$0xff]
    %v2304 = vld [vmem:[%s2298 + $0x28] sm:$0xff]
    %v2305 = vld [vmem:[%s2298 + $0x30] sm:$0xff]
    %v2306 = vld [vmem:[%s2298 + $0x38] sm:$0xff]
    %v2307 = vld [vmem:[%s2298 + $0x40] sm:$0xff]
    %v2308 = vld [vmem:[%s2298 + $0x48] sm:$0xff]
    %v2309 = vld [vmem:[%s2298 + $0x50] sm:$0xff]
    %v2310 = vld [vmem:[%s2298 + $0x58] sm:$0xff]
    %v2311 = vld [vmem:[%s2298 + $0x60] sm:$0xff]
    %v2312 = vld [vmem:[%s2298 + $0x68] sm:$0xff]
    %v2313 = vld [vmem:[%s2298 + $0x70] sm:$0xff]
    %v2314 = vld [vmem:[%s2298 + $0x78] sm:$0xff]
    %v2315 = vld [vmem:[%s2298 + $0x80] sm:$0xff]
    %v2316 = vld [vmem:[%s2298 + $0x88] sm:$0xff]
    %v2317 = vld [vmem:[%s2298 + $0x90] sm:$0xff]
    %v2318 = vld [vmem:[%s2298 + $0x98] sm:$0xff]
    %v2319 = vld [vmem:[%s2298 + $0xa0] sm:$0xff]
    %v2320 = vld [vmem:[%s2298 + $0xa8] sm:$0xff]
    %v2321 = vld [vmem:[%s2298 + $0xb0] sm:$0xff]
    %v2322 = vld [vmem:[%s2298 + $0xb8] sm:$0xff]
    %v2323 = vld [vmem:[%s2298 + $0xc0] sm:$0xff]
    %v2324 = vld [vmem:[%s2298 + $0xc8] sm:$0xff]
    %v2325 = vld [vmem:[%s2298 + $0xd0] sm:$0xff]
    %v2326 = vld [vmem:[%s2298 + $0xd8] sm:$0xff]
    %v2327 = vld [vmem:[%s2298 + $0xe0] sm:$0xff]
    %v2328 = vld [vmem:[%s2298 + $0xe8] sm:$0xff]
    %v2329 = vld [vmem:[%s2298 + $0xf0] sm:$0xff]
    %v2330 = vld [vmem:[%s2298 + $0xf8] sm:$0xff]
    %v2331 = vld [vmem:[%s2298 + $0x100] sm:$0xff]
    %v2332 = vld [vmem:[%s2298 + $0x108] sm:$0xff]
    %v2333 = vld [vmem:[%s2298 + $0x110] sm:$0xff]
    %v2334 = vld [vmem:[%s2298 + $0x118] sm:$0xff]
    %v2335 = vld [vmem:[%s2298 + $0x120] sm:$0xff]
    %v2336 = vld [vmem:[%s2298 + $0x128] sm:$0xff]
    %v2337 = vld [vmem:[%s2298 + $0x130] sm:$0xff]
    %v2338 = vld [vmem:[%s2298 + $0x138] sm:$0xff]
    %v2339 = vld [vmem:[%s2298 + $0x140] sm:$0xff]
    %v2340 = vld [vmem:[%s2298 + $0x148] sm:$0xff]
    %v2341 = vld [vmem:[%s2298 + $0x150] sm:$0xff]
    %v2342 = vld [vmem:[%s2298 + $0x158] sm:$0xff]
    %v2343 = vld [vmem:[%s2298 + $0x160] sm:$0xff]
    %v2344 = vld [vmem:[%s2298 + $0x168] sm:$0xff]
    %v2345 = vld [vmem:[%s2298 + $0x170] sm:$0xff]
    %v2346 = vld [vmem:[%s2298 + $0x178] sm:$0xff]
    %v2347 = vld [vmem:[%s2298 + $0x180] sm:$0xff]
    %v2348 = vld [vmem:[%s2298 + $0x188] sm:$0xff]
    %v2349 = vld [vmem:[%s2298 + $0x190] sm:$0xff]
    %v2350 = vld [vmem:[%s2298 + $0x198] sm:$0xff]
    %v2351 = vld [vmem:[%s2298 + $0x1a0] sm:$0xff]
    %v2352 = vld [vmem:[%s2298 + $0x1a8] sm:$0xff]
    %v2353 = vld [vmem:[%s2298 + $0x1b0] sm:$0xff]
    %v2354 = vld [vmem:[%s2298 + $0x1b8] sm:$0xff]
    %v2355 = vld [vmem:[%s2298 + $0x1c0] sm:$0xff]
    %v2356 = vld [vmem:[%s2298 + $0x1c8] sm:$0xff]
    %v2357 = vld [vmem:[%s2298 + $0x1d0] sm:$0xff]
    %v2358 = vld [vmem:[%s2298 + $0x1d8] sm:$0xff]
    %v2359 = vld [vmem:[%s2298 + $0x1e0] sm:$0xff]
    %v2360 = vld [vmem:[%s2298 + $0x1e8] sm:$0xff]
    %v2361 = vld [vmem:[%s2298 + $0x1f0] sm:$0xff]
    %v2362 = vld [vmem:[%s2298 + $0x1f8] sm:$0xff]
    %v2363 = vld [vmem:[%s2298 + $0x200] sm:$0xff]
    %v2364 = vld [vmem:[%s2298 + $0x208] sm:$0xff]
    %v2365 = vld [vmem:[%s2298 + $0x210] sm:$0xff]
    %v2366 = vld [vmem:[%s2298 + $0x218] sm:$0xff]
    %v2367 = vld [vmem:[%s2298 + $0x220] sm:$0xff]
    %v2368 = vld [vmem:[%s2298 + $0x228] sm:$0xff]
    %v2369 = vld [vmem:[%s2298 + $0x230] sm:$0xff]
    %v2370 = vld [vmem:[%s2298 + $0x238] sm:$0xff]
    %v2371 = vld [vmem:[%s2298 + $0x240] sm:$0xff]
    %v2372 = vld [vmem:[%s2298 + $0x248] sm:$0xff]
    %v2373 = vld [vmem:[%s2298 + $0x250] sm:$0xff]
    %v2374 = vld [vmem:[%s2298 + $0x258] sm:$0xff]
    %v2375 = vld [vmem:[%s2298 + $0x260] sm:$0xff]
    %v2376 = vld [vmem:[%s2298 + $0x268] sm:$0xff]
    %v2377 = vld [vmem:[%s2298 + $0x270] sm:$0xff]
    %v2378 = vld [vmem:[%s2298 + $0x278] sm:$0xff]
    %v2379 = vld [vmem:[%s2298 + $0x280] sm:$0xff]
    %v2380 = vld [vmem:[%s2298 + $0x288] sm:$0xff]
    %v2381 = vld [vmem:[%s2298 + $0x290] sm:$0xff]
    %v2382 = vld [vmem:[%s2298 + $0x298] sm:$0xff]
    %v2383 = vld [vmem:[%s2298 + $0x2a0] sm:$0xff]
    %v2384 = vld [vmem:[%s2298 + $0x2a8] sm:$0xff]
    %v2385 = vld [vmem:[%s2298 + $0x2b0] sm:$0xff]
    %v2386 = vld [vmem:[%s2298 + $0x2b8] sm:$0xff]
    %v2387 = vld [vmem:[%s2298 + $0x2c0] sm:$0xff]
    %v2388 = vld [vmem:[%s2298 + $0x2c8] sm:$0xff]
    %v2389 = vld [vmem:[%s2298 + $0x2d0] sm:$0xff]
    %v2390 = vld [vmem:[%s2298 + $0x2d8] sm:$0xff]
    %v2391 = vld [vmem:[%s2298 + $0x2e0] sm:$0xff]
    %v2392 = vld [vmem:[%s2298 + $0x2e8] sm:$0xff]
    %v2393 = vld [vmem:[%s2298 + $0x2f0] sm:$0xff]
    %v2394 = vld [vmem:[%s2298 + $0x2f8] sm:$0xff]
    %v2395 = vld [vmem:[%s2298 + $0x300] sm:$0xff]
    %v2396 = vld [vmem:[%s2298 + $0x308] sm:$0xff]
    %v2397 = vld [vmem:[%s2298 + $0x310] sm:$0xff]
    %v2398 = vld [vmem:[%s2298 + $0x318] sm:$0xff]
    %v2399 = vld [vmem:[%s2298 + $0x320] sm:$0xff]
    %v2400 = vld [vmem:[%s2298 + $0x328] sm:$0xff]
    %v2401 = vld [vmem:[%s2298 + $0x330] sm:$0xff]
    %v2402 = vld [vmem:[%s2298 + $0x338] sm:$0xff]
    %v2403 = vld [vmem:[%s2298 + $0x340] sm:$0xff]
    %v2404 = vld [vmem:[%s2298 + $0x348] sm:$0xff]
    %v2405 = vld [vmem:[%s2298 + $0x350] sm:$0xff]
    %v2406 = vld [vmem:[%s2298 + $0x358] sm:$0xff]
    %v2407 = vld [vmem:[%s2298 + $0x360] sm:$0xff]
    %v2408 = vld [vmem:[%s2298 + $0x368] sm:$0xff]
    %v2409 = vld [vmem:[%s2298 + $0x370] sm:$0xff]
    %v2410 = vld [vmem:[%s2298 + $0x378] sm:$0xff]
    %v2411 = vld [vmem:[%s2298 + $0x380] sm:$0xff]
    %v2412 = vld [vmem:[%s2298 + $0x388] sm:$0xff]
    %v2413 = vld [vmem:[%s2298 + $0x390] sm:$0xff]
    %v2414 = vld [vmem:[%s2298 + $0x398] sm:$0xff]
    %v2415 = vld [vmem:[%s2298 + $0x3a0] sm:$0xff]
    %v2416 = vld [vmem:[%s2298 + $0x3a8] sm:$0xff]
    %v2417 = vld [vmem:[%s2298 + $0x3b0] sm:$0xff]
    %v2418 = vld [vmem:[%s2298 + $0x3b8] sm:$0xff]
    %v2419 = vld [vmem:[%s2298 + $0x3c0] sm:$0xff]
    %v2420 = vld [vmem:[%s2298 + $0x3c8] sm:$0xff]
    %v2421 = vld [vmem:[%s2298 + $0x3d0] sm:$0xff]
    %v2422 = vld [vmem:[%s2298 + $0x3d8] sm:$0xff]
    %v2423 = vld [vmem:[%s2298 + $0x3e0] sm:$0xff]
    %v2424 = vld [vmem:[%s2298 + $0x3e8] sm:$0xff]
    %v2425 = vld [vmem:[%s2298 + $0x3f0] sm:$0xff]
    %v2426 = vld [vmem:[%s2298 + $0x3f8] sm:$0xff]
    %v2429 = vunpack.c.l.s4 1966171168
    %v2430 = vunpack.c.0.s8 %v2429
    %v2431 = vlaneseq
    %v2432 = vshrl.u32 %v2431, 7
    %v2433 = vsub.s32 %v2430, %v2432
    %v2434 = vrot.slane %v2297, %v2433
    %v2435 = vcombine.high %v2434, %v2434
    %v2437 = vunpack.c.l.s4 1966171168
    %v2438 = vunpack.c.0.s8 %v2437
    %v2439 = vlaneseq
    %v2440 = vshrl.u32 %v2439, 7
    %v2441 = vsub.s32 %v2438, %v2440
    %v2442 = vrot.slane %v2434, %v2441
    %v2444 = vunpack.c.l.s4 1966171168
    %v2445 = vunpack.c.0.s8 %v2444
    %v2446 = vlaneseq
    %v2447 = vshrl.u32 %v2446, 7
    %v2448 = vsub.s32 %v2445, %v2447
    %v2449 = vrot.slane %v2435, %v2448
    %v2450 = vcombine.high %v2442, %v2442
    %v2451 = vcombine.high %v2449, %v2449
    %v2584 = vunpack.c.l.b16 %v2299
    %v2585 = vunpack.c.h.b16 %v2299
    %v2586 = vunpack.c.l.b16 %v2300
    %v2587 = vunpack.c.h.b16 %v2300
    %v2588 = vunpack.c.l.b16 %v2301
    %v2589 = vunpack.c.h.b16 %v2301
    %v2590 = vunpack.c.l.b16 %v2302
    %v2591 = vunpack.c.h.b16 %v2302
    %v2592 = vunpack.c.l.b16 %v2303
    %v2593 = vunpack.c.h.b16 %v2303
    %v2594 = vunpack.c.l.b16 %v2304
    %v2595 = vunpack.c.h.b16 %v2304
    %v2596 = vunpack.c.l.b16 %v2305
    %v2597 = vunpack.c.h.b16 %v2305
    %v2598 = vunpack.c.l.b16 %v2306
    %v2599 = vunpack.c.h.b16 %v2306
    %v2600 = vunpack.c.l.b16 %v2307
    %v2601 = vunpack.c.h.b16 %v2307
    %v2602 = vunpack.c.l.b16 %v2308
    %v2603 = vunpack.c.h.b16 %v2308
    %v2604 = vunpack.c.l.b16 %v2309
    %v2605 = vunpack.c.h.b16 %v2309
    %v2606 = vunpack.c.l.b16 %v2310
    %v2607 = vunpack.c.h.b16 %v2310
    %v2608 = vunpack.c.l.b16 %v2311
    %v2609 = vunpack.c.h.b16 %v2311
    %v2610 = vunpack.c.l.b16 %v2312
    %v2611 = vunpack.c.h.b16 %v2312
    %v2612 = vunpack.c.l.b16 %v2313
    %v2613 = vunpack.c.h.b16 %v2313
    %v2614 = vunpack.c.l.b16 %v2314
    %v2615 = vunpack.c.h.b16 %v2314
    %v2616 = vunpack.c.l.b16 %v2315
    %v2617 = vunpack.c.h.b16 %v2315
    %v2618 = vunpack.c.l.b16 %v2316
    %v2619 = vunpack.c.h.b16 %v2316
    %v2620 = vunpack.c.l.b16 %v2317
    %v2621 = vunpack.c.h.b16 %v2317
    %v2622 = vunpack.c.l.b16 %v2318
    %v2623 = vunpack.c.h.b16 %v2318
    %v2624 = vunpack.c.l.b16 %v2319
    %v2625 = vunpack.c.h.b16 %v2319
    %v2626 = vunpack.c.l.b16 %v2320
    %v2627 = vunpack.c.h.b16 %v2320
    %v2628 = vunpack.c.l.b16 %v2321
    %v2629 = vunpack.c.h.b16 %v2321
    %v2630 = vunpack.c.l.b16 %v2322
    %v2631 = vunpack.c.h.b16 %v2322
    %v2632 = vunpack.c.l.b16 %v2323
    %v2633 = vunpack.c.h.b16 %v2323
    %v2634 = vunpack.c.l.b16 %v2324
    %v2635 = vunpack.c.h.b16 %v2324
    %v2636 = vunpack.c.l.b16 %v2325
    %v2637 = vunpack.c.h.b16 %v2325
    %v2638 = vunpack.c.l.b16 %v2326
    %v2639 = vunpack.c.h.b16 %v2326
    %v2640 = vunpack.c.l.b16 %v2327
    %v2641 = vunpack.c.h.b16 %v2327
    %v2642 = vunpack.c.l.b16 %v2328
    %v2643 = vunpack.c.h.b16 %v2328
    %v2644 = vunpack.c.l.b16 %v2329
    %v2645 = vunpack.c.h.b16 %v2329
    %v2646 = vunpack.c.l.b16 %v2330
    %v2647 = vunpack.c.h.b16 %v2330
    %v2648 = vunpack.c.l.b16 %v2331
    %v2649 = vunpack.c.h.b16 %v2331
    %v2650 = vunpack.c.l.b16 %v2332
    %v2651 = vunpack.c.h.b16 %v2332
    %v2652 = vunpack.c.l.b16 %v2333
    %v2653 = vunpack.c.h.b16 %v2333
    %v2654 = vunpack.c.l.b16 %v2334
    %v2655 = vunpack.c.h.b16 %v2334
    %v2656 = vunpack.c.l.b16 %v2335
    %v2657 = vunpack.c.h.b16 %v2335
    %v2658 = vunpack.c.l.b16 %v2336
    %v2659 = vunpack.c.h.b16 %v2336
    %v2660 = vunpack.c.l.b16 %v2337
    %v2661 = vunpack.c.h.b16 %v2337
    %v2662 = vunpack.c.l.b16 %v2338
    %v2663 = vunpack.c.h.b16 %v2338
    %v2664 = vunpack.c.l.b16 %v2339
    %v2665 = vunpack.c.h.b16 %v2339
    %v2666 = vunpack.c.l.b16 %v2340
    %v2667 = vunpack.c.h.b16 %v2340
    %v2668 = vunpack.c.l.b16 %v2341
    %v2669 = vunpack.c.h.b16 %v2341
    %v2670 = vunpack.c.l.b16 %v2342
    %v2671 = vunpack.c.h.b16 %v2342
    %v2672 = vunpack.c.l.b16 %v2343
    %v2673 = vunpack.c.h.b16 %v2343
    %v2674 = vunpack.c.l.b16 %v2344
    %v2675 = vunpack.c.h.b16 %v2344
    %v2676 = vunpack.c.l.b16 %v2345
    %v2677 = vunpack.c.h.b16 %v2345
    %v2678 = vunpack.c.l.b16 %v2346
    %v2679 = vunpack.c.h.b16 %v2346
    %v2680 = vunpack.c.l.b16 %v2347
    %v2681 = vunpack.c.h.b16 %v2347
    %v2682 = vunpack.c.l.b16 %v2348
    %v2683 = vunpack.c.h.b16 %v2348
    %v2684 = vunpack.c.l.b16 %v2349
    %v2685 = vunpack.c.h.b16 %v2349
    %v2686 = vunpack.c.l.b16 %v2350
    %v2687 = vunpack.c.h.b16 %v2350
    %v2688 = vunpack.c.l.b16 %v2351
    %v2689 = vunpack.c.h.b16 %v2351
    %v2690 = vunpack.c.l.b16 %v2352
    %v2691 = vunpack.c.h.b16 %v2352
    %v2692 = vunpack.c.l.b16 %v2353
    %v2693 = vunpack.c.h.b16 %v2353
    %v2694 = vunpack.c.l.b16 %v2354
    %v2695 = vunpack.c.h.b16 %v2354
    %v2696 = vunpack.c.l.b16 %v2355
    %v2697 = vunpack.c.h.b16 %v2355
    %v2698 = vunpack.c.l.b16 %v2356
    %v2699 = vunpack.c.h.b16 %v2356
    %v2700 = vunpack.c.l.b16 %v2357
    %v2701 = vunpack.c.h.b16 %v2357
    %v2702 = vunpack.c.l.b16 %v2358
    %v2703 = vunpack.c.h.b16 %v2358
    %v2704 = vunpack.c.l.b16 %v2359
    %v2705 = vunpack.c.h.b16 %v2359
    %v2706 = vunpack.c.l.b16 %v2360
    %v2707 = vunpack.c.h.b16 %v2360
    %v2708 = vunpack.c.l.b16 %v2361
    %v2709 = vunpack.c.h.b16 %v2361
    %v2710 = vunpack.c.l.b16 %v2362
    %v2711 = vunpack.c.h.b16 %v2362
    %v2712 = vunpack.c.l.b16 %v2363
    %v2713 = vunpack.c.h.b16 %v2363
    %v2714 = vunpack.c.l.b16 %v2364
    %v2715 = vunpack.c.h.b16 %v2364
    %v2716 = vunpack.c.l.b16 %v2365
    %v2717 = vunpack.c.h.b16 %v2365
    %v2718 = vunpack.c.l.b16 %v2366
    %v2719 = vunpack.c.h.b16 %v2366
    %v2720 = vunpack.c.l.b16 %v2367
    %v2721 = vunpack.c.h.b16 %v2367
    %v2722 = vunpack.c.l.b16 %v2368
    %v2723 = vunpack.c.h.b16 %v2368
    %v2724 = vunpack.c.l.b16 %v2369
    %v2725 = vunpack.c.h.b16 %v2369
    %v2726 = vunpack.c.l.b16 %v2370
    %v2727 = vunpack.c.h.b16 %v2370
    %v2728 = vunpack.c.l.b16 %v2371
    %v2729 = vunpack.c.h.b16 %v2371
    %v2730 = vunpack.c.l.b16 %v2372
    %v2731 = vunpack.c.h.b16 %v2372
    %v2732 = vunpack.c.l.b16 %v2373
    %v2733 = vunpack.c.h.b16 %v2373
    %v2734 = vunpack.c.l.b16 %v2374
    %v2735 = vunpack.c.h.b16 %v2374
    %v2736 = vunpack.c.l.b16 %v2375
    %v2737 = vunpack.c.h.b16 %v2375
    %v2738 = vunpack.c.l.b16 %v2376
    %v2739 = vunpack.c.h.b16 %v2376
    %v2740 = vunpack.c.l.b16 %v2377
    %v2741 = vunpack.c.h.b16 %v2377
    %v2742 = vunpack.c.l.b16 %v2378
    %v2743 = vunpack.c.h.b16 %v2378
    %v2744 = vunpack.c.l.b16 %v2379
    %v2745 = vunpack.c.h.b16 %v2379
    %v2746 = vunpack.c.l.b16 %v2380
    %v2747 = vunpack.c.h.b16 %v2380
    %v2748 = vunpack.c.l.b16 %v2381
    %v2749 = vunpack.c.h.b16 %v2381
    %v2750 = vunpack.c.l.b16 %v2382
    %v2751 = vunpack.c.h.b16 %v2382
    %v2752 = vunpack.c.l.b16 %v2383
    %v2753 = vunpack.c.h.b16 %v2383
    %v2754 = vunpack.c.l.b16 %v2384
    %v2755 = vunpack.c.h.b16 %v2384
    %v2756 = vunpack.c.l.b16 %v2385
    %v2757 = vunpack.c.h.b16 %v2385
    %v2758 = vunpack.c.l.b16 %v2386
    %v2759 = vunpack.c.h.b16 %v2386
    %v2760 = vunpack.c.l.b16 %v2387
    %v2761 = vunpack.c.h.b16 %v2387
    %v2762 = vunpack.c.l.b16 %v2388
    %v2763 = vunpack.c.h.b16 %v2388
    %v2764 = vunpack.c.l.b16 %v2389
    %v2765 = vunpack.c.h.b16 %v2389
    %v2766 = vunpack.c.l.b16 %v2390
    %v2767 = vunpack.c.h.b16 %v2390
    %v2768 = vunpack.c.l.b16 %v2391
    %v2769 = vunpack.c.h.b16 %v2391
    %v2770 = vunpack.c.l.b16 %v2392
    %v2771 = vunpack.c.h.b16 %v2392
    %v2772 = vunpack.c.l.b16 %v2393
    %v2773 = vunpack.c.h.b16 %v2393
    %v2774 = vunpack.c.l.b16 %v2394
    %v2775 = vunpack.c.h.b16 %v2394
    %v2776 = vunpack.c.l.b16 %v2395
    %v2777 = vunpack.c.h.b16 %v2395
    %v2778 = vunpack.c.l.b16 %v2396
    %v2779 = vunpack.c.h.b16 %v2396
    %v2780 = vunpack.c.l.b16 %v2397
    %v2781 = vunpack.c.h.b16 %v2397
    %v2782 = vunpack.c.l.b16 %v2398
    %v2783 = vunpack.c.h.b16 %v2398
    %v2784 = vunpack.c.l.b16 %v2399
    %v2785 = vunpack.c.h.b16 %v2399
    %v2786 = vunpack.c.l.b16 %v2400
    %v2787 = vunpack.c.h.b16 %v2400
    %v2788 = vunpack.c.l.b16 %v2401
    %v2789 = vunpack.c.h.b16 %v2401
    %v2790 = vunpack.c.l.b16 %v2402
    %v2791 = vunpack.c.h.b16 %v2402
    %v2792 = vunpack.c.l.b16 %v2403
    %v2793 = vunpack.c.h.b16 %v2403
    %v2794 = vunpack.c.l.b16 %v2404
    %v2795 = vunpack.c.h.b16 %v2404
    %v2796 = vunpack.c.l.b16 %v2405
    %v2797 = vunpack.c.h.b16 %v2405
    %v2798 = vunpack.c.l.b16 %v2406
    %v2799 = vunpack.c.h.b16 %v2406
    %v2800 = vunpack.c.l.b16 %v2407
    %v2801 = vunpack.c.h.b16 %v2407
    %v2802 = vunpack.c.l.b16 %v2408
    %v2803 = vunpack.c.h.b16 %v2408
    %v2804 = vunpack.c.l.b16 %v2409
    %v2805 = vunpack.c.h.b16 %v2409
    %v2806 = vunpack.c.l.b16 %v2410
    %v2807 = vunpack.c.h.b16 %v2410
    %v2808 = vunpack.c.l.b16 %v2411
    %v2809 = vunpack.c.h.b16 %v2411
    %v2810 = vunpack.c.l.b16 %v2412
    %v2811 = vunpack.c.h.b16 %v2412
    %v2812 = vunpack.c.l.b16 %v2413
    %v2813 = vunpack.c.h.b16 %v2413
    %v2814 = vunpack.c.l.b16 %v2414
    %v2815 = vunpack.c.h.b16 %v2414
    %v2816 = vunpack.c.l.b16 %v2415
    %v2817 = vunpack.c.h.b16 %v2415
    %v2818 = vunpack.c.l.b16 %v2416
    %v2819 = vunpack.c.h.b16 %v2416
    %v2820 = vunpack.c.l.b16 %v2417
    %v2821 = vunpack.c.h.b16 %v2417
    %v2822 = vunpack.c.l.b16 %v2418
    %v2823 = vunpack.c.h.b16 %v2418
    %v2824 = vunpack.c.l.b16 %v2419
    %v2825 = vunpack.c.h.b16 %v2419
    %v2826 = vunpack.c.l.b16 %v2420
    %v2827 = vunpack.c.h.b16 %v2420
    %v2828 = vunpack.c.l.b16 %v2421
    %v2829 = vunpack.c.h.b16 %v2421
    %v2830 = vunpack.c.l.b16 %v2422
    %v2831 = vunpack.c.h.b16 %v2422
    %v2832 = vunpack.c.l.b16 %v2423
    %v2833 = vunpack.c.h.b16 %v2423
    %v2834 = vunpack.c.l.b16 %v2424
    %v2835 = vunpack.c.h.b16 %v2424
    %v2836 = vunpack.c.l.b16 %v2425
    %v2837 = vunpack.c.h.b16 %v2425
    %v2838 = vunpack.c.l.b16 %v2426
    %v2839 = vunpack.c.h.b16 %v2426
    %v2840 = vpack.c.b16 %v2588, %v2584
    %v2841 = vpack.c.b16 %v2589, %v2585
    %v2842 = vpack.c.b16 %v2590, %v2586
    %v2843 = vpack.c.b16 %v2591, %v2587
    %v2844 = vpack.c.b16 %v2596, %v2592
    %v2845 = vpack.c.b16 %v2597, %v2593
    %v2846 = vpack.c.b16 %v2598, %v2594
    %v2847 = vpack.c.b16 %v2599, %v2595
    %v2848 = vpack.c.b16 %v2604, %v2600
    %v2849 = vpack.c.b16 %v2605, %v2601
    %v2850 = vpack.c.b16 %v2606, %v2602
    %v2851 = vpack.c.b16 %v2607, %v2603
    %v2852 = vpack.c.b16 %v2612, %v2608
    %v2853 = vpack.c.b16 %v2613, %v2609
    %v2854 = vpack.c.b16 %v2614, %v2610
    %v2855 = vpack.c.b16 %v2615, %v2611
    %v2856 = vpack.c.b16 %v2620, %v2616
    %v2857 = vpack.c.b16 %v2621, %v2617
    %v2858 = vpack.c.b16 %v2622, %v2618
    %v2859 = vpack.c.b16 %v2623, %v2619
    %v2860 = vpack.c.b16 %v2628, %v2624
    %v2861 = vpack.c.b16 %v2629, %v2625
    %v2862 = vpack.c.b16 %v2630, %v2626
    %v2863 = vpack.c.b16 %v2631, %v2627
    %v2864 = vpack.c.b16 %v2636, %v2632
    %v2865 = vpack.c.b16 %v2637, %v2633
    %v2866 = vpack.c.b16 %v2638, %v2634
    %v2867 = vpack.c.b16 %v2639, %v2635
    %v2868 = vpack.c.b16 %v2644, %v2640
    %v2869 = vpack.c.b16 %v2645, %v2641
    %v2870 = vpack.c.b16 %v2646, %v2642
    %v2871 = vpack.c.b16 %v2647, %v2643
    %v2872 = vpack.c.b16 %v2652, %v2648
    %v2873 = vpack.c.b16 %v2653, %v2649
    %v2874 = vpack.c.b16 %v2654, %v2650
    %v2875 = vpack.c.b16 %v2655, %v2651
    %v2876 = vpack.c.b16 %v2660, %v2656
    %v2877 = vpack.c.b16 %v2661, %v2657
    %v2878 = vpack.c.b16 %v2662, %v2658
    %v2879 = vpack.c.b16 %v2663, %v2659
    %v2880 = vpack.c.b16 %v2668, %v2664
    %v2881 = vpack.c.b16 %v2669, %v2665
    %v2882 = vpack.c.b16 %v2670, %v2666
    %v2883 = vpack.c.b16 %v2671, %v2667
    %v2884 = vpack.c.b16 %v2676, %v2672
    %v2885 = vpack.c.b16 %v2677, %v2673
    %v2886 = vpack.c.b16 %v2678, %v2674
    %v2887 = vpack.c.b16 %v2679, %v2675
    %v2888 = vpack.c.b16 %v2684, %v2680
    %v2889 = vpack.c.b16 %v2685, %v2681
    %v2890 = vpack.c.b16 %v2686, %v2682
    %v2891 = vpack.c.b16 %v2687, %v2683
    %v2892 = vpack.c.b16 %v2692, %v2688
    %v2893 = vpack.c.b16 %v2693, %v2689
    %v2894 = vpack.c.b16 %v2694, %v2690
    %v2895 = vpack.c.b16 %v2695, %v2691
    %v2896 = vpack.c.b16 %v2700, %v2696
    %v2897 = vpack.c.b16 %v2701, %v2697
    %v2898 = vpack.c.b16 %v2702, %v2698
    %v2899 = vpack.c.b16 %v2703, %v2699
    %v2900 = vpack.c.b16 %v2708, %v2704
    %v2901 = vpack.c.b16 %v2709, %v2705
    %v2902 = vpack.c.b16 %v2710, %v2706
    %v2903 = vpack.c.b16 %v2711, %v2707
    %v2904 = vpack.c.b16 %v2716, %v2712
    %v2905 = vpack.c.b16 %v2717, %v2713
    %v2906 = vpack.c.b16 %v2718, %v2714
    %v2907 = vpack.c.b16 %v2719, %v2715
    %v2908 = vpack.c.b16 %v2724, %v2720
    %v2909 = vpack.c.b16 %v2725, %v2721
    %v2910 = vpack.c.b16 %v2726, %v2722
    %v2911 = vpack.c.b16 %v2727, %v2723
    %v2912 = vpack.c.b16 %v2732, %v2728
    %v2913 = vpack.c.b16 %v2733, %v2729
    %v2914 = vpack.c.b16 %v2734, %v2730
    %v2915 = vpack.c.b16 %v2735, %v2731
    %v2916 = vpack.c.b16 %v2740, %v2736
    %v2917 = vpack.c.b16 %v2741, %v2737
    %v2918 = vpack.c.b16 %v2742, %v2738
    %v2919 = vpack.c.b16 %v2743, %v2739
    %v2920 = vpack.c.b16 %v2748, %v2744
    %v2921 = vpack.c.b16 %v2749, %v2745
    %v2922 = vpack.c.b16 %v2750, %v2746
    %v2923 = vpack.c.b16 %v2751, %v2747
    %v2924 = vpack.c.b16 %v2756, %v2752
    %v2925 = vpack.c.b16 %v2757, %v2753
    %v2926 = vpack.c.b16 %v2758, %v2754
    %v2927 = vpack.c.b16 %v2759, %v2755
    %v2928 = vpack.c.b16 %v2764, %v2760
    %v2929 = vpack.c.b16 %v2765, %v2761
    %v2930 = vpack.c.b16 %v2766, %v2762
    %v2931 = vpack.c.b16 %v2767, %v2763
    %v2932 = vpack.c.b16 %v2772, %v2768
    %v2933 = vpack.c.b16 %v2773, %v2769
    %v2934 = vpack.c.b16 %v2774, %v2770
    %v2935 = vpack.c.b16 %v2775, %v2771
    %v2936 = vpack.c.b16 %v2780, %v2776
    %v2937 = vpack.c.b16 %v2781, %v2777
    %v2938 = vpack.c.b16 %v2782, %v2778
    %v2939 = vpack.c.b16 %v2783, %v2779
    %v2940 = vpack.c.b16 %v2788, %v2784
    %v2941 = vpack.c.b16 %v2789, %v2785
    %v2942 = vpack.c.b16 %v2790, %v2786
    %v2943 = vpack.c.b16 %v2791, %v2787
    %v2944 = vpack.c.b16 %v2796, %v2792
    %v2945 = vpack.c.b16 %v2797, %v2793
    %v2946 = vpack.c.b16 %v2798, %v2794
    %v2947 = vpack.c.b16 %v2799, %v2795
    %v2948 = vpack.c.b16 %v2804, %v2800
    %v2949 = vpack.c.b16 %v2805, %v2801
    %v2950 = vpack.c.b16 %v2806, %v2802
    %v2951 = vpack.c.b16 %v2807, %v2803
    %v2952 = vpack.c.b16 %v2812, %v2808
    %v2953 = vpack.c.b16 %v2813, %v2809
    %v2954 = vpack.c.b16 %v2814, %v2810
    %v2955 = vpack.c.b16 %v2815, %v2811
    %v2956 = vpack.c.b16 %v2820, %v2816
    %v2957 = vpack.c.b16 %v2821, %v2817
    %v2958 = vpack.c.b16 %v2822, %v2818
    %v2959 = vpack.c.b16 %v2823, %v2819
    %v2960 = vpack.c.b16 %v2828, %v2824
    %v2961 = vpack.c.b16 %v2829, %v2825
    %v2962 = vpack.c.b16 %v2830, %v2826
    %v2963 = vpack.c.b16 %v2831, %v2827
    %v2964 = vpack.c.b16 %v2836, %v2832
    %v2965 = vpack.c.b16 %v2837, %v2833
    %v2966 = vpack.c.b16 %v2838, %v2834
    %v2967 = vpack.c.b16 %v2839, %v2835
    %3096 = vmatprep.subr.bf16.mxu0 %v2869
    %3097 = vmatpush1.bf16.msra.mxu0 %v2868
    %3098 = vmatprep.subr.bf16.mxu0 %v2865
    %3099 = vmatpush1.bf16.msra.mxu0 %v2864
    %3100 = vmatprep.subr.bf16.mxu0 %v2861
    %3101 = vmatpush1.bf16.msra.mxu0 %v2860
    %3102 = vmatprep.subr.bf16.mxu0 %v2857
    %3103 = vmatpush1.bf16.msra.mxu0 %v2856
    %3104 = vmatprep.subr.bf16.mxu0 %v2853
    %3105 = vmatpush1.bf16.msra.mxu0 %v2852
    %3106 = vmatprep.subr.bf16.mxu0 %v2849
    %3107 = vmatpush1.bf16.msra.mxu0 %v2848
    %3108 = vmatprep.subr.bf16.mxu0 %v2845
    %3109 = vmatpush1.bf16.msra.mxu0 %v2844
    %3110 = vmatprep.subr.bf16.mxu0 %v2841
    %3111 = vmatpush1.bf16.msra.mxu0 %v2840
    %3112 = vmatprep.subr.bf16.mxu0 %v2901
    %3113 = vmatpush2.bf16.msra.mxu0 %v2900
    %3114 = vmatprep.subr.bf16.mxu0 %v2897
    %3115 = vmatpush2.bf16.msra.mxu0 %v2896
    %3116 = vmatprep.subr.bf16.mxu0 %v2893
    %3117 = vmatpush2.bf16.msra.mxu0 %v2892
    %3118 = vmatprep.subr.bf16.mxu0 %v2889
    %3119 = vmatpush2.bf16.msra.mxu0 %v2888
    %3120 = vmatprep.subr.bf16.mxu0 %v2885
    %3121 = vmatpush2.bf16.msra.mxu0 %v2884
    %3122 = vmatprep.subr.bf16.mxu0 %v2881
    %3123 = vmatpush2.bf16.msra.mxu0 %v2880
    %3124 = vmatprep.subr.bf16.mxu0 %v2877
    %3125 = vmatpush2.bf16.msra.mxu0 %v2876
    %3126 = vmatprep.subr.bf16.mxu0 %v2873
    %3127 = vmatpush2.bf16.msra.mxu0 %v2872
    %3128 = vmatprep.mubr.bf16.mxu0 %v2449
    %3129 = vmatmul.mubr.bf16.gmra.mxu0 %v2442
    %v3130 = vpop.f32.mrf.mxu0
    %v3131 = vadd.f32 0.0, %v3130
    %v3132 = vpop.f32.mrf.mxu0
    %v3133 = vadd.f32 0.0, %v3132
    %v3134 = vpop.f32.mrf.mxu0
    %v3135 = vpop.f32.mrf.mxu0
    %3136 = vdwg.mxu0
    %3137 = vmatprep.subr.bf16.mxu0 %v2933
    %3138 = vmatpush1.bf16.msra.mxu0 %v2932
    %3139 = vmatprep.subr.bf16.mxu0 %v2929
    %3140 = vmatpush1.bf16.msra.mxu0 %v2928
    %3141 = vmatprep.subr.bf16.mxu0 %v2925
    %3142 = vmatpush1.bf16.msra.mxu0 %v2924
    %3143 = vmatprep.subr.bf16.mxu0 %v2921
    %3144 = vmatpush1.bf16.msra.mxu0 %v2920
    %3145 = vmatprep.subr.bf16.mxu0 %v2917
    %3146 = vmatpush1.bf16.msra.mxu0 %v2916
    %3147 = vmatprep.subr.bf16.mxu0 %v2913
    %3148 = vmatpush1.bf16.msra.mxu0 %v2912
    %3149 = vmatprep.subr.bf16.mxu0 %v2909
    %3150 = vmatpush1.bf16.msra.mxu0 %v2908
    %3151 = vmatprep.subr.bf16.mxu0 %v2905
    %3152 = vmatpush1.bf16.msra.mxu0 %v2904
    %3153 = vmatprep.subr.bf16.mxu0 %v2965
    %3154 = vmatpush2.bf16.msra.mxu0 %v2964
    %3155 = vmatprep.subr.bf16.mxu0 %v2961
    %3156 = vmatpush2.bf16.msra.mxu0 %v2960
    %3157 = vmatprep.subr.bf16.mxu0 %v2957
    %3158 = vmatpush2.bf16.msra.mxu0 %v2956
    %3159 = vmatprep.subr.bf16.mxu0 %v2953
    %3160 = vmatpush2.bf16.msra.mxu0 %v2952
    %3161 = vmatprep.subr.bf16.mxu0 %v2949
    %3162 = vmatpush2.bf16.msra.mxu0 %v2948
    %3163 = vmatprep.subr.bf16.mxu0 %v2945
    %3164 = vmatpush2.bf16.msra.mxu0 %v2944
    %3165 = vmatprep.subr.bf16.mxu0 %v2941
    %3166 = vmatpush2.bf16.msra.mxu0 %v2940
    %3167 = vmatprep.subr.bf16.mxu0 %v2937
    %3168 = vmatpush2.bf16.msra.mxu0 %v2936
    %3169 = vmatprep.mubr.bf16.mxu0 %v2451
    %3170 = vmatmul.mubr.bf16.gmra.mxu0 %v2450
    %v3171 = vpop.f32.mrf.mxu0
    %v3172 = vadd.f32 %v3131, %v3171
    %v3173 = vpop.f32.mrf.mxu0
    %v3174 = vadd.f32 %v3133, %v3173
    %v3175 = vpop.f32.mrf.mxu0
    %v3176 = vpop.f32.mrf.mxu0
    %3177 = vdwg.mxu0
    %3178 = vmatprep.subr.bf16.mxu0 %v2871
    %3179 = vmatpush1.bf16.msra.mxu0 %v2870
    %3180 = vmatprep.subr.bf16.mxu0 %v2867
    %3181 = vmatpush1.bf16.msra.mxu0 %v2866
    %3182 = vmatprep.subr.bf16.mxu0 %v2863
    %3183 = vmatpush1.bf16.msra.mxu0 %v2862
    %3184 = vmatprep.subr.bf16.mxu0 %v2859
    %3185 = vmatpush1.bf16.msra.mxu0 %v2858
    %3186 = vmatprep.subr.bf16.mxu0 %v2855
    %3187 = vmatpush1.bf16.msra.mxu0 %v2854
    %3188 = vmatprep.subr.bf16.mxu0 %v2851
    %3189 = vmatpush1.bf16.msra.mxu0 %v2850
    %3190 = vmatprep.subr.bf16.mxu0 %v2847
    %3191 = vmatpush1.bf16.msra.mxu0 %v2846
    %3192 = vmatprep.subr.bf16.mxu0 %v2843
    %3193 = vmatpush1.bf16.msra.mxu0 %v2842
    %3194 = vmatprep.subr.bf16.mxu0 %v2903
    %3195 = vmatpush2.bf16.msra.mxu0 %v2902
    %3196 = vmatprep.subr.bf16.mxu0 %v2899
    %3197 = vmatpush2.bf16.msra.mxu0 %v2898
    %3198 = vmatprep.subr.bf16.mxu0 %v2895
    %3199 = vmatpush2.bf16.msra.mxu0 %v2894
    %3200 = vmatprep.subr.bf16.mxu0 %v2891
    %3201 = vmatpush2.bf16.msra.mxu0 %v2890
    %3202 = vmatprep.subr.bf16.mxu0 %v2887
    %3203 = vmatpush2.bf16.msra.mxu0 %v2886
    %3204 = vmatprep.subr.bf16.mxu0 %v2883
    %3205 = vmatpush2.bf16.msra.mxu0 %v2882
    %3206 = vmatprep.subr.bf16.mxu0 %v2879
    %3207 = vmatpush2.bf16.msra.mxu0 %v2878
    %3208 = vmatprep.subr.bf16.mxu0 %v2875
    %3209 = vmatpush2.bf16.msra.mxu0 %v2874
    %3210 = vmatprep.mubr.bf16.mxu0 %v2449
    %3211 = vmatmul.mubr.bf16.gmra.mxu0 %v2442
    %v3212 = vpop.f32.mrf.mxu0
    %v3213 = vadd.f32 0.0, %v3212
    %v3214 = vpop.f32.mrf.mxu0
    %v3215 = vadd.f32 0.0, %v3214
    %v3216 = vpop.f32.mrf.mxu0
    %v3217 = vpop.f32.mrf.mxu0
    %3218 = vdwg.mxu0
    %3219 = vmatprep.subr.bf16.mxu0 %v2935
    %3220 = vmatpush1.bf16.msra.mxu0 %v2934
    %3221 = vmatprep.subr.bf16.mxu0 %v2931
    %3222 = vmatpush1.bf16.msra.mxu0 %v2930
    %3223 = vmatprep.subr.bf16.mxu0 %v2927
    %3224 = vmatpush1.bf16.msra.mxu0 %v2926
    %3225 = vmatprep.subr.bf16.mxu0 %v2923
    %3226 = vmatpush1.bf16.msra.mxu0 %v2922
    %3227 = vmatprep.subr.bf16.mxu0 %v2919
    %3228 = vmatpush1.bf16.msra.mxu0 %v2918
    %3229 = vmatprep.subr.bf16.mxu0 %v2915
    %3230 = vmatpush1.bf16.msra.mxu0 %v2914
    %3231 = vmatprep.subr.bf16.mxu0 %v2911
    %3232 = vmatpush1.bf16.msra.mxu0 %v2910
    %3233 = vmatprep.subr.bf16.mxu0 %v2907
    %3234 = vmatpush1.bf16.msra.mxu0 %v2906
    %3235 = vmatprep.subr.bf16.mxu0 %v2967
    %3236 = vmatpush2.bf16.msra.mxu0 %v2966
    %3237 = vmatprep.subr.bf16.mxu0 %v2963
    %3238 = vmatpush2.bf16.msra.mxu0 %v2962
    %3239 = vmatprep.subr.bf16.mxu0 %v2959
    %3240 = vmatpush2.bf16.msra.mxu0 %v2958
    %3241 = vmatprep.subr.bf16.mxu0 %v2955
    %3242 = vmatpush2.bf16.msra.mxu0 %v2954
    %3243 = vmatprep.subr.bf16.mxu0 %v2951
    %3244 = vmatpush2.bf16.msra.mxu0 %v2950
    %3245 = vmatprep.subr.bf16.mxu0 %v2947
    %3246 = vmatpush2.bf16.msra.mxu0 %v2946
    %3247 = vmatprep.subr.bf16.mxu0 %v2943
    %3248 = vmatpush2.bf16.msra.mxu0 %v2942
    %3249 = vmatprep.subr.bf16.mxu0 %v2939
    %3250 = vmatpush2.bf16.msra.mxu0 %v2938
    %3251 = vmatprep.mubr.bf16.mxu0 %v2451
    %3252 = vmatmul.mubr.bf16.gmra.mxu0 %v2450
    %v3253 = vpop.f32.mrf.mxu0
    %v3254 = vadd.f32 %v3213, %v3253
    %v3255 = vpop.f32.mrf.mxu0
    %v3256 = vadd.f32 %v3215, %v3255
    %v3257 = vpop.f32.mrf.mxu0
    %v3258 = vpop.f32.mrf.mxu0
    %3259 = vdwg.mxu0
    %v3262 = vunpack.c.l.s4 1966171168
    %v3263 = vunpack.c.0.s8 %v3262
    %v3264 = vlaneseq
    %v3265 = vshrl.u32 %v3264, 7
    %v3266 = vsub.s32 %v3263, %v3265
    %v3267 = vrot.slane %v2168, %v3266
    %v3268 = vcombine.high %v3267, %v3267
    %v3270 = vunpack.c.l.s4 1966171168
    %v3271 = vunpack.c.0.s8 %v3270
    %v3272 = vlaneseq
    %v3273 = vshrl.u32 %v3272, 7
    %v3274 = vsub.s32 %v3271, %v3273
    %v3275 = vrot.slane %v3267, %v3274
    %v3277 = vunpack.c.l.s4 1966171168
    %v3278 = vunpack.c.0.s8 %v3277
    %v3279 = vlaneseq
    %v3280 = vshrl.u32 %v3279, 7
    %v3281 = vsub.s32 %v3278, %v3280
    %v3282 = vrot.slane %v3268, %v3281
    %v3283 = vcombine.high %v3275, %v3275
    %v3284 = vcombine.high %v3282, %v3282
    %v3417 = vunpack.c.l.b16 %v2169
    %v3418 = vunpack.c.h.b16 %v2169
    %v3419 = vunpack.c.l.b16 %v2170
    %v3420 = vunpack.c.h.b16 %v2170
    %v3421 = vunpack.c.l.b16 %v2171
    %v3422 = vunpack.c.h.b16 %v2171
    %v3423 = vunpack.c.l.b16 %v2172
    %v3424 = vunpack.c.h.b16 %v2172
    %v3425 = vunpack.c.l.b16 %v2173
    %v3426 = vunpack.c.h.b16 %v2173
    %v3427 = vunpack.c.l.b16 %v2174
    %v3428 = vunpack.c.h.b16 %v2174
    %v3429 = vunpack.c.l.b16 %v2175
    %v3430 = vunpack.c.h.b16 %v2175
    %v3431 = vunpack.c.l.b16 %v2176
    %v3432 = vunpack.c.h.b16 %v2176
    %v3433 = vunpack.c.l.b16 %v2177
    %v3434 = vunpack.c.h.b16 %v2177
    %v3435 = vunpack.c.l.b16 %v2178
    %v3436 = vunpack.c.h.b16 %v2178
    %v3437 = vunpack.c.l.b16 %v2179
    %v3438 = vunpack.c.h.b16 %v2179
    %v3439 = vunpack.c.l.b16 %v2180
    %v3440 = vunpack.c.h.b16 %v2180
    %v3441 = vunpack.c.l.b16 %v2181
    %v3442 = vunpack.c.h.b16 %v2181
    %v3443 = vunpack.c.l.b16 %v2182
    %v3444 = vunpack.c.h.b16 %v2182
    %v3445 = vunpack.c.l.b16 %v2183
    %v3446 = vunpack.c.h.b16 %v2183
    %v3447 = vunpack.c.l.b16 %v2184
    %v3448 = vunpack.c.h.b16 %v2184
    %v3449 = vunpack.c.l.b16 %v2185
    %v3450 = vunpack.c.h.b16 %v2185
    %v3451 = vunpack.c.l.b16 %v2186
    %v3452 = vunpack.c.h.b16 %v2186
    %v3453 = vunpack.c.l.b16 %v2187
    %v3454 = vunpack.c.h.b16 %v2187
    %v3455 = vunpack.c.l.b16 %v2188
    %v3456 = vunpack.c.h.b16 %v2188
    %v3457 = vunpack.c.l.b16 %v2189
    %v3458 = vunpack.c.h.b16 %v2189
    %v3459 = vunpack.c.l.b16 %v2190
    %v3460 = vunpack.c.h.b16 %v2190
    %v3461 = vunpack.c.l.b16 %v2191
    %v3462 = vunpack.c.h.b16 %v2191
    %v3463 = vunpack.c.l.b16 %v2192
    %v3464 = vunpack.c.h.b16 %v2192
    %v3465 = vunpack.c.l.b16 %v2193
    %v3466 = vunpack.c.h.b16 %v2193
    %v3467 = vunpack.c.l.b16 %v2194
    %v3468 = vunpack.c.h.b16 %v2194
    %v3469 = vunpack.c.l.b16 %v2195
    %v3470 = vunpack.c.h.b16 %v2195
    %v3471 = vunpack.c.l.b16 %v2196
    %v3472 = vunpack.c.h.b16 %v2196
    %v3473 = vunpack.c.l.b16 %v2197
    %v3474 = vunpack.c.h.b16 %v2197
    %v3475 = vunpack.c.l.b16 %v2198
    %v3476 = vunpack.c.h.b16 %v2198
    %v3477 = vunpack.c.l.b16 %v2199
    %v3478 = vunpack.c.h.b16 %v2199
    %v3479 = vunpack.c.l.b16 %v2200
    %v3480 = vunpack.c.h.b16 %v2200
    %v3481 = vunpack.c.l.b16 %v2201
    %v3482 = vunpack.c.h.b16 %v2201
    %v3483 = vunpack.c.l.b16 %v2202
    %v3484 = vunpack.c.h.b16 %v2202
    %v3485 = vunpack.c.l.b16 %v2203
    %v3486 = vunpack.c.h.b16 %v2203
    %v3487 = vunpack.c.l.b16 %v2204
    %v3488 = vunpack.c.h.b16 %v2204
    %v3489 = vunpack.c.l.b16 %v2205
    %v3490 = vunpack.c.h.b16 %v2205
    %v3491 = vunpack.c.l.b16 %v2206
    %v3492 = vunpack.c.h.b16 %v2206
    %v3493 = vunpack.c.l.b16 %v2207
    %v3494 = vunpack.c.h.b16 %v2207
    %v3495 = vunpack.c.l.b16 %v2208
    %v3496 = vunpack.c.h.b16 %v2208
    %v3497 = vunpack.c.l.b16 %v2209
    %v3498 = vunpack.c.h.b16 %v2209
    %v3499 = vunpack.c.l.b16 %v2210
    %v3500 = vunpack.c.h.b16 %v2210
    %v3501 = vunpack.c.l.b16 %v2211
    %v3502 = vunpack.c.h.b16 %v2211
    %v3503 = vunpack.c.l.b16 %v2212
    %v3504 = vunpack.c.h.b16 %v2212
    %v3505 = vunpack.c.l.b16 %v2213
    %v3506 = vunpack.c.h.b16 %v2213
    %v3507 = vunpack.c.l.b16 %v2214
    %v3508 = vunpack.c.h.b16 %v2214
    %v3509 = vunpack.c.l.b16 %v2215
    %v3510 = vunpack.c.h.b16 %v2215
    %v3511 = vunpack.c.l.b16 %v2216
    %v3512 = vunpack.c.h.b16 %v2216
    %v3513 = vunpack.c.l.b16 %v2217
    %v3514 = vunpack.c.h.b16 %v2217
    %v3515 = vunpack.c.l.b16 %v2218
    %v3516 = vunpack.c.h.b16 %v2218
    %v3517 = vunpack.c.l.b16 %v2219
    %v3518 = vunpack.c.h.b16 %v2219
    %v3519 = vunpack.c.l.b16 %v2220
    %v3520 = vunpack.c.h.b16 %v2220
    %v3521 = vunpack.c.l.b16 %v2221
    %v3522 = vunpack.c.h.b16 %v2221
    %v3523 = vunpack.c.l.b16 %v2222
    %v3524 = vunpack.c.h.b16 %v2222
    %v3525 = vunpack.c.l.b16 %v2223
    %v3526 = vunpack.c.h.b16 %v2223
    %v3527 = vunpack.c.l.b16 %v2224
    %v3528 = vunpack.c.h.b16 %v2224
    %v3529 = vunpack.c.l.b16 %v2225
    %v3530 = vunpack.c.h.b16 %v2225
    %v3531 = vunpack.c.l.b16 %v2226
    %v3532 = vunpack.c.h.b16 %v2226
    %v3533 = vunpack.c.l.b16 %v2227
    %v3534 = vunpack.c.h.b16 %v2227
    %v3535 = vunpack.c.l.b16 %v2228
    %v3536 = vunpack.c.h.b16 %v2228
    %v3537 = vunpack.c.l.b16 %v2229
    %v3538 = vunpack.c.h.b16 %v2229
    %v3539 = vunpack.c.l.b16 %v2230
    %v3540 = vunpack.c.h.b16 %v2230
    %v3541 = vunpack.c.l.b16 %v2231
    %v3542 = vunpack.c.h.b16 %v2231
    %v3543 = vunpack.c.l.b16 %v2232
    %v3544 = vunpack.c.h.b16 %v2232
    %v3545 = vunpack.c.l.b16 %v2233
    %v3546 = vunpack.c.h.b16 %v2233
    %v3547 = vunpack.c.l.b16 %v2234
    %v3548 = vunpack.c.h.b16 %v2234
    %v3549 = vunpack.c.l.b16 %v2235
    %v3550 = vunpack.c.h.b16 %v2235
    %v3551 = vunpack.c.l.b16 %v2236
    %v3552 = vunpack.c.h.b16 %v2236
    %v3553 = vunpack.c.l.b16 %v2237
    %v3554 = vunpack.c.h.b16 %v2237
    %v3555 = vunpack.c.l.b16 %v2238
    %v3556 = vunpack.c.h.b16 %v2238
    %v3557 = vunpack.c.l.b16 %v2239
    %v3558 = vunpack.c.h.b16 %v2239
    %v3559 = vunpack.c.l.b16 %v2240
    %v3560 = vunpack.c.h.b16 %v2240
    %v3561 = vunpack.c.l.b16 %v2241
    %v3562 = vunpack.c.h.b16 %v2241
    %v3563 = vunpack.c.l.b16 %v2242
    %v3564 = vunpack.c.h.b16 %v2242
    %v3565 = vunpack.c.l.b16 %v2243
    %v3566 = vunpack.c.h.b16 %v2243
    %v3567 = vunpack.c.l.b16 %v2244
    %v3568 = vunpack.c.h.b16 %v2244
    %v3569 = vunpack.c.l.b16 %v2245
    %v3570 = vunpack.c.h.b16 %v2245
    %v3571 = vunpack.c.l.b16 %v2246
    %v3572 = vunpack.c.h.b16 %v2246
    %v3573 = vunpack.c.l.b16 %v2247
    %v3574 = vunpack.c.h.b16 %v2247
    %v3575 = vunpack.c.l.b16 %v2248
    %v3576 = vunpack.c.h.b16 %v2248
    %v3577 = vunpack.c.l.b16 %v2249
    %v3578 = vunpack.c.h.b16 %v2249
    %v3579 = vunpack.c.l.b16 %v2250
    %v3580 = vunpack.c.h.b16 %v2250
    %v3581 = vunpack.c.l.b16 %v2251
    %v3582 = vunpack.c.h.b16 %v2251
    %v3583 = vunpack.c.l.b16 %v2252
    %v3584 = vunpack.c.h.b16 %v2252
    %v3585 = vunpack.c.l.b16 %v2253
    %v3586 = vunpack.c.h.b16 %v2253
    %v3587 = vunpack.c.l.b16 %v2254
    %v3588 = vunpack.c.h.b16 %v2254
    %v3589 = vunpack.c.l.b16 %v2255
    %v3590 = vunpack.c.h.b16 %v2255
    %v3591 = vunpack.c.l.b16 %v2256
    %v3592 = vunpack.c.h.b16 %v2256
    %v3593 = vunpack.c.l.b16 %v2257
    %v3594 = vunpack.c.h.b16 %v2257
    %v3595 = vunpack.c.l.b16 %v2258
    %v3596 = vunpack.c.h.b16 %v2258
    %v3597 = vunpack.c.l.b16 %v2259
    %v3598 = vunpack.c.h.b16 %v2259
    %v3599 = vunpack.c.l.b16 %v2260
    %v3600 = vunpack.c.h.b16 %v2260
    %v3601 = vunpack.c.l.b16 %v2261
    %v3602 = vunpack.c.h.b16 %v2261
    %v3603 = vunpack.c.l.b16 %v2262
    %v3604 = vunpack.c.h.b16 %v2262
    %v3605 = vunpack.c.l.b16 %v2263
    %v3606 = vunpack.c.h.b16 %v2263
    %v3607 = vunpack.c.l.b16 %v2264
    %v3608 = vunpack.c.h.b16 %v2264
    %v3609 = vunpack.c.l.b16 %v2265
    %v3610 = vunpack.c.h.b16 %v2265
    %v3611 = vunpack.c.l.b16 %v2266
    %v3612 = vunpack.c.h.b16 %v2266
    %v3613 = vunpack.c.l.b16 %v2267
    %v3614 = vunpack.c.h.b16 %v2267
    %v3615 = vunpack.c.l.b16 %v2268
    %v3616 = vunpack.c.h.b16 %v2268
    %v3617 = vunpack.c.l.b16 %v2269
    %v3618 = vunpack.c.h.b16 %v2269
    %v3619 = vunpack.c.l.b16 %v2270
    %v3620 = vunpack.c.h.b16 %v2270
    %v3621 = vunpack.c.l.b16 %v2271
    %v3622 = vunpack.c.h.b16 %v2271
    %v3623 = vunpack.c.l.b16 %v2272
    %v3624 = vunpack.c.h.b16 %v2272
    %v3625 = vunpack.c.l.b16 %v2273
    %v3626 = vunpack.c.h.b16 %v2273
    %v3627 = vunpack.c.l.b16 %v2274
    %v3628 = vunpack.c.h.b16 %v2274
    %v3629 = vunpack.c.l.b16 %v2275
    %v3630 = vunpack.c.h.b16 %v2275
    %v3631 = vunpack.c.l.b16 %v2276
    %v3632 = vunpack.c.h.b16 %v2276
    %v3633 = vunpack.c.l.b16 %v2277
    %v3634 = vunpack.c.h.b16 %v2277
    %v3635 = vunpack.c.l.b16 %v2278
    %v3636 = vunpack.c.h.b16 %v2278
    %v3637 = vunpack.c.l.b16 %v2279
    %v3638 = vunpack.c.h.b16 %v2279
    %v3639 = vunpack.c.l.b16 %v2280
    %v3640 = vunpack.c.h.b16 %v2280
    %v3641 = vunpack.c.l.b16 %v2281
    %v3642 = vunpack.c.h.b16 %v2281
    %v3643 = vunpack.c.l.b16 %v2282
    %v3644 = vunpack.c.h.b16 %v2282
    %v3645 = vunpack.c.l.b16 %v2283
    %v3646 = vunpack.c.h.b16 %v2283
    %v3647 = vunpack.c.l.b16 %v2284
    %v3648 = vunpack.c.h.b16 %v2284
    %v3649 = vunpack.c.l.b16 %v2285
    %v3650 = vunpack.c.h.b16 %v2285
    %v3651 = vunpack.c.l.b16 %v2286
    %v3652 = vunpack.c.h.b16 %v2286
    %v3653 = vunpack.c.l.b16 %v2287
    %v3654 = vunpack.c.h.b16 %v2287
    %v3655 = vunpack.c.l.b16 %v2288
    %v3656 = vunpack.c.h.b16 %v2288
    %v3657 = vunpack.c.l.b16 %v2289
    %v3658 = vunpack.c.h.b16 %v2289
    %v3659 = vunpack.c.l.b16 %v2290
    %v3660 = vunpack.c.h.b16 %v2290
    %v3661 = vunpack.c.l.b16 %v2291
    %v3662 = vunpack.c.h.b16 %v2291
    %v3663 = vunpack.c.l.b16 %v2292
    %v3664 = vunpack.c.h.b16 %v2292
    %v3665 = vunpack.c.l.b16 %v2293
    %v3666 = vunpack.c.h.b16 %v2293
    %v3667 = vunpack.c.l.b16 %v2294
    %v3668 = vunpack.c.h.b16 %v2294
    %v3669 = vunpack.c.l.b16 %v2295
    %v3670 = vunpack.c.h.b16 %v2295
    %v3671 = vunpack.c.l.b16 %v2296
    %v3672 = vunpack.c.h.b16 %v2296
    %v3673 = vpack.c.b16 %v3421, %v3417
    %v3674 = vpack.c.b16 %v3422, %v3418
    %v3675 = vpack.c.b16 %v3423, %v3419
    %v3676 = vpack.c.b16 %v3424, %v3420
    %v3677 = vpack.c.b16 %v3429, %v3425
    %v3678 = vpack.c.b16 %v3430, %v3426
    %v3679 = vpack.c.b16 %v3431, %v3427
    %v3680 = vpack.c.b16 %v3432, %v3428
    %v3681 = vpack.c.b16 %v3437, %v3433
    %v3682 = vpack.c.b16 %v3438, %v3434
    %v3683 = vpack.c.b16 %v3439, %v3435
    %v3684 = vpack.c.b16 %v3440, %v3436
    %v3685 = vpack.c.b16 %v3445, %v3441
    %v3686 = vpack.c.b16 %v3446, %v3442
    %v3687 = vpack.c.b16 %v3447, %v3443
    %v3688 = vpack.c.b16 %v3448, %v3444
    %v3689 = vpack.c.b16 %v3453, %v3449
    %v3690 = vpack.c.b16 %v3454, %v3450
    %v3691 = vpack.c.b16 %v3455, %v3451
    %v3692 = vpack.c.b16 %v3456, %v3452
    %v3693 = vpack.c.b16 %v3461, %v3457
    %v3694 = vpack.c.b16 %v3462, %v3458
    %v3695 = vpack.c.b16 %v3463, %v3459
    %v3696 = vpack.c.b16 %v3464, %v3460
    %v3697 = vpack.c.b16 %v3469, %v3465
    %v3698 = vpack.c.b16 %v3470, %v3466
    %v3699 = vpack.c.b16 %v3471, %v3467
    %v3700 = vpack.c.b16 %v3472, %v3468
    %v3701 = vpack.c.b16 %v3477, %v3473
    %v3702 = vpack.c.b16 %v3478, %v3474
    %v3703 = vpack.c.b16 %v3479, %v3475
    %v3704 = vpack.c.b16 %v3480, %v3476
    %v3705 = vpack.c.b16 %v3485, %v3481
    %v3706 = vpack.c.b16 %v3486, %v3482
    %v3707 = vpack.c.b16 %v3487, %v3483
    %v3708 = vpack.c.b16 %v3488, %v3484
    %v3709 = vpack.c.b16 %v3493, %v3489
    %v3710 = vpack.c.b16 %v3494, %v3490
    %v3711 = vpack.c.b16 %v3495, %v3491
    %v3712 = vpack.c.b16 %v3496, %v3492
    %v3713 = vpack.c.b16 %v3501, %v3497
    %v3714 = vpack.c.b16 %v3502, %v3498
    %v3715 = vpack.c.b16 %v3503, %v3499
    %v3716 = vpack.c.b16 %v3504, %v3500
    %v3717 = vpack.c.b16 %v3509, %v3505
    %v3718 = vpack.c.b16 %v3510, %v3506
    %v3719 = vpack.c.b16 %v3511, %v3507
    %v3720 = vpack.c.b16 %v3512, %v3508
    %v3721 = vpack.c.b16 %v3517, %v3513
    %v3722 = vpack.c.b16 %v3518, %v3514
    %v3723 = vpack.c.b16 %v3519, %v3515
    %v3724 = vpack.c.b16 %v3520, %v3516
    %v3725 = vpack.c.b16 %v3525, %v3521
    %v3726 = vpack.c.b16 %v3526, %v3522
    %v3727 = vpack.c.b16 %v3527, %v3523
    %v3728 = vpack.c.b16 %v3528, %v3524
    %v3729 = vpack.c.b16 %v3533, %v3529
    %v3730 = vpack.c.b16 %v3534, %v3530
    %v3731 = vpack.c.b16 %v3535, %v3531
    %v3732 = vpack.c.b16 %v3536, %v3532
    %v3733 = vpack.c.b16 %v3541, %v3537
    %v3734 = vpack.c.b16 %v3542, %v3538
    %v3735 = vpack.c.b16 %v3543, %v3539
    %v3736 = vpack.c.b16 %v3544, %v3540
    %v3737 = vpack.c.b16 %v3549, %v3545
    %v3738 = vpack.c.b16 %v3550, %v3546
    %v3739 = vpack.c.b16 %v3551, %v3547
    %v3740 = vpack.c.b16 %v3552, %v3548
    %v3741 = vpack.c.b16 %v3557, %v3553
    %v3742 = vpack.c.b16 %v3558, %v3554
    %v3743 = vpack.c.b16 %v3559, %v3555
    %v3744 = vpack.c.b16 %v3560, %v3556
    %v3745 = vpack.c.b16 %v3565, %v3561
    %v3746 = vpack.c.b16 %v3566, %v3562
    %v3747 = vpack.c.b16 %v3567, %v3563
    %v3748 = vpack.c.b16 %v3568, %v3564
    %v3749 = vpack.c.b16 %v3573, %v3569
    %v3750 = vpack.c.b16 %v3574, %v3570
    %v3751 = vpack.c.b16 %v3575, %v3571
    %v3752 = vpack.c.b16 %v3576, %v3572
    %v3753 = vpack.c.b16 %v3581, %v3577
    %v3754 = vpack.c.b16 %v3582, %v3578
    %v3755 = vpack.c.b16 %v3583, %v3579
    %v3756 = vpack.c.b16 %v3584, %v3580
    %v3757 = vpack.c.b16 %v3589, %v3585
    %v3758 = vpack.c.b16 %v3590, %v3586
    %v3759 = vpack.c.b16 %v3591, %v3587
    %v3760 = vpack.c.b16 %v3592, %v3588
    %v3761 = vpack.c.b16 %v3597, %v3593
    %v3762 = vpack.c.b16 %v3598, %v3594
    %v3763 = vpack.c.b16 %v3599, %v3595
    %v3764 = vpack.c.b16 %v3600, %v3596
    %v3765 = vpack.c.b16 %v3605, %v3601
    %v3766 = vpack.c.b16 %v3606, %v3602
    %v3767 = vpack.c.b16 %v3607, %v3603
    %v3768 = vpack.c.b16 %v3608, %v3604
    %v3769 = vpack.c.b16 %v3613, %v3609
    %v3770 = vpack.c.b16 %v3614, %v3610
    %v3771 = vpack.c.b16 %v3615, %v3611
    %v3772 = vpack.c.b16 %v3616, %v3612
    %v3773 = vpack.c.b16 %v3621, %v3617
    %v3774 = vpack.c.b16 %v3622, %v3618
    %v3775 = vpack.c.b16 %v3623, %v3619
    %v3776 = vpack.c.b16 %v3624, %v3620
    %v3777 = vpack.c.b16 %v3629, %v3625
    %v3778 = vpack.c.b16 %v3630, %v3626
    %v3779 = vpack.c.b16 %v3631, %v3627
    %v3780 = vpack.c.b16 %v3632, %v3628
    %v3781 = vpack.c.b16 %v3637, %v3633
    %v3782 = vpack.c.b16 %v3638, %v3634
    %v3783 = vpack.c.b16 %v3639, %v3635
    %v3784 = vpack.c.b16 %v3640, %v3636
    %v3785 = vpack.c.b16 %v3645, %v3641
    %v3786 = vpack.c.b16 %v3646, %v3642
    %v3787 = vpack.c.b16 %v3647, %v3643
    %v3788 = vpack.c.b16 %v3648, %v3644
    %v3789 = vpack.c.b16 %v3653, %v3649
    %v3790 = vpack.c.b16 %v3654, %v3650
    %v3791 = vpack.c.b16 %v3655, %v3651
    %v3792 = vpack.c.b16 %v3656, %v3652
    %v3793 = vpack.c.b16 %v3661, %v3657
    %v3794 = vpack.c.b16 %v3662, %v3658
    %v3795 = vpack.c.b16 %v3663, %v3659
    %v3796 = vpack.c.b16 %v3664, %v3660
    %v3797 = vpack.c.b16 %v3669, %v3665
    %v3798 = vpack.c.b16 %v3670, %v3666
    %v3799 = vpack.c.b16 %v3671, %v3667
    %v3800 = vpack.c.b16 %v3672, %v3668
    %3929 = vmatprep.subr.bf16.mxu0 %v3702
    %3930 = vmatpush1.bf16.msra.mxu0 %v3701
    %3931 = vmatprep.subr.bf16.mxu0 %v3698
    %3932 = vmatpush1.bf16.msra.mxu0 %v3697
    %3933 = vmatprep.subr.bf16.mxu0 %v3694
    %3934 = vmatpush1.bf16.msra.mxu0 %v3693
    %3935 = vmatprep.subr.bf16.mxu0 %v3690
    %3936 = vmatpush1.bf16.msra.mxu0 %v3689
    %3937 = vmatprep.subr.bf16.mxu0 %v3686
    %3938 = vmatpush1.bf16.msra.mxu0 %v3685
    %3939 = vmatprep.subr.bf16.mxu0 %v3682
    %3940 = vmatpush1.bf16.msra.mxu0 %v3681
    %3941 = vmatprep.subr.bf16.mxu0 %v3678
    %3942 = vmatpush1.bf16.msra.mxu0 %v3677
    %3943 = vmatprep.subr.bf16.mxu0 %v3674
    %3944 = vmatpush1.bf16.msra.mxu0 %v3673
    %3945 = vmatprep.subr.bf16.mxu0 %v3734
    %3946 = vmatpush2.bf16.msra.mxu0 %v3733
    %3947 = vmatprep.subr.bf16.mxu0 %v3730
    %3948 = vmatpush2.bf16.msra.mxu0 %v3729
    %3949 = vmatprep.subr.bf16.mxu0 %v3726
    %3950 = vmatpush2.bf16.msra.mxu0 %v3725
    %3951 = vmatprep.subr.bf16.mxu0 %v3722
    %3952 = vmatpush2.bf16.msra.mxu0 %v3721
    %3953 = vmatprep.subr.bf16.mxu0 %v3718
    %3954 = vmatpush2.bf16.msra.mxu0 %v3717
    %3955 = vmatprep.subr.bf16.mxu0 %v3714
    %3956 = vmatpush2.bf16.msra.mxu0 %v3713
    %3957 = vmatprep.subr.bf16.mxu0 %v3710
    %3958 = vmatpush2.bf16.msra.mxu0 %v3709
    %3959 = vmatprep.subr.bf16.mxu0 %v3706
    %3960 = vmatpush2.bf16.msra.mxu0 %v3705
    %3961 = vmatprep.mubr.bf16.mxu0 %v3282
    %3962 = vmatmul.mubr.bf16.gmra.mxu0 %v3275
    %v3963 = vpop.f32.mrf.mxu0
    %v3964 = vadd.f32 %v3172, %v3963
    %v3965 = vpop.f32.mrf.mxu0
    %v3966 = vadd.f32 %v3174, %v3965
    %v3967 = vpop.f32.mrf.mxu0
    %v3968 = vpop.f32.mrf.mxu0
    %3969 = vdwg.mxu0
    %3970 = vmatprep.subr.bf16.mxu0 %v3766
    %3971 = vmatpush1.bf16.msra.mxu0 %v3765
    %3972 = vmatprep.subr.bf16.mxu0 %v3762
    %3973 = vmatpush1.bf16.msra.mxu0 %v3761
    %3974 = vmatprep.subr.bf16.mxu0 %v3758
    %3975 = vmatpush1.bf16.msra.mxu0 %v3757
    %3976 = vmatprep.subr.bf16.mxu0 %v3754
    %3977 = vmatpush1.bf16.msra.mxu0 %v3753
    %3978 = vmatprep.subr.bf16.mxu0 %v3750
    %3979 = vmatpush1.bf16.msra.mxu0 %v3749
    %3980 = vmatprep.subr.bf16.mxu0 %v3746
    %3981 = vmatpush1.bf16.msra.mxu0 %v3745
    %3982 = vmatprep.subr.bf16.mxu0 %v3742
    %3983 = vmatpush1.bf16.msra.mxu0 %v3741
    %3984 = vmatprep.subr.bf16.mxu0 %v3738
    %3985 = vmatpush1.bf16.msra.mxu0 %v3737
    %3986 = vmatprep.subr.bf16.mxu0 %v3798
    %3987 = vmatpush2.bf16.msra.mxu0 %v3797
    %3988 = vmatprep.subr.bf16.mxu0 %v3794
    %3989 = vmatpush2.bf16.msra.mxu0 %v3793
    %3990 = vmatprep.subr.bf16.mxu0 %v3790
    %3991 = vmatpush2.bf16.msra.mxu0 %v3789
    %3992 = vmatprep.subr.bf16.mxu0 %v3786
    %3993 = vmatpush2.bf16.msra.mxu0 %v3785
    %3994 = vmatprep.subr.bf16.mxu0 %v3782
    %3995 = vmatpush2.bf16.msra.mxu0 %v3781
    %3996 = vmatprep.subr.bf16.mxu0 %v3778
    %3997 = vmatpush2.bf16.msra.mxu0 %v3777
    %3998 = vmatprep.subr.bf16.mxu0 %v3774
    %3999 = vmatpush2.bf16.msra.mxu0 %v3773
    %4000 = vmatprep.subr.bf16.mxu0 %v3770
    %4001 = vmatpush2.bf16.msra.mxu0 %v3769
    %4002 = vmatprep.mubr.bf16.mxu0 %v3284
    %4003 = vmatmul.mubr.bf16.gmra.mxu0 %v3283
    %v4004 = vpop.f32.mrf.mxu0
    %v4005 = vadd.f32 %v3964, %v4004
    %v4006 = vpop.f32.mrf.mxu0
    %v4007 = vadd.f32 %v3966, %v4006
    %v4008 = vpop.f32.mrf.mxu0
    %v4009 = vpop.f32.mrf.mxu0
    %4010 = vdwg.mxu0
    %4011 = vmatprep.subr.bf16.mxu0 %v3704
    %4012 = vmatpush1.bf16.msra.mxu0 %v3703
    %4013 = vmatprep.subr.bf16.mxu0 %v3700
    %4014 = vmatpush1.bf16.msra.mxu0 %v3699
    %4015 = vmatprep.subr.bf16.mxu0 %v3696
    %4016 = vmatpush1.bf16.msra.mxu0 %v3695
    %4017 = vmatprep.subr.bf16.mxu0 %v3692
    %4018 = vmatpush1.bf16.msra.mxu0 %v3691
    %4019 = vmatprep.subr.bf16.mxu0 %v3688
    %4020 = vmatpush1.bf16.msra.mxu0 %v3687
    %4021 = vmatprep.subr.bf16.mxu0 %v3684
    %4022 = vmatpush1.bf16.msra.mxu0 %v3683
    %4023 = vmatprep.subr.bf16.mxu0 %v3680
    %4024 = vmatpush1.bf16.msra.mxu0 %v3679
    %4025 = vmatprep.subr.bf16.mxu0 %v3676
    %4026 = vmatpush1.bf16.msra.mxu0 %v3675
    %4027 = vmatprep.subr.bf16.mxu0 %v3736
    %4028 = vmatpush2.bf16.msra.mxu0 %v3735
    %4029 = vmatprep.subr.bf16.mxu0 %v3732
    %4030 = vmatpush2.bf16.msra.mxu0 %v3731
    %4031 = vmatprep.subr.bf16.mxu0 %v3728
    %4032 = vmatpush2.bf16.msra.mxu0 %v3727
    %4033 = vmatprep.subr.bf16.mxu0 %v3724
    %4034 = vmatpush2.bf16.msra.mxu0 %v3723
    %4035 = vmatprep.subr.bf16.mxu0 %v3720
    %4036 = vmatpush2.bf16.msra.mxu0 %v3719
    %4037 = vmatprep.subr.bf16.mxu0 %v3716
    %4038 = vmatpush2.bf16.msra.mxu0 %v3715
    %4039 = vmatprep.subr.bf16.mxu0 %v3712
    %4040 = vmatpush2.bf16.msra.mxu0 %v3711
    %4041 = vmatprep.subr.bf16.mxu0 %v3708
    %4042 = vmatpush2.bf16.msra.mxu0 %v3707
    %4043 = vmatprep.mubr.bf16.mxu0 %v3282
    %4044 = vmatmul.mubr.bf16.gmra.mxu0 %v3275
    %v4045 = vpop.f32.mrf.mxu0
    %v4046 = vadd.f32 %v3254, %v4045
    %v4047 = vpop.f32.mrf.mxu0
    %v4048 = vadd.f32 %v3256, %v4047
    %v4049 = vpop.f32.mrf.mxu0
    %v4050 = vpop.f32.mrf.mxu0
    %4051 = vdwg.mxu0
    %4052 = vmatprep.subr.bf16.mxu0 %v3768
    %4053 = vmatpush1.bf16.msra.mxu0 %v3767
    %4054 = vmatprep.subr.bf16.mxu0 %v3764
    %4055 = vmatpush1.bf16.msra.mxu0 %v3763
    %4056 = vmatprep.subr.bf16.mxu0 %v3760
    %4057 = vmatpush1.bf16.msra.mxu0 %v3759
    %4058 = vmatprep.subr.bf16.mxu0 %v3756
    %4059 = vmatpush1.bf16.msra.mxu0 %v3755
    %4060 = vmatprep.subr.bf16.mxu0 %v3752
    %4061 = vmatpush1.bf16.msra.mxu0 %v3751
    %4062 = vmatprep.subr.bf16.mxu0 %v3748
    %4063 = vmatpush1.bf16.msra.mxu0 %v3747
    %4064 = vmatprep.subr.bf16.mxu0 %v3744
    %4065 = vmatpush1.bf16.msra.mxu0 %v3743
    %4066 = vmatprep.subr.bf16.mxu0 %v3740
    %4067 = vmatpush1.bf16.msra.mxu0 %v3739
    %4068 = vmatprep.subr.bf16.mxu0 %v3800
    %4069 = vmatpush2.bf16.msra.mxu0 %v3799
    %4070 = vmatprep.subr.bf16.mxu0 %v3796
    %4071 = vmatpush2.bf16.msra.mxu0 %v3795
    %4072 = vmatprep.subr.bf16.mxu0 %v3792
    %4073 = vmatpush2.bf16.msra.mxu0 %v3791
    %4074 = vmatprep.subr.bf16.mxu0 %v3788
    %4075 = vmatpush2.bf16.msra.mxu0 %v3787
    %4076 = vmatprep.subr.bf16.mxu0 %v3784
    %4077 = vmatpush2.bf16.msra.mxu0 %v3783
    %4078 = vmatprep.subr.bf16.mxu0 %v3780
    %4079 = vmatpush2.bf16.msra.mxu0 %v3779
    %4080 = vmatprep.subr.bf16.mxu0 %v3776
    %4081 = vmatpush2.bf16.msra.mxu0 %v3775
    %4082 = vmatprep.subr.bf16.mxu0 %v3772
    %4083 = vmatpush2.bf16.msra.mxu0 %v3771
    %4084 = vmatprep.mubr.bf16.mxu0 %v3284
    %4085 = vmatmul.mubr.bf16.gmra.mxu0 %v3283
    %v4086 = vpop.f32.mrf.mxu0
    %v4087 = vadd.f32 %v4046, %v4086
    %v4088 = vpop.f32.mrf.mxu0
    %v4089 = vadd.f32 %v4048, %v4088
    %v4090 = vpop.f32.mrf.mxu0
    %v4091 = vpop.f32.mrf.mxu0
    %4092 = vdwg.mxu0
    %v4093 = vld [vmem:[%s485] sm:$0xf]
    %s4094 = scalar_lea.vmem %s3, 2048
    %v4095 = vld [vmem:[%s4094] sm:$0xff]
    %v4096 = vld [vmem:[%s4094 + $0x8] sm:$0xff]
    %v4097 = vld [vmem:[%s4094 + $0x10] sm:$0xff]
    %v4098 = vld [vmem:[%s4094 + $0x18] sm:$0xff]
    %v4099 = vld [vmem:[%s4094 + $0x20] sm:$0xff]
    %v4100 = vld [vmem:[%s4094 + $0x28] sm:$0xff]
    %v4101 = vld [vmem:[%s4094 + $0x30] sm:$0xff]
    %v4102 = vld [vmem:[%s4094 + $0x38] sm:$0xff]
    %v4103 = vld [vmem:[%s4094 + $0x40] sm:$0xff]
    %v4104 = vld [vmem:[%s4094 + $0x48] sm:$0xff]
    %v4105 = vld [vmem:[%s4094 + $0x50] sm:$0xff]
    %v4106 = vld [vmem:[%s4094 + $0x58] sm:$0xff]
    %v4107 = vld [vmem:[%s4094 + $0x60] sm:$0xff]
    %v4108 = vld [vmem:[%s4094 + $0x68] sm:$0xff]
    %v4109 = vld [vmem:[%s4094 + $0x70] sm:$0xff]
    %v4110 = vld [vmem:[%s4094 + $0x78] sm:$0xff]
    %v4111 = vld [vmem:[%s4094 + $0x80] sm:$0xff]
    %v4112 = vld [vmem:[%s4094 + $0x88] sm:$0xff]
    %v4113 = vld [vmem:[%s4094 + $0x90] sm:$0xff]
    %v4114 = vld [vmem:[%s4094 + $0x98] sm:$0xff]
    %v4115 = vld [vmem:[%s4094 + $0xa0] sm:$0xff]
    %v4116 = vld [vmem:[%s4094 + $0xa8] sm:$0xff]
    %v4117 = vld [vmem:[%s4094 + $0xb0] sm:$0xff]
    %v4118 = vld [vmem:[%s4094 + $0xb8] sm:$0xff]
    %v4119 = vld [vmem:[%s4094 + $0xc0] sm:$0xff]
    %v4120 = vld [vmem:[%s4094 + $0xc8] sm:$0xff]
    %v4121 = vld [vmem:[%s4094 + $0xd0] sm:$0xff]
    %v4122 = vld [vmem:[%s4094 + $0xd8] sm:$0xff]
    %v4123 = vld [vmem:[%s4094 + $0xe0] sm:$0xff]
    %v4124 = vld [vmem:[%s4094 + $0xe8] sm:$0xff]
    %v4125 = vld [vmem:[%s4094 + $0xf0] sm:$0xff]
    %v4126 = vld [vmem:[%s4094 + $0xf8] sm:$0xff]
    %v4127 = vld [vmem:[%s4094 + $0x100] sm:$0xff]
    %v4128 = vld [vmem:[%s4094 + $0x108] sm:$0xff]
    %v4129 = vld [vmem:[%s4094 + $0x110] sm:$0xff]
    %v4130 = vld [vmem:[%s4094 + $0x118] sm:$0xff]
    %v4131 = vld [vmem:[%s4094 + $0x120] sm:$0xff]
    %v4132 = vld [vmem:[%s4094 + $0x128] sm:$0xff]
    %v4133 = vld [vmem:[%s4094 + $0x130] sm:$0xff]
    %v4134 = vld [vmem:[%s4094 + $0x138] sm:$0xff]
    %v4135 = vld [vmem:[%s4094 + $0x140] sm:$0xff]
    %v4136 = vld [vmem:[%s4094 + $0x148] sm:$0xff]
    %v4137 = vld [vmem:[%s4094 + $0x150] sm:$0xff]
    %v4138 = vld [vmem:[%s4094 + $0x158] sm:$0xff]
    %v4139 = vld [vmem:[%s4094 + $0x160] sm:$0xff]
    %v4140 = vld [vmem:[%s4094 + $0x168] sm:$0xff]
    %v4141 = vld [vmem:[%s4094 + $0x170] sm:$0xff]
    %v4142 = vld [vmem:[%s4094 + $0x178] sm:$0xff]
    %v4143 = vld [vmem:[%s4094 + $0x180] sm:$0xff]
    %v4144 = vld [vmem:[%s4094 + $0x188] sm:$0xff]
    %v4145 = vld [vmem:[%s4094 + $0x190] sm:$0xff]
    %v4146 = vld [vmem:[%s4094 + $0x198] sm:$0xff]
    %v4147 = vld [vmem:[%s4094 + $0x1a0] sm:$0xff]
    %v4148 = vld [vmem:[%s4094 + $0x1a8] sm:$0xff]
    %v4149 = vld [vmem:[%s4094 + $0x1b0] sm:$0xff]
    %v4150 = vld [vmem:[%s4094 + $0x1b8] sm:$0xff]
    %v4151 = vld [vmem:[%s4094 + $0x1c0] sm:$0xff]
    %v4152 = vld [vmem:[%s4094 + $0x1c8] sm:$0xff]
    %v4153 = vld [vmem:[%s4094 + $0x1d0] sm:$0xff]
    %v4154 = vld [vmem:[%s4094 + $0x1d8] sm:$0xff]
    %v4155 = vld [vmem:[%s4094 + $0x1e0] sm:$0xff]
    %v4156 = vld [vmem:[%s4094 + $0x1e8] sm:$0xff]
    %v4157 = vld [vmem:[%s4094 + $0x1f0] sm:$0xff]
    %v4158 = vld [vmem:[%s4094 + $0x1f8] sm:$0xff]
    %v4159 = vld [vmem:[%s4094 + $0x200] sm:$0xff]
    %v4160 = vld [vmem:[%s4094 + $0x208] sm:$0xff]
    %v4161 = vld [vmem:[%s4094 + $0x210] sm:$0xff]
    %v4162 = vld [vmem:[%s4094 + $0x218] sm:$0xff]
    %v4163 = vld [vmem:[%s4094 + $0x220] sm:$0xff]
    %v4164 = vld [vmem:[%s4094 + $0x228] sm:$0xff]
    %v4165 = vld [vmem:[%s4094 + $0x230] sm:$0xff]
    %v4166 = vld [vmem:[%s4094 + $0x238] sm:$0xff]
    %v4167 = vld [vmem:[%s4094 + $0x240] sm:$0xff]
    %v4168 = vld [vmem:[%s4094 + $0x248] sm:$0xff]
    %v4169 = vld [vmem:[%s4094 + $0x250] sm:$0xff]
    %v4170 = vld [vmem:[%s4094 + $0x258] sm:$0xff]
    %v4171 = vld [vmem:[%s4094 + $0x260] sm:$0xff]
    %v4172 = vld [vmem:[%s4094 + $0x268] sm:$0xff]
    %v4173 = vld [vmem:[%s4094 + $0x270] sm:$0xff]
    %v4174 = vld [vmem:[%s4094 + $0x278] sm:$0xff]
    %v4175 = vld [vmem:[%s4094 + $0x280] sm:$0xff]
    %v4176 = vld [vmem:[%s4094 + $0x288] sm:$0xff]
    %v4177 = vld [vmem:[%s4094 + $0x290] sm:$0xff]
    %v4178 = vld [vmem:[%s4094 + $0x298] sm:$0xff]
    %v4179 = vld [vmem:[%s4094 + $0x2a0] sm:$0xff]
    %v4180 = vld [vmem:[%s4094 + $0x2a8] sm:$0xff]
    %v4181 = vld [vmem:[%s4094 + $0x2b0] sm:$0xff]
    %v4182 = vld [vmem:[%s4094 + $0x2b8] sm:$0xff]
    %v4183 = vld [vmem:[%s4094 + $0x2c0] sm:$0xff]
    %v4184 = vld [vmem:[%s4094 + $0x2c8] sm:$0xff]
    %v4185 = vld [vmem:[%s4094 + $0x2d0] sm:$0xff]
    %v4186 = vld [vmem:[%s4094 + $0x2d8] sm:$0xff]
    %v4187 = vld [vmem:[%s4094 + $0x2e0] sm:$0xff]
    %v4188 = vld [vmem:[%s4094 + $0x2e8] sm:$0xff]
    %v4189 = vld [vmem:[%s4094 + $0x2f0] sm:$0xff]
    %v4190 = vld [vmem:[%s4094 + $0x2f8] sm:$0xff]
    %v4191 = vld [vmem:[%s4094 + $0x300] sm:$0xff]
    %v4192 = vld [vmem:[%s4094 + $0x308] sm:$0xff]
    %v4193 = vld [vmem:[%s4094 + $0x310] sm:$0xff]
    %v4194 = vld [vmem:[%s4094 + $0x318] sm:$0xff]
    %v4195 = vld [vmem:[%s4094 + $0x320] sm:$0xff]
    %v4196 = vld [vmem:[%s4094 + $0x328] sm:$0xff]
    %v4197 = vld [vmem:[%s4094 + $0x330] sm:$0xff]
    %v4198 = vld [vmem:[%s4094 + $0x338] sm:$0xff]
    %v4199 = vld [vmem:[%s4094 + $0x340] sm:$0xff]
    %v4200 = vld [vmem:[%s4094 + $0x348] sm:$0xff]
    %v4201 = vld [vmem:[%s4094 + $0x350] sm:$0xff]
    %v4202 = vld [vmem:[%s4094 + $0x358] sm:$0xff]
    %v4203 = vld [vmem:[%s4094 + $0x360] sm:$0xff]
    %v4204 = vld [vmem:[%s4094 + $0x368] sm:$0xff]
    %v4205 = vld [vmem:[%s4094 + $0x370] sm:$0xff]
    %v4206 = vld [vmem:[%s4094 + $0x378] sm:$0xff]
    %v4207 = vld [vmem:[%s4094 + $0x380] sm:$0xff]
    %v4208 = vld [vmem:[%s4094 + $0x388] sm:$0xff]
    %v4209 = vld [vmem:[%s4094 + $0x390] sm:$0xff]
    %v4210 = vld [vmem:[%s4094 + $0x398] sm:$0xff]
    %v4211 = vld [vmem:[%s4094 + $0x3a0] sm:$0xff]
    %v4212 = vld [vmem:[%s4094 + $0x3a8] sm:$0xff]
    %v4213 = vld [vmem:[%s4094 + $0x3b0] sm:$0xff]
    %v4214 = vld [vmem:[%s4094 + $0x3b8] sm:$0xff]
    %v4215 = vld [vmem:[%s4094 + $0x3c0] sm:$0xff]
    %v4216 = vld [vmem:[%s4094 + $0x3c8] sm:$0xff]
    %v4217 = vld [vmem:[%s4094 + $0x3d0] sm:$0xff]
    %v4218 = vld [vmem:[%s4094 + $0x3d8] sm:$0xff]
    %v4219 = vld [vmem:[%s4094 + $0x3e0] sm:$0xff]
    %v4220 = vld [vmem:[%s4094 + $0x3e8] sm:$0xff]
    %v4221 = vld [vmem:[%s4094 + $0x3f0] sm:$0xff]
    %v4222 = vld [vmem:[%s4094 + $0x3f8] sm:$0xff]
    %v4225 = vunpack.c.l.s4 1966171168
    %v4226 = vunpack.c.0.s8 %v4225
    %v4227 = vlaneseq
    %v4228 = vshrl.u32 %v4227, 7
    %v4229 = vsub.s32 %v4226, %v4228
    %v4230 = vrot.slane %v4093, %v4229
    %v4231 = vcombine.high %v4230, %v4230
    %v4233 = vunpack.c.l.s4 1966171168
    %v4234 = vunpack.c.0.s8 %v4233
    %v4235 = vlaneseq
    %v4236 = vshrl.u32 %v4235, 7
    %v4237 = vsub.s32 %v4234, %v4236
    %v4238 = vrot.slane %v4230, %v4237
    %v4240 = vunpack.c.l.s4 1966171168
    %v4241 = vunpack.c.0.s8 %v4240
    %v4242 = vlaneseq
    %v4243 = vshrl.u32 %v4242, 7
    %v4244 = vsub.s32 %v4241, %v4243
    %v4245 = vrot.slane %v4231, %v4244
    %v4246 = vcombine.high %v4238, %v4238
    %v4247 = vcombine.high %v4245, %v4245
    %v4380 = vunpack.c.l.b16 %v4095
    %v4381 = vunpack.c.h.b16 %v4095
    %v4382 = vunpack.c.l.b16 %v4096
    %v4383 = vunpack.c.h.b16 %v4096
    %v4384 = vunpack.c.l.b16 %v4097
    %v4385 = vunpack.c.h.b16 %v4097
    %v4386 = vunpack.c.l.b16 %v4098
    %v4387 = vunpack.c.h.b16 %v4098
    %v4388 = vunpack.c.l.b16 %v4099
    %v4389 = vunpack.c.h.b16 %v4099
    %v4390 = vunpack.c.l.b16 %v4100
    %v4391 = vunpack.c.h.b16 %v4100
    %v4392 = vunpack.c.l.b16 %v4101
    %v4393 = vunpack.c.h.b16 %v4101
    %v4394 = vunpack.c.l.b16 %v4102
    %v4395 = vunpack.c.h.b16 %v4102
    %v4396 = vunpack.c.l.b16 %v4103
    %v4397 = vunpack.c.h.b16 %v4103
    %v4398 = vunpack.c.l.b16 %v4104
    %v4399 = vunpack.c.h.b16 %v4104
    %v4400 = vunpack.c.l.b16 %v4105
    %v4401 = vunpack.c.h.b16 %v4105
    %v4402 = vunpack.c.l.b16 %v4106
    %v4403 = vunpack.c.h.b16 %v4106
    %v4404 = vunpack.c.l.b16 %v4107
    %v4405 = vunpack.c.h.b16 %v4107
    %v4406 = vunpack.c.l.b16 %v4108
    %v4407 = vunpack.c.h.b16 %v4108
    %v4408 = vunpack.c.l.b16 %v4109
    %v4409 = vunpack.c.h.b16 %v4109
    %v4410 = vunpack.c.l.b16 %v4110
    %v4411 = vunpack.c.h.b16 %v4110
    %v4412 = vunpack.c.l.b16 %v4111
    %v4413 = vunpack.c.h.b16 %v4111
    %v4414 = vunpack.c.l.b16 %v4112
    %v4415 = vunpack.c.h.b16 %v4112
    %v4416 = vunpack.c.l.b16 %v4113
    %v4417 = vunpack.c.h.b16 %v4113
    %v4418 = vunpack.c.l.b16 %v4114
    %v4419 = vunpack.c.h.b16 %v4114
    %v4420 = vunpack.c.l.b16 %v4115
    %v4421 = vunpack.c.h.b16 %v4115
    %v4422 = vunpack.c.l.b16 %v4116
    %v4423 = vunpack.c.h.b16 %v4116
    %v4424 = vunpack.c.l.b16 %v4117
    %v4425 = vunpack.c.h.b16 %v4117
    %v4426 = vunpack.c.l.b16 %v4118
    %v4427 = vunpack.c.h.b16 %v4118
    %v4428 = vunpack.c.l.b16 %v4119
    %v4429 = vunpack.c.h.b16 %v4119
    %v4430 = vunpack.c.l.b16 %v4120
    %v4431 = vunpack.c.h.b16 %v4120
    %v4432 = vunpack.c.l.b16 %v4121
    %v4433 = vunpack.c.h.b16 %v4121
    %v4434 = vunpack.c.l.b16 %v4122
    %v4435 = vunpack.c.h.b16 %v4122
    %v4436 = vunpack.c.l.b16 %v4123
    %v4437 = vunpack.c.h.b16 %v4123
    %v4438 = vunpack.c.l.b16 %v4124
    %v4439 = vunpack.c.h.b16 %v4124
    %v4440 = vunpack.c.l.b16 %v4125
    %v4441 = vunpack.c.h.b16 %v4125
    %v4442 = vunpack.c.l.b16 %v4126
    %v4443 = vunpack.c.h.b16 %v4126
    %v4444 = vunpack.c.l.b16 %v4127
    %v4445 = vunpack.c.h.b16 %v4127
    %v4446 = vunpack.c.l.b16 %v4128
    %v4447 = vunpack.c.h.b16 %v4128
    %v4448 = vunpack.c.l.b16 %v4129
    %v4449 = vunpack.c.h.b16 %v4129
    %v4450 = vunpack.c.l.b16 %v4130
    %v4451 = vunpack.c.h.b16 %v4130
    %v4452 = vunpack.c.l.b16 %v4131
    %v4453 = vunpack.c.h.b16 %v4131
    %v4454 = vunpack.c.l.b16 %v4132
    %v4455 = vunpack.c.h.b16 %v4132
    %v4456 = vunpack.c.l.b16 %v4133
    %v4457 = vunpack.c.h.b16 %v4133
    %v4458 = vunpack.c.l.b16 %v4134
    %v4459 = vunpack.c.h.b16 %v4134
    %v4460 = vunpack.c.l.b16 %v4135
    %v4461 = vunpack.c.h.b16 %v4135
    %v4462 = vunpack.c.l.b16 %v4136
    %v4463 = vunpack.c.h.b16 %v4136
    %v4464 = vunpack.c.l.b16 %v4137
    %v4465 = vunpack.c.h.b16 %v4137
    %v4466 = vunpack.c.l.b16 %v4138
    %v4467 = vunpack.c.h.b16 %v4138
    %v4468 = vunpack.c.l.b16 %v4139
    %v4469 = vunpack.c.h.b16 %v4139
    %v4470 = vunpack.c.l.b16 %v4140
    %v4471 = vunpack.c.h.b16 %v4140
    %v4472 = vunpack.c.l.b16 %v4141
    %v4473 = vunpack.c.h.b16 %v4141
    %v4474 = vunpack.c.l.b16 %v4142
    %v4475 = vunpack.c.h.b16 %v4142
    %v4476 = vunpack.c.l.b16 %v4143
    %v4477 = vunpack.c.h.b16 %v4143
    %v4478 = vunpack.c.l.b16 %v4144
    %v4479 = vunpack.c.h.b16 %v4144
    %v4480 = vunpack.c.l.b16 %v4145
    %v4481 = vunpack.c.h.b16 %v4145
    %v4482 = vunpack.c.l.b16 %v4146
    %v4483 = vunpack.c.h.b16 %v4146
    %v4484 = vunpack.c.l.b16 %v4147
    %v4485 = vunpack.c.h.b16 %v4147
    %v4486 = vunpack.c.l.b16 %v4148
    %v4487 = vunpack.c.h.b16 %v4148
    %v4488 = vunpack.c.l.b16 %v4149
    %v4489 = vunpack.c.h.b16 %v4149
    %v4490 = vunpack.c.l.b16 %v4150
    %v4491 = vunpack.c.h.b16 %v4150
    %v4492 = vunpack.c.l.b16 %v4151
    %v4493 = vunpack.c.h.b16 %v4151
    %v4494 = vunpack.c.l.b16 %v4152
    %v4495 = vunpack.c.h.b16 %v4152
    %v4496 = vunpack.c.l.b16 %v4153
    %v4497 = vunpack.c.h.b16 %v4153
    %v4498 = vunpack.c.l.b16 %v4154
    %v4499 = vunpack.c.h.b16 %v4154
    %v4500 = vunpack.c.l.b16 %v4155
    %v4501 = vunpack.c.h.b16 %v4155
    %v4502 = vunpack.c.l.b16 %v4156
    %v4503 = vunpack.c.h.b16 %v4156
    %v4504 = vunpack.c.l.b16 %v4157
    %v4505 = vunpack.c.h.b16 %v4157
    %v4506 = vunpack.c.l.b16 %v4158
    %v4507 = vunpack.c.h.b16 %v4158
    %v4508 = vunpack.c.l.b16 %v4159
    %v4509 = vunpack.c.h.b16 %v4159
    %v4510 = vunpack.c.l.b16 %v4160
    %v4511 = vunpack.c.h.b16 %v4160
    %v4512 = vunpack.c.l.b16 %v4161
    %v4513 = vunpack.c.h.b16 %v4161
    %v4514 = vunpack.c.l.b16 %v4162
    %v4515 = vunpack.c.h.b16 %v4162
    %v4516 = vunpack.c.l.b16 %v4163
    %v4517 = vunpack.c.h.b16 %v4163
    %v4518 = vunpack.c.l.b16 %v4164
    %v4519 = vunpack.c.h.b16 %v4164
    %v4520 = vunpack.c.l.b16 %v4165
    %v4521 = vunpack.c.h.b16 %v4165
    %v4522 = vunpack.c.l.b16 %v4166
    %v4523 = vunpack.c.h.b16 %v4166
    %v4524 = vunpack.c.l.b16 %v4167
    %v4525 = vunpack.c.h.b16 %v4167
    %v4526 = vunpack.c.l.b16 %v4168
    %v4527 = vunpack.c.h.b16 %v4168
    %v4528 = vunpack.c.l.b16 %v4169
    %v4529 = vunpack.c.h.b16 %v4169
    %v4530 = vunpack.c.l.b16 %v4170
    %v4531 = vunpack.c.h.b16 %v4170
    %v4532 = vunpack.c.l.b16 %v4171
    %v4533 = vunpack.c.h.b16 %v4171
    %v4534 = vunpack.c.l.b16 %v4172
    %v4535 = vunpack.c.h.b16 %v4172
    %v4536 = vunpack.c.l.b16 %v4173
    %v4537 = vunpack.c.h.b16 %v4173
    %v4538 = vunpack.c.l.b16 %v4174
    %v4539 = vunpack.c.h.b16 %v4174
    %v4540 = vunpack.c.l.b16 %v4175
    %v4541 = vunpack.c.h.b16 %v4175
    %v4542 = vunpack.c.l.b16 %v4176
    %v4543 = vunpack.c.h.b16 %v4176
    %v4544 = vunpack.c.l.b16 %v4177
    %v4545 = vunpack.c.h.b16 %v4177
    %v4546 = vunpack.c.l.b16 %v4178
    %v4547 = vunpack.c.h.b16 %v4178
    %v4548 = vunpack.c.l.b16 %v4179
    %v4549 = vunpack.c.h.b16 %v4179
    %v4550 = vunpack.c.l.b16 %v4180
    %v4551 = vunpack.c.h.b16 %v4180
    %v4552 = vunpack.c.l.b16 %v4181
    %v4553 = vunpack.c.h.b16 %v4181
    %v4554 = vunpack.c.l.b16 %v4182
    %v4555 = vunpack.c.h.b16 %v4182
    %v4556 = vunpack.c.l.b16 %v4183
    %v4557 = vunpack.c.h.b16 %v4183
    %v4558 = vunpack.c.l.b16 %v4184
    %v4559 = vunpack.c.h.b16 %v4184
    %v4560 = vunpack.c.l.b16 %v4185
    %v4561 = vunpack.c.h.b16 %v4185
    %v4562 = vunpack.c.l.b16 %v4186
    %v4563 = vunpack.c.h.b16 %v4186
    %v4564 = vunpack.c.l.b16 %v4187
    %v4565 = vunpack.c.h.b16 %v4187
    %v4566 = vunpack.c.l.b16 %v4188
    %v4567 = vunpack.c.h.b16 %v4188
    %v4568 = vunpack.c.l.b16 %v4189
    %v4569 = vunpack.c.h.b16 %v4189
    %v4570 = vunpack.c.l.b16 %v4190
    %v4571 = vunpack.c.h.b16 %v4190
    %v4572 = vunpack.c.l.b16 %v4191
    %v4573 = vunpack.c.h.b16 %v4191
    %v4574 = vunpack.c.l.b16 %v4192
    %v4575 = vunpack.c.h.b16 %v4192
    %v4576 = vunpack.c.l.b16 %v4193
    %v4577 = vunpack.c.h.b16 %v4193
    %v4578 = vunpack.c.l.b16 %v4194
    %v4579 = vunpack.c.h.b16 %v4194
    %v4580 = vunpack.c.l.b16 %v4195
    %v4581 = vunpack.c.h.b16 %v4195
    %v4582 = vunpack.c.l.b16 %v4196
    %v4583 = vunpack.c.h.b16 %v4196
    %v4584 = vunpack.c.l.b16 %v4197
    %v4585 = vunpack.c.h.b16 %v4197
    %v4586 = vunpack.c.l.b16 %v4198
    %v4587 = vunpack.c.h.b16 %v4198
    %v4588 = vunpack.c.l.b16 %v4199
    %v4589 = vunpack.c.h.b16 %v4199
    %v4590 = vunpack.c.l.b16 %v4200
    %v4591 = vunpack.c.h.b16 %v4200
    %v4592 = vunpack.c.l.b16 %v4201
    %v4593 = vunpack.c.h.b16 %v4201
    %v4594 = vunpack.c.l.b16 %v4202
    %v4595 = vunpack.c.h.b16 %v4202
    %v4596 = vunpack.c.l.b16 %v4203
    %v4597 = vunpack.c.h.b16 %v4203
    %v4598 = vunpack.c.l.b16 %v4204
    %v4599 = vunpack.c.h.b16 %v4204
    %v4600 = vunpack.c.l.b16 %v4205
    %v4601 = vunpack.c.h.b16 %v4205
    %v4602 = vunpack.c.l.b16 %v4206
    %v4603 = vunpack.c.h.b16 %v4206
    %v4604 = vunpack.c.l.b16 %v4207
    %v4605 = vunpack.c.h.b16 %v4207
    %v4606 = vunpack.c.l.b16 %v4208
    %v4607 = vunpack.c.h.b16 %v4208
    %v4608 = vunpack.c.l.b16 %v4209
    %v4609 = vunpack.c.h.b16 %v4209
    %v4610 = vunpack.c.l.b16 %v4210
    %v4611 = vunpack.c.h.b16 %v4210
    %v4612 = vunpack.c.l.b16 %v4211
    %v4613 = vunpack.c.h.b16 %v4211
    %v4614 = vunpack.c.l.b16 %v4212
    %v4615 = vunpack.c.h.b16 %v4212
    %v4616 = vunpack.c.l.b16 %v4213
    %v4617 = vunpack.c.h.b16 %v4213
    %v4618 = vunpack.c.l.b16 %v4214
    %v4619 = vunpack.c.h.b16 %v4214
    %v4620 = vunpack.c.l.b16 %v4215
    %v4621 = vunpack.c.h.b16 %v4215
    %v4622 = vunpack.c.l.b16 %v4216
    %v4623 = vunpack.c.h.b16 %v4216
    %v4624 = vunpack.c.l.b16 %v4217
    %v4625 = vunpack.c.h.b16 %v4217
    %v4626 = vunpack.c.l.b16 %v4218
    %v4627 = vunpack.c.h.b16 %v4218
    %v4628 = vunpack.c.l.b16 %v4219
    %v4629 = vunpack.c.h.b16 %v4219
    %v4630 = vunpack.c.l.b16 %v4220
    %v4631 = vunpack.c.h.b16 %v4220
    %v4632 = vunpack.c.l.b16 %v4221
    %v4633 = vunpack.c.h.b16 %v4221
    %v4634 = vunpack.c.l.b16 %v4222
    %v4635 = vunpack.c.h.b16 %v4222
    %v4636 = vpack.c.b16 %v4384, %v4380
    %v4637 = vpack.c.b16 %v4385, %v4381
    %v4638 = vpack.c.b16 %v4386, %v4382
    %v4639 = vpack.c.b16 %v4387, %v4383
    %v4640 = vpack.c.b16 %v4392, %v4388
    %v4641 = vpack.c.b16 %v4393, %v4389
    %v4642 = vpack.c.b16 %v4394, %v4390
    %v4643 = vpack.c.b16 %v4395, %v4391
    %v4644 = vpack.c.b16 %v4400, %v4396
    %v4645 = vpack.c.b16 %v4401, %v4397
    %v4646 = vpack.c.b16 %v4402, %v4398
    %v4647 = vpack.c.b16 %v4403, %v4399
    %v4648 = vpack.c.b16 %v4408, %v4404
    %v4649 = vpack.c.b16 %v4409, %v4405
    %v4650 = vpack.c.b16 %v4410, %v4406
    %v4651 = vpack.c.b16 %v4411, %v4407
    %v4652 = vpack.c.b16 %v4416, %v4412
    %v4653 = vpack.c.b16 %v4417, %v4413
    %v4654 = vpack.c.b16 %v4418, %v4414
    %v4655 = vpack.c.b16 %v4419, %v4415
    %v4656 = vpack.c.b16 %v4424, %v4420
    %v4657 = vpack.c.b16 %v4425, %v4421
    %v4658 = vpack.c.b16 %v4426, %v4422
    %v4659 = vpack.c.b16 %v4427, %v4423
    %v4660 = vpack.c.b16 %v4432, %v4428
    %v4661 = vpack.c.b16 %v4433, %v4429
    %v4662 = vpack.c.b16 %v4434, %v4430
    %v4663 = vpack.c.b16 %v4435, %v4431
    %v4664 = vpack.c.b16 %v4440, %v4436
    %v4665 = vpack.c.b16 %v4441, %v4437
    %v4666 = vpack.c.b16 %v4442, %v4438
    %v4667 = vpack.c.b16 %v4443, %v4439
    %v4668 = vpack.c.b16 %v4448, %v4444
    %v4669 = vpack.c.b16 %v4449, %v4445
    %v4670 = vpack.c.b16 %v4450, %v4446
    %v4671 = vpack.c.b16 %v4451, %v4447
    %v4672 = vpack.c.b16 %v4456, %v4452
    %v4673 = vpack.c.b16 %v4457, %v4453
    %v4674 = vpack.c.b16 %v4458, %v4454
    %v4675 = vpack.c.b16 %v4459, %v4455
    %v4676 = vpack.c.b16 %v4464, %v4460
    %v4677 = vpack.c.b16 %v4465, %v4461
    %v4678 = vpack.c.b16 %v4466, %v4462
    %v4679 = vpack.c.b16 %v4467, %v4463
    %v4680 = vpack.c.b16 %v4472, %v4468
    %v4681 = vpack.c.b16 %v4473, %v4469
    %v4682 = vpack.c.b16 %v4474, %v4470
    %v4683 = vpack.c.b16 %v4475, %v4471
    %v4684 = vpack.c.b16 %v4480, %v4476
    %v4685 = vpack.c.b16 %v4481, %v4477
    %v4686 = vpack.c.b16 %v4482, %v4478
    %v4687 = vpack.c.b16 %v4483, %v4479
    %v4688 = vpack.c.b16 %v4488, %v4484
    %v4689 = vpack.c.b16 %v4489, %v4485
    %v4690 = vpack.c.b16 %v4490, %v4486
    %v4691 = vpack.c.b16 %v4491, %v4487
    %v4692 = vpack.c.b16 %v4496, %v4492
    %v4693 = vpack.c.b16 %v4497, %v4493
    %v4694 = vpack.c.b16 %v4498, %v4494
    %v4695 = vpack.c.b16 %v4499, %v4495
    %v4696 = vpack.c.b16 %v4504, %v4500
    %v4697 = vpack.c.b16 %v4505, %v4501
    %v4698 = vpack.c.b16 %v4506, %v4502
    %v4699 = vpack.c.b16 %v4507, %v4503
    %v4700 = vpack.c.b16 %v4512, %v4508
    %v4701 = vpack.c.b16 %v4513, %v4509
    %v4702 = vpack.c.b16 %v4514, %v4510
    %v4703 = vpack.c.b16 %v4515, %v4511
    %v4704 = vpack.c.b16 %v4520, %v4516
    %v4705 = vpack.c.b16 %v4521, %v4517
    %v4706 = vpack.c.b16 %v4522, %v4518
    %v4707 = vpack.c.b16 %v4523, %v4519
    %v4708 = vpack.c.b16 %v4528, %v4524
    %v4709 = vpack.c.b16 %v4529, %v4525
    %v4710 = vpack.c.b16 %v4530, %v4526
    %v4711 = vpack.c.b16 %v4531, %v4527
    %v4712 = vpack.c.b16 %v4536, %v4532
    %v4713 = vpack.c.b16 %v4537, %v4533
    %v4714 = vpack.c.b16 %v4538, %v4534
    %v4715 = vpack.c.b16 %v4539, %v4535
    %v4716 = vpack.c.b16 %v4544, %v4540
    %v4717 = vpack.c.b16 %v4545, %v4541
    %v4718 = vpack.c.b16 %v4546, %v4542
    %v4719 = vpack.c.b16 %v4547, %v4543
    %v4720 = vpack.c.b16 %v4552, %v4548
    %v4721 = vpack.c.b16 %v4553, %v4549
    %v4722 = vpack.c.b16 %v4554, %v4550
    %v4723 = vpack.c.b16 %v4555, %v4551
    %v4724 = vpack.c.b16 %v4560, %v4556
    %v4725 = vpack.c.b16 %v4561, %v4557
    %v4726 = vpack.c.b16 %v4562, %v4558
    %v4727 = vpack.c.b16 %v4563, %v4559
    %v4728 = vpack.c.b16 %v4568, %v4564
    %v4729 = vpack.c.b16 %v4569, %v4565
    %v4730 = vpack.c.b16 %v4570, %v4566
    %v4731 = vpack.c.b16 %v4571, %v4567
    %v4732 = vpack.c.b16 %v4576, %v4572
    %v4733 = vpack.c.b16 %v4577, %v4573
    %v4734 = vpack.c.b16 %v4578, %v4574
    %v4735 = vpack.c.b16 %v4579, %v4575
    %v4736 = vpack.c.b16 %v4584, %v4580
    %v4737 = vpack.c.b16 %v4585, %v4581
    %v4738 = vpack.c.b16 %v4586, %v4582
    %v4739 = vpack.c.b16 %v4587, %v4583
    %v4740 = vpack.c.b16 %v4592, %v4588
    %v4741 = vpack.c.b16 %v4593, %v4589
    %v4742 = vpack.c.b16 %v4594, %v4590
    %v4743 = vpack.c.b16 %v4595, %v4591
    %v4744 = vpack.c.b16 %v4600, %v4596
    %v4745 = vpack.c.b16 %v4601, %v4597
    %v4746 = vpack.c.b16 %v4602, %v4598
    %v4747 = vpack.c.b16 %v4603, %v4599
    %v4748 = vpack.c.b16 %v4608, %v4604
    %v4749 = vpack.c.b16 %v4609, %v4605
    %v4750 = vpack.c.b16 %v4610, %v4606
    %v4751 = vpack.c.b16 %v4611, %v4607
    %v4752 = vpack.c.b16 %v4616, %v4612
    %v4753 = vpack.c.b16 %v4617, %v4613
    %v4754 = vpack.c.b16 %v4618, %v4614
    %v4755 = vpack.c.b16 %v4619, %v4615
    %v4756 = vpack.c.b16 %v4624, %v4620
    %v4757 = vpack.c.b16 %v4625, %v4621
    %v4758 = vpack.c.b16 %v4626, %v4622
    %v4759 = vpack.c.b16 %v4627, %v4623
    %v4760 = vpack.c.b16 %v4632, %v4628
    %v4761 = vpack.c.b16 %v4633, %v4629
    %v4762 = vpack.c.b16 %v4634, %v4630
    %v4763 = vpack.c.b16 %v4635, %v4631
    %4892 = vmatprep.subr.bf16.mxu0 %v4665
    %4893 = vmatpush1.bf16.msra.mxu0 %v4664
    %4894 = vmatprep.subr.bf16.mxu0 %v4661
    %4895 = vmatpush1.bf16.msra.mxu0 %v4660
    %4896 = vmatprep.subr.bf16.mxu0 %v4657
    %4897 = vmatpush1.bf16.msra.mxu0 %v4656
    %4898 = vmatprep.subr.bf16.mxu0 %v4653
    %4899 = vmatpush1.bf16.msra.mxu0 %v4652
    %4900 = vmatprep.subr.bf16.mxu0 %v4649
    %4901 = vmatpush1.bf16.msra.mxu0 %v4648
    %4902 = vmatprep.subr.bf16.mxu0 %v4645
    %4903 = vmatpush1.bf16.msra.mxu0 %v4644
    %4904 = vmatprep.subr.bf16.mxu0 %v4641
    %4905 = vmatpush1.bf16.msra.mxu0 %v4640
    %4906 = vmatprep.subr.bf16.mxu0 %v4637
    %4907 = vmatpush1.bf16.msra.mxu0 %v4636
    %4908 = vmatprep.subr.bf16.mxu0 %v4697
    %4909 = vmatpush2.bf16.msra.mxu0 %v4696
    %4910 = vmatprep.subr.bf16.mxu0 %v4693
    %4911 = vmatpush2.bf16.msra.mxu0 %v4692
    %4912 = vmatprep.subr.bf16.mxu0 %v4689
    %4913 = vmatpush2.bf16.msra.mxu0 %v4688
    %4914 = vmatprep.subr.bf16.mxu0 %v4685
    %4915 = vmatpush2.bf16.msra.mxu0 %v4684
    %4916 = vmatprep.subr.bf16.mxu0 %v4681
    %4917 = vmatpush2.bf16.msra.mxu0 %v4680
    %4918 = vmatprep.subr.bf16.mxu0 %v4677
    %4919 = vmatpush2.bf16.msra.mxu0 %v4676
    %4920 = vmatprep.subr.bf16.mxu0 %v4673
    %4921 = vmatpush2.bf16.msra.mxu0 %v4672
    %4922 = vmatprep.subr.bf16.mxu0 %v4669
    %4923 = vmatpush2.bf16.msra.mxu0 %v4668
    %4924 = vmatprep.mubr.bf16.mxu0 %v4245
    %4925 = vmatmul.mubr.bf16.gmra.mxu0 %v4238
    %v4926 = vpop.f32.mrf.mxu0
    %v4927 = vadd.f32 0.0, %v4926
    %v4928 = vpop.f32.mrf.mxu0
    %v4929 = vadd.f32 0.0, %v4928
    %v4930 = vpop.f32.mrf.mxu0
    %v4931 = vpop.f32.mrf.mxu0
    %4932 = vdwg.mxu0
    %4933 = vmatprep.subr.bf16.mxu0 %v4729
    %4934 = vmatpush1.bf16.msra.mxu0 %v4728
    %4935 = vmatprep.subr.bf16.mxu0 %v4725
    %4936 = vmatpush1.bf16.msra.mxu0 %v4724
    %4937 = vmatprep.subr.bf16.mxu0 %v4721
    %4938 = vmatpush1.bf16.msra.mxu0 %v4720
    %4939 = vmatprep.subr.bf16.mxu0 %v4717
    %4940 = vmatpush1.bf16.msra.mxu0 %v4716
    %4941 = vmatprep.subr.bf16.mxu0 %v4713
    %4942 = vmatpush1.bf16.msra.mxu0 %v4712
    %4943 = vmatprep.subr.bf16.mxu0 %v4709
    %4944 = vmatpush1.bf16.msra.mxu0 %v4708
    %4945 = vmatprep.subr.bf16.mxu0 %v4705
    %4946 = vmatpush1.bf16.msra.mxu0 %v4704
    %4947 = vmatprep.subr.bf16.mxu0 %v4701
    %4948 = vmatpush1.bf16.msra.mxu0 %v4700
    %4949 = vmatprep.subr.bf16.mxu0 %v4761
    %4950 = vmatpush2.bf16.msra.mxu0 %v4760
    %4951 = vmatprep.subr.bf16.mxu0 %v4757
    %4952 = vmatpush2.bf16.msra.mxu0 %v4756
    %4953 = vmatprep.subr.bf16.mxu0 %v4753
    %4954 = vmatpush2.bf16.msra.mxu0 %v4752
    %4955 = vmatprep.subr.bf16.mxu0 %v4749
    %4956 = vmatpush2.bf16.msra.mxu0 %v4748
    %4957 = vmatprep.subr.bf16.mxu0 %v4745
    %4958 = vmatpush2.bf16.msra.mxu0 %v4744
    %4959 = vmatprep.subr.bf16.mxu0 %v4741
    %4960 = vmatpush2.bf16.msra.mxu0 %v4740
    %4961 = vmatprep.subr.bf16.mxu0 %v4737
    %4962 = vmatpush2.bf16.msra.mxu0 %v4736
    %4963 = vmatprep.subr.bf16.mxu0 %v4733
    %4964 = vmatpush2.bf16.msra.mxu0 %v4732
    %4965 = vmatprep.mubr.bf16.mxu0 %v4247
    %4966 = vmatmul.mubr.bf16.gmra.mxu0 %v4246
    %v4967 = vpop.f32.mrf.mxu0
    %v4968 = vadd.f32 %v4927, %v4967
    %v4969 = vpop.f32.mrf.mxu0
    %v4970 = vadd.f32 %v4929, %v4969
    %v4971 = vpop.f32.mrf.mxu0
    %v4972 = vpop.f32.mrf.mxu0
    %4973 = vdwg.mxu0
    %4974 = vmatprep.subr.bf16.mxu0 %v4667
    %4975 = vmatpush1.bf16.msra.mxu0 %v4666
    %4976 = vmatprep.subr.bf16.mxu0 %v4663
    %4977 = vmatpush1.bf16.msra.mxu0 %v4662
    %4978 = vmatprep.subr.bf16.mxu0 %v4659
    %4979 = vmatpush1.bf16.msra.mxu0 %v4658
    %4980 = vmatprep.subr.bf16.mxu0 %v4655
    %4981 = vmatpush1.bf16.msra.mxu0 %v4654
    %4982 = vmatprep.subr.bf16.mxu0 %v4651
    %4983 = vmatpush1.bf16.msra.mxu0 %v4650
    %4984 = vmatprep.subr.bf16.mxu0 %v4647
    %4985 = vmatpush1.bf16.msra.mxu0 %v4646
    %4986 = vmatprep.subr.bf16.mxu0 %v4643
    %4987 = vmatpush1.bf16.msra.mxu0 %v4642
    %4988 = vmatprep.subr.bf16.mxu0 %v4639
    %4989 = vmatpush1.bf16.msra.mxu0 %v4638
    %4990 = vmatprep.subr.bf16.mxu0 %v4699
    %4991 = vmatpush2.bf16.msra.mxu0 %v4698
    %4992 = vmatprep.subr.bf16.mxu0 %v4695
    %4993 = vmatpush2.bf16.msra.mxu0 %v4694
    %4994 = vmatprep.subr.bf16.mxu0 %v4691
    %4995 = vmatpush2.bf16.msra.mxu0 %v4690
    %4996 = vmatprep.subr.bf16.mxu0 %v4687
    %4997 = vmatpush2.bf16.msra.mxu0 %v4686
    %4998 = vmatprep.subr.bf16.mxu0 %v4683
    %4999 = vmatpush2.bf16.msra.mxu0 %v4682
    %5000 = vmatprep.subr.bf16.mxu0 %v4679
    %5001 = vmatpush2.bf16.msra.mxu0 %v4678
    %5002 = vmatprep.subr.bf16.mxu0 %v4675
    %5003 = vmatpush2.bf16.msra.mxu0 %v4674
    %5004 = vmatprep.subr.bf16.mxu0 %v4671
    %5005 = vmatpush2.bf16.msra.mxu0 %v4670
    %5006 = vmatprep.mubr.bf16.mxu0 %v4245
    %5007 = vmatmul.mubr.bf16.gmra.mxu0 %v4238
    %v5008 = vpop.f32.mrf.mxu0
    %v5009 = vadd.f32 0.0, %v5008
    %v5010 = vpop.f32.mrf.mxu0
    %v5011 = vadd.f32 0.0, %v5010
    %v5012 = vpop.f32.mrf.mxu0
    %v5013 = vpop.f32.mrf.mxu0
    %5014 = vdwg.mxu0
    %5015 = vmatprep.subr.bf16.mxu0 %v4731
    %5016 = vmatpush1.bf16.msra.mxu0 %v4730
    %5017 = vmatprep.subr.bf16.mxu0 %v4727
    %5018 = vmatpush1.bf16.msra.mxu0 %v4726
    %5019 = vmatprep.subr.bf16.mxu0 %v4723
    %5020 = vmatpush1.bf16.msra.mxu0 %v4722
    %5021 = vmatprep.subr.bf16.mxu0 %v4719
    %5022 = vmatpush1.bf16.msra.mxu0 %v4718
    %5023 = vmatprep.subr.bf16.mxu0 %v4715
    %5024 = vmatpush1.bf16.msra.mxu0 %v4714
    %5025 = vmatprep.subr.bf16.mxu0 %v4711
    %5026 = vmatpush1.bf16.msra.mxu0 %v4710
    %5027 = vmatprep.subr.bf16.mxu0 %v4707
    %5028 = vmatpush1.bf16.msra.mxu0 %v4706
    %5029 = vmatprep.subr.bf16.mxu0 %v4703
    %5030 = vmatpush1.bf16.msra.mxu0 %v4702
    %5031 = vmatprep.subr.bf16.mxu0 %v4763
    %5032 = vmatpush2.bf16.msra.mxu0 %v4762
    %5033 = vmatprep.subr.bf16.mxu0 %v4759
    %5034 = vmatpush2.bf16.msra.mxu0 %v4758
    %5035 = vmatprep.subr.bf16.mxu0 %v4755
    %5036 = vmatpush2.bf16.msra.mxu0 %v4754
    %5037 = vmatprep.subr.bf16.mxu0 %v4751
    %5038 = vmatpush2.bf16.msra.mxu0 %v4750
    %5039 = vmatprep.subr.bf16.mxu0 %v4747
    %5040 = vmatpush2.bf16.msra.mxu0 %v4746
    %5041 = vmatprep.subr.bf16.mxu0 %v4743
    %5042 = vmatpush2.bf16.msra.mxu0 %v4742
    %5043 = vmatprep.subr.bf16.mxu0 %v4739
    %5044 = vmatpush2.bf16.msra.mxu0 %v4738
    %5045 = vmatprep.subr.bf16.mxu0 %v4735
    %5046 = vmatpush2.bf16.msra.mxu0 %v4734
    %5047 = vmatprep.mubr.bf16.mxu0 %v4247
    %5048 = vmatmul.mubr.bf16.gmra.mxu0 %v4246
    %v5049 = vpop.f32.mrf.mxu0
    %v5050 = vadd.f32 %v5009, %v5049
    %v5051 = vpop.f32.mrf.mxu0
    %v5052 = vadd.f32 %v5011, %v5051
    %v5053 = vpop.f32.mrf.mxu0
    %v5054 = vpop.f32.mrf.mxu0
    %5055 = vdwg.mxu0
    %v5056 = vadd.f32 %v4005, %v4968
    %v5057 = vadd.f32 %v4007, %v4970
    %v5058 = vadd.f32 %v4087, %v5050
    %v5059 = vadd.f32 %v4089, %v5052
    %v5061 = vlaneseq
    %v5062 = vshrl.u32 %v5061, 7
    %v5063 = vsub.s32 0, %v5062
    %v5064 = vrot.slane %v2167, %v5063
    %v5065 = vlaneseq
    %v5066 = vshrl.u32 %v5065, 7
    %v5067 = vsub.s32 1, %v5066
    %v5068 = vrot.slane %v2167, %v5067
    %v5069 = vlaneseq
    %v5070 = vshrl.u32 %v5069, 7
    %v5071 = vsub.s32 2, %v5070
    %v5072 = vrot.slane %v2167, %v5071
    %v5073 = vlaneseq
    %v5074 = vshrl.u32 %v5073, 7
    %v5075 = vsub.s32 3, %v5074
    %v5076 = vrot.slane %v2167, %v5075
    %v5081 = vadd.f32 %v5056, %v5064
    %v5082 = vadd.f32 %v5057, %v5068
    %v5083 = vadd.f32 %v5058, %v5072
    %v5084 = vadd.f32 %v5059, %v5076
    %v5085 = vmax.f32 %v5081, 0.0
    %v5086 = vmax.f32 %v5082, 0.0
    %v5087 = vmax.f32 %v5083, 0.0
    %v5088 = vmax.f32 %v5084, 0.0
    %v5089 = vld [vmem:[%s5] sm:$0xff]
    %v5090 = vld [vmem:[%s5 + $0x8] sm:$0xff]
    %v5091 = vld [vmem:[%s5 + $0x10] sm:$0xff]
    %v5092 = vld [vmem:[%s5 + $0x18] sm:$0xff]
    %v5093 = vld [vmem:[%s5 + $0x20] sm:$0xff]
    %v5094 = vld [vmem:[%s5 + $0x28] sm:$0xff]
    %v5095 = vld [vmem:[%s5 + $0x30] sm:$0xff]
    %v5096 = vld [vmem:[%s5 + $0x38] sm:$0xff]
    %v5097 = vld [vmem:[%s5 + $0x40] sm:$0xff]
    %v5098 = vld [vmem:[%s5 + $0x48] sm:$0xff]
    %v5099 = vld [vmem:[%s5 + $0x50] sm:$0xff]
    %v5100 = vld [vmem:[%s5 + $0x58] sm:$0xff]
    %v5101 = vld [vmem:[%s5 + $0x60] sm:$0xff]
    %v5102 = vld [vmem:[%s5 + $0x68] sm:$0xff]
    %v5103 = vld [vmem:[%s5 + $0x70] sm:$0xff]
    %v5104 = vld [vmem:[%s5 + $0x78] sm:$0xff]
    %v5105 = vld [vmem:[%s5 + $0x80] sm:$0xff]
    %v5106 = vld [vmem:[%s5 + $0x88] sm:$0xff]
    %v5107 = vld [vmem:[%s5 + $0x90] sm:$0xff]
    %v5108 = vld [vmem:[%s5 + $0x98] sm:$0xff]
    %v5109 = vld [vmem:[%s5 + $0xa0] sm:$0xff]
    %v5110 = vld [vmem:[%s5 + $0xa8] sm:$0xff]
    %v5111 = vld [vmem:[%s5 + $0xb0] sm:$0xff]
    %v5112 = vld [vmem:[%s5 + $0xb8] sm:$0xff]
    %v5113 = vld [vmem:[%s5 + $0xc0] sm:$0xff]
    %v5114 = vld [vmem:[%s5 + $0xc8] sm:$0xff]
    %v5115 = vld [vmem:[%s5 + $0xd0] sm:$0xff]
    %v5116 = vld [vmem:[%s5 + $0xd8] sm:$0xff]
    %v5117 = vld [vmem:[%s5 + $0xe0] sm:$0xff]
    %v5118 = vld [vmem:[%s5 + $0xe8] sm:$0xff]
    %v5119 = vld [vmem:[%s5 + $0xf0] sm:$0xff]
    %v5120 = vld [vmem:[%s5 + $0xf8] sm:$0xff]
    %v5121 = vld [vmem:[%s5 + $0x100] sm:$0xff]
    %v5122 = vld [vmem:[%s5 + $0x108] sm:$0xff]
    %v5123 = vld [vmem:[%s5 + $0x110] sm:$0xff]
    %v5124 = vld [vmem:[%s5 + $0x118] sm:$0xff]
    %v5125 = vld [vmem:[%s5 + $0x120] sm:$0xff]
    %v5126 = vld [vmem:[%s5 + $0x128] sm:$0xff]
    %v5127 = vld [vmem:[%s5 + $0x130] sm:$0xff]
    %v5128 = vld [vmem:[%s5 + $0x138] sm:$0xff]
    %v5129 = vld [vmem:[%s5 + $0x140] sm:$0xff]
    %v5130 = vld [vmem:[%s5 + $0x148] sm:$0xff]
    %v5131 = vld [vmem:[%s5 + $0x150] sm:$0xff]
    %v5132 = vld [vmem:[%s5 + $0x158] sm:$0xff]
    %v5133 = vld [vmem:[%s5 + $0x160] sm:$0xff]
    %v5134 = vld [vmem:[%s5 + $0x168] sm:$0xff]
    %v5135 = vld [vmem:[%s5 + $0x170] sm:$0xff]
    %v5136 = vld [vmem:[%s5 + $0x178] sm:$0xff]
    %v5137 = vld [vmem:[%s5 + $0x180] sm:$0xff]
    %v5138 = vld [vmem:[%s5 + $0x188] sm:$0xff]
    %v5139 = vld [vmem:[%s5 + $0x190] sm:$0xff]
    %v5140 = vld [vmem:[%s5 + $0x198] sm:$0xff]
    %v5141 = vld [vmem:[%s5 + $0x1a0] sm:$0xff]
    %v5142 = vld [vmem:[%s5 + $0x1a8] sm:$0xff]
    %v5143 = vld [vmem:[%s5 + $0x1b0] sm:$0xff]
    %v5144 = vld [vmem:[%s5 + $0x1b8] sm:$0xff]
    %v5145 = vld [vmem:[%s625] sm:$0xf]
    %v5148 = vunpack.c.l.s4 1966171168
    %v5149 = vunpack.c.0.s8 %v5148
    %v5150 = vlaneseq
    %v5151 = vshrl.u32 %v5150, 7
    %v5152 = vsub.s32 %v5149, %v5151
    %v5153 = vrot.slane %v5145, %v5152
    %v5154 = vcombine.high %v5153, %v5153
    %v5156 = vunpack.c.l.s4 1966171168
    %v5157 = vunpack.c.0.s8 %v5156
    %v5158 = vlaneseq
    %v5159 = vshrl.u32 %v5158, 7
    %v5160 = vsub.s32 %v5157, %v5159
    %v5161 = vrot.slane %v5153, %v5160
    %v5163 = vunpack.c.l.s4 1966171168
    %v5164 = vunpack.c.0.s8 %v5163
    %v5165 = vlaneseq
    %v5166 = vshrl.u32 %v5165, 7
    %v5167 = vsub.s32 %v5164, %v5166
    %v5168 = vrot.slane %v5154, %v5167
    %v5169 = vcombine.high %v5161, %v5161
    %v5170 = vcombine.high %v5168, %v5168
    %5175 = vmatprep.subr.bf16.mxu0 %v2869
    %5176 = vmatpush1.bf16.msra.mxu0 %v2868
    %5177 = vmatprep.subr.bf16.mxu0 %v2865
    %5178 = vmatpush1.bf16.msra.mxu0 %v2864
    %5179 = vmatprep.subr.bf16.mxu0 %v2861
    %5180 = vmatpush1.bf16.msra.mxu0 %v2860
    %5181 = vmatprep.subr.bf16.mxu0 %v2857
    %5182 = vmatpush1.bf16.msra.mxu0 %v2856
    %5183 = vmatprep.subr.bf16.mxu0 %v2853
    %5184 = vmatpush1.bf16.msra.mxu0 %v2852
    %5185 = vmatprep.subr.bf16.mxu0 %v2849
    %5186 = vmatpush1.bf16.msra.mxu0 %v2848
    %5187 = vmatprep.subr.bf16.mxu0 %v2845
    %5188 = vmatpush1.bf16.msra.mxu0 %v2844
    %5189 = vmatprep.subr.bf16.mxu0 %v2841
    %5190 = vmatpush1.bf16.msra.mxu0 %v2840
    %5191 = vmatprep.subr.bf16.mxu0 %v2901
    %5192 = vmatpush2.bf16.msra.mxu0 %v2900
    %5193 = vmatprep.subr.bf16.mxu0 %v2897
    %5194 = vmatpush2.bf16.msra.mxu0 %v2896
    %5195 = vmatprep.subr.bf16.mxu0 %v2893
    %5196 = vmatpush2.bf16.msra.mxu0 %v2892
    %5197 = vmatprep.subr.bf16.mxu0 %v2889
    %5198 = vmatpush2.bf16.msra.mxu0 %v2888
    %5199 = vmatprep.subr.bf16.mxu0 %v2885
    %5200 = vmatpush2.bf16.msra.mxu0 %v2884
    %5201 = vmatprep.subr.bf16.mxu0 %v2881
    %5202 = vmatpush2.bf16.msra.mxu0 %v2880
    %5203 = vmatprep.subr.bf16.mxu0 %v2877
    %5204 = vmatpush2.bf16.msra.mxu0 %v2876
    %5205 = vmatprep.subr.bf16.mxu0 %v2873
    %5206 = vmatpush2.bf16.msra.mxu0 %v2872
    %5207 = vmatprep.mubr.bf16.mxu0 %v5168
    %5208 = vmatmul.mubr.bf16.gmra.mxu0 %v5161
    %v5209 = vpop.f32.mrf.mxu0
    %v5210 = vadd.f32 0.0, %v5209
    %v5211 = vpop.f32.mrf.mxu0
    %v5212 = vadd.f32 0.0, %v5211
    %v5213 = vpop.f32.mrf.mxu0
    %v5214 = vpop.f32.mrf.mxu0
    %5215 = vdwg.mxu0
    %5216 = vmatprep.subr.bf16.mxu0 %v2933
    %5217 = vmatpush1.bf16.msra.mxu0 %v2932
    %5218 = vmatprep.subr.bf16.mxu0 %v2929
    %5219 = vmatpush1.bf16.msra.mxu0 %v2928
    %5220 = vmatprep.subr.bf16.mxu0 %v2925
    %5221 = vmatpush1.bf16.msra.mxu0 %v2924
    %5222 = vmatprep.subr.bf16.mxu0 %v2921
    %5223 = vmatpush1.bf16.msra.mxu0 %v2920
    %5224 = vmatprep.subr.bf16.mxu0 %v2917
    %5225 = vmatpush1.bf16.msra.mxu0 %v2916
    %5226 = vmatprep.subr.bf16.mxu0 %v2913
    %5227 = vmatpush1.bf16.msra.mxu0 %v2912
    %5228 = vmatprep.subr.bf16.mxu0 %v2909
    %5229 = vmatpush1.bf16.msra.mxu0 %v2908
    %5230 = vmatprep.subr.bf16.mxu0 %v2905
    %5231 = vmatpush1.bf16.msra.mxu0 %v2904
    %5232 = vmatprep.subr.bf16.mxu0 %v2965
    %5233 = vmatpush2.bf16.msra.mxu0 %v2964
    %5234 = vmatprep.subr.bf16.mxu0 %v2961
    %5235 = vmatpush2.bf16.msra.mxu0 %v2960
    %5236 = vmatprep.subr.bf16.mxu0 %v2957
    %5237 = vmatpush2.bf16.msra.mxu0 %v2956
    %5238 = vmatprep.subr.bf16.mxu0 %v2953
    %5239 = vmatpush2.bf16.msra.mxu0 %v2952
    %5240 = vmatprep.subr.bf16.mxu0 %v2949
    %5241 = vmatpush2.bf16.msra.mxu0 %v2948
    %5242 = vmatprep.subr.bf16.mxu0 %v2945
    %5243 = vmatpush2.bf16.msra.mxu0 %v2944
    %5244 = vmatprep.subr.bf16.mxu0 %v2941
    %5245 = vmatpush2.bf16.msra.mxu0 %v2940
    %5246 = vmatprep.subr.bf16.mxu0 %v2937
    %5247 = vmatpush2.bf16.msra.mxu0 %v2936
    %5248 = vmatprep.mubr.bf16.mxu0 %v5170
    %5249 = vmatmul.mubr.bf16.gmra.mxu0 %v5169
    %v5250 = vpop.f32.mrf.mxu0
    %v5251 = vadd.f32 %v5210, %v5250
    %v5252 = vpop.f32.mrf.mxu0
    %v5253 = vadd.f32 %v5212, %v5252
    %v5254 = vpop.f32.mrf.mxu0
    %v5255 = vpop.f32.mrf.mxu0
    %5256 = vdwg.mxu0
    %5257 = vmatprep.subr.bf16.mxu0 %v2871
    %5258 = vmatpush1.bf16.msra.mxu0 %v2870
    %5259 = vmatprep.subr.bf16.mxu0 %v2867
    %5260 = vmatpush1.bf16.msra.mxu0 %v2866
    %5261 = vmatprep.subr.bf16.mxu0 %v2863
    %5262 = vmatpush1.bf16.msra.mxu0 %v2862
    %5263 = vmatprep.subr.bf16.mxu0 %v2859
    %5264 = vmatpush1.bf16.msra.mxu0 %v2858
    %5265 = vmatprep.subr.bf16.mxu0 %v2855
    %5266 = vmatpush1.bf16.msra.mxu0 %v2854
    %5267 = vmatprep.subr.bf16.mxu0 %v2851
    %5268 = vmatpush1.bf16.msra.mxu0 %v2850
    %5269 = vmatprep.subr.bf16.mxu0 %v2847
    %5270 = vmatpush1.bf16.msra.mxu0 %v2846
    %5271 = vmatprep.subr.bf16.mxu0 %v2843
    %5272 = vmatpush1.bf16.msra.mxu0 %v2842
    %5273 = vmatprep.subr.bf16.mxu0 %v2903
    %5274 = vmatpush2.bf16.msra.mxu0 %v2902
    %5275 = vmatprep.subr.bf16.mxu0 %v2899
    %5276 = vmatpush2.bf16.msra.mxu0 %v2898
    %5277 = vmatprep.subr.bf16.mxu0 %v2895
    %5278 = vmatpush2.bf16.msra.mxu0 %v2894
    %5279 = vmatprep.subr.bf16.mxu0 %v2891
    %5280 = vmatpush2.bf16.msra.mxu0 %v2890
    %5281 = vmatprep.subr.bf16.mxu0 %v2887
    %5282 = vmatpush2.bf16.msra.mxu0 %v2886
    %5283 = vmatprep.subr.bf16.mxu0 %v2883
    %5284 = vmatpush2.bf16.msra.mxu0 %v2882
    %5285 = vmatprep.subr.bf16.mxu0 %v2879
    %5286 = vmatpush2.bf16.msra.mxu0 %v2878
    %5287 = vmatprep.subr.bf16.mxu0 %v2875
    %5288 = vmatpush2.bf16.msra.mxu0 %v2874
    %5289 = vmatprep.mubr.bf16.mxu0 %v5168
    %5290 = vmatmul.mubr.bf16.gmra.mxu0 %v5161
    %v5291 = vpop.f32.mrf.mxu0
    %v5292 = vadd.f32 0.0, %v5291
    %v5293 = vpop.f32.mrf.mxu0
    %v5294 = vadd.f32 0.0, %v5293
    %v5295 = vpop.f32.mrf.mxu0
    %v5296 = vpop.f32.mrf.mxu0
    %5297 = vdwg.mxu0
    %5298 = vmatprep.subr.bf16.mxu0 %v2935
    %5299 = vmatpush1.bf16.msra.mxu0 %v2934
    %5300 = vmatprep.subr.bf16.mxu0 %v2931
    %5301 = vmatpush1.bf16.msra.mxu0 %v2930
    %5302 = vmatprep.subr.bf16.mxu0 %v2927
    %5303 = vmatpush1.bf16.msra.mxu0 %v2926
    %5304 = vmatprep.subr.bf16.mxu0 %v2923
    %5305 = vmatpush1.bf16.msra.mxu0 %v2922
    %5306 = vmatprep.subr.bf16.mxu0 %v2919
    %5307 = vmatpush1.bf16.msra.mxu0 %v2918
    %5308 = vmatprep.subr.bf16.mxu0 %v2915
    %5309 = vmatpush1.bf16.msra.mxu0 %v2914
    %5310 = vmatprep.subr.bf16.mxu0 %v2911
    %5311 = vmatpush1.bf16.msra.mxu0 %v2910
    %5312 = vmatprep.subr.bf16.mxu0 %v2907
    %5313 = vmatpush1.bf16.msra.mxu0 %v2906
    %5314 = vmatprep.subr.bf16.mxu0 %v2967
    %5315 = vmatpush2.bf16.msra.mxu0 %v2966
    %5316 = vmatprep.subr.bf16.mxu0 %v2963
    %5317 = vmatpush2.bf16.msra.mxu0 %v2962
    %5318 = vmatprep.subr.bf16.mxu0 %v2959
    %5319 = vmatpush2.bf16.msra.mxu0 %v2958
    %5320 = vmatprep.subr.bf16.mxu0 %v2955
    %5321 = vmatpush2.bf16.msra.mxu0 %v2954
    %5322 = vmatprep.subr.bf16.mxu0 %v2951
    %5323 = vmatpush2.bf16.msra.mxu0 %v2950
    %5324 = vmatprep.subr.bf16.mxu0 %v2947
    %5325 = vmatpush2.bf16.msra.mxu0 %v2946
    %5326 = vmatprep.subr.bf16.mxu0 %v2943
    %5327 = vmatpush2.bf16.msra.mxu0 %v2942
    %5328 = vmatprep.subr.bf16.mxu0 %v2939
    %5329 = vmatpush2.bf16.msra.mxu0 %v2938
    %5330 = vmatprep.mubr.bf16.mxu0 %v5170
    %5331 = vmatmul.mubr.bf16.gmra.mxu0 %v5169
    %v5332 = vpop.f32.mrf.mxu0
    %v5333 = vadd.f32 %v5292, %v5332
    %v5334 = vpop.f32.mrf.mxu0
    %v5335 = vadd.f32 %v5294, %v5334
    %v5336 = vpop.f32.mrf.mxu0
    %v5337 = vpop.f32.mrf.mxu0
    %5338 = vdwg.mxu0
    %5339 = vmatprep.subr.bf16.mxu0 %v3702
    %5340 = vmatpush1.bf16.msra.mxu0 %v3701
    %5341 = vmatprep.subr.bf16.mxu0 %v3698
    %5342 = vmatpush1.bf16.msra.mxu0 %v3697
    %5343 = vmatprep.subr.bf16.mxu0 %v3694
    %5344 = vmatpush1.bf16.msra.mxu0 %v3693
    %5345 = vmatprep.subr.bf16.mxu0 %v3690
    %5346 = vmatpush1.bf16.msra.mxu0 %v3689
    %5347 = vmatprep.subr.bf16.mxu0 %v3686
    %5348 = vmatpush1.bf16.msra.mxu0 %v3685
    %5349 = vmatprep.subr.bf16.mxu0 %v3682
    %5350 = vmatpush1.bf16.msra.mxu0 %v3681
    %5351 = vmatprep.subr.bf16.mxu0 %v3678
    %5352 = vmatpush1.bf16.msra.mxu0 %v3677
    %5353 = vmatprep.subr.bf16.mxu0 %v3674
    %5354 = vmatpush1.bf16.msra.mxu0 %v3673
    %5355 = vmatprep.subr.bf16.mxu0 %v3734
    %5356 = vmatpush2.bf16.msra.mxu0 %v3733
    %5357 = vmatprep.subr.bf16.mxu0 %v3730
    %5358 = vmatpush2.bf16.msra.mxu0 %v3729
    %5359 = vmatprep.subr.bf16.mxu0 %v3726
    %5360 = vmatpush2.bf16.msra.mxu0 %v3725
    %5361 = vmatprep.subr.bf16.mxu0 %v3722
    %5362 = vmatpush2.bf16.msra.mxu0 %v3721
    %5363 = vmatprep.subr.bf16.mxu0 %v3718
    %5364 = vmatpush2.bf16.msra.mxu0 %v3717
    %5365 = vmatprep.subr.bf16.mxu0 %v3714
    %5366 = vmatpush2.bf16.msra.mxu0 %v3713
    %5367 = vmatprep.subr.bf16.mxu0 %v3710
    %5368 = vmatpush2.bf16.msra.mxu0 %v3709
    %5369 = vmatprep.subr.bf16.mxu0 %v3706
    %5370 = vmatpush2.bf16.msra.mxu0 %v3705
    %5371 = vmatprep.mubr.bf16.mxu0 %v4245
    %5372 = vmatmul.mubr.bf16.gmra.mxu0 %v4238
    %v5373 = vpop.f32.mrf.mxu0
    %v5374 = vadd.f32 %v5251, %v5373
    %v5375 = vpop.f32.mrf.mxu0
    %v5376 = vadd.f32 %v5253, %v5375
    %v5377 = vpop.f32.mrf.mxu0
    %v5378 = vpop.f32.mrf.mxu0
    %5379 = vdwg.mxu0
    %5380 = vmatprep.subr.bf16.mxu0 %v3766
    %5381 = vmatpush1.bf16.msra.mxu0 %v3765
    %5382 = vmatprep.subr.bf16.mxu0 %v3762
    %5383 = vmatpush1.bf16.msra.mxu0 %v3761
    %5384 = vmatprep.subr.bf16.mxu0 %v3758
    %5385 = vmatpush1.bf16.msra.mxu0 %v3757
    %5386 = vmatprep.subr.bf16.mxu0 %v3754
    %5387 = vmatpush1.bf16.msra.mxu0 %v3753
    %5388 = vmatprep.subr.bf16.mxu0 %v3750
    %5389 = vmatpush1.bf16.msra.mxu0 %v3749
    %5390 = vmatprep.subr.bf16.mxu0 %v3746
    %5391 = vmatpush1.bf16.msra.mxu0 %v3745
    %5392 = vmatprep.subr.bf16.mxu0 %v3742
    %5393 = vmatpush1.bf16.msra.mxu0 %v3741
    %5394 = vmatprep.subr.bf16.mxu0 %v3738
    %5395 = vmatpush1.bf16.msra.mxu0 %v3737
    %5396 = vmatprep.subr.bf16.mxu0 %v3798
    %5397 = vmatpush2.bf16.msra.mxu0 %v3797
    %5398 = vmatprep.subr.bf16.mxu0 %v3794
    %5399 = vmatpush2.bf16.msra.mxu0 %v3793
    %5400 = vmatprep.subr.bf16.mxu0 %v3790
    %5401 = vmatpush2.bf16.msra.mxu0 %v3789
    %5402 = vmatprep.subr.bf16.mxu0 %v3786
    %5403 = vmatpush2.bf16.msra.mxu0 %v3785
    %5404 = vmatprep.subr.bf16.mxu0 %v3782
    %5405 = vmatpush2.bf16.msra.mxu0 %v3781
    %5406 = vmatprep.subr.bf16.mxu0 %v3778
    %5407 = vmatpush2.bf16.msra.mxu0 %v3777
    %5408 = vmatprep.subr.bf16.mxu0 %v3774
    %5409 = vmatpush2.bf16.msra.mxu0 %v3773
    %5410 = vmatprep.subr.bf16.mxu0 %v3770
    %5411 = vmatpush2.bf16.msra.mxu0 %v3769
    %5412 = vmatprep.mubr.bf16.mxu0 %v4247
    %5413 = vmatmul.mubr.bf16.gmra.mxu0 %v4246
    %v5414 = vpop.f32.mrf.mxu0
    %v5415 = vadd.f32 %v5374, %v5414
    %v5416 = vpop.f32.mrf.mxu0
    %v5417 = vadd.f32 %v5376, %v5416
    %v5418 = vpop.f32.mrf.mxu0
    %v5419 = vpop.f32.mrf.mxu0
    %5420 = vdwg.mxu0
    %5421 = vmatprep.subr.bf16.mxu0 %v3704
    %5422 = vmatpush1.bf16.msra.mxu0 %v3703
    %5423 = vmatprep.subr.bf16.mxu0 %v3700
    %5424 = vmatpush1.bf16.msra.mxu0 %v3699
    %5425 = vmatprep.subr.bf16.mxu0 %v3696
    %5426 = vmatpush1.bf16.msra.mxu0 %v3695
    %5427 = vmatprep.subr.bf16.mxu0 %v3692
    %5428 = vmatpush1.bf16.msra.mxu0 %v3691
    %5429 = vmatprep.subr.bf16.mxu0 %v3688
    %5430 = vmatpush1.bf16.msra.mxu0 %v3687
    %5431 = vmatprep.subr.bf16.mxu0 %v3684
    %5432 = vmatpush1.bf16.msra.mxu0 %v3683
    %5433 = vmatprep.subr.bf16.mxu0 %v3680
    %5434 = vmatpush1.bf16.msra.mxu0 %v3679
    %5435 = vmatprep.subr.bf16.mxu0 %v3676
    %5436 = vmatpush1.bf16.msra.mxu0 %v3675
    %5437 = vmatprep.subr.bf16.mxu0 %v3736
    %5438 = vmatpush2.bf16.msra.mxu0 %v3735
    %5439 = vmatprep.subr.bf16.mxu0 %v3732
    %5440 = vmatpush2.bf16.msra.mxu0 %v3731
    %5441 = vmatprep.subr.bf16.mxu0 %v3728
    %5442 = vmatpush2.bf16.msra.mxu0 %v3727
    %5443 = vmatprep.subr.bf16.mxu0 %v3724
    %5444 = vmatpush2.bf16.msra.mxu0 %v3723
    %5445 = vmatprep.subr.bf16.mxu0 %v3720
    %5446 = vmatpush2.bf16.msra.mxu0 %v3719
    %5447 = vmatprep.subr.bf16.mxu0 %v3716
    %5448 = vmatpush2.bf16.msra.mxu0 %v3715
    %5449 = vmatprep.subr.bf16.mxu0 %v3712
    %5450 = vmatpush2.bf16.msra.mxu0 %v3711
    %5451 = vmatprep.subr.bf16.mxu0 %v3708
    %5452 = vmatpush2.bf16.msra.mxu0 %v3707
    %5453 = vmatprep.mubr.bf16.mxu0 %v4245
    %5454 = vmatmul.mubr.bf16.gmra.mxu0 %v4238
    %v5455 = vpop.f32.mrf.mxu0
    %v5456 = vadd.f32 %v5333, %v5455
    %v5457 = vpop.f32.mrf.mxu0
    %v5458 = vadd.f32 %v5335, %v5457
    %v5459 = vpop.f32.mrf.mxu0
    %v5460 = vpop.f32.mrf.mxu0
    %5461 = vdwg.mxu0
    %5462 = vmatprep.subr.bf16.mxu0 %v3768
    %5463 = vmatpush1.bf16.msra.mxu0 %v3767
    %5464 = vmatprep.subr.bf16.mxu0 %v3764
    %5465 = vmatpush1.bf16.msra.mxu0 %v3763
    %5466 = vmatprep.subr.bf16.mxu0 %v3760
    %5467 = vmatpush1.bf16.msra.mxu0 %v3759
    %5468 = vmatprep.subr.bf16.mxu0 %v3756
    %5469 = vmatpush1.bf16.msra.mxu0 %v3755
    %5470 = vmatprep.subr.bf16.mxu0 %v3752
    %5471 = vmatpush1.bf16.msra.mxu0 %v3751
    %5472 = vmatprep.subr.bf16.mxu0 %v3748
    %5473 = vmatpush1.bf16.msra.mxu0 %v3747
    %5474 = vmatprep.subr.bf16.mxu0 %v3744
    %5475 = vmatpush1.bf16.msra.mxu0 %v3743
    %5476 = vmatprep.subr.bf16.mxu0 %v3740
    %5477 = vmatpush1.bf16.msra.mxu0 %v3739
    %5478 = vmatprep.subr.bf16.mxu0 %v3800
    %5479 = vmatpush2.bf16.msra.mxu0 %v3799
    %5480 = vmatprep.subr.bf16.mxu0 %v3796
    %5481 = vmatpush2.bf16.msra.mxu0 %v3795
    %5482 = vmatprep.subr.bf16.mxu0 %v3792
    %5483 = vmatpush2.bf16.msra.mxu0 %v3791
    %5484 = vmatprep.subr.bf16.mxu0 %v3788
    %5485 = vmatpush2.bf16.msra.mxu0 %v3787
    %5486 = vmatprep.subr.bf16.mxu0 %v3784
    %5487 = vmatpush2.bf16.msra.mxu0 %v3783
    %5488 = vmatprep.subr.bf16.mxu0 %v3780
    %5489 = vmatpush2.bf16.msra.mxu0 %v3779
    %5490 = vmatprep.subr.bf16.mxu0 %v3776
    %5491 = vmatpush2.bf16.msra.mxu0 %v3775
    %5492 = vmatprep.subr.bf16.mxu0 %v3772
    %5493 = vmatpush2.bf16.msra.mxu0 %v3771
    %5494 = vmatprep.mubr.bf16.mxu0 %v4247
    %5495 = vmatmul.mubr.bf16.gmra.mxu0 %v4246
    %v5496 = vpop.f32.mrf.mxu0
    %v5497 = vadd.f32 %v5456, %v5496
    %v5498 = vpop.f32.mrf.mxu0
    %v5499 = vadd.f32 %v5458, %v5498
    %v5500 = vpop.f32.mrf.mxu0
    %v5501 = vpop.f32.mrf.mxu0
    %5502 = vdwg.mxu0
    %v5503 = vld [vmem:[%s765] sm:$0xf]
    %v5506 = vunpack.c.l.s4 1966171168
    %v5507 = vunpack.c.0.s8 %v5506
    %v5508 = vlaneseq
    %v5509 = vshrl.u32 %v5508, 7
    %v5510 = vsub.s32 %v5507, %v5509
    %v5511 = vrot.slane %v5503, %v5510
    %v5512 = vcombine.high %v5511, %v5511
    %v5514 = vunpack.c.l.s4 1966171168
    %v5515 = vunpack.c.0.s8 %v5514
    %v5516 = vlaneseq
    %v5517 = vshrl.u32 %v5516, 7
    %v5518 = vsub.s32 %v5515, %v5517
    %v5519 = vrot.slane %v5511, %v5518
    %v5521 = vunpack.c.l.s4 1966171168
    %v5522 = vunpack.c.0.s8 %v5521
    %v5523 = vlaneseq
    %v5524 = vshrl.u32 %v5523, 7
    %v5525 = vsub.s32 %v5522, %v5524
    %v5526 = vrot.slane %v5512, %v5525
    %v5527 = vcombine.high %v5519, %v5519
    %v5528 = vcombine.high %v5526, %v5526
    %5533 = vmatprep.subr.bf16.mxu0 %v4665
    %5534 = vmatpush1.bf16.msra.mxu0 %v4664
    %5535 = vmatprep.subr.bf16.mxu0 %v4661
    %5536 = vmatpush1.bf16.msra.mxu0 %v4660
    %5537 = vmatprep.subr.bf16.mxu0 %v4657
    %5538 = vmatpush1.bf16.msra.mxu0 %v4656
    %5539 = vmatprep.subr.bf16.mxu0 %v4653
    %5540 = vmatpush1.bf16.msra.mxu0 %v4652
    %5541 = vmatprep.subr.bf16.mxu0 %v4649
    %5542 = vmatpush1.bf16.msra.mxu0 %v4648
    %5543 = vmatprep.subr.bf16.mxu0 %v4645
    %5544 = vmatpush1.bf16.msra.mxu0 %v4644
    %5545 = vmatprep.subr.bf16.mxu0 %v4641
    %5546 = vmatpush1.bf16.msra.mxu0 %v4640
    %5547 = vmatprep.subr.bf16.mxu0 %v4637
    %5548 = vmatpush1.bf16.msra.mxu0 %v4636
    %5549 = vmatprep.subr.bf16.mxu0 %v4697
    %5550 = vmatpush2.bf16.msra.mxu0 %v4696
    %5551 = vmatprep.subr.bf16.mxu0 %v4693
    %5552 = vmatpush2.bf16.msra.mxu0 %v4692
    %5553 = vmatprep.subr.bf16.mxu0 %v4689
    %5554 = vmatpush2.bf16.msra.mxu0 %v4688
    %5555 = vmatprep.subr.bf16.mxu0 %v4685
    %5556 = vmatpush2.bf16.msra.mxu0 %v4684
    %5557 = vmatprep.subr.bf16.mxu0 %v4681
    %5558 = vmatpush2.bf16.msra.mxu0 %v4680
    %5559 = vmatprep.subr.bf16.mxu0 %v4677
    %5560 = vmatpush2.bf16.msra.mxu0 %v4676
    %5561 = vmatprep.subr.bf16.mxu0 %v4673
    %5562 = vmatpush2.bf16.msra.mxu0 %v4672
    %5563 = vmatprep.subr.bf16.mxu0 %v4669
    %5564 = vmatpush2.bf16.msra.mxu0 %v4668
    %5565 = vmatprep.mubr.bf16.mxu0 %v5526
    %5566 = vmatmul.mubr.bf16.gmra.mxu0 %v5519
    %v5567 = vpop.f32.mrf.mxu0
    %v5568 = vadd.f32 0.0, %v5567
    %v5569 = vpop.f32.mrf.mxu0
    %v5570 = vadd.f32 0.0, %v5569
    %v5571 = vpop.f32.mrf.mxu0
    %v5572 = vpop.f32.mrf.mxu0
    %5573 = vdwg.mxu0
    %5574 = vmatprep.subr.bf16.mxu0 %v4729
    %5575 = vmatpush1.bf16.msra.mxu0 %v4728
    %5576 = vmatprep.subr.bf16.mxu0 %v4725
    %5577 = vmatpush1.bf16.msra.mxu0 %v4724
    %5578 = vmatprep.subr.bf16.mxu0 %v4721
    %5579 = vmatpush1.bf16.msra.mxu0 %v4720
    %5580 = vmatprep.subr.bf16.mxu0 %v4717
    %5581 = vmatpush1.bf16.msra.mxu0 %v4716
    %5582 = vmatprep.subr.bf16.mxu0 %v4713
    %5583 = vmatpush1.bf16.msra.mxu0 %v4712
    %5584 = vmatprep.subr.bf16.mxu0 %v4709
    %5585 = vmatpush1.bf16.msra.mxu0 %v4708
    %5586 = vmatprep.subr.bf16.mxu0 %v4705
    %5587 = vmatpush1.bf16.msra.mxu0 %v4704
    %5588 = vmatprep.subr.bf16.mxu0 %v4701
    %5589 = vmatpush1.bf16.msra.mxu0 %v4700
    %5590 = vmatprep.subr.bf16.mxu0 %v4761
    %5591 = vmatpush2.bf16.msra.mxu0 %v4760
    %5592 = vmatprep.subr.bf16.mxu0 %v4757
    %5593 = vmatpush2.bf16.msra.mxu0 %v4756
    %5594 = vmatprep.subr.bf16.mxu0 %v4753
    %5595 = vmatpush2.bf16.msra.mxu0 %v4752
    %5596 = vmatprep.subr.bf16.mxu0 %v4749
    %5597 = vmatpush2.bf16.msra.mxu0 %v4748
    %5598 = vmatprep.subr.bf16.mxu0 %v4745
    %5599 = vmatpush2.bf16.msra.mxu0 %v4744
    %5600 = vmatprep.subr.bf16.mxu0 %v4741
    %5601 = vmatpush2.bf16.msra.mxu0 %v4740
    %5602 = vmatprep.subr.bf16.mxu0 %v4737
    %5603 = vmatpush2.bf16.msra.mxu0 %v4736
    %5604 = vmatprep.subr.bf16.mxu0 %v4733
    %5605 = vmatpush2.bf16.msra.mxu0 %v4732
    %5606 = vmatprep.mubr.bf16.mxu0 %v5528
    %5607 = vmatmul.mubr.bf16.gmra.mxu0 %v5527
    %v5608 = vpop.f32.mrf.mxu0
    %v5609 = vadd.f32 %v5568, %v5608
    %v5610 = vpop.f32.mrf.mxu0
    %v5611 = vadd.f32 %v5570, %v5610
    %v5612 = vpop.f32.mrf.mxu0
    %v5613 = vpop.f32.mrf.mxu0
    %5614 = vdwg.mxu0
    %5615 = vmatprep.subr.bf16.mxu0 %v4667
    %5616 = vmatpush1.bf16.msra.mxu0 %v4666
    %5617 = vmatprep.subr.bf16.mxu0 %v4663
    %5618 = vmatpush1.bf16.msra.mxu0 %v4662
    %5619 = vmatprep.subr.bf16.mxu0 %v4659
    %5620 = vmatpush1.bf16.msra.mxu0 %v4658
    %5621 = vmatprep.subr.bf16.mxu0 %v4655
    %5622 = vmatpush1.bf16.msra.mxu0 %v4654
    %5623 = vmatprep.subr.bf16.mxu0 %v4651
    %5624 = vmatpush1.bf16.msra.mxu0 %v4650
    %5625 = vmatprep.subr.bf16.mxu0 %v4647
    %5626 = vmatpush1.bf16.msra.mxu0 %v4646
    %5627 = vmatprep.subr.bf16.mxu0 %v4643
    %5628 = vmatpush1.bf16.msra.mxu0 %v4642
    %5629 = vmatprep.subr.bf16.mxu0 %v4639
    %5630 = vmatpush1.bf16.msra.mxu0 %v4638
    %5631 = vmatprep.subr.bf16.mxu0 %v4699
    %5632 = vmatpush2.bf16.msra.mxu0 %v4698
    %5633 = vmatprep.subr.bf16.mxu0 %v4695
    %5634 = vmatpush2.bf16.msra.mxu0 %v4694
    %5635 = vmatprep.subr.bf16.mxu0 %v4691
    %5636 = vmatpush2.bf16.msra.mxu0 %v4690
    %5637 = vmatprep.subr.bf16.mxu0 %v4687
    %5638 = vmatpush2.bf16.msra.mxu0 %v4686
    %5639 = vmatprep.subr.bf16.mxu0 %v4683
    %5640 = vmatpush2.bf16.msra.mxu0 %v4682
    %5641 = vmatprep.subr.bf16.mxu0 %v4679
    %5642 = vmatpush2.bf16.msra.mxu0 %v4678
    %5643 = vmatprep.subr.bf16.mxu0 %v4675
    %5644 = vmatpush2.bf16.msra.mxu0 %v4674
    %5645 = vmatprep.subr.bf16.mxu0 %v4671
    %5646 = vmatpush2.bf16.msra.mxu0 %v4670
    %5647 = vmatprep.mubr.bf16.mxu0 %v5526
    %5648 = vmatmul.mubr.bf16.gmra.mxu0 %v5519
    %v5649 = vpop.f32.mrf.mxu0
    %v5650 = vadd.f32 0.0, %v5649
    %v5651 = vpop.f32.mrf.mxu0
    %v5652 = vadd.f32 0.0, %v5651
    %v5653 = vpop.f32.mrf.mxu0
    %v5654 = vpop.f32.mrf.mxu0
    %5655 = vdwg.mxu0
    %5656 = vmatprep.subr.bf16.mxu0 %v4731
    %5657 = vmatpush1.bf16.msra.mxu0 %v4730
    %5658 = vmatprep.subr.bf16.mxu0 %v4727
    %5659 = vmatpush1.bf16.msra.mxu0 %v4726
    %5660 = vmatprep.subr.bf16.mxu0 %v4723
    %5661 = vmatpush1.bf16.msra.mxu0 %v4722
    %5662 = vmatprep.subr.bf16.mxu0 %v4719
    %5663 = vmatpush1.bf16.msra.mxu0 %v4718
    %5664 = vmatprep.subr.bf16.mxu0 %v4715
    %5665 = vmatpush1.bf16.msra.mxu0 %v4714
    %5666 = vmatprep.subr.bf16.mxu0 %v4711
    %5667 = vmatpush1.bf16.msra.mxu0 %v4710
    %5668 = vmatprep.subr.bf16.mxu0 %v4707
    %5669 = vmatpush1.bf16.msra.mxu0 %v4706
    %5670 = vmatprep.subr.bf16.mxu0 %v4703
    %5671 = vmatpush1.bf16.msra.mxu0 %v4702
    %5672 = vmatprep.subr.bf16.mxu0 %v4763
    %5673 = vmatpush2.bf16.msra.mxu0 %v4762
    %5674 = vmatprep.subr.bf16.mxu0 %v4759
    %5675 = vmatpush2.bf16.msra.mxu0 %v4758
    %5676 = vmatprep.subr.bf16.mxu0 %v4755
    %5677 = vmatpush2.bf16.msra.mxu0 %v4754
    %5678 = vmatprep.subr.bf16.mxu0 %v4751
    %5679 = vmatpush2.bf16.msra.mxu0 %v4750
    %5680 = vmatprep.subr.bf16.mxu0 %v4747
    %5681 = vmatpush2.bf16.msra.mxu0 %v4746
    %5682 = vmatprep.subr.bf16.mxu0 %v4743
    %5683 = vmatpush2.bf16.msra.mxu0 %v4742
    %5684 = vmatprep.subr.bf16.mxu0 %v4739
    %5685 = vmatpush2.bf16.msra.mxu0 %v4738
    %5686 = vmatprep.subr.bf16.mxu0 %v4735
    %5687 = vmatpush2.bf16.msra.mxu0 %v4734
    %5688 = vmatprep.mubr.bf16.mxu0 %v5528
    %5689 = vmatmul.mubr.bf16.gmra.mxu0 %v5527
    %v5690 = vpop.f32.mrf.mxu0
    %v5691 = vadd.f32 %v5650, %v5690
    %v5692 = vpop.f32.mrf.mxu0
    %v5693 = vadd.f32 %v5652, %v5692
    %v5694 = vpop.f32.mrf.mxu0
    %v5695 = vpop.f32.mrf.mxu0
    %5696 = vdwg.mxu0
    %v5697 = vadd.f32 %v5415, %v5609
    %v5698 = vadd.f32 %v5417, %v5611
    %v5699 = vadd.f32 %v5497, %v5691
    %v5700 = vadd.f32 %v5499, %v5693
    %v5701 = vadd.f32 %v5697, %v5064
    %v5702 = vadd.f32 %v5698, %v5068
    %v5703 = vadd.f32 %v5699, %v5072
    %v5704 = vadd.f32 %v5700, %v5076
    %v5705 = vmax.f32 %v5701, 0.0
    %v5706 = vmax.f32 %v5702, 0.0
    %v5707 = vmax.f32 %v5703, 0.0
    %v5708 = vmax.f32 %v5704, 0.0
    %s5709 = scalar_lea.vmem %s5, 448
    %v5710 = vld [vmem:[%s5709] sm:$0xff]
    %v5711 = vld [vmem:[%s5709 + $0x8] sm:$0xff]
    %v5712 = vld [vmem:[%s5709 + $0x10] sm:$0xff]
    %v5713 = vld [vmem:[%s5709 + $0x18] sm:$0xff]
    %v5714 = vld [vmem:[%s5709 + $0x20] sm:$0xff]
    %v5715 = vld [vmem:[%s5709 + $0x28] sm:$0xff]
    %v5716 = vld [vmem:[%s5709 + $0x30] sm:$0xff]
    %v5717 = vld [vmem:[%s5709 + $0x38] sm:$0xff]
    %v5718 = vld [vmem:[%s5709 + $0x40] sm:$0xff]
    %v5719 = vld [vmem:[%s5709 + $0x48] sm:$0xff]
    %v5720 = vld [vmem:[%s5709 + $0x50] sm:$0xff]
    %v5721 = vld [vmem:[%s5709 + $0x58] sm:$0xff]
    %v5722 = vld [vmem:[%s5709 + $0x60] sm:$0xff]
    %v5723 = vld [vmem:[%s5709 + $0x68] sm:$0xff]
    %v5724 = vld [vmem:[%s5709 + $0x70] sm:$0xff]
    %v5725 = vld [vmem:[%s5709 + $0x78] sm:$0xff]
    %v5726 = vld [vmem:[%s5709 + $0x80] sm:$0xff]
    %v5727 = vld [vmem:[%s5709 + $0x88] sm:$0xff]
    %v5728 = vld [vmem:[%s5709 + $0x90] sm:$0xff]
    %v5729 = vld [vmem:[%s5709 + $0x98] sm:$0xff]
    %v5730 = vld [vmem:[%s5709 + $0xa0] sm:$0xff]
    %v5731 = vld [vmem:[%s5709 + $0xa8] sm:$0xff]
    %v5732 = vld [vmem:[%s5709 + $0xb0] sm:$0xff]
    %v5733 = vld [vmem:[%s5709 + $0xb8] sm:$0xff]
    %v5734 = vld [vmem:[%s5709 + $0xc0] sm:$0xff]
    %v5735 = vld [vmem:[%s5709 + $0xc8] sm:$0xff]
    %v5736 = vld [vmem:[%s5709 + $0xd0] sm:$0xff]
    %v5737 = vld [vmem:[%s5709 + $0xd8] sm:$0xff]
    %v5738 = vld [vmem:[%s5709 + $0xe0] sm:$0xff]
    %v5739 = vld [vmem:[%s5709 + $0xe8] sm:$0xff]
    %v5740 = vld [vmem:[%s5709 + $0xf0] sm:$0xff]
    %v5741 = vld [vmem:[%s5709 + $0xf8] sm:$0xff]
    %v5742 = vld [vmem:[%s5709 + $0x100] sm:$0xff]
    %v5743 = vld [vmem:[%s5709 + $0x108] sm:$0xff]
    %v5744 = vld [vmem:[%s5709 + $0x110] sm:$0xff]
    %v5745 = vld [vmem:[%s5709 + $0x118] sm:$0xff]
    %v5746 = vld [vmem:[%s5709 + $0x120] sm:$0xff]
    %v5747 = vld [vmem:[%s5709 + $0x128] sm:$0xff]
    %v5748 = vld [vmem:[%s5709 + $0x130] sm:$0xff]
    %v5749 = vld [vmem:[%s5709 + $0x138] sm:$0xff]
    %v5750 = vld [vmem:[%s5709 + $0x140] sm:$0xff]
    %v5751 = vld [vmem:[%s5709 + $0x148] sm:$0xff]
    %v5752 = vld [vmem:[%s5709 + $0x150] sm:$0xff]
    %v5753 = vld [vmem:[%s5709 + $0x158] sm:$0xff]
    %v5754 = vld [vmem:[%s5709 + $0x160] sm:$0xff]
    %v5755 = vld [vmem:[%s5709 + $0x168] sm:$0xff]
    %v5756 = vld [vmem:[%s5709 + $0x170] sm:$0xff]
    %v5757 = vld [vmem:[%s5709 + $0x178] sm:$0xff]
    %v5758 = vld [vmem:[%s5709 + $0x180] sm:$0xff]
    %v5759 = vld [vmem:[%s5709 + $0x188] sm:$0xff]
    %v5760 = vld [vmem:[%s5709 + $0x190] sm:$0xff]
    %v5761 = vld [vmem:[%s5709 + $0x198] sm:$0xff]
    %v5762 = vld [vmem:[%s5709 + $0x1a0] sm:$0xff]
    %v5763 = vld [vmem:[%s5709 + $0x1a8] sm:$0xff]
    %v5764 = vld [vmem:[%s5709 + $0x1b0] sm:$0xff]
    %v5765 = vld [vmem:[%s5709 + $0x1b8] sm:$0xff]
    %vm5766 = vcmask 523264
    %v5768 = vsel %vm5766, %v5708, 0
    %5770 = vmatprep.subr.mxu0 0.0
    %5771 = vmatpush1.msra.mxu0 %v5725
    %5772 = vmatprep.subr.mxu0 0.0
    %5773 = vmatpush1.msra.mxu0 %v5724
    %5774 = vmatprep.subr.mxu0 0.0
    %5775 = vmatpush1.msra.mxu0 %v5723
    %5776 = vmatprep.subr.mxu0 0.0
    %5777 = vmatpush1.msra.mxu0 %v5722
    %5778 = vmatprep.subr.mxu0 0.0
    %5779 = vmatpush1.msra.mxu0 %v5721
    %5780 = vmatprep.subr.mxu0 0.0
    %5781 = vmatpush1.msra.mxu0 %v5720
    %5782 = vmatprep.subr.mxu0 0.0
    %5783 = vmatpush1.msra.mxu0 %v5719
    %5784 = vmatprep.subr.mxu0 0.0
    %5785 = vmatpush1.msra.mxu0 %v5718
    %5786 = vmatprep.subr.mxu0 0.0
    %5787 = vmatpush1.msra.mxu0 %v5717
    %5788 = vmatprep.subr.mxu0 0.0
    %5789 = vmatpush1.msra.mxu0 %v5716
    %5790 = vmatprep.subr.mxu0 0.0
    %5791 = vmatpush1.msra.mxu0 %v5715
    %5792 = vmatprep.subr.mxu0 0.0
    %5793 = vmatpush1.msra.mxu0 %v5714
    %5794 = vmatprep.subr.mxu0 0.0
    %5795 = vmatpush1.msra.mxu0 %v5713
    %5796 = vmatprep.subr.mxu0 0.0
    %5797 = vmatpush1.msra.mxu0 %v5712
    %5798 = vmatprep.subr.mxu0 0.0
    %5799 = vmatpush1.msra.mxu0 %v5711
    %5800 = vmatprep.subr.mxu0 0.0
    %5801 = vmatpush1.msra.mxu0 %v5710
    %5802 = vmatprep.subr.mxu0 0.0
    %5803 = vmatpush2.msra.mxu0 %v5741
    %5804 = vmatprep.subr.mxu0 0.0
    %5805 = vmatpush2.msra.mxu0 %v5740
    %5806 = vmatprep.subr.mxu0 0.0
    %5807 = vmatpush2.msra.mxu0 %v5739
    %5808 = vmatprep.subr.mxu0 0.0
    %5809 = vmatpush2.msra.mxu0 %v5738
    %5810 = vmatprep.subr.mxu0 0.0
    %5811 = vmatpush2.msra.mxu0 %v5737
    %5812 = vmatprep.subr.mxu0 0.0
    %5813 = vmatpush2.msra.mxu0 %v5736
    %5814 = vmatprep.subr.mxu0 0.0
    %5815 = vmatpush2.msra.mxu0 %v5735
    %5816 = vmatprep.subr.mxu0 0.0
    %5817 = vmatpush2.msra.mxu0 %v5734
    %5818 = vmatprep.subr.mxu0 0.0
    %5819 = vmatpush2.msra.mxu0 %v5733
    %5820 = vmatprep.subr.mxu0 0.0
    %5821 = vmatpush2.msra.mxu0 %v5732
    %5822 = vmatprep.subr.mxu0 0.0
    %5823 = vmatpush2.msra.mxu0 %v5731
    %5824 = vmatprep.subr.mxu0 0.0
    %5825 = vmatpush2.msra.mxu0 %v5730
    %5826 = vmatprep.subr.mxu0 0.0
    %5827 = vmatpush2.msra.mxu0 %v5729
    %5828 = vmatprep.subr.mxu0 0.0
    %5829 = vmatpush2.msra.mxu0 %v5728
    %5830 = vmatprep.subr.mxu0 0.0
    %5831 = vmatpush2.msra.mxu0 %v5727
    %5832 = vmatprep.subr.mxu0 0.0
    %5833 = vmatpush2.msra.mxu0 %v5726
    %5834 = vmatprep.mubr.f32.mxu0 %v5706
    %5835 = vmatmul.mubr.f32.gmra.mxu0 %v5705
    %v5836 = vpop.f32.mrf.mxu0
    %v5837 = vadd.f32 0.0, %v5836
    %v5838 = vpop.f32.mrf.mxu0
    %5839 = vdwg.mxu0
    %5840 = vmatprep.subr.mxu0 0.0
    %5841 = vmatpush1.msra.mxu0 %v5757
    %5842 = vmatprep.subr.mxu0 0.0
    %5843 = vmatpush1.msra.mxu0 %v5756
    %5844 = vmatprep.subr.mxu0 0.0
    %5845 = vmatpush1.msra.mxu0 %v5755
    %5846 = vmatprep.subr.mxu0 0.0
    %5847 = vmatpush1.msra.mxu0 %v5754
    %5848 = vmatprep.subr.mxu0 0.0
    %5849 = vmatpush1.msra.mxu0 %v5753
    %5850 = vmatprep.subr.mxu0 0.0
    %5851 = vmatpush1.msra.mxu0 %v5752
    %5852 = vmatprep.subr.mxu0 0.0
    %5853 = vmatpush1.msra.mxu0 %v5751
    %5854 = vmatprep.subr.mxu0 0.0
    %5855 = vmatpush1.msra.mxu0 %v5750
    %5856 = vmatprep.subr.mxu0 0.0
    %5857 = vmatpush1.msra.mxu0 %v5749
    %5858 = vmatprep.subr.mxu0 0.0
    %5859 = vmatpush1.msra.mxu0 %v5748
    %5860 = vmatprep.subr.mxu0 0.0
    %5861 = vmatpush1.msra.mxu0 %v5747
    %5862 = vmatprep.subr.mxu0 0.0
    %5863 = vmatpush1.msra.mxu0 %v5746
    %5864 = vmatprep.subr.mxu0 0.0
    %5865 = vmatpush1.msra.mxu0 %v5745
    %5866 = vmatprep.subr.mxu0 0.0
    %5867 = vmatpush1.msra.mxu0 %v5744
    %5868 = vmatprep.subr.mxu0 0.0
    %5869 = vmatpush1.msra.mxu0 %v5743
    %5870 = vmatprep.subr.mxu0 0.0
    %5871 = vmatpush1.msra.mxu0 %v5742
    %5872 = vmatprep.subr.mxu0 0.0
    %5873 = vmatpush2.msra.mxu0 0.0
    %5874 = vmatprep.subr.mxu0 0.0
    %5875 = vmatpush2.msra.mxu0 0.0
    %5876 = vmatprep.subr.mxu0 0.0
    %5877 = vmatpush2.msra.mxu0 0.0
    %5878 = vmatprep.subr.mxu0 0.0
    %5879 = vmatpush2.msra.mxu0 0.0
    %5880 = vmatprep.subr.mxu0 0.0
    %5881 = vmatpush2.msra.mxu0 0.0
    %5882 = vmatprep.subr.mxu0 0.0
    %5883 = vmatpush2.msra.mxu0 0.0
    %5884 = vmatprep.subr.mxu0 0.0
    %5885 = vmatpush2.msra.mxu0 0.0
    %5886 = vmatprep.subr.mxu0 0.0
    %5887 = vmatpush2.msra.mxu0 0.0
    %5888 = vmatprep.subr.mxu0 0.0
    %5889 = vmatpush2.msra.mxu0 %v5765
    %5890 = vmatprep.subr.mxu0 0.0
    %5891 = vmatpush2.msra.mxu0 %v5764
    %5892 = vmatprep.subr.mxu0 0.0
    %5893 = vmatpush2.msra.mxu0 %v5763
    %5894 = vmatprep.subr.mxu0 0.0
    %5895 = vmatpush2.msra.mxu0 %v5762
    %5896 = vmatprep.subr.mxu0 0.0
    %5897 = vmatpush2.msra.mxu0 %v5761
    %5898 = vmatprep.subr.mxu0 0.0
    %5899 = vmatpush2.msra.mxu0 %v5760
    %5900 = vmatprep.subr.mxu0 0.0
    %5901 = vmatpush2.msra.mxu0 %v5759
    %5902 = vmatprep.subr.mxu0 0.0
    %5903 = vmatpush2.msra.mxu0 %v5758
    %5904 = vmatprep.mubr.f32.mxu0 %v5768
    %5905 = vmatmul.mubr.f32.gmra.mxu0 %v5707
    %v5906 = vpop.f32.mrf.mxu0
    %v5907 = vadd.f32 %v5837, %v5906
    %v5908 = vpop.f32.mrf.mxu0
    %5909 = vdwg.mxu0
    %v5911 = vsel %vm5766, %v5088, 0
    %5913 = vmatprep.subr.mxu0 0.0
    %5914 = vmatpush1.msra.mxu0 %v5104
    %5915 = vmatprep.subr.mxu0 0.0
    %5916 = vmatpush1.msra.mxu0 %v5103
    %5917 = vmatprep.subr.mxu0 0.0
    %5918 = vmatpush1.msra.mxu0 %v5102
    %5919 = vmatprep.subr.mxu0 0.0
    %5920 = vmatpush1.msra.mxu0 %v5101
    %5921 = vmatprep.subr.mxu0 0.0
    %5922 = vmatpush1.msra.mxu0 %v5100
    %5923 = vmatprep.subr.mxu0 0.0
    %5924 = vmatpush1.msra.mxu0 %v5099
    %5925 = vmatprep.subr.mxu0 0.0
    %5926 = vmatpush1.msra.mxu0 %v5098
    %5927 = vmatprep.subr.mxu0 0.0
    %5928 = vmatpush1.msra.mxu0 %v5097
    %5929 = vmatprep.subr.mxu0 0.0
    %5930 = vmatpush1.msra.mxu0 %v5096
    %5931 = vmatprep.subr.mxu0 0.0
    %5932 = vmatpush1.msra.mxu0 %v5095
    %5933 = vmatprep.subr.mxu0 0.0
    %5934 = vmatpush1.msra.mxu0 %v5094
    %5935 = vmatprep.subr.mxu0 0.0
    %5936 = vmatpush1.msra.mxu0 %v5093
    %5937 = vmatprep.subr.mxu0 0.0
    %5938 = vmatpush1.msra.mxu0 %v5092
    %5939 = vmatprep.subr.mxu0 0.0
    %5940 = vmatpush1.msra.mxu0 %v5091
    %5941 = vmatprep.subr.mxu0 0.0
    %5942 = vmatpush1.msra.mxu0 %v5090
    %5943 = vmatprep.subr.mxu0 0.0
    %5944 = vmatpush1.msra.mxu0 %v5089
    %5945 = vmatprep.subr.mxu0 0.0
    %5946 = vmatpush2.msra.mxu0 %v5120
    %5947 = vmatprep.subr.mxu0 0.0
    %5948 = vmatpush2.msra.mxu0 %v5119
    %5949 = vmatprep.subr.mxu0 0.0
    %5950 = vmatpush2.msra.mxu0 %v5118
    %5951 = vmatprep.subr.mxu0 0.0
    %5952 = vmatpush2.msra.mxu0 %v5117
    %5953 = vmatprep.subr.mxu0 0.0
    %5954 = vmatpush2.msra.mxu0 %v5116
    %5955 = vmatprep.subr.mxu0 0.0
    %5956 = vmatpush2.msra.mxu0 %v5115
    %5957 = vmatprep.subr.mxu0 0.0
    %5958 = vmatpush2.msra.mxu0 %v5114
    %5959 = vmatprep.subr.mxu0 0.0
    %5960 = vmatpush2.msra.mxu0 %v5113
    %5961 = vmatprep.subr.mxu0 0.0
    %5962 = vmatpush2.msra.mxu0 %v5112
    %5963 = vmatprep.subr.mxu0 0.0
    %5964 = vmatpush2.msra.mxu0 %v5111
    %5965 = vmatprep.subr.mxu0 0.0
    %5966 = vmatpush2.msra.mxu0 %v5110
    %5967 = vmatprep.subr.mxu0 0.0
    %5968 = vmatpush2.msra.mxu0 %v5109
    %5969 = vmatprep.subr.mxu0 0.0
    %5970 = vmatpush2.msra.mxu0 %v5108
    %5971 = vmatprep.subr.mxu0 0.0
    %5972 = vmatpush2.msra.mxu0 %v5107
    %5973 = vmatprep.subr.mxu0 0.0
    %5974 = vmatpush2.msra.mxu0 %v5106
    %5975 = vmatprep.subr.mxu0 0.0
    %5976 = vmatpush2.msra.mxu0 %v5105
    %5977 = vmatprep.mubr.f32.mxu0 %v5086
    %5978 = vmatmul.mubr.f32.gmra.mxu0 %v5085
    %v5979 = vpop.f32.mrf.mxu0
    %v5980 = vadd.f32 %v5907, %v5979
    %v5981 = vpop.f32.mrf.mxu0
    %5982 = vdwg.mxu0
    %5983 = vmatprep.subr.mxu0 0.0
    %5984 = vmatpush1.msra.mxu0 %v5136
    %5985 = vmatprep.subr.mxu0 0.0
    %5986 = vmatpush1.msra.mxu0 %v5135
    %5987 = vmatprep.subr.mxu0 0.0
    %5988 = vmatpush1.msra.mxu0 %v5134
    %5989 = vmatprep.subr.mxu0 0.0
    %5990 = vmatpush1.msra.mxu0 %v5133
    %5991 = vmatprep.subr.mxu0 0.0
    %5992 = vmatpush1.msra.mxu0 %v5132
    %5993 = vmatprep.subr.mxu0 0.0
    %5994 = vmatpush1.msra.mxu0 %v5131
    %5995 = vmatprep.subr.mxu0 0.0
    %5996 = vmatpush1.msra.mxu0 %v5130
    %5997 = vmatprep.subr.mxu0 0.0
    %5998 = vmatpush1.msra.mxu0 %v5129
    %5999 = vmatprep.subr.mxu0 0.0
    %6000 = vmatpush1.msra.mxu0 %v5128
    %6001 = vmatprep.subr.mxu0 0.0
    %6002 = vmatpush1.msra.mxu0 %v5127
    %6003 = vmatprep.subr.mxu0 0.0
    %6004 = vmatpush1.msra.mxu0 %v5126
    %6005 = vmatprep.subr.mxu0 0.0
    %6006 = vmatpush1.msra.mxu0 %v5125
    %6007 = vmatprep.subr.mxu0 0.0
    %6008 = vmatpush1.msra.mxu0 %v5124
    %6009 = vmatprep.subr.mxu0 0.0
    %6010 = vmatpush1.msra.mxu0 %v5123
    %6011 = vmatprep.subr.mxu0 0.0
    %6012 = vmatpush1.msra.mxu0 %v5122
    %6013 = vmatprep.subr.mxu0 0.0
    %6014 = vmatpush1.msra.mxu0 %v5121
    %6015 = vmatprep.subr.mxu0 0.0
    %6016 = vmatpush2.msra.mxu0 0.0
    %6017 = vmatprep.subr.mxu0 0.0
    %6018 = vmatpush2.msra.mxu0 0.0
    %6019 = vmatprep.subr.mxu0 0.0
    %6020 = vmatpush2.msra.mxu0 0.0
    %6021 = vmatprep.subr.mxu0 0.0
    %6022 = vmatpush2.msra.mxu0 0.0
    %6023 = vmatprep.subr.mxu0 0.0
    %6024 = vmatpush2.msra.mxu0 0.0
    %6025 = vmatprep.subr.mxu0 0.0
    %6026 = vmatpush2.msra.mxu0 0.0
    %6027 = vmatprep.subr.mxu0 0.0
    %6028 = vmatpush2.msra.mxu0 0.0
    %6029 = vmatprep.subr.mxu0 0.0
    %6030 = vmatpush2.msra.mxu0 0.0
    %6031 = vmatprep.subr.mxu0 0.0
    %6032 = vmatpush2.msra.mxu0 %v5144
    %6033 = vmatprep.subr.mxu0 0.0
    %6034 = vmatpush2.msra.mxu0 %v5143
    %6035 = vmatprep.subr.mxu0 0.0
    %6036 = vmatpush2.msra.mxu0 %v5142
    %6037 = vmatprep.subr.mxu0 0.0
    %6038 = vmatpush2.msra.mxu0 %v5141
    %6039 = vmatprep.subr.mxu0 0.0
    %6040 = vmatpush2.msra.mxu0 %v5140
    %6041 = vmatprep.subr.mxu0 0.0
    %6042 = vmatpush2.msra.mxu0 %v5139
    %6043 = vmatprep.subr.mxu0 0.0
    %6044 = vmatpush2.msra.mxu0 %v5138
    %6045 = vmatprep.subr.mxu0 0.0
    %6046 = vmatpush2.msra.mxu0 %v5137
    %6047 = vmatprep.mubr.f32.mxu0 %v5911
    %6048 = vmatmul.mubr.f32.gmra.mxu0 %v5087
    %v6049 = vpop.f32.mrf.mxu0
    %v6050 = vadd.f32 %v5980, %v6049
    %v6051 = vpop.f32.mrf.mxu0
    %6052 = vdwg.mxu0
    %v6053 = vld [vmem:[%s905] sm:$0xf]
    %v6056 = vunpack.c.l.s4 1966171168
    %v6057 = vunpack.c.0.s8 %v6056
    %v6058 = vlaneseq
    %v6059 = vshrl.u32 %v6058, 7
    %v6060 = vsub.s32 %v6057, %v6059
    %v6061 = vrot.slane %v6053, %v6060
    %v6062 = vcombine.high %v6061, %v6061
    %v6064 = vunpack.c.l.s4 1966171168
    %v6065 = vunpack.c.0.s8 %v6064
    %v6066 = vlaneseq
    %v6067 = vshrl.u32 %v6066, 7
    %v6068 = vsub.s32 %v6065, %v6067
    %v6069 = vrot.slane %v6061, %v6068
    %v6071 = vunpack.c.l.s4 1966171168
    %v6072 = vunpack.c.0.s8 %v6071
    %v6073 = vlaneseq
    %v6074 = vshrl.u32 %v6073, 7
    %v6075 = vsub.s32 %v6072, %v6074
    %v6076 = vrot.slane %v6062, %v6075
    %v6077 = vcombine.high %v6069, %v6069
    %v6078 = vcombine.high %v6076, %v6076
    %6083 = vmatprep.subr.bf16.mxu0 %v2869
    %6084 = vmatpush1.bf16.msra.mxu0 %v2868
    %6085 = vmatprep.subr.bf16.mxu0 %v2865
    %6086 = vmatpush1.bf16.msra.mxu0 %v2864
    %6087 = vmatprep.subr.bf16.mxu0 %v2861
    %6088 = vmatpush1.bf16.msra.mxu0 %v2860
    %6089 = vmatprep.subr.bf16.mxu0 %v2857
    %6090 = vmatpush1.bf16.msra.mxu0 %v2856
    %6091 = vmatprep.subr.bf16.mxu0 %v2853
    %6092 = vmatpush1.bf16.msra.mxu0 %v2852
    %6093 = vmatprep.subr.bf16.mxu0 %v2849
    %6094 = vmatpush1.bf16.msra.mxu0 %v2848
    %6095 = vmatprep.subr.bf16.mxu0 %v2845
    %6096 = vmatpush1.bf16.msra.mxu0 %v2844
    %6097 = vmatprep.subr.bf16.mxu0 %v2841
    %6098 = vmatpush1.bf16.msra.mxu0 %v2840
    %6099 = vmatprep.subr.bf16.mxu0 %v2901
    %6100 = vmatpush2.bf16.msra.mxu0 %v2900
    %6101 = vmatprep.subr.bf16.mxu0 %v2897
    %6102 = vmatpush2.bf16.msra.mxu0 %v2896
    %6103 = vmatprep.subr.bf16.mxu0 %v2893
    %6104 = vmatpush2.bf16.msra.mxu0 %v2892
    %6105 = vmatprep.subr.bf16.mxu0 %v2889
    %6106 = vmatpush2.bf16.msra.mxu0 %v2888
    %6107 = vmatprep.subr.bf16.mxu0 %v2885
    %6108 = vmatpush2.bf16.msra.mxu0 %v2884
    %6109 = vmatprep.subr.bf16.mxu0 %v2881
    %6110 = vmatpush2.bf16.msra.mxu0 %v2880
    %6111 = vmatprep.subr.bf16.mxu0 %v2877
    %6112 = vmatpush2.bf16.msra.mxu0 %v2876
    %6113 = vmatprep.subr.bf16.mxu0 %v2873
    %6114 = vmatpush2.bf16.msra.mxu0 %v2872
    %6115 = vmatprep.mubr.bf16.mxu0 %v6076
    %6116 = vmatmul.mubr.bf16.gmra.mxu0 %v6069
    %v6117 = vpop.f32.mrf.mxu0
    %v6118 = vadd.f32 0.0, %v6117
    %v6119 = vpop.f32.mrf.mxu0
    %v6120 = vadd.f32 0.0, %v6119
    %v6121 = vpop.f32.mrf.mxu0
    %v6122 = vpop.f32.mrf.mxu0
    %6123 = vdwg.mxu0
    %6124 = vmatprep.subr.bf16.mxu0 %v2933
    %6125 = vmatpush1.bf16.msra.mxu0 %v2932
    %6126 = vmatprep.subr.bf16.mxu0 %v2929
    %6127 = vmatpush1.bf16.msra.mxu0 %v2928
    %6128 = vmatprep.subr.bf16.mxu0 %v2925
    %6129 = vmatpush1.bf16.msra.mxu0 %v2924
    %6130 = vmatprep.subr.bf16.mxu0 %v2921
    %6131 = vmatpush1.bf16.msra.mxu0 %v2920
    %6132 = vmatprep.subr.bf16.mxu0 %v2917
    %6133 = vmatpush1.bf16.msra.mxu0 %v2916
    %6134 = vmatprep.subr.bf16.mxu0 %v2913
    %6135 = vmatpush1.bf16.msra.mxu0 %v2912
    %6136 = vmatprep.subr.bf16.mxu0 %v2909
    %6137 = vmatpush1.bf16.msra.mxu0 %v2908
    %6138 = vmatprep.subr.bf16.mxu0 %v2905
    %6139 = vmatpush1.bf16.msra.mxu0 %v2904
    %6140 = vmatprep.subr.bf16.mxu0 %v2965
    %6141 = vmatpush2.bf16.msra.mxu0 %v2964
    %6142 = vmatprep.subr.bf16.mxu0 %v2961
    %6143 = vmatpush2.bf16.msra.mxu0 %v2960
    %6144 = vmatprep.subr.bf16.mxu0 %v2957
    %6145 = vmatpush2.bf16.msra.mxu0 %v2956
    %6146 = vmatprep.subr.bf16.mxu0 %v2953
    %6147 = vmatpush2.bf16.msra.mxu0 %v2952
    %6148 = vmatprep.subr.bf16.mxu0 %v2949
    %6149 = vmatpush2.bf16.msra.mxu0 %v2948
    %6150 = vmatprep.subr.bf16.mxu0 %v2945
    %6151 = vmatpush2.bf16.msra.mxu0 %v2944
    %6152 = vmatprep.subr.bf16.mxu0 %v2941
    %6153 = vmatpush2.bf16.msra.mxu0 %v2940
    %6154 = vmatprep.subr.bf16.mxu0 %v2937
    %6155 = vmatpush2.bf16.msra.mxu0 %v2936
    %6156 = vmatprep.mubr.bf16.mxu0 %v6078
    %6157 = vmatmul.mubr.bf16.gmra.mxu0 %v6077
    %v6158 = vpop.f32.mrf.mxu0
    %v6159 = vadd.f32 %v6118, %v6158
    %v6160 = vpop.f32.mrf.mxu0
    %v6161 = vadd.f32 %v6120, %v6160
    %v6162 = vpop.f32.mrf.mxu0
    %v6163 = vpop.f32.mrf.mxu0
    %6164 = vdwg.mxu0
    %6165 = vmatprep.subr.bf16.mxu0 %v2871
    %6166 = vmatpush1.bf16.msra.mxu0 %v2870
    %6167 = vmatprep.subr.bf16.mxu0 %v2867
    %6168 = vmatpush1.bf16.msra.mxu0 %v2866
    %6169 = vmatprep.subr.bf16.mxu0 %v2863
    %6170 = vmatpush1.bf16.msra.mxu0 %v2862
    %6171 = vmatprep.subr.bf16.mxu0 %v2859
    %6172 = vmatpush1.bf16.msra.mxu0 %v2858
    %6173 = vmatprep.subr.bf16.mxu0 %v2855
    %6174 = vmatpush1.bf16.msra.mxu0 %v2854
    %6175 = vmatprep.subr.bf16.mxu0 %v2851
    %6176 = vmatpush1.bf16.msra.mxu0 %v2850
    %6177 = vmatprep.subr.bf16.mxu0 %v2847
    %6178 = vmatpush1.bf16.msra.mxu0 %v2846
    %6179 = vmatprep.subr.bf16.mxu0 %v2843
    %6180 = vmatpush1.bf16.msra.mxu0 %v2842
    %6181 = vmatprep.subr.bf16.mxu0 %v2903
    %6182 = vmatpush2.bf16.msra.mxu0 %v2902
    %6183 = vmatprep.subr.bf16.mxu0 %v2899
    %6184 = vmatpush2.bf16.msra.mxu0 %v2898
    %6185 = vmatprep.subr.bf16.mxu0 %v2895
    %6186 = vmatpush2.bf16.msra.mxu0 %v2894
    %6187 = vmatprep.subr.bf16.mxu0 %v2891
    %6188 = vmatpush2.bf16.msra.mxu0 %v2890
    %6189 = vmatprep.subr.bf16.mxu0 %v2887
    %6190 = vmatpush2.bf16.msra.mxu0 %v2886
    %6191 = vmatprep.subr.bf16.mxu0 %v2883
    %6192 = vmatpush2.bf16.msra.mxu0 %v2882
    %6193 = vmatprep.subr.bf16.mxu0 %v2879
    %6194 = vmatpush2.bf16.msra.mxu0 %v2878
    %6195 = vmatprep.subr.bf16.mxu0 %v2875
    %6196 = vmatpush2.bf16.msra.mxu0 %v2874
    %6197 = vmatprep.mubr.bf16.mxu0 %v6076
    %6198 = vmatmul.mubr.bf16.gmra.mxu0 %v6069
    %v6199 = vpop.f32.mrf.mxu0
    %v6200 = vadd.f32 0.0, %v6199
    %v6201 = vpop.f32.mrf.mxu0
    %v6202 = vadd.f32 0.0, %v6201
    %v6203 = vpop.f32.mrf.mxu0
    %v6204 = vpop.f32.mrf.mxu0
    %6205 = vdwg.mxu0
    %6206 = vmatprep.subr.bf16.mxu0 %v2935
    %6207 = vmatpush1.bf16.msra.mxu0 %v2934
    %6208 = vmatprep.subr.bf16.mxu0 %v2931
    %6209 = vmatpush1.bf16.msra.mxu0 %v2930
    %6210 = vmatprep.subr.bf16.mxu0 %v2927
    %6211 = vmatpush1.bf16.msra.mxu0 %v2926
    %6212 = vmatprep.subr.bf16.mxu0 %v2923
    %6213 = vmatpush1.bf16.msra.mxu0 %v2922
    %6214 = vmatprep.subr.bf16.mxu0 %v2919
    %6215 = vmatpush1.bf16.msra.mxu0 %v2918
    %6216 = vmatprep.subr.bf16.mxu0 %v2915
    %6217 = vmatpush1.bf16.msra.mxu0 %v2914
    %6218 = vmatprep.subr.bf16.mxu0 %v2911
    %6219 = vmatpush1.bf16.msra.mxu0 %v2910
    %6220 = vmatprep.subr.bf16.mxu0 %v2907
    %6221 = vmatpush1.bf16.msra.mxu0 %v2906
    %6222 = vmatprep.subr.bf16.mxu0 %v2967
    %6223 = vmatpush2.bf16.msra.mxu0 %v2966
    %6224 = vmatprep.subr.bf16.mxu0 %v2963
    %6225 = vmatpush2.bf16.msra.mxu0 %v2962
    %6226 = vmatprep.subr.bf16.mxu0 %v2959
    %6227 = vmatpush2.bf16.msra.mxu0 %v2958
    %6228 = vmatprep.subr.bf16.mxu0 %v2955
    %6229 = vmatpush2.bf16.msra.mxu0 %v2954
    %6230 = vmatprep.subr.bf16.mxu0 %v2951
    %6231 = vmatpush2.bf16.msra.mxu0 %v2950
    %6232 = vmatprep.subr.bf16.mxu0 %v2947
    %6233 = vmatpush2.bf16.msra.mxu0 %v2946
    %6234 = vmatprep.subr.bf16.mxu0 %v2943
    %6235 = vmatpush2.bf16.msra.mxu0 %v2942
    %6236 = vmatprep.subr.bf16.mxu0 %v2939
    %6237 = vmatpush2.bf16.msra.mxu0 %v2938
    %6238 = vmatprep.mubr.bf16.mxu0 %v6078
    %6239 = vmatmul.mubr.bf16.gmra.mxu0 %v6077
    %v6240 = vpop.f32.mrf.mxu0
    %v6241 = vadd.f32 %v6200, %v6240
    %v6242 = vpop.f32.mrf.mxu0
    %v6243 = vadd.f32 %v6202, %v6242
    %v6244 = vpop.f32.mrf.mxu0
    %v6245 = vpop.f32.mrf.mxu0
    %6246 = vdwg.mxu0
    %6247 = vmatprep.subr.bf16.mxu0 %v3702
    %6248 = vmatpush1.bf16.msra.mxu0 %v3701
    %6249 = vmatprep.subr.bf16.mxu0 %v3698
    %6250 = vmatpush1.bf16.msra.mxu0 %v3697
    %6251 = vmatprep.subr.bf16.mxu0 %v3694
    %6252 = vmatpush1.bf16.msra.mxu0 %v3693
    %6253 = vmatprep.subr.bf16.mxu0 %v3690
    %6254 = vmatpush1.bf16.msra.mxu0 %v3689
    %6255 = vmatprep.subr.bf16.mxu0 %v3686
    %6256 = vmatpush1.bf16.msra.mxu0 %v3685
    %6257 = vmatprep.subr.bf16.mxu0 %v3682
    %6258 = vmatpush1.bf16.msra.mxu0 %v3681
    %6259 = vmatprep.subr.bf16.mxu0 %v3678
    %6260 = vmatpush1.bf16.msra.mxu0 %v3677
    %6261 = vmatprep.subr.bf16.mxu0 %v3674
    %6262 = vmatpush1.bf16.msra.mxu0 %v3673
    %6263 = vmatprep.subr.bf16.mxu0 %v3734
    %6264 = vmatpush2.bf16.msra.mxu0 %v3733
    %6265 = vmatprep.subr.bf16.mxu0 %v3730
    %6266 = vmatpush2.bf16.msra.mxu0 %v3729
    %6267 = vmatprep.subr.bf16.mxu0 %v3726
    %6268 = vmatpush2.bf16.msra.mxu0 %v3725
    %6269 = vmatprep.subr.bf16.mxu0 %v3722
    %6270 = vmatpush2.bf16.msra.mxu0 %v3721
    %6271 = vmatprep.subr.bf16.mxu0 %v3718
    %6272 = vmatpush2.bf16.msra.mxu0 %v3717
    %6273 = vmatprep.subr.bf16.mxu0 %v3714
    %6274 = vmatpush2.bf16.msra.mxu0 %v3713
    %6275 = vmatprep.subr.bf16.mxu0 %v3710
    %6276 = vmatpush2.bf16.msra.mxu0 %v3709
    %6277 = vmatprep.subr.bf16.mxu0 %v3706
    %6278 = vmatpush2.bf16.msra.mxu0 %v3705
    %6279 = vmatprep.mubr.bf16.mxu0 %v5526
    %6280 = vmatmul.mubr.bf16.gmra.mxu0 %v5519
    %v6281 = vpop.f32.mrf.mxu0
    %v6282 = vadd.f32 %v6159, %v6281
    %v6283 = vpop.f32.mrf.mxu0
    %v6284 = vadd.f32 %v6161, %v6283
    %v6285 = vpop.f32.mrf.mxu0
    %v6286 = vpop.f32.mrf.mxu0
    %6287 = vdwg.mxu0
    %6288 = vmatprep.subr.bf16.mxu0 %v3766
    %6289 = vmatpush1.bf16.msra.mxu0 %v3765
    %6290 = vmatprep.subr.bf16.mxu0 %v3762
    %6291 = vmatpush1.bf16.msra.mxu0 %v3761
    %6292 = vmatprep.subr.bf16.mxu0 %v3758
    %6293 = vmatpush1.bf16.msra.mxu0 %v3757
    %6294 = vmatprep.subr.bf16.mxu0 %v3754
    %6295 = vmatpush1.bf16.msra.mxu0 %v3753
    %6296 = vmatprep.subr.bf16.mxu0 %v3750
    %6297 = vmatpush1.bf16.msra.mxu0 %v3749
    %6298 = vmatprep.subr.bf16.mxu0 %v3746
    %6299 = vmatpush1.bf16.msra.mxu0 %v3745
    %6300 = vmatprep.subr.bf16.mxu0 %v3742
    %6301 = vmatpush1.bf16.msra.mxu0 %v3741
    %6302 = vmatprep.subr.bf16.mxu0 %v3738
    %6303 = vmatpush1.bf16.msra.mxu0 %v3737
    %6304 = vmatprep.subr.bf16.mxu0 %v3798
    %6305 = vmatpush2.bf16.msra.mxu0 %v3797
    %6306 = vmatprep.subr.bf16.mxu0 %v3794
    %6307 = vmatpush2.bf16.msra.mxu0 %v3793
    %6308 = vmatprep.subr.bf16.mxu0 %v3790
    %6309 = vmatpush2.bf16.msra.mxu0 %v3789
    %6310 = vmatprep.subr.bf16.mxu0 %v3786
    %6311 = vmatpush2.bf16.msra.mxu0 %v3785
    %6312 = vmatprep.subr.bf16.mxu0 %v3782
    %6313 = vmatpush2.bf16.msra.mxu0 %v3781
    %6314 = vmatprep.subr.bf16.mxu0 %v3778
    %6315 = vmatpush2.bf16.msra.mxu0 %v3777
    %6316 = vmatprep.subr.bf16.mxu0 %v3774
    %6317 = vmatpush2.bf16.msra.mxu0 %v3773
    %6318 = vmatprep.subr.bf16.mxu0 %v3770
    %6319 = vmatpush2.bf16.msra.mxu0 %v3769
    %6320 = vmatprep.mubr.bf16.mxu0 %v5528
    %6321 = vmatmul.mubr.bf16.gmra.mxu0 %v5527
    %v6322 = vpop.f32.mrf.mxu0
    %v6323 = vadd.f32 %v6282, %v6322
    %v6324 = vpop.f32.mrf.mxu0
    %v6325 = vadd.f32 %v6284, %v6324
    %v6326 = vpop.f32.mrf.mxu0
    %v6327 = vpop.f32.mrf.mxu0
    %6328 = vdwg.mxu0
    %6329 = vmatprep.subr.bf16.mxu0 %v3704
    %6330 = vmatpush1.bf16.msra.mxu0 %v3703
    %6331 = vmatprep.subr.bf16.mxu0 %v3700
    %6332 = vmatpush1.bf16.msra.mxu0 %v3699
    %6333 = vmatprep.subr.bf16.mxu0 %v3696
    %6334 = vmatpush1.bf16.msra.mxu0 %v3695
    %6335 = vmatprep.subr.bf16.mxu0 %v3692
    %6336 = vmatpush1.bf16.msra.mxu0 %v3691
    %6337 = vmatprep.subr.bf16.mxu0 %v3688
    %6338 = vmatpush1.bf16.msra.mxu0 %v3687
    %6339 = vmatprep.subr.bf16.mxu0 %v3684
    %6340 = vmatpush1.bf16.msra.mxu0 %v3683
    %6341 = vmatprep.subr.bf16.mxu0 %v3680
    %6342 = vmatpush1.bf16.msra.mxu0 %v3679
    %6343 = vmatprep.subr.bf16.mxu0 %v3676
    %6344 = vmatpush1.bf16.msra.mxu0 %v3675
    %6345 = vmatprep.subr.bf16.mxu0 %v3736
    %6346 = vmatpush2.bf16.msra.mxu0 %v3735
    %6347 = vmatprep.subr.bf16.mxu0 %v3732
    %6348 = vmatpush2.bf16.msra.mxu0 %v3731
    %6349 = vmatprep.subr.bf16.mxu0 %v3728
    %6350 = vmatpush2.bf16.msra.mxu0 %v3727
    %6351 = vmatprep.subr.bf16.mxu0 %v3724
    %6352 = vmatpush2.bf16.msra.mxu0 %v3723
    %6353 = vmatprep.subr.bf16.mxu0 %v3720
    %6354 = vmatpush2.bf16.msra.mxu0 %v3719
    %6355 = vmatprep.subr.bf16.mxu0 %v3716
    %6356 = vmatpush2.bf16.msra.mxu0 %v3715
    %6357 = vmatprep.subr.bf16.mxu0 %v3712
    %6358 = vmatpush2.bf16.msra.mxu0 %v3711
    %6359 = vmatprep.subr.bf16.mxu0 %v3708
    %6360 = vmatpush2.bf16.msra.mxu0 %v3707
    %6361 = vmatprep.mubr.bf16.mxu0 %v5526
    %6362 = vmatmul.mubr.bf16.gmra.mxu0 %v5519
    %v6363 = vpop.f32.mrf.mxu0
    %v6364 = vadd.f32 %v6241, %v6363
    %v6365 = vpop.f32.mrf.mxu0
    %v6366 = vadd.f32 %v6243, %v6365
    %v6367 = vpop.f32.mrf.mxu0
    %v6368 = vpop.f32.mrf.mxu0
    %6369 = vdwg.mxu0
    %6370 = vmatprep.subr.bf16.mxu0 %v3768
    %6371 = vmatpush1.bf16.msra.mxu0 %v3767
    %6372 = vmatprep.subr.bf16.mxu0 %v3764
    %6373 = vmatpush1.bf16.msra.mxu0 %v3763
    %6374 = vmatprep.subr.bf16.mxu0 %v3760
    %6375 = vmatpush1.bf16.msra.mxu0 %v3759
    %6376 = vmatprep.subr.bf16.mxu0 %v3756
    %6377 = vmatpush1.bf16.msra.mxu0 %v3755
    %6378 = vmatprep.subr.bf16.mxu0 %v3752
    %6379 = vmatpush1.bf16.msra.mxu0 %v3751
    %6380 = vmatprep.subr.bf16.mxu0 %v3748
    %6381 = vmatpush1.bf16.msra.mxu0 %v3747
    %6382 = vmatprep.subr.bf16.mxu0 %v3744
    %6383 = vmatpush1.bf16.msra.mxu0 %v3743
    %6384 = vmatprep.subr.bf16.mxu0 %v3740
    %6385 = vmatpush1.bf16.msra.mxu0 %v3739
    %6386 = vmatprep.subr.bf16.mxu0 %v3800
    %6387 = vmatpush2.bf16.msra.mxu0 %v3799
    %6388 = vmatprep.subr.bf16.mxu0 %v3796
    %6389 = vmatpush2.bf16.msra.mxu0 %v3795
    %6390 = vmatprep.subr.bf16.mxu0 %v3792
    %6391 = vmatpush2.bf16.msra.mxu0 %v3791
    %6392 = vmatprep.subr.bf16.mxu0 %v3788
    %6393 = vmatpush2.bf16.msra.mxu0 %v3787
    %6394 = vmatprep.subr.bf16.mxu0 %v3784
    %6395 = vmatpush2.bf16.msra.mxu0 %v3783
    %6396 = vmatprep.subr.bf16.mxu0 %v3780
    %6397 = vmatpush2.bf16.msra.mxu0 %v3779
    %6398 = vmatprep.subr.bf16.mxu0 %v3776
    %6399 = vmatpush2.bf16.msra.mxu0 %v3775
    %6400 = vmatprep.subr.bf16.mxu0 %v3772
    %6401 = vmatpush2.bf16.msra.mxu0 %v3771
    %6402 = vmatprep.mubr.bf16.mxu0 %v5528
    %6403 = vmatmul.mubr.bf16.gmra.mxu0 %v5527
    %v6404 = vpop.f32.mrf.mxu0
    %v6405 = vadd.f32 %v6364, %v6404
    %v6406 = vpop.f32.mrf.mxu0
    %v6407 = vadd.f32 %v6366, %v6406
    %v6408 = vpop.f32.mrf.mxu0
    %v6409 = vpop.f32.mrf.mxu0
    %6410 = vdwg.mxu0
    %v6411 = vld [vmem:[%s1045] sm:$0xf]
    %v6414 = vunpack.c.l.s4 1966171168
    %v6415 = vunpack.c.0.s8 %v6414
    %v6416 = vlaneseq
    %v6417 = vshrl.u32 %v6416, 7
    %v6418 = vsub.s32 %v6415, %v6417
    %v6419 = vrot.slane %v6411, %v6418
    %v6420 = vcombine.high %v6419, %v6419
    %v6422 = vunpack.c.l.s4 1966171168
    %v6423 = vunpack.c.0.s8 %v6422
    %v6424 = vlaneseq
    %v6425 = vshrl.u32 %v6424, 7
    %v6426 = vsub.s32 %v6423, %v6425
    %v6427 = vrot.slane %v6419, %v6426
    %v6429 = vunpack.c.l.s4 1966171168
    %v6430 = vunpack.c.0.s8 %v6429
    %v6431 = vlaneseq
    %v6432 = vshrl.u32 %v6431, 7
    %v6433 = vsub.s32 %v6430, %v6432
    %v6434 = vrot.slane %v6420, %v6433
    %v6435 = vcombine.high %v6427, %v6427
    %v6436 = vcombine.high %v6434, %v6434
    %6441 = vmatprep.subr.bf16.mxu0 %v4665
    %6442 = vmatpush1.bf16.msra.mxu0 %v4664
    %6443 = vmatprep.subr.bf16.mxu0 %v4661
    %6444 = vmatpush1.bf16.msra.mxu0 %v4660
    %6445 = vmatprep.subr.bf16.mxu0 %v4657
    %6446 = vmatpush1.bf16.msra.mxu0 %v4656
    %6447 = vmatprep.subr.bf16.mxu0 %v4653
    %6448 = vmatpush1.bf16.msra.mxu0 %v4652
    %6449 = vmatprep.subr.bf16.mxu0 %v4649
    %6450 = vmatpush1.bf16.msra.mxu0 %v4648
    %6451 = vmatprep.subr.bf16.mxu0 %v4645
    %6452 = vmatpush1.bf16.msra.mxu0 %v4644
    %6453 = vmatprep.subr.bf16.mxu0 %v4641
    %6454 = vmatpush1.bf16.msra.mxu0 %v4640
    %6455 = vmatprep.subr.bf16.mxu0 %v4637
    %6456 = vmatpush1.bf16.msra.mxu0 %v4636
    %6457 = vmatprep.subr.bf16.mxu0 %v4697
    %6458 = vmatpush2.bf16.msra.mxu0 %v4696
    %6459 = vmatprep.subr.bf16.mxu0 %v4693
    %6460 = vmatpush2.bf16.msra.mxu0 %v4692
    %6461 = vmatprep.subr.bf16.mxu0 %v4689
    %6462 = vmatpush2.bf16.msra.mxu0 %v4688
    %6463 = vmatprep.subr.bf16.mxu0 %v4685
    %6464 = vmatpush2.bf16.msra.mxu0 %v4684
    %6465 = vmatprep.subr.bf16.mxu0 %v4681
    %6466 = vmatpush2.bf16.msra.mxu0 %v4680
    %6467 = vmatprep.subr.bf16.mxu0 %v4677
    %6468 = vmatpush2.bf16.msra.mxu0 %v4676
    %6469 = vmatprep.subr.bf16.mxu0 %v4673
    %6470 = vmatpush2.bf16.msra.mxu0 %v4672
    %6471 = vmatprep.subr.bf16.mxu0 %v4669
    %6472 = vmatpush2.bf16.msra.mxu0 %v4668
    %6473 = vmatprep.mubr.bf16.mxu0 %v6434
    %6474 = vmatmul.mubr.bf16.gmra.mxu0 %v6427
    %v6475 = vpop.f32.mrf.mxu0
    %v6476 = vadd.f32 0.0, %v6475
    %v6477 = vpop.f32.mrf.mxu0
    %v6478 = vadd.f32 0.0, %v6477
    %v6479 = vpop.f32.mrf.mxu0
    %v6480 = vpop.f32.mrf.mxu0
    %6481 = vdwg.mxu0
    %6482 = vmatprep.subr.bf16.mxu0 %v4729
    %6483 = vmatpush1.bf16.msra.mxu0 %v4728
    %6484 = vmatprep.subr.bf16.mxu0 %v4725
    %6485 = vmatpush1.bf16.msra.mxu0 %v4724
    %6486 = vmatprep.subr.bf16.mxu0 %v4721
    %6487 = vmatpush1.bf16.msra.mxu0 %v4720
    %6488 = vmatprep.subr.bf16.mxu0 %v4717
    %6489 = vmatpush1.bf16.msra.mxu0 %v4716
    %6490 = vmatprep.subr.bf16.mxu0 %v4713
    %6491 = vmatpush1.bf16.msra.mxu0 %v4712
    %6492 = vmatprep.subr.bf16.mxu0 %v4709
    %6493 = vmatpush1.bf16.msra.mxu0 %v4708
    %6494 = vmatprep.subr.bf16.mxu0 %v4705
    %6495 = vmatpush1.bf16.msra.mxu0 %v4704
    %6496 = vmatprep.subr.bf16.mxu0 %v4701
    %6497 = vmatpush1.bf16.msra.mxu0 %v4700
    %6498 = vmatprep.subr.bf16.mxu0 %v4761
    %6499 = vmatpush2.bf16.msra.mxu0 %v4760
    %6500 = vmatprep.subr.bf16.mxu0 %v4757
    %6501 = vmatpush2.bf16.msra.mxu0 %v4756
    %6502 = vmatprep.subr.bf16.mxu0 %v4753
    %6503 = vmatpush2.bf16.msra.mxu0 %v4752
    %6504 = vmatprep.subr.bf16.mxu0 %v4749
    %6505 = vmatpush2.bf16.msra.mxu0 %v4748
    %6506 = vmatprep.subr.bf16.mxu0 %v4745
    %6507 = vmatpush2.bf16.msra.mxu0 %v4744
    %6508 = vmatprep.subr.bf16.mxu0 %v4741
    %6509 = vmatpush2.bf16.msra.mxu0 %v4740
    %6510 = vmatprep.subr.bf16.mxu0 %v4737
    %6511 = vmatpush2.bf16.msra.mxu0 %v4736
    %6512 = vmatprep.subr.bf16.mxu0 %v4733
    %6513 = vmatpush2.bf16.msra.mxu0 %v4732
    %6514 = vmatprep.mubr.bf16.mxu0 %v6436
    %6515 = vmatmul.mubr.bf16.gmra.mxu0 %v6435
    %v6516 = vpop.f32.mrf.mxu0
    %v6517 = vadd.f32 %v6476, %v6516
    %v6518 = vpop.f32.mrf.mxu0
    %v6519 = vadd.f32 %v6478, %v6518
    %v6520 = vpop.f32.mrf.mxu0
    %v6521 = vpop.f32.mrf.mxu0
    %6522 = vdwg.mxu0
    %6523 = vmatprep.subr.bf16.mxu0 %v4667
    %6524 = vmatpush1.bf16.msra.mxu0 %v4666
    %6525 = vmatprep.subr.bf16.mxu0 %v4663
    %6526 = vmatpush1.bf16.msra.mxu0 %v4662
    %6527 = vmatprep.subr.bf16.mxu0 %v4659
    %6528 = vmatpush1.bf16.msra.mxu0 %v4658
    %6529 = vmatprep.subr.bf16.mxu0 %v4655
    %6530 = vmatpush1.bf16.msra.mxu0 %v4654
    %6531 = vmatprep.subr.bf16.mxu0 %v4651
    %6532 = vmatpush1.bf16.msra.mxu0 %v4650
    %6533 = vmatprep.subr.bf16.mxu0 %v4647
    %6534 = vmatpush1.bf16.msra.mxu0 %v4646
    %6535 = vmatprep.subr.bf16.mxu0 %v4643
    %6536 = vmatpush1.bf16.msra.mxu0 %v4642
    %6537 = vmatprep.subr.bf16.mxu0 %v4639
    %6538 = vmatpush1.bf16.msra.mxu0 %v4638
    %6539 = vmatprep.subr.bf16.mxu0 %v4699
    %6540 = vmatpush2.bf16.msra.mxu0 %v4698
    %6541 = vmatprep.subr.bf16.mxu0 %v4695
    %6542 = vmatpush2.bf16.msra.mxu0 %v4694
    %6543 = vmatprep.subr.bf16.mxu0 %v4691
    %6544 = vmatpush2.bf16.msra.mxu0 %v4690
    %6545 = vmatprep.subr.bf16.mxu0 %v4687
    %6546 = vmatpush2.bf16.msra.mxu0 %v4686
    %6547 = vmatprep.subr.bf16.mxu0 %v4683
    %6548 = vmatpush2.bf16.msra.mxu0 %v4682
    %6549 = vmatprep.subr.bf16.mxu0 %v4679
    %6550 = vmatpush2.bf16.msra.mxu0 %v4678
    %6551 = vmatprep.subr.bf16.mxu0 %v4675
    %6552 = vmatpush2.bf16.msra.mxu0 %v4674
    %6553 = vmatprep.subr.bf16.mxu0 %v4671
    %6554 = vmatpush2.bf16.msra.mxu0 %v4670
    %6555 = vmatprep.mubr.bf16.mxu0 %v6434
    %6556 = vmatmul.mubr.bf16.gmra.mxu0 %v6427
    %v6557 = vpop.f32.mrf.mxu0
    %v6558 = vadd.f32 0.0, %v6557
    %v6559 = vpop.f32.mrf.mxu0
    %v6560 = vadd.f32 0.0, %v6559
    %v6561 = vpop.f32.mrf.mxu0
    %v6562 = vpop.f32.mrf.mxu0
    %6563 = vdwg.mxu0
    %6564 = vmatprep.subr.bf16.mxu0 %v4731
    %6565 = vmatpush1.bf16.msra.mxu0 %v4730
    %6566 = vmatprep.subr.bf16.mxu0 %v4727
    %6567 = vmatpush1.bf16.msra.mxu0 %v4726
    %6568 = vmatprep.subr.bf16.mxu0 %v4723
    %6569 = vmatpush1.bf16.msra.mxu0 %v4722
    %6570 = vmatprep.subr.bf16.mxu0 %v4719
    %6571 = vmatpush1.bf16.msra.mxu0 %v4718
    %6572 = vmatprep.subr.bf16.mxu0 %v4715
    %6573 = vmatpush1.bf16.msra.mxu0 %v4714
    %6574 = vmatprep.subr.bf16.mxu0 %v4711
    %6575 = vmatpush1.bf16.msra.mxu0 %v4710
    %6576 = vmatprep.subr.bf16.mxu0 %v4707
    %6577 = vmatpush1.bf16.msra.mxu0 %v4706
    %6578 = vmatprep.subr.bf16.mxu0 %v4703
    %6579 = vmatpush1.bf16.msra.mxu0 %v4702
    %6580 = vmatprep.subr.bf16.mxu0 %v4763
    %6581 = vmatpush2.bf16.msra.mxu0 %v4762
    %6582 = vmatprep.subr.bf16.mxu0 %v4759
    %6583 = vmatpush2.bf16.msra.mxu0 %v4758
    %6584 = vmatprep.subr.bf16.mxu0 %v4755
    %6585 = vmatpush2.bf16.msra.mxu0 %v4754
    %6586 = vmatprep.subr.bf16.mxu0 %v4751
    %6587 = vmatpush2.bf16.msra.mxu0 %v4750
    %6588 = vmatprep.subr.bf16.mxu0 %v4747
    %6589 = vmatpush2.bf16.msra.mxu0 %v4746
    %6590 = vmatprep.subr.bf16.mxu0 %v4743
    %6591 = vmatpush2.bf16.msra.mxu0 %v4742
    %6592 = vmatprep.subr.bf16.mxu0 %v4739
    %6593 = vmatpush2.bf16.msra.mxu0 %v4738
    %6594 = vmatprep.subr.bf16.mxu0 %v4735
    %6595 = vmatpush2.bf16.msra.mxu0 %v4734
    %6596 = vmatprep.mubr.bf16.mxu0 %v6436
    %6597 = vmatmul.mubr.bf16.gmra.mxu0 %v6435
    %v6598 = vpop.f32.mrf.mxu0
    %v6599 = vadd.f32 %v6558, %v6598
    %v6600 = vpop.f32.mrf.mxu0
    %v6601 = vadd.f32 %v6560, %v6600
    %v6602 = vpop.f32.mrf.mxu0
    %v6603 = vpop.f32.mrf.mxu0
    %6604 = vdwg.mxu0
    %v6605 = vadd.f32 %v6323, %v6517
    %v6606 = vadd.f32 %v6325, %v6519
    %v6607 = vadd.f32 %v6405, %v6599
    %v6608 = vadd.f32 %v6407, %v6601
    %v6609 = vadd.f32 %v6605, %v5064
    %v6610 = vadd.f32 %v6606, %v5068
    %v6611 = vadd.f32 %v6607, %v5072
    %v6612 = vadd.f32 %v6608, %v5076
    %v6613 = vmax.f32 %v6609, 0.0
    %v6614 = vmax.f32 %v6610, 0.0
    %v6615 = vmax.f32 %v6611, 0.0
    %v6616 = vmax.f32 %v6612, 0.0
    %s6617 = scalar_lea.vmem %s5, 896
    %v6618 = vld [vmem:[%s6617] sm:$0xff]
    %v6619 = vld [vmem:[%s6617 + $0x8] sm:$0xff]
    %v6620 = vld [vmem:[%s6617 + $0x10] sm:$0xff]
    %v6621 = vld [vmem:[%s6617 + $0x18] sm:$0xff]
    %v6622 = vld [vmem:[%s6617 + $0x20] sm:$0xff]
    %v6623 = vld [vmem:[%s6617 + $0x28] sm:$0xff]
    %v6624 = vld [vmem:[%s6617 + $0x30] sm:$0xff]
    %v6625 = vld [vmem:[%s6617 + $0x38] sm:$0xff]
    %v6626 = vld [vmem:[%s6617 + $0x40] sm:$0xff]
    %v6627 = vld [vmem:[%s6617 + $0x48] sm:$0xff]
    %v6628 = vld [vmem:[%s6617 + $0x50] sm:$0xff]
    %v6629 = vld [vmem:[%s6617 + $0x58] sm:$0xff]
    %v6630 = vld [vmem:[%s6617 + $0x60] sm:$0xff]
    %v6631 = vld [vmem:[%s6617 + $0x68] sm:$0xff]
    %v6632 = vld [vmem:[%s6617 + $0x70] sm:$0xff]
    %v6633 = vld [vmem:[%s6617 + $0x78] sm:$0xff]
    %v6634 = vld [vmem:[%s6617 + $0x80] sm:$0xff]
    %v6635 = vld [vmem:[%s6617 + $0x88] sm:$0xff]
    %v6636 = vld [vmem:[%s6617 + $0x90] sm:$0xff]
    %v6637 = vld [vmem:[%s6617 + $0x98] sm:$0xff]
    %v6638 = vld [vmem:[%s6617 + $0xa0] sm:$0xff]
    %v6639 = vld [vmem:[%s6617 + $0xa8] sm:$0xff]
    %v6640 = vld [vmem:[%s6617 + $0xb0] sm:$0xff]
    %v6641 = vld [vmem:[%s6617 + $0xb8] sm:$0xff]
    %v6642 = vld [vmem:[%s6617 + $0xc0] sm:$0xff]
    %v6643 = vld [vmem:[%s6617 + $0xc8] sm:$0xff]
    %v6644 = vld [vmem:[%s6617 + $0xd0] sm:$0xff]
    %v6645 = vld [vmem:[%s6617 + $0xd8] sm:$0xff]
    %v6646 = vld [vmem:[%s6617 + $0xe0] sm:$0xff]
    %v6647 = vld [vmem:[%s6617 + $0xe8] sm:$0xff]
    %v6648 = vld [vmem:[%s6617 + $0xf0] sm:$0xff]
    %v6649 = vld [vmem:[%s6617 + $0xf8] sm:$0xff]
    %v6650 = vld [vmem:[%s6617 + $0x100] sm:$0xff]
    %v6651 = vld [vmem:[%s6617 + $0x108] sm:$0xff]
    %v6652 = vld [vmem:[%s6617 + $0x110] sm:$0xff]
    %v6653 = vld [vmem:[%s6617 + $0x118] sm:$0xff]
    %v6654 = vld [vmem:[%s6617 + $0x120] sm:$0xff]
    %v6655 = vld [vmem:[%s6617 + $0x128] sm:$0xff]
    %v6656 = vld [vmem:[%s6617 + $0x130] sm:$0xff]
    %v6657 = vld [vmem:[%s6617 + $0x138] sm:$0xff]
    %v6658 = vld [vmem:[%s6617 + $0x140] sm:$0xff]
    %v6659 = vld [vmem:[%s6617 + $0x148] sm:$0xff]
    %v6660 = vld [vmem:[%s6617 + $0x150] sm:$0xff]
    %v6661 = vld [vmem:[%s6617 + $0x158] sm:$0xff]
    %v6662 = vld [vmem:[%s6617 + $0x160] sm:$0xff]
    %v6663 = vld [vmem:[%s6617 + $0x168] sm:$0xff]
    %v6664 = vld [vmem:[%s6617 + $0x170] sm:$0xff]
    %v6665 = vld [vmem:[%s6617 + $0x178] sm:$0xff]
    %v6666 = vld [vmem:[%s6617 + $0x180] sm:$0xff]
    %v6667 = vld [vmem:[%s6617 + $0x188] sm:$0xff]
    %v6668 = vld [vmem:[%s6617 + $0x190] sm:$0xff]
    %v6669 = vld [vmem:[%s6617 + $0x198] sm:$0xff]
    %v6670 = vld [vmem:[%s6617 + $0x1a0] sm:$0xff]
    %v6671 = vld [vmem:[%s6617 + $0x1a8] sm:$0xff]
    %v6672 = vld [vmem:[%s6617 + $0x1b0] sm:$0xff]
    %v6673 = vld [vmem:[%s6617 + $0x1b8] sm:$0xff]
    %v6675 = vsel %vm5766, %v6616, 0
    %6677 = vmatprep.subr.mxu0 0.0
    %6678 = vmatpush1.msra.mxu0 %v6633
    %6679 = vmatprep.subr.mxu0 0.0
    %6680 = vmatpush1.msra.mxu0 %v6632
    %6681 = vmatprep.subr.mxu0 0.0
    %6682 = vmatpush1.msra.mxu0 %v6631
    %6683 = vmatprep.subr.mxu0 0.0
    %6684 = vmatpush1.msra.mxu0 %v6630
    %6685 = vmatprep.subr.mxu0 0.0
    %6686 = vmatpush1.msra.mxu0 %v6629
    %6687 = vmatprep.subr.mxu0 0.0
    %6688 = vmatpush1.msra.mxu0 %v6628
    %6689 = vmatprep.subr.mxu0 0.0
    %6690 = vmatpush1.msra.mxu0 %v6627
    %6691 = vmatprep.subr.mxu0 0.0
    %6692 = vmatpush1.msra.mxu0 %v6626
    %6693 = vmatprep.subr.mxu0 0.0
    %6694 = vmatpush1.msra.mxu0 %v6625
    %6695 = vmatprep.subr.mxu0 0.0
    %6696 = vmatpush1.msra.mxu0 %v6624
    %6697 = vmatprep.subr.mxu0 0.0
    %6698 = vmatpush1.msra.mxu0 %v6623
    %6699 = vmatprep.subr.mxu0 0.0
    %6700 = vmatpush1.msra.mxu0 %v6622
    %6701 = vmatprep.subr.mxu0 0.0
    %6702 = vmatpush1.msra.mxu0 %v6621
    %6703 = vmatprep.subr.mxu0 0.0
    %6704 = vmatpush1.msra.mxu0 %v6620
    %6705 = vmatprep.subr.mxu0 0.0
    %6706 = vmatpush1.msra.mxu0 %v6619
    %6707 = vmatprep.subr.mxu0 0.0
    %6708 = vmatpush1.msra.mxu0 %v6618
    %6709 = vmatprep.subr.mxu0 0.0
    %6710 = vmatpush2.msra.mxu0 %v6649
    %6711 = vmatprep.subr.mxu0 0.0
    %6712 = vmatpush2.msra.mxu0 %v6648
    %6713 = vmatprep.subr.mxu0 0.0
    %6714 = vmatpush2.msra.mxu0 %v6647
    %6715 = vmatprep.subr.mxu0 0.0
    %6716 = vmatpush2.msra.mxu0 %v6646
    %6717 = vmatprep.subr.mxu0 0.0
    %6718 = vmatpush2.msra.mxu0 %v6645
    %6719 = vmatprep.subr.mxu0 0.0
    %6720 = vmatpush2.msra.mxu0 %v6644
    %6721 = vmatprep.subr.mxu0 0.0
    %6722 = vmatpush2.msra.mxu0 %v6643
    %6723 = vmatprep.subr.mxu0 0.0
    %6724 = vmatpush2.msra.mxu0 %v6642
    %6725 = vmatprep.subr.mxu0 0.0
    %6726 = vmatpush2.msra.mxu0 %v6641
    %6727 = vmatprep.subr.mxu0 0.0
    %6728 = vmatpush2.msra.mxu0 %v6640
    %6729 = vmatprep.subr.mxu0 0.0
    %6730 = vmatpush2.msra.mxu0 %v6639
    %6731 = vmatprep.subr.mxu0 0.0
    %6732 = vmatpush2.msra.mxu0 %v6638
    %6733 = vmatprep.subr.mxu0 0.0
    %6734 = vmatpush2.msra.mxu0 %v6637
    %6735 = vmatprep.subr.mxu0 0.0
    %6736 = vmatpush2.msra.mxu0 %v6636
    %6737 = vmatprep.subr.mxu0 0.0
    %6738 = vmatpush2.msra.mxu0 %v6635
    %6739 = vmatprep.subr.mxu0 0.0
    %6740 = vmatpush2.msra.mxu0 %v6634
    %6741 = vmatprep.mubr.f32.mxu0 %v6614
    %6742 = vmatmul.mubr.f32.gmra.mxu0 %v6613
    %v6743 = vpop.f32.mrf.mxu0
    %v6744 = vadd.f32 0.0, %v6743
    %v6745 = vpop.f32.mrf.mxu0
    %6746 = vdwg.mxu0
    %6747 = vmatprep.subr.mxu0 0.0
    %6748 = vmatpush1.msra.mxu0 %v6665
    %6749 = vmatprep.subr.mxu0 0.0
    %6750 = vmatpush1.msra.mxu0 %v6664
    %6751 = vmatprep.subr.mxu0 0.0
    %6752 = vmatpush1.msra.mxu0 %v6663
    %6753 = vmatprep.subr.mxu0 0.0
    %6754 = vmatpush1.msra.mxu0 %v6662
    %6755 = vmatprep.subr.mxu0 0.0
    %6756 = vmatpush1.msra.mxu0 %v6661
    %6757 = vmatprep.subr.mxu0 0.0
    %6758 = vmatpush1.msra.mxu0 %v6660
    %6759 = vmatprep.subr.mxu0 0.0
    %6760 = vmatpush1.msra.mxu0 %v6659
    %6761 = vmatprep.subr.mxu0 0.0
    %6762 = vmatpush1.msra.mxu0 %v6658
    %6763 = vmatprep.subr.mxu0 0.0
    %6764 = vmatpush1.msra.mxu0 %v6657
    %6765 = vmatprep.subr.mxu0 0.0
    %6766 = vmatpush1.msra.mxu0 %v6656
    %6767 = vmatprep.subr.mxu0 0.0
    %6768 = vmatpush1.msra.mxu0 %v6655
    %6769 = vmatprep.subr.mxu0 0.0
    %6770 = vmatpush1.msra.mxu0 %v6654
    %6771 = vmatprep.subr.mxu0 0.0
    %6772 = vmatpush1.msra.mxu0 %v6653
    %6773 = vmatprep.subr.mxu0 0.0
    %6774 = vmatpush1.msra.mxu0 %v6652
    %6775 = vmatprep.subr.mxu0 0.0
    %6776 = vmatpush1.msra.mxu0 %v6651
    %6777 = vmatprep.subr.mxu0 0.0
    %6778 = vmatpush1.msra.mxu0 %v6650
    %6779 = vmatprep.subr.mxu0 0.0
    %6780 = vmatpush2.msra.mxu0 0.0
    %6781 = vmatprep.subr.mxu0 0.0
    %6782 = vmatpush2.msra.mxu0 0.0
    %6783 = vmatprep.subr.mxu0 0.0
    %6784 = vmatpush2.msra.mxu0 0.0
    %6785 = vmatprep.subr.mxu0 0.0
    %6786 = vmatpush2.msra.mxu0 0.0
    %6787 = vmatprep.subr.mxu0 0.0
    %6788 = vmatpush2.msra.mxu0 0.0
    %6789 = vmatprep.subr.mxu0 0.0
    %6790 = vmatpush2.msra.mxu0 0.0
    %6791 = vmatprep.subr.mxu0 0.0
    %6792 = vmatpush2.msra.mxu0 0.0
    %6793 = vmatprep.subr.mxu0 0.0
    %6794 = vmatpush2.msra.mxu0 0.0
    %6795 = vmatprep.subr.mxu0 0.0
    %6796 = vmatpush2.msra.mxu0 %v6673
    %6797 = vmatprep.subr.mxu0 0.0
    %6798 = vmatpush2.msra.mxu0 %v6672
    %6799 = vmatprep.subr.mxu0 0.0
    %6800 = vmatpush2.msra.mxu0 %v6671
    %6801 = vmatprep.subr.mxu0 0.0
    %6802 = vmatpush2.msra.mxu0 %v6670
    %6803 = vmatprep.subr.mxu0 0.0
    %6804 = vmatpush2.msra.mxu0 %v6669
    %6805 = vmatprep.subr.mxu0 0.0
    %6806 = vmatpush2.msra.mxu0 %v6668
    %6807 = vmatprep.subr.mxu0 0.0
    %6808 = vmatpush2.msra.mxu0 %v6667
    %6809 = vmatprep.subr.mxu0 0.0
    %6810 = vmatpush2.msra.mxu0 %v6666
    %6811 = vmatprep.mubr.f32.mxu0 %v6675
    %6812 = vmatmul.mubr.f32.gmra.mxu0 %v6615
    %v6813 = vpop.f32.mrf.mxu0
    %v6814 = vadd.f32 %v6744, %v6813
    %v6815 = vpop.f32.mrf.mxu0
    %6816 = vdwg.mxu0
    %v6817 = vadd.f32 %v6050, %v6814
    %v6818 = vld [vmem:[%s1185] sm:$0xf]
    %v6821 = vunpack.c.l.s4 1966171168
    %v6822 = vunpack.c.0.s8 %v6821
    %v6823 = vlaneseq
    %v6824 = vshrl.u32 %v6823, 7
    %v6825 = vsub.s32 %v6822, %v6824
    %v6826 = vrot.slane %v6818, %v6825
    %v6827 = vcombine.high %v6826, %v6826
    %v6829 = vunpack.c.l.s4 1966171168
    %v6830 = vunpack.c.0.s8 %v6829
    %v6831 = vlaneseq
    %v6832 = vshrl.u32 %v6831, 7
    %v6833 = vsub.s32 %v6830, %v6832
    %v6834 = vrot.slane %v6826, %v6833
    %v6836 = vunpack.c.l.s4 1966171168
    %v6837 = vunpack.c.0.s8 %v6836
    %v6838 = vlaneseq
    %v6839 = vshrl.u32 %v6838, 7
    %v6840 = vsub.s32 %v6837, %v6839
    %v6841 = vrot.slane %v6827, %v6840
    %v6842 = vcombine.high %v6834, %v6834
    %v6843 = vcombine.high %v6841, %v6841
    %6848 = vmatprep.subr.bf16.mxu0 %v2869
    %6849 = vmatpush1.bf16.msra.mxu0 %v2868
    %6850 = vmatprep.subr.bf16.mxu0 %v2865
    %6851 = vmatpush1.bf16.msra.mxu0 %v2864
    %6852 = vmatprep.subr.bf16.mxu0 %v2861
    %6853 = vmatpush1.bf16.msra.mxu0 %v2860
    %6854 = vmatprep.subr.bf16.mxu0 %v2857
    %6855 = vmatpush1.bf16.msra.mxu0 %v2856
    %6856 = vmatprep.subr.bf16.mxu0 %v2853
    %6857 = vmatpush1.bf16.msra.mxu0 %v2852
    %6858 = vmatprep.subr.bf16.mxu0 %v2849
    %6859 = vmatpush1.bf16.msra.mxu0 %v2848
    %6860 = vmatprep.subr.bf16.mxu0 %v2845
    %6861 = vmatpush1.bf16.msra.mxu0 %v2844
    %6862 = vmatprep.subr.bf16.mxu0 %v2841
    %6863 = vmatpush1.bf16.msra.mxu0 %v2840
    %6864 = vmatprep.subr.bf16.mxu0 %v2901
    %6865 = vmatpush2.bf16.msra.mxu0 %v2900
    %6866 = vmatprep.subr.bf16.mxu0 %v2897
    %6867 = vmatpush2.bf16.msra.mxu0 %v2896
    %6868 = vmatprep.subr.bf16.mxu0 %v2893
    %6869 = vmatpush2.bf16.msra.mxu0 %v2892
    %6870 = vmatprep.subr.bf16.mxu0 %v2889
    %6871 = vmatpush2.bf16.msra.mxu0 %v2888
    %6872 = vmatprep.subr.bf16.mxu0 %v2885
    %6873 = vmatpush2.bf16.msra.mxu0 %v2884
    %6874 = vmatprep.subr.bf16.mxu0 %v2881
    %6875 = vmatpush2.bf16.msra.mxu0 %v2880
    %6876 = vmatprep.subr.bf16.mxu0 %v2877
    %6877 = vmatpush2.bf16.msra.mxu0 %v2876
    %6878 = vmatprep.subr.bf16.mxu0 %v2873
    %6879 = vmatpush2.bf16.msra.mxu0 %v2872
    %6880 = vmatprep.mubr.bf16.mxu0 %v6841
    %6881 = vmatmul.mubr.bf16.gmra.mxu0 %v6834
    %v6882 = vpop.f32.mrf.mxu0
    %v6883 = vadd.f32 0.0, %v6882
    %v6884 = vpop.f32.mrf.mxu0
    %v6885 = vadd.f32 0.0, %v6884
    %v6886 = vpop.f32.mrf.mxu0
    %v6887 = vpop.f32.mrf.mxu0
    %6888 = vdwg.mxu0
    %6889 = vmatprep.subr.bf16.mxu0 %v2933
    %6890 = vmatpush1.bf16.msra.mxu0 %v2932
    %6891 = vmatprep.subr.bf16.mxu0 %v2929
    %6892 = vmatpush1.bf16.msra.mxu0 %v2928
    %6893 = vmatprep.subr.bf16.mxu0 %v2925
    %6894 = vmatpush1.bf16.msra.mxu0 %v2924
    %6895 = vmatprep.subr.bf16.mxu0 %v2921
    %6896 = vmatpush1.bf16.msra.mxu0 %v2920
    %6897 = vmatprep.subr.bf16.mxu0 %v2917
    %6898 = vmatpush1.bf16.msra.mxu0 %v2916
    %6899 = vmatprep.subr.bf16.mxu0 %v2913
    %6900 = vmatpush1.bf16.msra.mxu0 %v2912
    %6901 = vmatprep.subr.bf16.mxu0 %v2909
    %6902 = vmatpush1.bf16.msra.mxu0 %v2908
    %6903 = vmatprep.subr.bf16.mxu0 %v2905
    %6904 = vmatpush1.bf16.msra.mxu0 %v2904
    %6905 = vmatprep.subr.bf16.mxu0 %v2965
    %6906 = vmatpush2.bf16.msra.mxu0 %v2964
    %6907 = vmatprep.subr.bf16.mxu0 %v2961
    %6908 = vmatpush2.bf16.msra.mxu0 %v2960
    %6909 = vmatprep.subr.bf16.mxu0 %v2957
    %6910 = vmatpush2.bf16.msra.mxu0 %v2956
    %6911 = vmatprep.subr.bf16.mxu0 %v2953
    %6912 = vmatpush2.bf16.msra.mxu0 %v2952
    %6913 = vmatprep.subr.bf16.mxu0 %v2949
    %6914 = vmatpush2.bf16.msra.mxu0 %v2948
    %6915 = vmatprep.subr.bf16.mxu0 %v2945
    %6916 = vmatpush2.bf16.msra.mxu0 %v2944
    %6917 = vmatprep.subr.bf16.mxu0 %v2941
    %6918 = vmatpush2.bf16.msra.mxu0 %v2940
    %6919 = vmatprep.subr.bf16.mxu0 %v2937
    %6920 = vmatpush2.bf16.msra.mxu0 %v2936
    %6921 = vmatprep.mubr.bf16.mxu0 %v6843
    %6922 = vmatmul.mubr.bf16.gmra.mxu0 %v6842
    %v6923 = vpop.f32.mrf.mxu0
    %v6924 = vadd.f32 %v6883, %v6923
    %v6925 = vpop.f32.mrf.mxu0
    %v6926 = vadd.f32 %v6885, %v6925
    %v6927 = vpop.f32.mrf.mxu0
    %v6928 = vpop.f32.mrf.mxu0
    %6929 = vdwg.mxu0
    %6930 = vmatprep.subr.bf16.mxu0 %v2871
    %6931 = vmatpush1.bf16.msra.mxu0 %v2870
    %6932 = vmatprep.subr.bf16.mxu0 %v2867
    %6933 = vmatpush1.bf16.msra.mxu0 %v2866
    %6934 = vmatprep.subr.bf16.mxu0 %v2863
    %6935 = vmatpush1.bf16.msra.mxu0 %v2862
    %6936 = vmatprep.subr.bf16.mxu0 %v2859
    %6937 = vmatpush1.bf16.msra.mxu0 %v2858
    %6938 = vmatprep.subr.bf16.mxu0 %v2855
    %6939 = vmatpush1.bf16.msra.mxu0 %v2854
    %6940 = vmatprep.subr.bf16.mxu0 %v2851
    %6941 = vmatpush1.bf16.msra.mxu0 %v2850
    %6942 = vmatprep.subr.bf16.mxu0 %v2847
    %6943 = vmatpush1.bf16.msra.mxu0 %v2846
    %6944 = vmatprep.subr.bf16.mxu0 %v2843
    %6945 = vmatpush1.bf16.msra.mxu0 %v2842
    %6946 = vmatprep.subr.bf16.mxu0 %v2903
    %6947 = vmatpush2.bf16.msra.mxu0 %v2902
    %6948 = vmatprep.subr.bf16.mxu0 %v2899
    %6949 = vmatpush2.bf16.msra.mxu0 %v2898
    %6950 = vmatprep.subr.bf16.mxu0 %v2895
    %6951 = vmatpush2.bf16.msra.mxu0 %v2894
    %6952 = vmatprep.subr.bf16.mxu0 %v2891
    %6953 = vmatpush2.bf16.msra.mxu0 %v2890
    %6954 = vmatprep.subr.bf16.mxu0 %v2887
    %6955 = vmatpush2.bf16.msra.mxu0 %v2886
    %6956 = vmatprep.subr.bf16.mxu0 %v2883
    %6957 = vmatpush2.bf16.msra.mxu0 %v2882
    %6958 = vmatprep.subr.bf16.mxu0 %v2879
    %6959 = vmatpush2.bf16.msra.mxu0 %v2878
    %6960 = vmatprep.subr.bf16.mxu0 %v2875
    %6961 = vmatpush2.bf16.msra.mxu0 %v2874
    %6962 = vmatprep.mubr.bf16.mxu0 %v6841
    %6963 = vmatmul.mubr.bf16.gmra.mxu0 %v6834
    %v6964 = vpop.f32.mrf.mxu0
    %v6965 = vadd.f32 0.0, %v6964
    %v6966 = vpop.f32.mrf.mxu0
    %v6967 = vadd.f32 0.0, %v6966
    %v6968 = vpop.f32.mrf.mxu0
    %v6969 = vpop.f32.mrf.mxu0
    %6970 = vdwg.mxu0
    %6971 = vmatprep.subr.bf16.mxu0 %v2935
    %6972 = vmatpush1.bf16.msra.mxu0 %v2934
    %6973 = vmatprep.subr.bf16.mxu0 %v2931
    %6974 = vmatpush1.bf16.msra.mxu0 %v2930
    %6975 = vmatprep.subr.bf16.mxu0 %v2927
    %6976 = vmatpush1.bf16.msra.mxu0 %v2926
    %6977 = vmatprep.subr.bf16.mxu0 %v2923
    %6978 = vmatpush1.bf16.msra.mxu0 %v2922
    %6979 = vmatprep.subr.bf16.mxu0 %v2919
    %6980 = vmatpush1.bf16.msra.mxu0 %v2918
    %6981 = vmatprep.subr.bf16.mxu0 %v2915
    %6982 = vmatpush1.bf16.msra.mxu0 %v2914
    %6983 = vmatprep.subr.bf16.mxu0 %v2911
    %6984 = vmatpush1.bf16.msra.mxu0 %v2910
    %6985 = vmatprep.subr.bf16.mxu0 %v2907
    %6986 = vmatpush1.bf16.msra.mxu0 %v2906
    %6987 = vmatprep.subr.bf16.mxu0 %v2967
    %6988 = vmatpush2.bf16.msra.mxu0 %v2966
    %6989 = vmatprep.subr.bf16.mxu0 %v2963
    %6990 = vmatpush2.bf16.msra.mxu0 %v2962
    %6991 = vmatprep.subr.bf16.mxu0 %v2959
    %6992 = vmatpush2.bf16.msra.mxu0 %v2958
    %6993 = vmatprep.subr.bf16.mxu0 %v2955
    %6994 = vmatpush2.bf16.msra.mxu0 %v2954
    %6995 = vmatprep.subr.bf16.mxu0 %v2951
    %6996 = vmatpush2.bf16.msra.mxu0 %v2950
    %6997 = vmatprep.subr.bf16.mxu0 %v2947
    %6998 = vmatpush2.bf16.msra.mxu0 %v2946
    %6999 = vmatprep.subr.bf16.mxu0 %v2943
    %7000 = vmatpush2.bf16.msra.mxu0 %v2942
    %7001 = vmatprep.subr.bf16.mxu0 %v2939
    %7002 = vmatpush2.bf16.msra.mxu0 %v2938
    %7003 = vmatprep.mubr.bf16.mxu0 %v6843
    %7004 = vmatmul.mubr.bf16.gmra.mxu0 %v6842
    %v7005 = vpop.f32.mrf.mxu0
    %v7006 = vadd.f32 %v6965, %v7005
    %v7007 = vpop.f32.mrf.mxu0
    %v7008 = vadd.f32 %v6967, %v7007
    %v7009 = vpop.f32.mrf.mxu0
    %v7010 = vpop.f32.mrf.mxu0
    %7011 = vdwg.mxu0
    %7012 = vmatprep.subr.bf16.mxu0 %v3702
    %7013 = vmatpush1.bf16.msra.mxu0 %v3701
    %7014 = vmatprep.subr.bf16.mxu0 %v3698
    %7015 = vmatpush1.bf16.msra.mxu0 %v3697
    %7016 = vmatprep.subr.bf16.mxu0 %v3694
    %7017 = vmatpush1.bf16.msra.mxu0 %v3693
    %7018 = vmatprep.subr.bf16.mxu0 %v3690
    %7019 = vmatpush1.bf16.msra.mxu0 %v3689
    %7020 = vmatprep.subr.bf16.mxu0 %v3686
    %7021 = vmatpush1.bf16.msra.mxu0 %v3685
    %7022 = vmatprep.subr.bf16.mxu0 %v3682
    %7023 = vmatpush1.bf16.msra.mxu0 %v3681
    %7024 = vmatprep.subr.bf16.mxu0 %v3678
    %7025 = vmatpush1.bf16.msra.mxu0 %v3677
    %7026 = vmatprep.subr.bf16.mxu0 %v3674
    %7027 = vmatpush1.bf16.msra.mxu0 %v3673
    %7028 = vmatprep.subr.bf16.mxu0 %v3734
    %7029 = vmatpush2.bf16.msra.mxu0 %v3733
    %7030 = vmatprep.subr.bf16.mxu0 %v3730
    %7031 = vmatpush2.bf16.msra.mxu0 %v3729
    %7032 = vmatprep.subr.bf16.mxu0 %v3726
    %7033 = vmatpush2.bf16.msra.mxu0 %v3725
    %7034 = vmatprep.subr.bf16.mxu0 %v3722
    %7035 = vmatpush2.bf16.msra.mxu0 %v3721
    %7036 = vmatprep.subr.bf16.mxu0 %v3718
    %7037 = vmatpush2.bf16.msra.mxu0 %v3717
    %7038 = vmatprep.subr.bf16.mxu0 %v3714
    %7039 = vmatpush2.bf16.msra.mxu0 %v3713
    %7040 = vmatprep.subr.bf16.mxu0 %v3710
    %7041 = vmatpush2.bf16.msra.mxu0 %v3709
    %7042 = vmatprep.subr.bf16.mxu0 %v3706
    %7043 = vmatpush2.bf16.msra.mxu0 %v3705
    %7044 = vmatprep.mubr.bf16.mxu0 %v6434
    %7045 = vmatmul.mubr.bf16.gmra.mxu0 %v6427
    %v7046 = vpop.f32.mrf.mxu0
    %v7047 = vadd.f32 %v6924, %v7046
    %v7048 = vpop.f32.mrf.mxu0
    %v7049 = vadd.f32 %v6926, %v7048
    %v7050 = vpop.f32.mrf.mxu0
    %v7051 = vpop.f32.mrf.mxu0
    %7052 = vdwg.mxu0
    %7053 = vmatprep.subr.bf16.mxu0 %v3766
    %7054 = vmatpush1.bf16.msra.mxu0 %v3765
    %7055 = vmatprep.subr.bf16.mxu0 %v3762
    %7056 = vmatpush1.bf16.msra.mxu0 %v3761
    %7057 = vmatprep.subr.bf16.mxu0 %v3758
    %7058 = vmatpush1.bf16.msra.mxu0 %v3757
    %7059 = vmatprep.subr.bf16.mxu0 %v3754
    %7060 = vmatpush1.bf16.msra.mxu0 %v3753
    %7061 = vmatprep.subr.bf16.mxu0 %v3750
    %7062 = vmatpush1.bf16.msra.mxu0 %v3749
    %7063 = vmatprep.subr.bf16.mxu0 %v3746
    %7064 = vmatpush1.bf16.msra.mxu0 %v3745
    %7065 = vmatprep.subr.bf16.mxu0 %v3742
    %7066 = vmatpush1.bf16.msra.mxu0 %v3741
    %7067 = vmatprep.subr.bf16.mxu0 %v3738
    %7068 = vmatpush1.bf16.msra.mxu0 %v3737
    %7069 = vmatprep.subr.bf16.mxu0 %v3798
    %7070 = vmatpush2.bf16.msra.mxu0 %v3797
    %7071 = vmatprep.subr.bf16.mxu0 %v3794
    %7072 = vmatpush2.bf16.msra.mxu0 %v3793
    %7073 = vmatprep.subr.bf16.mxu0 %v3790
    %7074 = vmatpush2.bf16.msra.mxu0 %v3789
    %7075 = vmatprep.subr.bf16.mxu0 %v3786
    %7076 = vmatpush2.bf16.msra.mxu0 %v3785
    %7077 = vmatprep.subr.bf16.mxu0 %v3782
    %7078 = vmatpush2.bf16.msra.mxu0 %v3781
    %7079 = vmatprep.subr.bf16.mxu0 %v3778
    %7080 = vmatpush2.bf16.msra.mxu0 %v3777
    %7081 = vmatprep.subr.bf16.mxu0 %v3774
    %7082 = vmatpush2.bf16.msra.mxu0 %v3773
    %7083 = vmatprep.subr.bf16.mxu0 %v3770
    %7084 = vmatpush2.bf16.msra.mxu0 %v3769
    %7085 = vmatprep.mubr.bf16.mxu0 %v6436
    %7086 = vmatmul.mubr.bf16.gmra.mxu0 %v6435
    %v7087 = vpop.f32.mrf.mxu0
    %v7088 = vadd.f32 %v7047, %v7087
    %v7089 = vpop.f32.mrf.mxu0
    %v7090 = vadd.f32 %v7049, %v7089
    %v7091 = vpop.f32.mrf.mxu0
    %v7092 = vpop.f32.mrf.mxu0
    %7093 = vdwg.mxu0
    %7094 = vmatprep.subr.bf16.mxu0 %v3704
    %7095 = vmatpush1.bf16.msra.mxu0 %v3703
    %7096 = vmatprep.subr.bf16.mxu0 %v3700
    %7097 = vmatpush1.bf16.msra.mxu0 %v3699
    %7098 = vmatprep.subr.bf16.mxu0 %v3696
    %7099 = vmatpush1.bf16.msra.mxu0 %v3695
    %7100 = vmatprep.subr.bf16.mxu0 %v3692
    %7101 = vmatpush1.bf16.msra.mxu0 %v3691
    %7102 = vmatprep.subr.bf16.mxu0 %v3688
    %7103 = vmatpush1.bf16.msra.mxu0 %v3687
    %7104 = vmatprep.subr.bf16.mxu0 %v3684
    %7105 = vmatpush1.bf16.msra.mxu0 %v3683
    %7106 = vmatprep.subr.bf16.mxu0 %v3680
    %7107 = vmatpush1.bf16.msra.mxu0 %v3679
    %7108 = vmatprep.subr.bf16.mxu0 %v3676
    %7109 = vmatpush1.bf16.msra.mxu0 %v3675
    %7110 = vmatprep.subr.bf16.mxu0 %v3736
    %7111 = vmatpush2.bf16.msra.mxu0 %v3735
    %7112 = vmatprep.subr.bf16.mxu0 %v3732
    %7113 = vmatpush2.bf16.msra.mxu0 %v3731
    %7114 = vmatprep.subr.bf16.mxu0 %v3728
    %7115 = vmatpush2.bf16.msra.mxu0 %v3727
    %7116 = vmatprep.subr.bf16.mxu0 %v3724
    %7117 = vmatpush2.bf16.msra.mxu0 %v3723
    %7118 = vmatprep.subr.bf16.mxu0 %v3720
    %7119 = vmatpush2.bf16.msra.mxu0 %v3719
    %7120 = vmatprep.subr.bf16.mxu0 %v3716
    %7121 = vmatpush2.bf16.msra.mxu0 %v3715
    %7122 = vmatprep.subr.bf16.mxu0 %v3712
    %7123 = vmatpush2.bf16.msra.mxu0 %v3711
    %7124 = vmatprep.subr.bf16.mxu0 %v3708
    %7125 = vmatpush2.bf16.msra.mxu0 %v3707
    %7126 = vmatprep.mubr.bf16.mxu0 %v6434
    %7127 = vmatmul.mubr.bf16.gmra.mxu0 %v6427
    %v7128 = vpop.f32.mrf.mxu0
    %v7129 = vadd.f32 %v7006, %v7128
    %v7130 = vpop.f32.mrf.mxu0
    %v7131 = vadd.f32 %v7008, %v7130
    %v7132 = vpop.f32.mrf.mxu0
    %v7133 = vpop.f32.mrf.mxu0
    %7134 = vdwg.mxu0
    %7135 = vmatprep.subr.bf16.mxu0 %v3768
    %7136 = vmatpush1.bf16.msra.mxu0 %v3767
    %7137 = vmatprep.subr.bf16.mxu0 %v3764
    %7138 = vmatpush1.bf16.msra.mxu0 %v3763
    %7139 = vmatprep.subr.bf16.mxu0 %v3760
    %7140 = vmatpush1.bf16.msra.mxu0 %v3759
    %7141 = vmatprep.subr.bf16.mxu0 %v3756
    %7142 = vmatpush1.bf16.msra.mxu0 %v3755
    %7143 = vmatprep.subr.bf16.mxu0 %v3752
    %7144 = vmatpush1.bf16.msra.mxu0 %v3751
    %7145 = vmatprep.subr.bf16.mxu0 %v3748
    %7146 = vmatpush1.bf16.msra.mxu0 %v3747
    %7147 = vmatprep.subr.bf16.mxu0 %v3744
    %7148 = vmatpush1.bf16.msra.mxu0 %v3743
    %7149 = vmatprep.subr.bf16.mxu0 %v3740
    %7150 = vmatpush1.bf16.msra.mxu0 %v3739
    %7151 = vmatprep.subr.bf16.mxu0 %v3800
    %7152 = vmatpush2.bf16.msra.mxu0 %v3799
    %7153 = vmatprep.subr.bf16.mxu0 %v3796
    %7154 = vmatpush2.bf16.msra.mxu0 %v3795
    %7155 = vmatprep.subr.bf16.mxu0 %v3792
    %7156 = vmatpush2.bf16.msra.mxu0 %v3791
    %7157 = vmatprep.subr.bf16.mxu0 %v3788
    %7158 = vmatpush2.bf16.msra.mxu0 %v3787
    %7159 = vmatprep.subr.bf16.mxu0 %v3784
    %7160 = vmatpush2.bf16.msra.mxu0 %v3783
    %7161 = vmatprep.subr.bf16.mxu0 %v3780
    %7162 = vmatpush2.bf16.msra.mxu0 %v3779
    %7163 = vmatprep.subr.bf16.mxu0 %v3776
    %7164 = vmatpush2.bf16.msra.mxu0 %v3775
    %7165 = vmatprep.subr.bf16.mxu0 %v3772
    %7166 = vmatpush2.bf16.msra.mxu0 %v3771
    %7167 = vmatprep.mubr.bf16.mxu0 %v6436
    %7168 = vmatmul.mubr.bf16.gmra.mxu0 %v6435
    %v7169 = vpop.f32.mrf.mxu0
    %v7170 = vadd.f32 %v7129, %v7169
    %v7171 = vpop.f32.mrf.mxu0
    %v7172 = vadd.f32 %v7131, %v7171
    %v7173 = vpop.f32.mrf.mxu0
    %v7174 = vpop.f32.mrf.mxu0
    %7175 = vdwg.mxu0
    %v7176 = vld [vmem:[%s1325] sm:$0xf]
    %v7179 = vunpack.c.l.s4 1966171168
    %v7180 = vunpack.c.0.s8 %v7179
    %v7181 = vlaneseq
    %v7182 = vshrl.u32 %v7181, 7
    %v7183 = vsub.s32 %v7180, %v7182
    %v7184 = vrot.slane %v7176, %v7183
    %v7185 = vcombine.high %v7184, %v7184
    %v7187 = vunpack.c.l.s4 1966171168
    %v7188 = vunpack.c.0.s8 %v7187
    %v7189 = vlaneseq
    %v7190 = vshrl.u32 %v7189, 7
    %v7191 = vsub.s32 %v7188, %v7190
    %v7192 = vrot.slane %v7184, %v7191
    %v7194 = vunpack.c.l.s4 1966171168
    %v7195 = vunpack.c.0.s8 %v7194
    %v7196 = vlaneseq
    %v7197 = vshrl.u32 %v7196, 7
    %v7198 = vsub.s32 %v7195, %v7197
    %v7199 = vrot.slane %v7185, %v7198
    %v7200 = vcombine.high %v7192, %v7192
    %v7201 = vcombine.high %v7199, %v7199
    %7206 = vmatprep.subr.bf16.mxu0 %v4665
    %7207 = vmatpush1.bf16.msra.mxu0 %v4664
    %7208 = vmatprep.subr.bf16.mxu0 %v4661
    %7209 = vmatpush1.bf16.msra.mxu0 %v4660
    %7210 = vmatprep.subr.bf16.mxu0 %v4657
    %7211 = vmatpush1.bf16.msra.mxu0 %v4656
    %7212 = vmatprep.subr.bf16.mxu0 %v4653
    %7213 = vmatpush1.bf16.msra.mxu0 %v4652
    %7214 = vmatprep.subr.bf16.mxu0 %v4649
    %7215 = vmatpush1.bf16.msra.mxu0 %v4648
    %7216 = vmatprep.subr.bf16.mxu0 %v4645
    %7217 = vmatpush1.bf16.msra.mxu0 %v4644
    %7218 = vmatprep.subr.bf16.mxu0 %v4641
    %7219 = vmatpush1.bf16.msra.mxu0 %v4640
    %7220 = vmatprep.subr.bf16.mxu0 %v4637
    %7221 = vmatpush1.bf16.msra.mxu0 %v4636
    %7222 = vmatprep.subr.bf16.mxu0 %v4697
    %7223 = vmatpush2.bf16.msra.mxu0 %v4696
    %7224 = vmatprep.subr.bf16.mxu0 %v4693
    %7225 = vmatpush2.bf16.msra.mxu0 %v4692
    %7226 = vmatprep.subr.bf16.mxu0 %v4689
    %7227 = vmatpush2.bf16.msra.mxu0 %v4688
    %7228 = vmatprep.subr.bf16.mxu0 %v4685
    %7229 = vmatpush2.bf16.msra.mxu0 %v4684
    %7230 = vmatprep.subr.bf16.mxu0 %v4681
    %7231 = vmatpush2.bf16.msra.mxu0 %v4680
    %7232 = vmatprep.subr.bf16.mxu0 %v4677
    %7233 = vmatpush2.bf16.msra.mxu0 %v4676
    %7234 = vmatprep.subr.bf16.mxu0 %v4673
    %7235 = vmatpush2.bf16.msra.mxu0 %v4672
    %7236 = vmatprep.subr.bf16.mxu0 %v4669
    %7237 = vmatpush2.bf16.msra.mxu0 %v4668
    %7238 = vmatprep.mubr.bf16.mxu0 %v7199
    %7239 = vmatmul.mubr.bf16.gmra.mxu0 %v7192
    %v7240 = vpop.f32.mrf.mxu0
    %v7241 = vadd.f32 0.0, %v7240
    %v7242 = vpop.f32.mrf.mxu0
    %v7243 = vadd.f32 0.0, %v7242
    %v7244 = vpop.f32.mrf.mxu0
    %v7245 = vpop.f32.mrf.mxu0
    %7246 = vdwg.mxu0
    %7247 = vmatprep.subr.bf16.mxu0 %v4729
    %7248 = vmatpush1.bf16.msra.mxu0 %v4728
    %7249 = vmatprep.subr.bf16.mxu0 %v4725
    %7250 = vmatpush1.bf16.msra.mxu0 %v4724
    %7251 = vmatprep.subr.bf16.mxu0 %v4721
    %7252 = vmatpush1.bf16.msra.mxu0 %v4720
    %7253 = vmatprep.subr.bf16.mxu0 %v4717
    %7254 = vmatpush1.bf16.msra.mxu0 %v4716
    %7255 = vmatprep.subr.bf16.mxu0 %v4713
    %7256 = vmatpush1.bf16.msra.mxu0 %v4712
    %7257 = vmatprep.subr.bf16.mxu0 %v4709
    %7258 = vmatpush1.bf16.msra.mxu0 %v4708
    %7259 = vmatprep.subr.bf16.mxu0 %v4705
    %7260 = vmatpush1.bf16.msra.mxu0 %v4704
    %7261 = vmatprep.subr.bf16.mxu0 %v4701
    %7262 = vmatpush1.bf16.msra.mxu0 %v4700
    %7263 = vmatprep.subr.bf16.mxu0 %v4761
    %7264 = vmatpush2.bf16.msra.mxu0 %v4760
    %7265 = vmatprep.subr.bf16.mxu0 %v4757
    %7266 = vmatpush2.bf16.msra.mxu0 %v4756
    %7267 = vmatprep.subr.bf16.mxu0 %v4753
    %7268 = vmatpush2.bf16.msra.mxu0 %v4752
    %7269 = vmatprep.subr.bf16.mxu0 %v4749
    %7270 = vmatpush2.bf16.msra.mxu0 %v4748
    %7271 = vmatprep.subr.bf16.mxu0 %v4745
    %7272 = vmatpush2.bf16.msra.mxu0 %v4744
    %7273 = vmatprep.subr.bf16.mxu0 %v4741
    %7274 = vmatpush2.bf16.msra.mxu0 %v4740
    %7275 = vmatprep.subr.bf16.mxu0 %v4737
    %7276 = vmatpush2.bf16.msra.mxu0 %v4736
    %7277 = vmatprep.subr.bf16.mxu0 %v4733
    %7278 = vmatpush2.bf16.msra.mxu0 %v4732
    %7279 = vmatprep.mubr.bf16.mxu0 %v7201
    %7280 = vmatmul.mubr.bf16.gmra.mxu0 %v7200
    %v7281 = vpop.f32.mrf.mxu0
    %v7282 = vadd.f32 %v7241, %v7281
    %v7283 = vpop.f32.mrf.mxu0
    %v7284 = vadd.f32 %v7243, %v7283
    %v7285 = vpop.f32.mrf.mxu0
    %v7286 = vpop.f32.mrf.mxu0
    %7287 = vdwg.mxu0
    %7288 = vmatprep.subr.bf16.mxu0 %v4667
    %7289 = vmatpush1.bf16.msra.mxu0 %v4666
    %7290 = vmatprep.subr.bf16.mxu0 %v4663
    %7291 = vmatpush1.bf16.msra.mxu0 %v4662
    %7292 = vmatprep.subr.bf16.mxu0 %v4659
    %7293 = vmatpush1.bf16.msra.mxu0 %v4658
    %7294 = vmatprep.subr.bf16.mxu0 %v4655
    %7295 = vmatpush1.bf16.msra.mxu0 %v4654
    %7296 = vmatprep.subr.bf16.mxu0 %v4651
    %7297 = vmatpush1.bf16.msra.mxu0 %v4650
    %7298 = vmatprep.subr.bf16.mxu0 %v4647
    %7299 = vmatpush1.bf16.msra.mxu0 %v4646
    %7300 = vmatprep.subr.bf16.mxu0 %v4643
    %7301 = vmatpush1.bf16.msra.mxu0 %v4642
    %7302 = vmatprep.subr.bf16.mxu0 %v4639
    %7303 = vmatpush1.bf16.msra.mxu0 %v4638
    %7304 = vmatprep.subr.bf16.mxu0 %v4699
    %7305 = vmatpush2.bf16.msra.mxu0 %v4698
    %7306 = vmatprep.subr.bf16.mxu0 %v4695
    %7307 = vmatpush2.bf16.msra.mxu0 %v4694
    %7308 = vmatprep.subr.bf16.mxu0 %v4691
    %7309 = vmatpush2.bf16.msra.mxu0 %v4690
    %7310 = vmatprep.subr.bf16.mxu0 %v4687
    %7311 = vmatpush2.bf16.msra.mxu0 %v4686
    %7312 = vmatprep.subr.bf16.mxu0 %v4683
    %7313 = vmatpush2.bf16.msra.mxu0 %v4682
    %7314 = vmatprep.subr.bf16.mxu0 %v4679
    %7315 = vmatpush2.bf16.msra.mxu0 %v4678
    %7316 = vmatprep.subr.bf16.mxu0 %v4675
    %7317 = vmatpush2.bf16.msra.mxu0 %v4674
    %7318 = vmatprep.subr.bf16.mxu0 %v4671
    %7319 = vmatpush2.bf16.msra.mxu0 %v4670
    %7320 = vmatprep.mubr.bf16.mxu0 %v7199
    %7321 = vmatmul.mubr.bf16.gmra.mxu0 %v7192
    %v7322 = vpop.f32.mrf.mxu0
    %v7323 = vadd.f32 0.0, %v7322
    %v7324 = vpop.f32.mrf.mxu0
    %v7325 = vadd.f32 0.0, %v7324
    %v7326 = vpop.f32.mrf.mxu0
    %v7327 = vpop.f32.mrf.mxu0
    %7328 = vdwg.mxu0
    %7329 = vmatprep.subr.bf16.mxu0 %v4731
    %7330 = vmatpush1.bf16.msra.mxu0 %v4730
    %7331 = vmatprep.subr.bf16.mxu0 %v4727
    %7332 = vmatpush1.bf16.msra.mxu0 %v4726
    %7333 = vmatprep.subr.bf16.mxu0 %v4723
    %7334 = vmatpush1.bf16.msra.mxu0 %v4722
    %7335 = vmatprep.subr.bf16.mxu0 %v4719
    %7336 = vmatpush1.bf16.msra.mxu0 %v4718
    %7337 = vmatprep.subr.bf16.mxu0 %v4715
    %7338 = vmatpush1.bf16.msra.mxu0 %v4714
    %7339 = vmatprep.subr.bf16.mxu0 %v4711
    %7340 = vmatpush1.bf16.msra.mxu0 %v4710
    %7341 = vmatprep.subr.bf16.mxu0 %v4707
    %7342 = vmatpush1.bf16.msra.mxu0 %v4706
    %7343 = vmatprep.subr.bf16.mxu0 %v4703
    %7344 = vmatpush1.bf16.msra.mxu0 %v4702
    %7345 = vmatprep.subr.bf16.mxu0 %v4763
    %7346 = vmatpush2.bf16.msra.mxu0 %v4762
    %7347 = vmatprep.subr.bf16.mxu0 %v4759
    %7348 = vmatpush2.bf16.msra.mxu0 %v4758
    %7349 = vmatprep.subr.bf16.mxu0 %v4755
    %7350 = vmatpush2.bf16.msra.mxu0 %v4754
    %7351 = vmatprep.subr.bf16.mxu0 %v4751
    %7352 = vmatpush2.bf16.msra.mxu0 %v4750
    %7353 = vmatprep.subr.bf16.mxu0 %v4747
    %7354 = vmatpush2.bf16.msra.mxu0 %v4746
    %7355 = vmatprep.subr.bf16.mxu0 %v4743
    %7356 = vmatpush2.bf16.msra.mxu0 %v4742
    %7357 = vmatprep.subr.bf16.mxu0 %v4739
    %7358 = vmatpush2.bf16.msra.mxu0 %v4738
    %7359 = vmatprep.subr.bf16.mxu0 %v4735
    %7360 = vmatpush2.bf16.msra.mxu0 %v4734
    %7361 = vmatprep.mubr.bf16.mxu0 %v7201
    %7362 = vmatmul.mubr.bf16.gmra.mxu0 %v7200
    %v7363 = vpop.f32.mrf.mxu0
    %v7364 = vadd.f32 %v7323, %v7363
    %v7365 = vpop.f32.mrf.mxu0
    %v7366 = vadd.f32 %v7325, %v7365
    %v7367 = vpop.f32.mrf.mxu0
    %v7368 = vpop.f32.mrf.mxu0
    %7369 = vdwg.mxu0
    %v7370 = vadd.f32 %v7088, %v7282
    %v7371 = vadd.f32 %v7090, %v7284
    %v7372 = vadd.f32 %v7170, %v7364
    %v7373 = vadd.f32 %v7172, %v7366
    %v7374 = vadd.f32 %v7370, %v5064
    %v7375 = vadd.f32 %v7371, %v5068
    %v7376 = vadd.f32 %v7372, %v5072
    %v7377 = vadd.f32 %v7373, %v5076
    %v7378 = vmax.f32 %v7374, 0.0
    %v7379 = vmax.f32 %v7375, 0.0
    %v7380 = vmax.f32 %v7376, 0.0
    %v7381 = vmax.f32 %v7377, 0.0
    %s7382 = scalar_lea.vmem %s5, 1344
    %v7383 = vld [vmem:[%s7382] sm:$0xff]
    %v7384 = vld [vmem:[%s7382 + $0x8] sm:$0xff]
    %v7385 = vld [vmem:[%s7382 + $0x10] sm:$0xff]
    %v7386 = vld [vmem:[%s7382 + $0x18] sm:$0xff]
    %v7387 = vld [vmem:[%s7382 + $0x20] sm:$0xff]
    %v7388 = vld [vmem:[%s7382 + $0x28] sm:$0xff]
    %v7389 = vld [vmem:[%s7382 + $0x30] sm:$0xff]
    %v7390 = vld [vmem:[%s7382 + $0x38] sm:$0xff]
    %v7391 = vld [vmem:[%s7382 + $0x40] sm:$0xff]
    %v7392 = vld [vmem:[%s7382 + $0x48] sm:$0xff]
    %v7393 = vld [vmem:[%s7382 + $0x50] sm:$0xff]
    %v7394 = vld [vmem:[%s7382 + $0x58] sm:$0xff]
    %v7395 = vld [vmem:[%s7382 + $0x60] sm:$0xff]
    %v7396 = vld [vmem:[%s7382 + $0x68] sm:$0xff]
    %v7397 = vld [vmem:[%s7382 + $0x70] sm:$0xff]
    %v7398 = vld [vmem:[%s7382 + $0x78] sm:$0xff]
    %v7399 = vld [vmem:[%s7382 + $0x80] sm:$0xff]
    %v7400 = vld [vmem:[%s7382 + $0x88] sm:$0xff]
    %v7401 = vld [vmem:[%s7382 + $0x90] sm:$0xff]
    %v7402 = vld [vmem:[%s7382 + $0x98] sm:$0xff]
    %v7403 = vld [vmem:[%s7382 + $0xa0] sm:$0xff]
    %v7404 = vld [vmem:[%s7382 + $0xa8] sm:$0xff]
    %v7405 = vld [vmem:[%s7382 + $0xb0] sm:$0xff]
    %v7406 = vld [vmem:[%s7382 + $0xb8] sm:$0xff]
    %v7407 = vld [vmem:[%s7382 + $0xc0] sm:$0xff]
    %v7408 = vld [vmem:[%s7382 + $0xc8] sm:$0xff]
    %v7409 = vld [vmem:[%s7382 + $0xd0] sm:$0xff]
    %v7410 = vld [vmem:[%s7382 + $0xd8] sm:$0xff]
    %v7411 = vld [vmem:[%s7382 + $0xe0] sm:$0xff]
    %v7412 = vld [vmem:[%s7382 + $0xe8] sm:$0xff]
    %v7413 = vld [vmem:[%s7382 + $0xf0] sm:$0xff]
    %v7414 = vld [vmem:[%s7382 + $0xf8] sm:$0xff]
    %v7415 = vld [vmem:[%s7382 + $0x100] sm:$0xff]
    %v7416 = vld [vmem:[%s7382 + $0x108] sm:$0xff]
    %v7417 = vld [vmem:[%s7382 + $0x110] sm:$0xff]
    %v7418 = vld [vmem:[%s7382 + $0x118] sm:$0xff]
    %v7419 = vld [vmem:[%s7382 + $0x120] sm:$0xff]
    %v7420 = vld [vmem:[%s7382 + $0x128] sm:$0xff]
    %v7421 = vld [vmem:[%s7382 + $0x130] sm:$0xff]
    %v7422 = vld [vmem:[%s7382 + $0x138] sm:$0xff]
    %v7423 = vld [vmem:[%s7382 + $0x140] sm:$0xff]
    %v7424 = vld [vmem:[%s7382 + $0x148] sm:$0xff]
    %v7425 = vld [vmem:[%s7382 + $0x150] sm:$0xff]
    %v7426 = vld [vmem:[%s7382 + $0x158] sm:$0xff]
    %v7427 = vld [vmem:[%s7382 + $0x160] sm:$0xff]
    %v7428 = vld [vmem:[%s7382 + $0x168] sm:$0xff]
    %v7429 = vld [vmem:[%s7382 + $0x170] sm:$0xff]
    %v7430 = vld [vmem:[%s7382 + $0x178] sm:$0xff]
    %v7431 = vld [vmem:[%s7382 + $0x180] sm:$0xff]
    %v7432 = vld [vmem:[%s7382 + $0x188] sm:$0xff]
    %v7433 = vld [vmem:[%s7382 + $0x190] sm:$0xff]
    %v7434 = vld [vmem:[%s7382 + $0x198] sm:$0xff]
    %v7435 = vld [vmem:[%s7382 + $0x1a0] sm:$0xff]
    %v7436 = vld [vmem:[%s7382 + $0x1a8] sm:$0xff]
    %v7437 = vld [vmem:[%s7382 + $0x1b0] sm:$0xff]
    %v7438 = vld [vmem:[%s7382 + $0x1b8] sm:$0xff]
    %v7440 = vsel %vm5766, %v7381, 0
    %7442 = vmatprep.subr.mxu0 0.0
    %7443 = vmatpush1.msra.mxu0 %v7398
    %7444 = vmatprep.subr.mxu0 0.0
    %7445 = vmatpush1.msra.mxu0 %v7397
    %7446 = vmatprep.subr.mxu0 0.0
    %7447 = vmatpush1.msra.mxu0 %v7396
    %7448 = vmatprep.subr.mxu0 0.0
    %7449 = vmatpush1.msra.mxu0 %v7395
    %7450 = vmatprep.subr.mxu0 0.0
    %7451 = vmatpush1.msra.mxu0 %v7394
    %7452 = vmatprep.subr.mxu0 0.0
    %7453 = vmatpush1.msra.mxu0 %v7393
    %7454 = vmatprep.subr.mxu0 0.0
    %7455 = vmatpush1.msra.mxu0 %v7392
    %7456 = vmatprep.subr.mxu0 0.0
    %7457 = vmatpush1.msra.mxu0 %v7391
    %7458 = vmatprep.subr.mxu0 0.0
    %7459 = vmatpush1.msra.mxu0 %v7390
    %7460 = vmatprep.subr.mxu0 0.0
    %7461 = vmatpush1.msra.mxu0 %v7389
    %7462 = vmatprep.subr.mxu0 0.0
    %7463 = vmatpush1.msra.mxu0 %v7388
    %7464 = vmatprep.subr.mxu0 0.0
    %7465 = vmatpush1.msra.mxu0 %v7387
    %7466 = vmatprep.subr.mxu0 0.0
    %7467 = vmatpush1.msra.mxu0 %v7386
    %7468 = vmatprep.subr.mxu0 0.0
    %7469 = vmatpush1.msra.mxu0 %v7385
    %7470 = vmatprep.subr.mxu0 0.0
    %7471 = vmatpush1.msra.mxu0 %v7384
    %7472 = vmatprep.subr.mxu0 0.0
    %7473 = vmatpush1.msra.mxu0 %v7383
    %7474 = vmatprep.subr.mxu0 0.0
    %7475 = vmatpush2.msra.mxu0 %v7414
    %7476 = vmatprep.subr.mxu0 0.0
    %7477 = vmatpush2.msra.mxu0 %v7413
    %7478 = vmatprep.subr.mxu0 0.0
    %7479 = vmatpush2.msra.mxu0 %v7412
    %7480 = vmatprep.subr.mxu0 0.0
    %7481 = vmatpush2.msra.mxu0 %v7411
    %7482 = vmatprep.subr.mxu0 0.0
    %7483 = vmatpush2.msra.mxu0 %v7410
    %7484 = vmatprep.subr.mxu0 0.0
    %7485 = vmatpush2.msra.mxu0 %v7409
    %7486 = vmatprep.subr.mxu0 0.0
    %7487 = vmatpush2.msra.mxu0 %v7408
    %7488 = vmatprep.subr.mxu0 0.0
    %7489 = vmatpush2.msra.mxu0 %v7407
    %7490 = vmatprep.subr.mxu0 0.0
    %7491 = vmatpush2.msra.mxu0 %v7406
    %7492 = vmatprep.subr.mxu0 0.0
    %7493 = vmatpush2.msra.mxu0 %v7405
    %7494 = vmatprep.subr.mxu0 0.0
    %7495 = vmatpush2.msra.mxu0 %v7404
    %7496 = vmatprep.subr.mxu0 0.0
    %7497 = vmatpush2.msra.mxu0 %v7403
    %7498 = vmatprep.subr.mxu0 0.0
    %7499 = vmatpush2.msra.mxu0 %v7402
    %7500 = vmatprep.subr.mxu0 0.0
    %7501 = vmatpush2.msra.mxu0 %v7401
    %7502 = vmatprep.subr.mxu0 0.0
    %7503 = vmatpush2.msra.mxu0 %v7400
    %7504 = vmatprep.subr.mxu0 0.0
    %7505 = vmatpush2.msra.mxu0 %v7399
    %7506 = vmatprep.mubr.f32.mxu0 %v7379
    %7507 = vmatmul.mubr.f32.gmra.mxu0 %v7378
    %v7508 = vpop.f32.mrf.mxu0
    %v7509 = vadd.f32 0.0, %v7508
    %v7510 = vpop.f32.mrf.mxu0
    %7511 = vdwg.mxu0
    %7512 = vmatprep.subr.mxu0 0.0
    %7513 = vmatpush1.msra.mxu0 %v7430
    %7514 = vmatprep.subr.mxu0 0.0
    %7515 = vmatpush1.msra.mxu0 %v7429
    %7516 = vmatprep.subr.mxu0 0.0
    %7517 = vmatpush1.msra.mxu0 %v7428
    %7518 = vmatprep.subr.mxu0 0.0
    %7519 = vmatpush1.msra.mxu0 %v7427
    %7520 = vmatprep.subr.mxu0 0.0
    %7521 = vmatpush1.msra.mxu0 %v7426
    %7522 = vmatprep.subr.mxu0 0.0
    %7523 = vmatpush1.msra.mxu0 %v7425
    %7524 = vmatprep.subr.mxu0 0.0
    %7525 = vmatpush1.msra.mxu0 %v7424
    %7526 = vmatprep.subr.mxu0 0.0
    %7527 = vmatpush1.msra.mxu0 %v7423
    %7528 = vmatprep.subr.mxu0 0.0
    %7529 = vmatpush1.msra.mxu0 %v7422
    %7530 = vmatprep.subr.mxu0 0.0
    %7531 = vmatpush1.msra.mxu0 %v7421
    %7532 = vmatprep.subr.mxu0 0.0
    %7533 = vmatpush1.msra.mxu0 %v7420
    %7534 = vmatprep.subr.mxu0 0.0
    %7535 = vmatpush1.msra.mxu0 %v7419
    %7536 = vmatprep.subr.mxu0 0.0
    %7537 = vmatpush1.msra.mxu0 %v7418
    %7538 = vmatprep.subr.mxu0 0.0
    %7539 = vmatpush1.msra.mxu0 %v7417
    %7540 = vmatprep.subr.mxu0 0.0
    %7541 = vmatpush1.msra.mxu0 %v7416
    %7542 = vmatprep.subr.mxu0 0.0
    %7543 = vmatpush1.msra.mxu0 %v7415
    %7544 = vmatprep.subr.mxu0 0.0
    %7545 = vmatpush2.msra.mxu0 0.0
    %7546 = vmatprep.subr.mxu0 0.0
    %7547 = vmatpush2.msra.mxu0 0.0
    %7548 = vmatprep.subr.mxu0 0.0
    %7549 = vmatpush2.msra.mxu0 0.0
    %7550 = vmatprep.subr.mxu0 0.0
    %7551 = vmatpush2.msra.mxu0 0.0
    %7552 = vmatprep.subr.mxu0 0.0
    %7553 = vmatpush2.msra.mxu0 0.0
    %7554 = vmatprep.subr.mxu0 0.0
    %7555 = vmatpush2.msra.mxu0 0.0
    %7556 = vmatprep.subr.mxu0 0.0
    %7557 = vmatpush2.msra.mxu0 0.0
    %7558 = vmatprep.subr.mxu0 0.0
    %7559 = vmatpush2.msra.mxu0 0.0
    %7560 = vmatprep.subr.mxu0 0.0
    %7561 = vmatpush2.msra.mxu0 %v7438
    %7562 = vmatprep.subr.mxu0 0.0
    %7563 = vmatpush2.msra.mxu0 %v7437
    %7564 = vmatprep.subr.mxu0 0.0
    %7565 = vmatpush2.msra.mxu0 %v7436
    %7566 = vmatprep.subr.mxu0 0.0
    %7567 = vmatpush2.msra.mxu0 %v7435
    %7568 = vmatprep.subr.mxu0 0.0
    %7569 = vmatpush2.msra.mxu0 %v7434
    %7570 = vmatprep.subr.mxu0 0.0
    %7571 = vmatpush2.msra.mxu0 %v7433
    %7572 = vmatprep.subr.mxu0 0.0
    %7573 = vmatpush2.msra.mxu0 %v7432
    %7574 = vmatprep.subr.mxu0 0.0
    %7575 = vmatpush2.msra.mxu0 %v7431
    %7576 = vmatprep.mubr.f32.mxu0 %v7440
    %7577 = vmatmul.mubr.f32.gmra.mxu0 %v7380
    %v7578 = vpop.f32.mrf.mxu0
    %v7579 = vadd.f32 %v7509, %v7578
    %v7580 = vpop.f32.mrf.mxu0
    %7581 = vdwg.mxu0
    %v7582 = vadd.f32 %v6817, %v7579
    %v7583 = vld [vmem:[%s1465] sm:$0xf]
    %v7586 = vunpack.c.l.s4 1966171168
    %v7587 = vunpack.c.0.s8 %v7586
    %v7588 = vlaneseq
    %v7589 = vshrl.u32 %v7588, 7
    %v7590 = vsub.s32 %v7587, %v7589
    %v7591 = vrot.slane %v7583, %v7590
    %v7592 = vcombine.high %v7591, %v7591
    %v7594 = vunpack.c.l.s4 1966171168
    %v7595 = vunpack.c.0.s8 %v7594
    %v7596 = vlaneseq
    %v7597 = vshrl.u32 %v7596, 7
    %v7598 = vsub.s32 %v7595, %v7597
    %v7599 = vrot.slane %v7591, %v7598
    %v7601 = vunpack.c.l.s4 1966171168
    %v7602 = vunpack.c.0.s8 %v7601
    %v7603 = vlaneseq
    %v7604 = vshrl.u32 %v7603, 7
    %v7605 = vsub.s32 %v7602, %v7604
    %v7606 = vrot.slane %v7592, %v7605
    %v7607 = vcombine.high %v7599, %v7599
    %v7608 = vcombine.high %v7606, %v7606
    %7613 = vmatprep.subr.bf16.mxu0 %v2869
    %7614 = vmatpush1.bf16.msra.mxu0 %v2868
    %7615 = vmatprep.subr.bf16.mxu0 %v2865
    %7616 = vmatpush1.bf16.msra.mxu0 %v2864
    %7617 = vmatprep.subr.bf16.mxu0 %v2861
    %7618 = vmatpush1.bf16.msra.mxu0 %v2860
    %7619 = vmatprep.subr.bf16.mxu0 %v2857
    %7620 = vmatpush1.bf16.msra.mxu0 %v2856
    %7621 = vmatprep.subr.bf16.mxu0 %v2853
    %7622 = vmatpush1.bf16.msra.mxu0 %v2852
    %7623 = vmatprep.subr.bf16.mxu0 %v2849
    %7624 = vmatpush1.bf16.msra.mxu0 %v2848
    %7625 = vmatprep.subr.bf16.mxu0 %v2845
    %7626 = vmatpush1.bf16.msra.mxu0 %v2844
    %7627 = vmatprep.subr.bf16.mxu0 %v2841
    %7628 = vmatpush1.bf16.msra.mxu0 %v2840
    %7629 = vmatprep.subr.bf16.mxu0 %v2901
    %7630 = vmatpush2.bf16.msra.mxu0 %v2900
    %7631 = vmatprep.subr.bf16.mxu0 %v2897
    %7632 = vmatpush2.bf16.msra.mxu0 %v2896
    %7633 = vmatprep.subr.bf16.mxu0 %v2893
    %7634 = vmatpush2.bf16.msra.mxu0 %v2892
    %7635 = vmatprep.subr.bf16.mxu0 %v2889
    %7636 = vmatpush2.bf16.msra.mxu0 %v2888
    %7637 = vmatprep.subr.bf16.mxu0 %v2885
    %7638 = vmatpush2.bf16.msra.mxu0 %v2884
    %7639 = vmatprep.subr.bf16.mxu0 %v2881
    %7640 = vmatpush2.bf16.msra.mxu0 %v2880
    %7641 = vmatprep.subr.bf16.mxu0 %v2877
    %7642 = vmatpush2.bf16.msra.mxu0 %v2876
    %7643 = vmatprep.subr.bf16.mxu0 %v2873
    %7644 = vmatpush2.bf16.msra.mxu0 %v2872
    %7645 = vmatprep.mubr.bf16.mxu0 %v7606
    %7646 = vmatmul.mubr.bf16.gmra.mxu0 %v7599
    %v7647 = vpop.f32.mrf.mxu0
    %v7648 = vadd.f32 0.0, %v7647
    %v7649 = vpop.f32.mrf.mxu0
    %v7650 = vadd.f32 0.0, %v7649
    %v7651 = vpop.f32.mrf.mxu0
    %v7652 = vpop.f32.mrf.mxu0
    %7653 = vdwg.mxu0
    %7654 = vmatprep.subr.bf16.mxu0 %v2933
    %7655 = vmatpush1.bf16.msra.mxu0 %v2932
    %7656 = vmatprep.subr.bf16.mxu0 %v2929
    %7657 = vmatpush1.bf16.msra.mxu0 %v2928
    %7658 = vmatprep.subr.bf16.mxu0 %v2925
    %7659 = vmatpush1.bf16.msra.mxu0 %v2924
    %7660 = vmatprep.subr.bf16.mxu0 %v2921
    %7661 = vmatpush1.bf16.msra.mxu0 %v2920
    %7662 = vmatprep.subr.bf16.mxu0 %v2917
    %7663 = vmatpush1.bf16.msra.mxu0 %v2916
    %7664 = vmatprep.subr.bf16.mxu0 %v2913
    %7665 = vmatpush1.bf16.msra.mxu0 %v2912
    %7666 = vmatprep.subr.bf16.mxu0 %v2909
    %7667 = vmatpush1.bf16.msra.mxu0 %v2908
    %7668 = vmatprep.subr.bf16.mxu0 %v2905
    %7669 = vmatpush1.bf16.msra.mxu0 %v2904
    %7670 = vmatprep.subr.bf16.mxu0 %v2965
    %7671 = vmatpush2.bf16.msra.mxu0 %v2964
    %7672 = vmatprep.subr.bf16.mxu0 %v2961
    %7673 = vmatpush2.bf16.msra.mxu0 %v2960
    %7674 = vmatprep.subr.bf16.mxu0 %v2957
    %7675 = vmatpush2.bf16.msra.mxu0 %v2956
    %7676 = vmatprep.subr.bf16.mxu0 %v2953
    %7677 = vmatpush2.bf16.msra.mxu0 %v2952
    %7678 = vmatprep.subr.bf16.mxu0 %v2949
    %7679 = vmatpush2.bf16.msra.mxu0 %v2948
    %7680 = vmatprep.subr.bf16.mxu0 %v2945
    %7681 = vmatpush2.bf16.msra.mxu0 %v2944
    %7682 = vmatprep.subr.bf16.mxu0 %v2941
    %7683 = vmatpush2.bf16.msra.mxu0 %v2940
    %7684 = vmatprep.subr.bf16.mxu0 %v2937
    %7685 = vmatpush2.bf16.msra.mxu0 %v2936
    %7686 = vmatprep.mubr.bf16.mxu0 %v7608
    %7687 = vmatmul.mubr.bf16.gmra.mxu0 %v7607
    %v7688 = vpop.f32.mrf.mxu0
    %v7689 = vadd.f32 %v7648, %v7688
    %v7690 = vpop.f32.mrf.mxu0
    %v7691 = vadd.f32 %v7650, %v7690
    %v7692 = vpop.f32.mrf.mxu0
    %v7693 = vpop.f32.mrf.mxu0
    %7694 = vdwg.mxu0
    %7695 = vmatprep.subr.bf16.mxu0 %v2871
    %7696 = vmatpush1.bf16.msra.mxu0 %v2870
    %7697 = vmatprep.subr.bf16.mxu0 %v2867
    %7698 = vmatpush1.bf16.msra.mxu0 %v2866
    %7699 = vmatprep.subr.bf16.mxu0 %v2863
    %7700 = vmatpush1.bf16.msra.mxu0 %v2862
    %7701 = vmatprep.subr.bf16.mxu0 %v2859
    %7702 = vmatpush1.bf16.msra.mxu0 %v2858
    %7703 = vmatprep.subr.bf16.mxu0 %v2855
    %7704 = vmatpush1.bf16.msra.mxu0 %v2854
    %7705 = vmatprep.subr.bf16.mxu0 %v2851
    %7706 = vmatpush1.bf16.msra.mxu0 %v2850
    %7707 = vmatprep.subr.bf16.mxu0 %v2847
    %7708 = vmatpush1.bf16.msra.mxu0 %v2846
    %7709 = vmatprep.subr.bf16.mxu0 %v2843
    %7710 = vmatpush1.bf16.msra.mxu0 %v2842
    %7711 = vmatprep.subr.bf16.mxu0 %v2903
    %7712 = vmatpush2.bf16.msra.mxu0 %v2902
    %7713 = vmatprep.subr.bf16.mxu0 %v2899
    %7714 = vmatpush2.bf16.msra.mxu0 %v2898
    %7715 = vmatprep.subr.bf16.mxu0 %v2895
    %7716 = vmatpush2.bf16.msra.mxu0 %v2894
    %7717 = vmatprep.subr.bf16.mxu0 %v2891
    %7718 = vmatpush2.bf16.msra.mxu0 %v2890
    %7719 = vmatprep.subr.bf16.mxu0 %v2887
    %7720 = vmatpush2.bf16.msra.mxu0 %v2886
    %7721 = vmatprep.subr.bf16.mxu0 %v2883
    %7722 = vmatpush2.bf16.msra.mxu0 %v2882
    %7723 = vmatprep.subr.bf16.mxu0 %v2879
    %7724 = vmatpush2.bf16.msra.mxu0 %v2878
    %7725 = vmatprep.subr.bf16.mxu0 %v2875
    %7726 = vmatpush2.bf16.msra.mxu0 %v2874
    %7727 = vmatprep.mubr.bf16.mxu0 %v7606
    %7728 = vmatmul.mubr.bf16.gmra.mxu0 %v7599
    %v7729 = vpop.f32.mrf.mxu0
    %v7730 = vadd.f32 0.0, %v7729
    %v7731 = vpop.f32.mrf.mxu0
    %v7732 = vadd.f32 0.0, %v7731
    %v7733 = vpop.f32.mrf.mxu0
    %v7734 = vpop.f32.mrf.mxu0
    %7735 = vdwg.mxu0
    %7736 = vmatprep.subr.bf16.mxu0 %v2935
    %7737 = vmatpush1.bf16.msra.mxu0 %v2934
    %7738 = vmatprep.subr.bf16.mxu0 %v2931
    %7739 = vmatpush1.bf16.msra.mxu0 %v2930
    %7740 = vmatprep.subr.bf16.mxu0 %v2927
    %7741 = vmatpush1.bf16.msra.mxu0 %v2926
    %7742 = vmatprep.subr.bf16.mxu0 %v2923
    %7743 = vmatpush1.bf16.msra.mxu0 %v2922
    %7744 = vmatprep.subr.bf16.mxu0 %v2919
    %7745 = vmatpush1.bf16.msra.mxu0 %v2918
    %7746 = vmatprep.subr.bf16.mxu0 %v2915
    %7747 = vmatpush1.bf16.msra.mxu0 %v2914
    %7748 = vmatprep.subr.bf16.mxu0 %v2911
    %7749 = vmatpush1.bf16.msra.mxu0 %v2910
    %7750 = vmatprep.subr.bf16.mxu0 %v2907
    %7751 = vmatpush1.bf16.msra.mxu0 %v2906
    %7752 = vmatprep.subr.bf16.mxu0 %v2967
    %7753 = vmatpush2.bf16.msra.mxu0 %v2966
    %7754 = vmatprep.subr.bf16.mxu0 %v2963
    %7755 = vmatpush2.bf16.msra.mxu0 %v2962
    %7756 = vmatprep.subr.bf16.mxu0 %v2959
    %7757 = vmatpush2.bf16.msra.mxu0 %v2958
    %7758 = vmatprep.subr.bf16.mxu0 %v2955
    %7759 = vmatpush2.bf16.msra.mxu0 %v2954
    %7760 = vmatprep.subr.bf16.mxu0 %v2951
    %7761 = vmatpush2.bf16.msra.mxu0 %v2950
    %7762 = vmatprep.subr.bf16.mxu0 %v2947
    %7763 = vmatpush2.bf16.msra.mxu0 %v2946
    %7764 = vmatprep.subr.bf16.mxu0 %v2943
    %7765 = vmatpush2.bf16.msra.mxu0 %v2942
    %7766 = vmatprep.subr.bf16.mxu0 %v2939
    %7767 = vmatpush2.bf16.msra.mxu0 %v2938
    %7768 = vmatprep.mubr.bf16.mxu0 %v7608
    %7769 = vmatmul.mubr.bf16.gmra.mxu0 %v7607
    %v7770 = vpop.f32.mrf.mxu0
    %v7771 = vadd.f32 %v7730, %v7770
    %v7772 = vpop.f32.mrf.mxu0
    %v7773 = vadd.f32 %v7732, %v7772
    %v7774 = vpop.f32.mrf.mxu0
    %v7775 = vpop.f32.mrf.mxu0
    %7776 = vdwg.mxu0
    %7777 = vmatprep.subr.bf16.mxu0 %v3702
    %7778 = vmatpush1.bf16.msra.mxu0 %v3701
    %7779 = vmatprep.subr.bf16.mxu0 %v3698
    %7780 = vmatpush1.bf16.msra.mxu0 %v3697
    %7781 = vmatprep.subr.bf16.mxu0 %v3694
    %7782 = vmatpush1.bf16.msra.mxu0 %v3693
    %7783 = vmatprep.subr.bf16.mxu0 %v3690
    %7784 = vmatpush1.bf16.msra.mxu0 %v3689
    %7785 = vmatprep.subr.bf16.mxu0 %v3686
    %7786 = vmatpush1.bf16.msra.mxu0 %v3685
    %7787 = vmatprep.subr.bf16.mxu0 %v3682
    %7788 = vmatpush1.bf16.msra.mxu0 %v3681
    %7789 = vmatprep.subr.bf16.mxu0 %v3678
    %7790 = vmatpush1.bf16.msra.mxu0 %v3677
    %7791 = vmatprep.subr.bf16.mxu0 %v3674
    %7792 = vmatpush1.bf16.msra.mxu0 %v3673
    %7793 = vmatprep.subr.bf16.mxu0 %v3734
    %7794 = vmatpush2.bf16.msra.mxu0 %v3733
    %7795 = vmatprep.subr.bf16.mxu0 %v3730
    %7796 = vmatpush2.bf16.msra.mxu0 %v3729
    %7797 = vmatprep.subr.bf16.mxu0 %v3726
    %7798 = vmatpush2.bf16.msra.mxu0 %v3725
    %7799 = vmatprep.subr.bf16.mxu0 %v3722
    %7800 = vmatpush2.bf16.msra.mxu0 %v3721
    %7801 = vmatprep.subr.bf16.mxu0 %v3718
    %7802 = vmatpush2.bf16.msra.mxu0 %v3717
    %7803 = vmatprep.subr.bf16.mxu0 %v3714
    %7804 = vmatpush2.bf16.msra.mxu0 %v3713
    %7805 = vmatprep.subr.bf16.mxu0 %v3710
    %7806 = vmatpush2.bf16.msra.mxu0 %v3709
    %7807 = vmatprep.subr.bf16.mxu0 %v3706
    %7808 = vmatpush2.bf16.msra.mxu0 %v3705
    %7809 = vmatprep.mubr.bf16.mxu0 %v7199
    %7810 = vmatmul.mubr.bf16.gmra.mxu0 %v7192
    %v7811 = vpop.f32.mrf.mxu0
    %v7812 = vadd.f32 %v7689, %v7811
    %v7813 = vpop.f32.mrf.mxu0
    %v7814 = vadd.f32 %v7691, %v7813
    %v7815 = vpop.f32.mrf.mxu0
    %v7816 = vpop.f32.mrf.mxu0
    %7817 = vdwg.mxu0
    %7818 = vmatprep.subr.bf16.mxu0 %v3766
    %7819 = vmatpush1.bf16.msra.mxu0 %v3765
    %7820 = vmatprep.subr.bf16.mxu0 %v3762
    %7821 = vmatpush1.bf16.msra.mxu0 %v3761
    %7822 = vmatprep.subr.bf16.mxu0 %v3758
    %7823 = vmatpush1.bf16.msra.mxu0 %v3757
    %7824 = vmatprep.subr.bf16.mxu0 %v3754
    %7825 = vmatpush1.bf16.msra.mxu0 %v3753
    %7826 = vmatprep.subr.bf16.mxu0 %v3750
    %7827 = vmatpush1.bf16.msra.mxu0 %v3749
    %7828 = vmatprep.subr.bf16.mxu0 %v3746
    %7829 = vmatpush1.bf16.msra.mxu0 %v3745
    %7830 = vmatprep.subr.bf16.mxu0 %v3742
    %7831 = vmatpush1.bf16.msra.mxu0 %v3741
    %7832 = vmatprep.subr.bf16.mxu0 %v3738
    %7833 = vmatpush1.bf16.msra.mxu0 %v3737
    %7834 = vmatprep.subr.bf16.mxu0 %v3798
    %7835 = vmatpush2.bf16.msra.mxu0 %v3797
    %7836 = vmatprep.subr.bf16.mxu0 %v3794
    %7837 = vmatpush2.bf16.msra.mxu0 %v3793
    %7838 = vmatprep.subr.bf16.mxu0 %v3790
    %7839 = vmatpush2.bf16.msra.mxu0 %v3789
    %7840 = vmatprep.subr.bf16.mxu0 %v3786
    %7841 = vmatpush2.bf16.msra.mxu0 %v3785
    %7842 = vmatprep.subr.bf16.mxu0 %v3782
    %7843 = vmatpush2.bf16.msra.mxu0 %v3781
    %7844 = vmatprep.subr.bf16.mxu0 %v3778
    %7845 = vmatpush2.bf16.msra.mxu0 %v3777
    %7846 = vmatprep.subr.bf16.mxu0 %v3774
    %7847 = vmatpush2.bf16.msra.mxu0 %v3773
    %7848 = vmatprep.subr.bf16.mxu0 %v3770
    %7849 = vmatpush2.bf16.msra.mxu0 %v3769
    %7850 = vmatprep.mubr.bf16.mxu0 %v7201
    %7851 = vmatmul.mubr.bf16.gmra.mxu0 %v7200
    %v7852 = vpop.f32.mrf.mxu0
    %v7853 = vadd.f32 %v7812, %v7852
    %v7854 = vpop.f32.mrf.mxu0
    %v7855 = vadd.f32 %v7814, %v7854
    %v7856 = vpop.f32.mrf.mxu0
    %v7857 = vpop.f32.mrf.mxu0
    %7858 = vdwg.mxu0
    %7859 = vmatprep.subr.bf16.mxu0 %v3704
    %7860 = vmatpush1.bf16.msra.mxu0 %v3703
    %7861 = vmatprep.subr.bf16.mxu0 %v3700
    %7862 = vmatpush1.bf16.msra.mxu0 %v3699
    %7863 = vmatprep.subr.bf16.mxu0 %v3696
    %7864 = vmatpush1.bf16.msra.mxu0 %v3695
    %7865 = vmatprep.subr.bf16.mxu0 %v3692
    %7866 = vmatpush1.bf16.msra.mxu0 %v3691
    %7867 = vmatprep.subr.bf16.mxu0 %v3688
    %7868 = vmatpush1.bf16.msra.mxu0 %v3687
    %7869 = vmatprep.subr.bf16.mxu0 %v3684
    %7870 = vmatpush1.bf16.msra.mxu0 %v3683
    %7871 = vmatprep.subr.bf16.mxu0 %v3680
    %7872 = vmatpush1.bf16.msra.mxu0 %v3679
    %7873 = vmatprep.subr.bf16.mxu0 %v3676
    %7874 = vmatpush1.bf16.msra.mxu0 %v3675
    %7875 = vmatprep.subr.bf16.mxu0 %v3736
    %7876 = vmatpush2.bf16.msra.mxu0 %v3735
    %7877 = vmatprep.subr.bf16.mxu0 %v3732
    %7878 = vmatpush2.bf16.msra.mxu0 %v3731
    %7879 = vmatprep.subr.bf16.mxu0 %v3728
    %7880 = vmatpush2.bf16.msra.mxu0 %v3727
    %7881 = vmatprep.subr.bf16.mxu0 %v3724
    %7882 = vmatpush2.bf16.msra.mxu0 %v3723
    %7883 = vmatprep.subr.bf16.mxu0 %v3720
    %7884 = vmatpush2.bf16.msra.mxu0 %v3719
    %7885 = vmatprep.subr.bf16.mxu0 %v3716
    %7886 = vmatpush2.bf16.msra.mxu0 %v3715
    %7887 = vmatprep.subr.bf16.mxu0 %v3712
    %7888 = vmatpush2.bf16.msra.mxu0 %v3711
    %7889 = vmatprep.subr.bf16.mxu0 %v3708
    %7890 = vmatpush2.bf16.msra.mxu0 %v3707
    %7891 = vmatprep.mubr.bf16.mxu0 %v7199
    %7892 = vmatmul.mubr.bf16.gmra.mxu0 %v7192
    %v7893 = vpop.f32.mrf.mxu0
    %v7894 = vadd.f32 %v7771, %v7893
    %v7895 = vpop.f32.mrf.mxu0
    %v7896 = vadd.f32 %v7773, %v7895
    %v7897 = vpop.f32.mrf.mxu0
    %v7898 = vpop.f32.mrf.mxu0
    %7899 = vdwg.mxu0
    %7900 = vmatprep.subr.bf16.mxu0 %v3768
    %7901 = vmatpush1.bf16.msra.mxu0 %v3767
    %7902 = vmatprep.subr.bf16.mxu0 %v3764
    %7903 = vmatpush1.bf16.msra.mxu0 %v3763
    %7904 = vmatprep.subr.bf16.mxu0 %v3760
    %7905 = vmatpush1.bf16.msra.mxu0 %v3759
    %7906 = vmatprep.subr.bf16.mxu0 %v3756
    %7907 = vmatpush1.bf16.msra.mxu0 %v3755
    %7908 = vmatprep.subr.bf16.mxu0 %v3752
    %7909 = vmatpush1.bf16.msra.mxu0 %v3751
    %7910 = vmatprep.subr.bf16.mxu0 %v3748
    %7911 = vmatpush1.bf16.msra.mxu0 %v3747
    %7912 = vmatprep.subr.bf16.mxu0 %v3744
    %7913 = vmatpush1.bf16.msra.mxu0 %v3743
    %7914 = vmatprep.subr.bf16.mxu0 %v3740
    %7915 = vmatpush1.bf16.msra.mxu0 %v3739
    %7916 = vmatprep.subr.bf16.mxu0 %v3800
    %7917 = vmatpush2.bf16.msra.mxu0 %v3799
    %7918 = vmatprep.subr.bf16.mxu0 %v3796
    %7919 = vmatpush2.bf16.msra.mxu0 %v3795
    %7920 = vmatprep.subr.bf16.mxu0 %v3792
    %7921 = vmatpush2.bf16.msra.mxu0 %v3791
    %7922 = vmatprep.subr.bf16.mxu0 %v3788
    %7923 = vmatpush2.bf16.msra.mxu0 %v3787
    %7924 = vmatprep.subr.bf16.mxu0 %v3784
    %7925 = vmatpush2.bf16.msra.mxu0 %v3783
    %7926 = vmatprep.subr.bf16.mxu0 %v3780
    %7927 = vmatpush2.bf16.msra.mxu0 %v3779
    %7928 = vmatprep.subr.bf16.mxu0 %v3776
    %7929 = vmatpush2.bf16.msra.mxu0 %v3775
    %7930 = vmatprep.subr.bf16.mxu0 %v3772
    %7931 = vmatpush2.bf16.msra.mxu0 %v3771
    %7932 = vmatprep.mubr.bf16.mxu0 %v7201
    %7933 = vmatmul.mubr.bf16.gmra.mxu0 %v7200
    %v7934 = vpop.f32.mrf.mxu0
    %v7935 = vadd.f32 %v7894, %v7934
    %v7936 = vpop.f32.mrf.mxu0
    %v7937 = vadd.f32 %v7896, %v7936
    %v7938 = vpop.f32.mrf.mxu0
    %v7939 = vpop.f32.mrf.mxu0
    %7940 = vdwg.mxu0
    %v7941 = vld [vmem:[%s1605] sm:$0xf]
    %v7944 = vunpack.c.l.s4 1966171168
    %v7945 = vunpack.c.0.s8 %v7944
    %v7946 = vlaneseq
    %v7947 = vshrl.u32 %v7946, 7
    %v7948 = vsub.s32 %v7945, %v7947
    %v7949 = vrot.slane %v7941, %v7948
    %v7950 = vcombine.high %v7949, %v7949
    %v7952 = vunpack.c.l.s4 1966171168
    %v7953 = vunpack.c.0.s8 %v7952
    %v7954 = vlaneseq
    %v7955 = vshrl.u32 %v7954, 7
    %v7956 = vsub.s32 %v7953, %v7955
    %v7957 = vrot.slane %v7949, %v7956
    %v7959 = vunpack.c.l.s4 1966171168
    %v7960 = vunpack.c.0.s8 %v7959
    %v7961 = vlaneseq
    %v7962 = vshrl.u32 %v7961, 7
    %v7963 = vsub.s32 %v7960, %v7962
    %v7964 = vrot.slane %v7950, %v7963
    %v7965 = vcombine.high %v7957, %v7957
    %v7966 = vcombine.high %v7964, %v7964
    %7971 = vmatprep.subr.bf16.mxu0 %v4665
    %7972 = vmatpush1.bf16.msra.mxu0 %v4664
    %7973 = vmatprep.subr.bf16.mxu0 %v4661
    %7974 = vmatpush1.bf16.msra.mxu0 %v4660
    %7975 = vmatprep.subr.bf16.mxu0 %v4657
    %7976 = vmatpush1.bf16.msra.mxu0 %v4656
    %7977 = vmatprep.subr.bf16.mxu0 %v4653
    %7978 = vmatpush1.bf16.msra.mxu0 %v4652
    %7979 = vmatprep.subr.bf16.mxu0 %v4649
    %7980 = vmatpush1.bf16.msra.mxu0 %v4648
    %7981 = vmatprep.subr.bf16.mxu0 %v4645
    %7982 = vmatpush1.bf16.msra.mxu0 %v4644
    %7983 = vmatprep.subr.bf16.mxu0 %v4641
    %7984 = vmatpush1.bf16.msra.mxu0 %v4640
    %7985 = vmatprep.subr.bf16.mxu0 %v4637
    %7986 = vmatpush1.bf16.msra.mxu0 %v4636
    %7987 = vmatprep.subr.bf16.mxu0 %v4697
    %7988 = vmatpush2.bf16.msra.mxu0 %v4696
    %7989 = vmatprep.subr.bf16.mxu0 %v4693
    %7990 = vmatpush2.bf16.msra.mxu0 %v4692
    %7991 = vmatprep.subr.bf16.mxu0 %v4689
    %7992 = vmatpush2.bf16.msra.mxu0 %v4688
    %7993 = vmatprep.subr.bf16.mxu0 %v4685
    %7994 = vmatpush2.bf16.msra.mxu0 %v4684
    %7995 = vmatprep.subr.bf16.mxu0 %v4681
    %7996 = vmatpush2.bf16.msra.mxu0 %v4680
    %7997 = vmatprep.subr.bf16.mxu0 %v4677
    %7998 = vmatpush2.bf16.msra.mxu0 %v4676
    %7999 = vmatprep.subr.bf16.mxu0 %v4673
    %8000 = vmatpush2.bf16.msra.mxu0 %v4672
    %8001 = vmatprep.subr.bf16.mxu0 %v4669
    %8002 = vmatpush2.bf16.msra.mxu0 %v4668
    %8003 = vmatprep.mubr.bf16.mxu0 %v7964
    %8004 = vmatmul.mubr.bf16.gmra.mxu0 %v7957
    %v8005 = vpop.f32.mrf.mxu0
    %v8006 = vadd.f32 0.0, %v8005
    %v8007 = vpop.f32.mrf.mxu0
    %v8008 = vadd.f32 0.0, %v8007
    %v8009 = vpop.f32.mrf.mxu0
    %v8010 = vpop.f32.mrf.mxu0
    %8011 = vdwg.mxu0
    %8012 = vmatprep.subr.bf16.mxu0 %v4729
    %8013 = vmatpush1.bf16.msra.mxu0 %v4728
    %8014 = vmatprep.subr.bf16.mxu0 %v4725
    %8015 = vmatpush1.bf16.msra.mxu0 %v4724
    %8016 = vmatprep.subr.bf16.mxu0 %v4721
    %8017 = vmatpush1.bf16.msra.mxu0 %v4720
    %8018 = vmatprep.subr.bf16.mxu0 %v4717
    %8019 = vmatpush1.bf16.msra.mxu0 %v4716
    %8020 = vmatprep.subr.bf16.mxu0 %v4713
    %8021 = vmatpush1.bf16.msra.mxu0 %v4712
    %8022 = vmatprep.subr.bf16.mxu0 %v4709
    %8023 = vmatpush1.bf16.msra.mxu0 %v4708
    %8024 = vmatprep.subr.bf16.mxu0 %v4705
    %8025 = vmatpush1.bf16.msra.mxu0 %v4704
    %8026 = vmatprep.subr.bf16.mxu0 %v4701
    %8027 = vmatpush1.bf16.msra.mxu0 %v4700
    %8028 = vmatprep.subr.bf16.mxu0 %v4761
    %8029 = vmatpush2.bf16.msra.mxu0 %v4760
    %8030 = vmatprep.subr.bf16.mxu0 %v4757
    %8031 = vmatpush2.bf16.msra.mxu0 %v4756
    %8032 = vmatprep.subr.bf16.mxu0 %v4753
    %8033 = vmatpush2.bf16.msra.mxu0 %v4752
    %8034 = vmatprep.subr.bf16.mxu0 %v4749
    %8035 = vmatpush2.bf16.msra.mxu0 %v4748
    %8036 = vmatprep.subr.bf16.mxu0 %v4745
    %8037 = vmatpush2.bf16.msra.mxu0 %v4744
    %8038 = vmatprep.subr.bf16.mxu0 %v4741
    %8039 = vmatpush2.bf16.msra.mxu0 %v4740
    %8040 = vmatprep.subr.bf16.mxu0 %v4737
    %8041 = vmatpush2.bf16.msra.mxu0 %v4736
    %8042 = vmatprep.subr.bf16.mxu0 %v4733
    %8043 = vmatpush2.bf16.msra.mxu0 %v4732
    %8044 = vmatprep.mubr.bf16.mxu0 %v7966
    %8045 = vmatmul.mubr.bf16.gmra.mxu0 %v7965
    %v8046 = vpop.f32.mrf.mxu0
    %v8047 = vadd.f32 %v8006, %v8046
    %v8048 = vpop.f32.mrf.mxu0
    %v8049 = vadd.f32 %v8008, %v8048
    %v8050 = vpop.f32.mrf.mxu0
    %v8051 = vpop.f32.mrf.mxu0
    %8052 = vdwg.mxu0
    %8053 = vmatprep.subr.bf16.mxu0 %v4667
    %8054 = vmatpush1.bf16.msra.mxu0 %v4666
    %8055 = vmatprep.subr.bf16.mxu0 %v4663
    %8056 = vmatpush1.bf16.msra.mxu0 %v4662
    %8057 = vmatprep.subr.bf16.mxu0 %v4659
    %8058 = vmatpush1.bf16.msra.mxu0 %v4658
    %8059 = vmatprep.subr.bf16.mxu0 %v4655
    %8060 = vmatpush1.bf16.msra.mxu0 %v4654
    %8061 = vmatprep.subr.bf16.mxu0 %v4651
    %8062 = vmatpush1.bf16.msra.mxu0 %v4650
    %8063 = vmatprep.subr.bf16.mxu0 %v4647
    %8064 = vmatpush1.bf16.msra.mxu0 %v4646
    %8065 = vmatprep.subr.bf16.mxu0 %v4643
    %8066 = vmatpush1.bf16.msra.mxu0 %v4642
    %8067 = vmatprep.subr.bf16.mxu0 %v4639
    %8068 = vmatpush1.bf16.msra.mxu0 %v4638
    %8069 = vmatprep.subr.bf16.mxu0 %v4699
    %8070 = vmatpush2.bf16.msra.mxu0 %v4698
    %8071 = vmatprep.subr.bf16.mxu0 %v4695
    %8072 = vmatpush2.bf16.msra.mxu0 %v4694
    %8073 = vmatprep.subr.bf16.mxu0 %v4691
    %8074 = vmatpush2.bf16.msra.mxu0 %v4690
    %8075 = vmatprep.subr.bf16.mxu0 %v4687
    %8076 = vmatpush2.bf16.msra.mxu0 %v4686
    %8077 = vmatprep.subr.bf16.mxu0 %v4683
    %8078 = vmatpush2.bf16.msra.mxu0 %v4682
    %8079 = vmatprep.subr.bf16.mxu0 %v4679
    %8080 = vmatpush2.bf16.msra.mxu0 %v4678
    %8081 = vmatprep.subr.bf16.mxu0 %v4675
    %8082 = vmatpush2.bf16.msra.mxu0 %v4674
    %8083 = vmatprep.subr.bf16.mxu0 %v4671
    %8084 = vmatpush2.bf16.msra.mxu0 %v4670
    %8085 = vmatprep.mubr.bf16.mxu0 %v7964
    %8086 = vmatmul.mubr.bf16.gmra.mxu0 %v7957
    %v8087 = vpop.f32.mrf.mxu0
    %v8088 = vadd.f32 0.0, %v8087
    %v8089 = vpop.f32.mrf.mxu0
    %v8090 = vadd.f32 0.0, %v8089
    %v8091 = vpop.f32.mrf.mxu0
    %v8092 = vpop.f32.mrf.mxu0
    %8093 = vdwg.mxu0
    %8094 = vmatprep.subr.bf16.mxu0 %v4731
    %8095 = vmatpush1.bf16.msra.mxu0 %v4730
    %8096 = vmatprep.subr.bf16.mxu0 %v4727
    %8097 = vmatpush1.bf16.msra.mxu0 %v4726
    %8098 = vmatprep.subr.bf16.mxu0 %v4723
    %8099 = vmatpush1.bf16.msra.mxu0 %v4722
    %8100 = vmatprep.subr.bf16.mxu0 %v4719
    %8101 = vmatpush1.bf16.msra.mxu0 %v4718
    %8102 = vmatprep.subr.bf16.mxu0 %v4715
    %8103 = vmatpush1.bf16.msra.mxu0 %v4714
    %8104 = vmatprep.subr.bf16.mxu0 %v4711
    %8105 = vmatpush1.bf16.msra.mxu0 %v4710
    %8106 = vmatprep.subr.bf16.mxu0 %v4707
    %8107 = vmatpush1.bf16.msra.mxu0 %v4706
    %8108 = vmatprep.subr.bf16.mxu0 %v4703
    %8109 = vmatpush1.bf16.msra.mxu0 %v4702
    %8110 = vmatprep.subr.bf16.mxu0 %v4763
    %8111 = vmatpush2.bf16.msra.mxu0 %v4762
    %8112 = vmatprep.subr.bf16.mxu0 %v4759
    %8113 = vmatpush2.bf16.msra.mxu0 %v4758
    %8114 = vmatprep.subr.bf16.mxu0 %v4755
    %8115 = vmatpush2.bf16.msra.mxu0 %v4754
    %8116 = vmatprep.subr.bf16.mxu0 %v4751
    %8117 = vmatpush2.bf16.msra.mxu0 %v4750
    %8118 = vmatprep.subr.bf16.mxu0 %v4747
    %8119 = vmatpush2.bf16.msra.mxu0 %v4746
    %8120 = vmatprep.subr.bf16.mxu0 %v4743
    %8121 = vmatpush2.bf16.msra.mxu0 %v4742
    %8122 = vmatprep.subr.bf16.mxu0 %v4739
    %8123 = vmatpush2.bf16.msra.mxu0 %v4738
    %8124 = vmatprep.subr.bf16.mxu0 %v4735
    %8125 = vmatpush2.bf16.msra.mxu0 %v4734
    %8126 = vmatprep.mubr.bf16.mxu0 %v7966
    %8127 = vmatmul.mubr.bf16.gmra.mxu0 %v7965
    %v8128 = vpop.f32.mrf.mxu0
    %v8129 = vadd.f32 %v8088, %v8128
    %v8130 = vpop.f32.mrf.mxu0
    %v8131 = vadd.f32 %v8090, %v8130
    %v8132 = vpop.f32.mrf.mxu0
    %v8133 = vpop.f32.mrf.mxu0
    %8134 = vdwg.mxu0
    %v8135 = vadd.f32 %v7853, %v8047
    %v8136 = vadd.f32 %v7855, %v8049
    %v8137 = vadd.f32 %v7935, %v8129
    %v8138 = vadd.f32 %v7937, %v8131
    %v8139 = vadd.f32 %v8135, %v5064
    %v8140 = vadd.f32 %v8136, %v5068
    %v8141 = vadd.f32 %v8137, %v5072
    %v8142 = vadd.f32 %v8138, %v5076
    %v8143 = vmax.f32 %v8139, 0.0
    %v8144 = vmax.f32 %v8140, 0.0
    %v8145 = vmax.f32 %v8141, 0.0
    %v8146 = vmax.f32 %v8142, 0.0
    %s8147 = scalar_lea.vmem %s5, 1792
    %v8148 = vld [vmem:[%s8147] sm:$0xff]
    %v8149 = vld [vmem:[%s8147 + $0x8] sm:$0xff]
    %v8150 = vld [vmem:[%s8147 + $0x10] sm:$0xff]
    %v8151 = vld [vmem:[%s8147 + $0x18] sm:$0xff]
    %v8152 = vld [vmem:[%s8147 + $0x20] sm:$0xff]
    %v8153 = vld [vmem:[%s8147 + $0x28] sm:$0xff]
    %v8154 = vld [vmem:[%s8147 + $0x30] sm:$0xff]
    %v8155 = vld [vmem:[%s8147 + $0x38] sm:$0xff]
    %v8156 = vld [vmem:[%s8147 + $0x40] sm:$0xff]
    %v8157 = vld [vmem:[%s8147 + $0x48] sm:$0xff]
    %v8158 = vld [vmem:[%s8147 + $0x50] sm:$0xff]
    %v8159 = vld [vmem:[%s8147 + $0x58] sm:$0xff]
    %v8160 = vld [vmem:[%s8147 + $0x60] sm:$0xff]
    %v8161 = vld [vmem:[%s8147 + $0x68] sm:$0xff]
    %v8162 = vld [vmem:[%s8147 + $0x70] sm:$0xff]
    %v8163 = vld [vmem:[%s8147 + $0x78] sm:$0xff]
    %v8164 = vld [vmem:[%s8147 + $0x80] sm:$0xff]
    %v8165 = vld [vmem:[%s8147 + $0x88] sm:$0xff]
    %v8166 = vld [vmem:[%s8147 + $0x90] sm:$0xff]
    %v8167 = vld [vmem:[%s8147 + $0x98] sm:$0xff]
    %v8168 = vld [vmem:[%s8147 + $0xa0] sm:$0xff]
    %v8169 = vld [vmem:[%s8147 + $0xa8] sm:$0xff]
    %v8170 = vld [vmem:[%s8147 + $0xb0] sm:$0xff]
    %v8171 = vld [vmem:[%s8147 + $0xb8] sm:$0xff]
    %v8172 = vld [vmem:[%s8147 + $0xc0] sm:$0xff]
    %v8173 = vld [vmem:[%s8147 + $0xc8] sm:$0xff]
    %v8174 = vld [vmem:[%s8147 + $0xd0] sm:$0xff]
    %v8175 = vld [vmem:[%s8147 + $0xd8] sm:$0xff]
    %v8176 = vld [vmem:[%s8147 + $0xe0] sm:$0xff]
    %v8177 = vld [vmem:[%s8147 + $0xe8] sm:$0xff]
    %v8178 = vld [vmem:[%s8147 + $0xf0] sm:$0xff]
    %v8179 = vld [vmem:[%s8147 + $0xf8] sm:$0xff]
    %v8180 = vld [vmem:[%s8147 + $0x100] sm:$0xff]
    %v8181 = vld [vmem:[%s8147 + $0x108] sm:$0xff]
    %v8182 = vld [vmem:[%s8147 + $0x110] sm:$0xff]
    %v8183 = vld [vmem:[%s8147 + $0x118] sm:$0xff]
    %v8184 = vld [vmem:[%s8147 + $0x120] sm:$0xff]
    %v8185 = vld [vmem:[%s8147 + $0x128] sm:$0xff]
    %v8186 = vld [vmem:[%s8147 + $0x130] sm:$0xff]
    %v8187 = vld [vmem:[%s8147 + $0x138] sm:$0xff]
    %v8188 = vld [vmem:[%s8147 + $0x140] sm:$0xff]
    %v8189 = vld [vmem:[%s8147 + $0x148] sm:$0xff]
    %v8190 = vld [vmem:[%s8147 + $0x150] sm:$0xff]
    %v8191 = vld [vmem:[%s8147 + $0x158] sm:$0xff]
    %v8192 = vld [vmem:[%s8147 + $0x160] sm:$0xff]
    %v8193 = vld [vmem:[%s8147 + $0x168] sm:$0xff]
    %v8194 = vld [vmem:[%s8147 + $0x170] sm:$0xff]
    %v8195 = vld [vmem:[%s8147 + $0x178] sm:$0xff]
    %v8196 = vld [vmem:[%s8147 + $0x180] sm:$0xff]
    %v8197 = vld [vmem:[%s8147 + $0x188] sm:$0xff]
    %v8198 = vld [vmem:[%s8147 + $0x190] sm:$0xff]
    %v8199 = vld [vmem:[%s8147 + $0x198] sm:$0xff]
    %v8200 = vld [vmem:[%s8147 + $0x1a0] sm:$0xff]
    %v8201 = vld [vmem:[%s8147 + $0x1a8] sm:$0xff]
    %v8202 = vld [vmem:[%s8147 + $0x1b0] sm:$0xff]
    %v8203 = vld [vmem:[%s8147 + $0x1b8] sm:$0xff]
    %v8205 = vsel %vm5766, %v8146, 0
    %8207 = vmatprep.subr.mxu0 0.0
    %8208 = vmatpush1.msra.mxu0 %v8163
    %8209 = vmatprep.subr.mxu0 0.0
    %8210 = vmatpush1.msra.mxu0 %v8162
    %8211 = vmatprep.subr.mxu0 0.0
    %8212 = vmatpush1.msra.mxu0 %v8161
    %8213 = vmatprep.subr.mxu0 0.0
    %8214 = vmatpush1.msra.mxu0 %v8160
    %8215 = vmatprep.subr.mxu0 0.0
    %8216 = vmatpush1.msra.mxu0 %v8159
    %8217 = vmatprep.subr.mxu0 0.0
    %8218 = vmatpush1.msra.mxu0 %v8158
    %8219 = vmatprep.subr.mxu0 0.0
    %8220 = vmatpush1.msra.mxu0 %v8157
    %8221 = vmatprep.subr.mxu0 0.0
    %8222 = vmatpush1.msra.mxu0 %v8156
    %8223 = vmatprep.subr.mxu0 0.0
    %8224 = vmatpush1.msra.mxu0 %v8155
    %8225 = vmatprep.subr.mxu0 0.0
    %8226 = vmatpush1.msra.mxu0 %v8154
    %8227 = vmatprep.subr.mxu0 0.0
    %8228 = vmatpush1.msra.mxu0 %v8153
    %8229 = vmatprep.subr.mxu0 0.0
    %8230 = vmatpush1.msra.mxu0 %v8152
    %8231 = vmatprep.subr.mxu0 0.0
    %8232 = vmatpush1.msra.mxu0 %v8151
    %8233 = vmatprep.subr.mxu0 0.0
    %8234 = vmatpush1.msra.mxu0 %v8150
    %8235 = vmatprep.subr.mxu0 0.0
    %8236 = vmatpush1.msra.mxu0 %v8149
    %8237 = vmatprep.subr.mxu0 0.0
    %8238 = vmatpush1.msra.mxu0 %v8148
    %8239 = vmatprep.subr.mxu0 0.0
    %8240 = vmatpush2.msra.mxu0 %v8179
    %8241 = vmatprep.subr.mxu0 0.0
    %8242 = vmatpush2.msra.mxu0 %v8178
    %8243 = vmatprep.subr.mxu0 0.0
    %8244 = vmatpush2.msra.mxu0 %v8177
    %8245 = vmatprep.subr.mxu0 0.0
    %8246 = vmatpush2.msra.mxu0 %v8176
    %8247 = vmatprep.subr.mxu0 0.0
    %8248 = vmatpush2.msra.mxu0 %v8175
    %8249 = vmatprep.subr.mxu0 0.0
    %8250 = vmatpush2.msra.mxu0 %v8174
    %8251 = vmatprep.subr.mxu0 0.0
    %8252 = vmatpush2.msra.mxu0 %v8173
    %8253 = vmatprep.subr.mxu0 0.0
    %8254 = vmatpush2.msra.mxu0 %v8172
    %8255 = vmatprep.subr.mxu0 0.0
    %8256 = vmatpush2.msra.mxu0 %v8171
    %8257 = vmatprep.subr.mxu0 0.0
    %8258 = vmatpush2.msra.mxu0 %v8170
    %8259 = vmatprep.subr.mxu0 0.0
    %8260 = vmatpush2.msra.mxu0 %v8169
    %8261 = vmatprep.subr.mxu0 0.0
    %8262 = vmatpush2.msra.mxu0 %v8168
    %8263 = vmatprep.subr.mxu0 0.0
    %8264 = vmatpush2.msra.mxu0 %v8167
    %8265 = vmatprep.subr.mxu0 0.0
    %8266 = vmatpush2.msra.mxu0 %v8166
    %8267 = vmatprep.subr.mxu0 0.0
    %8268 = vmatpush2.msra.mxu0 %v8165
    %8269 = vmatprep.subr.mxu0 0.0
    %8270 = vmatpush2.msra.mxu0 %v8164
    %8271 = vmatprep.mubr.f32.mxu0 %v8144
    %8272 = vmatmul.mubr.f32.gmra.mxu0 %v8143
    %v8273 = vpop.f32.mrf.mxu0
    %v8274 = vadd.f32 0.0, %v8273
    %v8275 = vpop.f32.mrf.mxu0
    %8276 = vdwg.mxu0
    %8277 = vmatprep.subr.mxu0 0.0
    %8278 = vmatpush1.msra.mxu0 %v8195
    %8279 = vmatprep.subr.mxu0 0.0
    %8280 = vmatpush1.msra.mxu0 %v8194
    %8281 = vmatprep.subr.mxu0 0.0
    %8282 = vmatpush1.msra.mxu0 %v8193
    %8283 = vmatprep.subr.mxu0 0.0
    %8284 = vmatpush1.msra.mxu0 %v8192
    %8285 = vmatprep.subr.mxu0 0.0
    %8286 = vmatpush1.msra.mxu0 %v8191
    %8287 = vmatprep.subr.mxu0 0.0
    %8288 = vmatpush1.msra.mxu0 %v8190
    %8289 = vmatprep.subr.mxu0 0.0
    %8290 = vmatpush1.msra.mxu0 %v8189
    %8291 = vmatprep.subr.mxu0 0.0
    %8292 = vmatpush1.msra.mxu0 %v8188
    %8293 = vmatprep.subr.mxu0 0.0
    %8294 = vmatpush1.msra.mxu0 %v8187
    %8295 = vmatprep.subr.mxu0 0.0
    %8296 = vmatpush1.msra.mxu0 %v8186
    %8297 = vmatprep.subr.mxu0 0.0
    %8298 = vmatpush1.msra.mxu0 %v8185
    %8299 = vmatprep.subr.mxu0 0.0
    %8300 = vmatpush1.msra.mxu0 %v8184
    %8301 = vmatprep.subr.mxu0 0.0
    %8302 = vmatpush1.msra.mxu0 %v8183
    %8303 = vmatprep.subr.mxu0 0.0
    %8304 = vmatpush1.msra.mxu0 %v8182
    %8305 = vmatprep.subr.mxu0 0.0
    %8306 = vmatpush1.msra.mxu0 %v8181
    %8307 = vmatprep.subr.mxu0 0.0
    %8308 = vmatpush1.msra.mxu0 %v8180
    %8309 = vmatprep.subr.mxu0 0.0
    %8310 = vmatpush2.msra.mxu0 0.0
    %8311 = vmatprep.subr.mxu0 0.0
    %8312 = vmatpush2.msra.mxu0 0.0
    %8313 = vmatprep.subr.mxu0 0.0
    %8314 = vmatpush2.msra.mxu0 0.0
    %8315 = vmatprep.subr.mxu0 0.0
    %8316 = vmatpush2.msra.mxu0 0.0
    %8317 = vmatprep.subr.mxu0 0.0
    %8318 = vmatpush2.msra.mxu0 0.0
    %8319 = vmatprep.subr.mxu0 0.0
    %8320 = vmatpush2.msra.mxu0 0.0
    %8321 = vmatprep.subr.mxu0 0.0
    %8322 = vmatpush2.msra.mxu0 0.0
    %8323 = vmatprep.subr.mxu0 0.0
    %8324 = vmatpush2.msra.mxu0 0.0
    %8325 = vmatprep.subr.mxu0 0.0
    %8326 = vmatpush2.msra.mxu0 %v8203
    %8327 = vmatprep.subr.mxu0 0.0
    %8328 = vmatpush2.msra.mxu0 %v8202
    %8329 = vmatprep.subr.mxu0 0.0
    %8330 = vmatpush2.msra.mxu0 %v8201
    %8331 = vmatprep.subr.mxu0 0.0
    %8332 = vmatpush2.msra.mxu0 %v8200
    %8333 = vmatprep.subr.mxu0 0.0
    %8334 = vmatpush2.msra.mxu0 %v8199
    %8335 = vmatprep.subr.mxu0 0.0
    %8336 = vmatpush2.msra.mxu0 %v8198
    %8337 = vmatprep.subr.mxu0 0.0
    %8338 = vmatpush2.msra.mxu0 %v8197
    %8339 = vmatprep.subr.mxu0 0.0
    %8340 = vmatpush2.msra.mxu0 %v8196
    %8341 = vmatprep.mubr.f32.mxu0 %v8205
    %8342 = vmatmul.mubr.f32.gmra.mxu0 %v8145
    %v8343 = vpop.f32.mrf.mxu0
    %v8344 = vadd.f32 %v8274, %v8343
    %v8345 = vpop.f32.mrf.mxu0
    %8346 = vdwg.mxu0
    %v8347 = vadd.f32 %v7582, %v8344
    %v8348 = vld [vmem:[%s1745] sm:$0xf]
    %v8351 = vunpack.c.l.s4 1966171168
    %v8352 = vunpack.c.0.s8 %v8351
    %v8353 = vlaneseq
    %v8354 = vshrl.u32 %v8353, 7
    %v8355 = vsub.s32 %v8352, %v8354
    %v8356 = vrot.slane %v8348, %v8355
    %v8357 = vcombine.high %v8356, %v8356
    %v8359 = vunpack.c.l.s4 1966171168
    %v8360 = vunpack.c.0.s8 %v8359
    %v8361 = vlaneseq
    %v8362 = vshrl.u32 %v8361, 7
    %v8363 = vsub.s32 %v8360, %v8362
    %v8364 = vrot.slane %v8356, %v8363
    %v8366 = vunpack.c.l.s4 1966171168
    %v8367 = vunpack.c.0.s8 %v8366
    %v8368 = vlaneseq
    %v8369 = vshrl.u32 %v8368, 7
    %v8370 = vsub.s32 %v8367, %v8369
    %v8371 = vrot.slane %v8357, %v8370
    %v8372 = vcombine.high %v8364, %v8364
    %v8373 = vcombine.high %v8371, %v8371
    %8378 = vmatprep.subr.bf16.mxu0 %v2869
    %8379 = vmatpush1.bf16.msra.mxu0 %v2868
    %8380 = vmatprep.subr.bf16.mxu0 %v2865
    %8381 = vmatpush1.bf16.msra.mxu0 %v2864
    %8382 = vmatprep.subr.bf16.mxu0 %v2861
    %8383 = vmatpush1.bf16.msra.mxu0 %v2860
    %8384 = vmatprep.subr.bf16.mxu0 %v2857
    %8385 = vmatpush1.bf16.msra.mxu0 %v2856
    %8386 = vmatprep.subr.bf16.mxu0 %v2853
    %8387 = vmatpush1.bf16.msra.mxu0 %v2852
    %8388 = vmatprep.subr.bf16.mxu0 %v2849
    %8389 = vmatpush1.bf16.msra.mxu0 %v2848
    %8390 = vmatprep.subr.bf16.mxu0 %v2845
    %8391 = vmatpush1.bf16.msra.mxu0 %v2844
    %8392 = vmatprep.subr.bf16.mxu0 %v2841
    %8393 = vmatpush1.bf16.msra.mxu0 %v2840
    %8394 = vmatprep.subr.bf16.mxu0 %v2901
    %8395 = vmatpush2.bf16.msra.mxu0 %v2900
    %8396 = vmatprep.subr.bf16.mxu0 %v2897
    %8397 = vmatpush2.bf16.msra.mxu0 %v2896
    %8398 = vmatprep.subr.bf16.mxu0 %v2893
    %8399 = vmatpush2.bf16.msra.mxu0 %v2892
    %8400 = vmatprep.subr.bf16.mxu0 %v2889
    %8401 = vmatpush2.bf16.msra.mxu0 %v2888
    %8402 = vmatprep.subr.bf16.mxu0 %v2885
    %8403 = vmatpush2.bf16.msra.mxu0 %v2884
    %8404 = vmatprep.subr.bf16.mxu0 %v2881
    %8405 = vmatpush2.bf16.msra.mxu0 %v2880
    %8406 = vmatprep.subr.bf16.mxu0 %v2877
    %8407 = vmatpush2.bf16.msra.mxu0 %v2876
    %8408 = vmatprep.subr.bf16.mxu0 %v2873
    %8409 = vmatpush2.bf16.msra.mxu0 %v2872
    %8410 = vmatprep.mubr.bf16.mxu0 %v8371
    %8411 = vmatmul.mubr.bf16.gmra.mxu0 %v8364
    %v8412 = vpop.f32.mrf.mxu0
    %v8413 = vadd.f32 0.0, %v8412
    %v8414 = vpop.f32.mrf.mxu0
    %v8415 = vadd.f32 0.0, %v8414
    %v8416 = vpop.f32.mrf.mxu0
    %v8417 = vpop.f32.mrf.mxu0
    %8418 = vdwg.mxu0
    %8419 = vmatprep.subr.bf16.mxu0 %v2933
    %8420 = vmatpush1.bf16.msra.mxu0 %v2932
    %8421 = vmatprep.subr.bf16.mxu0 %v2929
    %8422 = vmatpush1.bf16.msra.mxu0 %v2928
    %8423 = vmatprep.subr.bf16.mxu0 %v2925
    %8424 = vmatpush1.bf16.msra.mxu0 %v2924
    %8425 = vmatprep.subr.bf16.mxu0 %v2921
    %8426 = vmatpush1.bf16.msra.mxu0 %v2920
    %8427 = vmatprep.subr.bf16.mxu0 %v2917
    %8428 = vmatpush1.bf16.msra.mxu0 %v2916
    %8429 = vmatprep.subr.bf16.mxu0 %v2913
    %8430 = vmatpush1.bf16.msra.mxu0 %v2912
    %8431 = vmatprep.subr.bf16.mxu0 %v2909
    %8432 = vmatpush1.bf16.msra.mxu0 %v2908
    %8433 = vmatprep.subr.bf16.mxu0 %v2905
    %8434 = vmatpush1.bf16.msra.mxu0 %v2904
    %8435 = vmatprep.subr.bf16.mxu0 %v2965
    %8436 = vmatpush2.bf16.msra.mxu0 %v2964
    %8437 = vmatprep.subr.bf16.mxu0 %v2961
    %8438 = vmatpush2.bf16.msra.mxu0 %v2960
    %8439 = vmatprep.subr.bf16.mxu0 %v2957
    %8440 = vmatpush2.bf16.msra.mxu0 %v2956
    %8441 = vmatprep.subr.bf16.mxu0 %v2953
    %8442 = vmatpush2.bf16.msra.mxu0 %v2952
    %8443 = vmatprep.subr.bf16.mxu0 %v2949
    %8444 = vmatpush2.bf16.msra.mxu0 %v2948
    %8445 = vmatprep.subr.bf16.mxu0 %v2945
    %8446 = vmatpush2.bf16.msra.mxu0 %v2944
    %8447 = vmatprep.subr.bf16.mxu0 %v2941
    %8448 = vmatpush2.bf16.msra.mxu0 %v2940
    %8449 = vmatprep.subr.bf16.mxu0 %v2937
    %8450 = vmatpush2.bf16.msra.mxu0 %v2936
    %8451 = vmatprep.mubr.bf16.mxu0 %v8373
    %8452 = vmatmul.mubr.bf16.gmra.mxu0 %v8372
    %v8453 = vpop.f32.mrf.mxu0
    %v8454 = vadd.f32 %v8413, %v8453
    %v8455 = vpop.f32.mrf.mxu0
    %v8456 = vadd.f32 %v8415, %v8455
    %v8457 = vpop.f32.mrf.mxu0
    %v8458 = vpop.f32.mrf.mxu0
    %8459 = vdwg.mxu0
    %8460 = vmatprep.subr.bf16.mxu0 %v2871
    %8461 = vmatpush1.bf16.msra.mxu0 %v2870
    %8462 = vmatprep.subr.bf16.mxu0 %v2867
    %8463 = vmatpush1.bf16.msra.mxu0 %v2866
    %8464 = vmatprep.subr.bf16.mxu0 %v2863
    %8465 = vmatpush1.bf16.msra.mxu0 %v2862
    %8466 = vmatprep.subr.bf16.mxu0 %v2859
    %8467 = vmatpush1.bf16.msra.mxu0 %v2858
    %8468 = vmatprep.subr.bf16.mxu0 %v2855
    %8469 = vmatpush1.bf16.msra.mxu0 %v2854
    %8470 = vmatprep.subr.bf16.mxu0 %v2851
    %8471 = vmatpush1.bf16.msra.mxu0 %v2850
    %8472 = vmatprep.subr.bf16.mxu0 %v2847
    %8473 = vmatpush1.bf16.msra.mxu0 %v2846
    %8474 = vmatprep.subr.bf16.mxu0 %v2843
    %8475 = vmatpush1.bf16.msra.mxu0 %v2842
    %8476 = vmatprep.subr.bf16.mxu0 %v2903
    %8477 = vmatpush2.bf16.msra.mxu0 %v2902
    %8478 = vmatprep.subr.bf16.mxu0 %v2899
    %8479 = vmatpush2.bf16.msra.mxu0 %v2898
    %8480 = vmatprep.subr.bf16.mxu0 %v2895
    %8481 = vmatpush2.bf16.msra.mxu0 %v2894
    %8482 = vmatprep.subr.bf16.mxu0 %v2891
    %8483 = vmatpush2.bf16.msra.mxu0 %v2890
    %8484 = vmatprep.subr.bf16.mxu0 %v2887
    %8485 = vmatpush2.bf16.msra.mxu0 %v2886
    %8486 = vmatprep.subr.bf16.mxu0 %v2883
    %8487 = vmatpush2.bf16.msra.mxu0 %v2882
    %8488 = vmatprep.subr.bf16.mxu0 %v2879
    %8489 = vmatpush2.bf16.msra.mxu0 %v2878
    %8490 = vmatprep.subr.bf16.mxu0 %v2875
    %8491 = vmatpush2.bf16.msra.mxu0 %v2874
    %8492 = vmatprep.mubr.bf16.mxu0 %v8371
    %8493 = vmatmul.mubr.bf16.gmra.mxu0 %v8364
    %v8494 = vpop.f32.mrf.mxu0
    %v8495 = vadd.f32 0.0, %v8494
    %v8496 = vpop.f32.mrf.mxu0
    %v8497 = vadd.f32 0.0, %v8496
    %v8498 = vpop.f32.mrf.mxu0
    %v8499 = vpop.f32.mrf.mxu0
    %8500 = vdwg.mxu0
    %8501 = vmatprep.subr.bf16.mxu0 %v2935
    %8502 = vmatpush1.bf16.msra.mxu0 %v2934
    %8503 = vmatprep.subr.bf16.mxu0 %v2931
    %8504 = vmatpush1.bf16.msra.mxu0 %v2930
    %8505 = vmatprep.subr.bf16.mxu0 %v2927
    %8506 = vmatpush1.bf16.msra.mxu0 %v2926
    %8507 = vmatprep.subr.bf16.mxu0 %v2923
    %8508 = vmatpush1.bf16.msra.mxu0 %v2922
    %8509 = vmatprep.subr.bf16.mxu0 %v2919
    %8510 = vmatpush1.bf16.msra.mxu0 %v2918
    %8511 = vmatprep.subr.bf16.mxu0 %v2915
    %8512 = vmatpush1.bf16.msra.mxu0 %v2914
    %8513 = vmatprep.subr.bf16.mxu0 %v2911
    %8514 = vmatpush1.bf16.msra.mxu0 %v2910
    %8515 = vmatprep.subr.bf16.mxu0 %v2907
    %8516 = vmatpush1.bf16.msra.mxu0 %v2906
    %8517 = vmatprep.subr.bf16.mxu0 %v2967
    %8518 = vmatpush2.bf16.msra.mxu0 %v2966
    %8519 = vmatprep.subr.bf16.mxu0 %v2963
    %8520 = vmatpush2.bf16.msra.mxu0 %v2962
    %8521 = vmatprep.subr.bf16.mxu0 %v2959
    %8522 = vmatpush2.bf16.msra.mxu0 %v2958
    %8523 = vmatprep.subr.bf16.mxu0 %v2955
    %8524 = vmatpush2.bf16.msra.mxu0 %v2954
    %8525 = vmatprep.subr.bf16.mxu0 %v2951
    %8526 = vmatpush2.bf16.msra.mxu0 %v2950
    %8527 = vmatprep.subr.bf16.mxu0 %v2947
    %8528 = vmatpush2.bf16.msra.mxu0 %v2946
    %8529 = vmatprep.subr.bf16.mxu0 %v2943
    %8530 = vmatpush2.bf16.msra.mxu0 %v2942
    %8531 = vmatprep.subr.bf16.mxu0 %v2939
    %8532 = vmatpush2.bf16.msra.mxu0 %v2938
    %8533 = vmatprep.mubr.bf16.mxu0 %v8373
    %8534 = vmatmul.mubr.bf16.gmra.mxu0 %v8372
    %v8535 = vpop.f32.mrf.mxu0
    %v8536 = vadd.f32 %v8495, %v8535
    %v8537 = vpop.f32.mrf.mxu0
    %v8538 = vadd.f32 %v8497, %v8537
    %v8539 = vpop.f32.mrf.mxu0
    %v8540 = vpop.f32.mrf.mxu0
    %8541 = vdwg.mxu0
    %8542 = vmatprep.subr.bf16.mxu0 %v3702
    %8543 = vmatpush1.bf16.msra.mxu0 %v3701
    %8544 = vmatprep.subr.bf16.mxu0 %v3698
    %8545 = vmatpush1.bf16.msra.mxu0 %v3697
    %8546 = vmatprep.subr.bf16.mxu0 %v3694
    %8547 = vmatpush1.bf16.msra.mxu0 %v3693
    %8548 = vmatprep.subr.bf16.mxu0 %v3690
    %8549 = vmatpush1.bf16.msra.mxu0 %v3689
    %8550 = vmatprep.subr.bf16.mxu0 %v3686
    %8551 = vmatpush1.bf16.msra.mxu0 %v3685
    %8552 = vmatprep.subr.bf16.mxu0 %v3682
    %8553 = vmatpush1.bf16.msra.mxu0 %v3681
    %8554 = vmatprep.subr.bf16.mxu0 %v3678
    %8555 = vmatpush1.bf16.msra.mxu0 %v3677
    %8556 = vmatprep.subr.bf16.mxu0 %v3674
    %8557 = vmatpush1.bf16.msra.mxu0 %v3673
    %8558 = vmatprep.subr.bf16.mxu0 %v3734
    %8559 = vmatpush2.bf16.msra.mxu0 %v3733
    %8560 = vmatprep.subr.bf16.mxu0 %v3730
    %8561 = vmatpush2.bf16.msra.mxu0 %v3729
    %8562 = vmatprep.subr.bf16.mxu0 %v3726
    %8563 = vmatpush2.bf16.msra.mxu0 %v3725
    %8564 = vmatprep.subr.bf16.mxu0 %v3722
    %8565 = vmatpush2.bf16.msra.mxu0 %v3721
    %8566 = vmatprep.subr.bf16.mxu0 %v3718
    %8567 = vmatpush2.bf16.msra.mxu0 %v3717
    %8568 = vmatprep.subr.bf16.mxu0 %v3714
    %8569 = vmatpush2.bf16.msra.mxu0 %v3713
    %8570 = vmatprep.subr.bf16.mxu0 %v3710
    %8571 = vmatpush2.bf16.msra.mxu0 %v3709
    %8572 = vmatprep.subr.bf16.mxu0 %v3706
    %8573 = vmatpush2.bf16.msra.mxu0 %v3705
    %8574 = vmatprep.mubr.bf16.mxu0 %v7964
    %8575 = vmatmul.mubr.bf16.gmra.mxu0 %v7957
    %v8576 = vpop.f32.mrf.mxu0
    %v8577 = vadd.f32 %v8454, %v8576
    %v8578 = vpop.f32.mrf.mxu0
    %v8579 = vadd.f32 %v8456, %v8578
    %v8580 = vpop.f32.mrf.mxu0
    %v8581 = vpop.f32.mrf.mxu0
    %8582 = vdwg.mxu0
    %8583 = vmatprep.subr.bf16.mxu0 %v3766
    %8584 = vmatpush1.bf16.msra.mxu0 %v3765
    %8585 = vmatprep.subr.bf16.mxu0 %v3762
    %8586 = vmatpush1.bf16.msra.mxu0 %v3761
    %8587 = vmatprep.subr.bf16.mxu0 %v3758
    %8588 = vmatpush1.bf16.msra.mxu0 %v3757
    %8589 = vmatprep.subr.bf16.mxu0 %v3754
    %8590 = vmatpush1.bf16.msra.mxu0 %v3753
    %8591 = vmatprep.subr.bf16.mxu0 %v3750
    %8592 = vmatpush1.bf16.msra.mxu0 %v3749
    %8593 = vmatprep.subr.bf16.mxu0 %v3746
    %8594 = vmatpush1.bf16.msra.mxu0 %v3745
    %8595 = vmatprep.subr.bf16.mxu0 %v3742
    %8596 = vmatpush1.bf16.msra.mxu0 %v3741
    %8597 = vmatprep.subr.bf16.mxu0 %v3738
    %8598 = vmatpush1.bf16.msra.mxu0 %v3737
    %8599 = vmatprep.subr.bf16.mxu0 %v3798
    %8600 = vmatpush2.bf16.msra.mxu0 %v3797
    %8601 = vmatprep.subr.bf16.mxu0 %v3794
    %8602 = vmatpush2.bf16.msra.mxu0 %v3793
    %8603 = vmatprep.subr.bf16.mxu0 %v3790
    %8604 = vmatpush2.bf16.msra.mxu0 %v3789
    %8605 = vmatprep.subr.bf16.mxu0 %v3786
    %8606 = vmatpush2.bf16.msra.mxu0 %v3785
    %8607 = vmatprep.subr.bf16.mxu0 %v3782
    %8608 = vmatpush2.bf16.msra.mxu0 %v3781
    %8609 = vmatprep.subr.bf16.mxu0 %v3778
    %8610 = vmatpush2.bf16.msra.mxu0 %v3777
    %8611 = vmatprep.subr.bf16.mxu0 %v3774
    %8612 = vmatpush2.bf16.msra.mxu0 %v3773
    %8613 = vmatprep.subr.bf16.mxu0 %v3770
    %8614 = vmatpush2.bf16.msra.mxu0 %v3769
    %8615 = vmatprep.mubr.bf16.mxu0 %v7966
    %8616 = vmatmul.mubr.bf16.gmra.mxu0 %v7965
    %v8617 = vpop.f32.mrf.mxu0
    %v8618 = vadd.f32 %v8577, %v8617
    %v8619 = vpop.f32.mrf.mxu0
    %v8620 = vadd.f32 %v8579, %v8619
    %v8621 = vpop.f32.mrf.mxu0
    %v8622 = vpop.f32.mrf.mxu0
    %8623 = vdwg.mxu0
    %8624 = vmatprep.subr.bf16.mxu0 %v3704
    %8625 = vmatpush1.bf16.msra.mxu0 %v3703
    %8626 = vmatprep.subr.bf16.mxu0 %v3700
    %8627 = vmatpush1.bf16.msra.mxu0 %v3699
    %8628 = vmatprep.subr.bf16.mxu0 %v3696
    %8629 = vmatpush1.bf16.msra.mxu0 %v3695
    %8630 = vmatprep.subr.bf16.mxu0 %v3692
    %8631 = vmatpush1.bf16.msra.mxu0 %v3691
    %8632 = vmatprep.subr.bf16.mxu0 %v3688
    %8633 = vmatpush1.bf16.msra.mxu0 %v3687
    %8634 = vmatprep.subr.bf16.mxu0 %v3684
    %8635 = vmatpush1.bf16.msra.mxu0 %v3683
    %8636 = vmatprep.subr.bf16.mxu0 %v3680
    %8637 = vmatpush1.bf16.msra.mxu0 %v3679
    %8638 = vmatprep.subr.bf16.mxu0 %v3676
    %8639 = vmatpush1.bf16.msra.mxu0 %v3675
    %8640 = vmatprep.subr.bf16.mxu0 %v3736
    %8641 = vmatpush2.bf16.msra.mxu0 %v3735
    %8642 = vmatprep.subr.bf16.mxu0 %v3732
    %8643 = vmatpush2.bf16.msra.mxu0 %v3731
    %8644 = vmatprep.subr.bf16.mxu0 %v3728
    %8645 = vmatpush2.bf16.msra.mxu0 %v3727
    %8646 = vmatprep.subr.bf16.mxu0 %v3724
    %8647 = vmatpush2.bf16.msra.mxu0 %v3723
    %8648 = vmatprep.subr.bf16.mxu0 %v3720
    %8649 = vmatpush2.bf16.msra.mxu0 %v3719
    %8650 = vmatprep.subr.bf16.mxu0 %v3716
    %8651 = vmatpush2.bf16.msra.mxu0 %v3715
    %8652 = vmatprep.subr.bf16.mxu0 %v3712
    %8653 = vmatpush2.bf16.msra.mxu0 %v3711
    %8654 = vmatprep.subr.bf16.mxu0 %v3708
    %8655 = vmatpush2.bf16.msra.mxu0 %v3707
    %8656 = vmatprep.mubr.bf16.mxu0 %v7964
    %8657 = vmatmul.mubr.bf16.gmra.mxu0 %v7957
    %v8658 = vpop.f32.mrf.mxu0
    %v8659 = vadd.f32 %v8536, %v8658
    %v8660 = vpop.f32.mrf.mxu0
    %v8661 = vadd.f32 %v8538, %v8660
    %v8662 = vpop.f32.mrf.mxu0
    %v8663 = vpop.f32.mrf.mxu0
    %8664 = vdwg.mxu0
    %8665 = vmatprep.subr.bf16.mxu0 %v3768
    %8666 = vmatpush1.bf16.msra.mxu0 %v3767
    %8667 = vmatprep.subr.bf16.mxu0 %v3764
    %8668 = vmatpush1.bf16.msra.mxu0 %v3763
    %8669 = vmatprep.subr.bf16.mxu0 %v3760
    %8670 = vmatpush1.bf16.msra.mxu0 %v3759
    %8671 = vmatprep.subr.bf16.mxu0 %v3756
    %8672 = vmatpush1.bf16.msra.mxu0 %v3755
    %8673 = vmatprep.subr.bf16.mxu0 %v3752
    %8674 = vmatpush1.bf16.msra.mxu0 %v3751
    %8675 = vmatprep.subr.bf16.mxu0 %v3748
    %8676 = vmatpush1.bf16.msra.mxu0 %v3747
    %8677 = vmatprep.subr.bf16.mxu0 %v3744
    %8678 = vmatpush1.bf16.msra.mxu0 %v3743
    %8679 = vmatprep.subr.bf16.mxu0 %v3740
    %8680 = vmatpush1.bf16.msra.mxu0 %v3739
    %8681 = vmatprep.subr.bf16.mxu0 %v3800
    %8682 = vmatpush2.bf16.msra.mxu0 %v3799
    %8683 = vmatprep.subr.bf16.mxu0 %v3796
    %8684 = vmatpush2.bf16.msra.mxu0 %v3795
    %8685 = vmatprep.subr.bf16.mxu0 %v3792
    %8686 = vmatpush2.bf16.msra.mxu0 %v3791
    %8687 = vmatprep.subr.bf16.mxu0 %v3788
    %8688 = vmatpush2.bf16.msra.mxu0 %v3787
    %8689 = vmatprep.subr.bf16.mxu0 %v3784
    %8690 = vmatpush2.bf16.msra.mxu0 %v3783
    %8691 = vmatprep.subr.bf16.mxu0 %v3780
    %8692 = vmatpush2.bf16.msra.mxu0 %v3779
    %8693 = vmatprep.subr.bf16.mxu0 %v3776
    %8694 = vmatpush2.bf16.msra.mxu0 %v3775
    %8695 = vmatprep.subr.bf16.mxu0 %v3772
    %8696 = vmatpush2.bf16.msra.mxu0 %v3771
    %8697 = vmatprep.mubr.bf16.mxu0 %v7966
    %8698 = vmatmul.mubr.bf16.gmra.mxu0 %v7965
    %v8699 = vpop.f32.mrf.mxu0
    %v8700 = vadd.f32 %v8659, %v8699
    %v8701 = vpop.f32.mrf.mxu0
    %v8702 = vadd.f32 %v8661, %v8701
    %v8703 = vpop.f32.mrf.mxu0
    %v8704 = vpop.f32.mrf.mxu0
    %8705 = vdwg.mxu0
    %v8706 = vld [vmem:[%s1885] sm:$0xf]
    %v8709 = vunpack.c.l.s4 1966171168
    %v8710 = vunpack.c.0.s8 %v8709
    %v8711 = vlaneseq
    %v8712 = vshrl.u32 %v8711, 7
    %v8713 = vsub.s32 %v8710, %v8712
    %v8714 = vrot.slane %v8706, %v8713
    %v8715 = vcombine.high %v8714, %v8714
    %v8717 = vunpack.c.l.s4 1966171168
    %v8718 = vunpack.c.0.s8 %v8717
    %v8719 = vlaneseq
    %v8720 = vshrl.u32 %v8719, 7
    %v8721 = vsub.s32 %v8718, %v8720
    %v8722 = vrot.slane %v8714, %v8721
    %v8724 = vunpack.c.l.s4 1966171168
    %v8725 = vunpack.c.0.s8 %v8724
    %v8726 = vlaneseq
    %v8727 = vshrl.u32 %v8726, 7
    %v8728 = vsub.s32 %v8725, %v8727
    %v8729 = vrot.slane %v8715, %v8728
    %v8730 = vcombine.high %v8722, %v8722
    %v8731 = vcombine.high %v8729, %v8729
    %8736 = vmatprep.subr.bf16.mxu0 %v4665
    %8737 = vmatpush1.bf16.msra.mxu0 %v4664
    %8738 = vmatprep.subr.bf16.mxu0 %v4661
    %8739 = vmatpush1.bf16.msra.mxu0 %v4660
    %8740 = vmatprep.subr.bf16.mxu0 %v4657
    %8741 = vmatpush1.bf16.msra.mxu0 %v4656
    %8742 = vmatprep.subr.bf16.mxu0 %v4653
    %8743 = vmatpush1.bf16.msra.mxu0 %v4652
    %8744 = vmatprep.subr.bf16.mxu0 %v4649
    %8745 = vmatpush1.bf16.msra.mxu0 %v4648
    %8746 = vmatprep.subr.bf16.mxu0 %v4645
    %8747 = vmatpush1.bf16.msra.mxu0 %v4644
    %8748 = vmatprep.subr.bf16.mxu0 %v4641
    %8749 = vmatpush1.bf16.msra.mxu0 %v4640
    %8750 = vmatprep.subr.bf16.mxu0 %v4637
    %8751 = vmatpush1.bf16.msra.mxu0 %v4636
    %8752 = vmatprep.subr.bf16.mxu0 %v4697
    %8753 = vmatpush2.bf16.msra.mxu0 %v4696
    %8754 = vmatprep.subr.bf16.mxu0 %v4693
    %8755 = vmatpush2.bf16.msra.mxu0 %v4692
    %8756 = vmatprep.subr.bf16.mxu0 %v4689
    %8757 = vmatpush2.bf16.msra.mxu0 %v4688
    %8758 = vmatprep.subr.bf16.mxu0 %v4685
    %8759 = vmatpush2.bf16.msra.mxu0 %v4684
    %8760 = vmatprep.subr.bf16.mxu0 %v4681
    %8761 = vmatpush2.bf16.msra.mxu0 %v4680
    %8762 = vmatprep.subr.bf16.mxu0 %v4677
    %8763 = vmatpush2.bf16.msra.mxu0 %v4676
    %8764 = vmatprep.subr.bf16.mxu0 %v4673
    %8765 = vmatpush2.bf16.msra.mxu0 %v4672
    %8766 = vmatprep.subr.bf16.mxu0 %v4669
    %8767 = vmatpush2.bf16.msra.mxu0 %v4668
    %8768 = vmatprep.mubr.bf16.mxu0 %v8729
    %8769 = vmatmul.mubr.bf16.gmra.mxu0 %v8722
    %v8770 = vpop.f32.mrf.mxu0
    %v8771 = vadd.f32 0.0, %v8770
    %v8772 = vpop.f32.mrf.mxu0
    %v8773 = vadd.f32 0.0, %v8772
    %v8774 = vpop.f32.mrf.mxu0
    %v8775 = vpop.f32.mrf.mxu0
    %8776 = vdwg.mxu0
    %8777 = vmatprep.subr.bf16.mxu0 %v4729
    %8778 = vmatpush1.bf16.msra.mxu0 %v4728
    %8779 = vmatprep.subr.bf16.mxu0 %v4725
    %8780 = vmatpush1.bf16.msra.mxu0 %v4724
    %8781 = vmatprep.subr.bf16.mxu0 %v4721
    %8782 = vmatpush1.bf16.msra.mxu0 %v4720
    %8783 = vmatprep.subr.bf16.mxu0 %v4717
    %8784 = vmatpush1.bf16.msra.mxu0 %v4716
    %8785 = vmatprep.subr.bf16.mxu0 %v4713
    %8786 = vmatpush1.bf16.msra.mxu0 %v4712
    %8787 = vmatprep.subr.bf16.mxu0 %v4709
    %8788 = vmatpush1.bf16.msra.mxu0 %v4708
    %8789 = vmatprep.subr.bf16.mxu0 %v4705
    %8790 = vmatpush1.bf16.msra.mxu0 %v4704
    %8791 = vmatprep.subr.bf16.mxu0 %v4701
    %8792 = vmatpush1.bf16.msra.mxu0 %v4700
    %8793 = vmatprep.subr.bf16.mxu0 %v4761
    %8794 = vmatpush2.bf16.msra.mxu0 %v4760
    %8795 = vmatprep.subr.bf16.mxu0 %v4757
    %8796 = vmatpush2.bf16.msra.mxu0 %v4756
    %8797 = vmatprep.subr.bf16.mxu0 %v4753
    %8798 = vmatpush2.bf16.msra.mxu0 %v4752
    %8799 = vmatprep.subr.bf16.mxu0 %v4749
    %8800 = vmatpush2.bf16.msra.mxu0 %v4748
    %8801 = vmatprep.subr.bf16.mxu0 %v4745
    %8802 = vmatpush2.bf16.msra.mxu0 %v4744
    %8803 = vmatprep.subr.bf16.mxu0 %v4741
    %8804 = vmatpush2.bf16.msra.mxu0 %v4740
    %8805 = vmatprep.subr.bf16.mxu0 %v4737
    %8806 = vmatpush2.bf16.msra.mxu0 %v4736
    %8807 = vmatprep.subr.bf16.mxu0 %v4733
    %8808 = vmatpush2.bf16.msra.mxu0 %v4732
    %8809 = vmatprep.mubr.bf16.mxu0 %v8731
    %8810 = vmatmul.mubr.bf16.gmra.mxu0 %v8730
    %v8811 = vpop.f32.mrf.mxu0
    %v8812 = vadd.f32 %v8771, %v8811
    %v8813 = vpop.f32.mrf.mxu0
    %v8814 = vadd.f32 %v8773, %v8813
    %v8815 = vpop.f32.mrf.mxu0
    %v8816 = vpop.f32.mrf.mxu0
    %8817 = vdwg.mxu0
    %8818 = vmatprep.subr.bf16.mxu0 %v4667
    %8819 = vmatpush1.bf16.msra.mxu0 %v4666
    %8820 = vmatprep.subr.bf16.mxu0 %v4663
    %8821 = vmatpush1.bf16.msra.mxu0 %v4662
    %8822 = vmatprep.subr.bf16.mxu0 %v4659
    %8823 = vmatpush1.bf16.msra.mxu0 %v4658
    %8824 = vmatprep.subr.bf16.mxu0 %v4655
    %8825 = vmatpush1.bf16.msra.mxu0 %v4654
    %8826 = vmatprep.subr.bf16.mxu0 %v4651
    %8827 = vmatpush1.bf16.msra.mxu0 %v4650
    %8828 = vmatprep.subr.bf16.mxu0 %v4647
    %8829 = vmatpush1.bf16.msra.mxu0 %v4646
    %8830 = vmatprep.subr.bf16.mxu0 %v4643
    %8831 = vmatpush1.bf16.msra.mxu0 %v4642
    %8832 = vmatprep.subr.bf16.mxu0 %v4639
    %8833 = vmatpush1.bf16.msra.mxu0 %v4638
    %8834 = vmatprep.subr.bf16.mxu0 %v4699
    %8835 = vmatpush2.bf16.msra.mxu0 %v4698
    %8836 = vmatprep.subr.bf16.mxu0 %v4695
    %8837 = vmatpush2.bf16.msra.mxu0 %v4694
    %8838 = vmatprep.subr.bf16.mxu0 %v4691
    %8839 = vmatpush2.bf16.msra.mxu0 %v4690
    %8840 = vmatprep.subr.bf16.mxu0 %v4687
    %8841 = vmatpush2.bf16.msra.mxu0 %v4686
    %8842 = vmatprep.subr.bf16.mxu0 %v4683
    %8843 = vmatpush2.bf16.msra.mxu0 %v4682
    %8844 = vmatprep.subr.bf16.mxu0 %v4679
    %8845 = vmatpush2.bf16.msra.mxu0 %v4678
    %8846 = vmatprep.subr.bf16.mxu0 %v4675
    %8847 = vmatpush2.bf16.msra.mxu0 %v4674
    %8848 = vmatprep.subr.bf16.mxu0 %v4671
    %8849 = vmatpush2.bf16.msra.mxu0 %v4670
    %8850 = vmatprep.mubr.bf16.mxu0 %v8729
    %8851 = vmatmul.mubr.bf16.gmra.mxu0 %v8722
    %v8852 = vpop.f32.mrf.mxu0
    %v8853 = vadd.f32 0.0, %v8852
    %v8854 = vpop.f32.mrf.mxu0
    %v8855 = vadd.f32 0.0, %v8854
    %v8856 = vpop.f32.mrf.mxu0
    %v8857 = vpop.f32.mrf.mxu0
    %8858 = vdwg.mxu0
    %8859 = vmatprep.subr.bf16.mxu0 %v4731
    %8860 = vmatpush1.bf16.msra.mxu0 %v4730
    %8861 = vmatprep.subr.bf16.mxu0 %v4727
    %8862 = vmatpush1.bf16.msra.mxu0 %v4726
    %8863 = vmatprep.subr.bf16.mxu0 %v4723
    %8864 = vmatpush1.bf16.msra.mxu0 %v4722
    %8865 = vmatprep.subr.bf16.mxu0 %v4719
    %8866 = vmatpush1.bf16.msra.mxu0 %v4718
    %8867 = vmatprep.subr.bf16.mxu0 %v4715
    %8868 = vmatpush1.bf16.msra.mxu0 %v4714
    %8869 = vmatprep.subr.bf16.mxu0 %v4711
    %8870 = vmatpush1.bf16.msra.mxu0 %v4710
    %8871 = vmatprep.subr.bf16.mxu0 %v4707
    %8872 = vmatpush1.bf16.msra.mxu0 %v4706
    %8873 = vmatprep.subr.bf16.mxu0 %v4703
    %8874 = vmatpush1.bf16.msra.mxu0 %v4702
    %8875 = vmatprep.subr.bf16.mxu0 %v4763
    %8876 = vmatpush2.bf16.msra.mxu0 %v4762
    %8877 = vmatprep.subr.bf16.mxu0 %v4759
    %8878 = vmatpush2.bf16.msra.mxu0 %v4758
    %8879 = vmatprep.subr.bf16.mxu0 %v4755
    %8880 = vmatpush2.bf16.msra.mxu0 %v4754
    %8881 = vmatprep.subr.bf16.mxu0 %v4751
    %8882 = vmatpush2.bf16.msra.mxu0 %v4750
    %8883 = vmatprep.subr.bf16.mxu0 %v4747
    %8884 = vmatpush2.bf16.msra.mxu0 %v4746
    %8885 = vmatprep.subr.bf16.mxu0 %v4743
    %8886 = vmatpush2.bf16.msra.mxu0 %v4742
    %8887 = vmatprep.subr.bf16.mxu0 %v4739
    %8888 = vmatpush2.bf16.msra.mxu0 %v4738
    %8889 = vmatprep.subr.bf16.mxu0 %v4735
    %8890 = vmatpush2.bf16.msra.mxu0 %v4734
    %8891 = vmatprep.mubr.bf16.mxu0 %v8731
    %8892 = vmatmul.mubr.bf16.gmra.mxu0 %v8730
    %v8893 = vpop.f32.mrf.mxu0
    %v8894 = vadd.f32 %v8853, %v8893
    %v8895 = vpop.f32.mrf.mxu0
    %v8896 = vadd.f32 %v8855, %v8895
    %v8897 = vpop.f32.mrf.mxu0
    %v8898 = vpop.f32.mrf.mxu0
    %8899 = vdwg.mxu0
    %v8900 = vadd.f32 %v8618, %v8812
    %v8901 = vadd.f32 %v8620, %v8814
    %v8902 = vadd.f32 %v8700, %v8894
    %v8903 = vadd.f32 %v8702, %v8896
    %v8904 = vadd.f32 %v8900, %v5064
    %v8905 = vadd.f32 %v8901, %v5068
    %v8906 = vadd.f32 %v8902, %v5072
    %v8907 = vadd.f32 %v8903, %v5076
    %v8908 = vmax.f32 %v8904, 0.0
    %v8909 = vmax.f32 %v8905, 0.0
    %v8910 = vmax.f32 %v8906, 0.0
    %v8911 = vmax.f32 %v8907, 0.0
    %s8912 = scalar_lea.vmem %s5, 2240
    %v8913 = vld [vmem:[%s8912] sm:$0xff]
    %v8914 = vld [vmem:[%s8912 + $0x8] sm:$0xff]
    %v8915 = vld [vmem:[%s8912 + $0x10] sm:$0xff]
    %v8916 = vld [vmem:[%s8912 + $0x18] sm:$0xff]
    %v8917 = vld [vmem:[%s8912 + $0x20] sm:$0xff]
    %v8918 = vld [vmem:[%s8912 + $0x28] sm:$0xff]
    %v8919 = vld [vmem:[%s8912 + $0x30] sm:$0xff]
    %v8920 = vld [vmem:[%s8912 + $0x38] sm:$0xff]
    %v8921 = vld [vmem:[%s8912 + $0x40] sm:$0xff]
    %v8922 = vld [vmem:[%s8912 + $0x48] sm:$0xff]
    %v8923 = vld [vmem:[%s8912 + $0x50] sm:$0xff]
    %v8924 = vld [vmem:[%s8912 + $0x58] sm:$0xff]
    %v8925 = vld [vmem:[%s8912 + $0x60] sm:$0xff]
    %v8926 = vld [vmem:[%s8912 + $0x68] sm:$0xff]
    %v8927 = vld [vmem:[%s8912 + $0x70] sm:$0xff]
    %v8928 = vld [vmem:[%s8912 + $0x78] sm:$0xff]
    %v8929 = vld [vmem:[%s8912 + $0x80] sm:$0xff]
    %v8930 = vld [vmem:[%s8912 + $0x88] sm:$0xff]
    %v8931 = vld [vmem:[%s8912 + $0x90] sm:$0xff]
    %v8932 = vld [vmem:[%s8912 + $0x98] sm:$0xff]
    %v8933 = vld [vmem:[%s8912 + $0xa0] sm:$0xff]
    %v8934 = vld [vmem:[%s8912 + $0xa8] sm:$0xff]
    %v8935 = vld [vmem:[%s8912 + $0xb0] sm:$0xff]
    %v8936 = vld [vmem:[%s8912 + $0xb8] sm:$0xff]
    %v8937 = vld [vmem:[%s8912 + $0xc0] sm:$0xff]
    %v8938 = vld [vmem:[%s8912 + $0xc8] sm:$0xff]
    %v8939 = vld [vmem:[%s8912 + $0xd0] sm:$0xff]
    %v8940 = vld [vmem:[%s8912 + $0xd8] sm:$0xff]
    %v8941 = vld [vmem:[%s8912 + $0xe0] sm:$0xff]
    %v8942 = vld [vmem:[%s8912 + $0xe8] sm:$0xff]
    %v8943 = vld [vmem:[%s8912 + $0xf0] sm:$0xff]
    %v8944 = vld [vmem:[%s8912 + $0xf8] sm:$0xff]
    %v8945 = vld [vmem:[%s8912 + $0x100] sm:$0xff]
    %v8946 = vld [vmem:[%s8912 + $0x108] sm:$0xff]
    %v8947 = vld [vmem:[%s8912 + $0x110] sm:$0xff]
    %v8948 = vld [vmem:[%s8912 + $0x118] sm:$0xff]
    %v8949 = vld [vmem:[%s8912 + $0x120] sm:$0xff]
    %v8950 = vld [vmem:[%s8912 + $0x128] sm:$0xff]
    %v8951 = vld [vmem:[%s8912 + $0x130] sm:$0xff]
    %v8952 = vld [vmem:[%s8912 + $0x138] sm:$0xff]
    %v8953 = vld [vmem:[%s8912 + $0x140] sm:$0xff]
    %v8954 = vld [vmem:[%s8912 + $0x148] sm:$0xff]
    %v8955 = vld [vmem:[%s8912 + $0x150] sm:$0xff]
    %v8956 = vld [vmem:[%s8912 + $0x158] sm:$0xff]
    %v8957 = vld [vmem:[%s8912 + $0x160] sm:$0xff]
    %v8958 = vld [vmem:[%s8912 + $0x168] sm:$0xff]
    %v8959 = vld [vmem:[%s8912 + $0x170] sm:$0xff]
    %v8960 = vld [vmem:[%s8912 + $0x178] sm:$0xff]
    %v8961 = vld [vmem:[%s8912 + $0x180] sm:$0xff]
    %v8962 = vld [vmem:[%s8912 + $0x188] sm:$0xff]
    %v8963 = vld [vmem:[%s8912 + $0x190] sm:$0xff]
    %v8964 = vld [vmem:[%s8912 + $0x198] sm:$0xff]
    %v8965 = vld [vmem:[%s8912 + $0x1a0] sm:$0xff]
    %v8966 = vld [vmem:[%s8912 + $0x1a8] sm:$0xff]
    %v8967 = vld [vmem:[%s8912 + $0x1b0] sm:$0xff]
    %v8968 = vld [vmem:[%s8912 + $0x1b8] sm:$0xff]
    %v8970 = vsel %vm5766, %v8911, 0
    %8972 = vmatprep.subr.mxu0 0.0
    %8973 = vmatpush1.msra.mxu0 %v8928
    %8974 = vmatprep.subr.mxu0 0.0
    %8975 = vmatpush1.msra.mxu0 %v8927
    %8976 = vmatprep.subr.mxu0 0.0
    %8977 = vmatpush1.msra.mxu0 %v8926
    %8978 = vmatprep.subr.mxu0 0.0
    %8979 = vmatpush1.msra.mxu0 %v8925
    %8980 = vmatprep.subr.mxu0 0.0
    %8981 = vmatpush1.msra.mxu0 %v8924
    %8982 = vmatprep.subr.mxu0 0.0
    %8983 = vmatpush1.msra.mxu0 %v8923
    %8984 = vmatprep.subr.mxu0 0.0
    %8985 = vmatpush1.msra.mxu0 %v8922
    %8986 = vmatprep.subr.mxu0 0.0
    %8987 = vmatpush1.msra.mxu0 %v8921
    %8988 = vmatprep.subr.mxu0 0.0
    %8989 = vmatpush1.msra.mxu0 %v8920
    %8990 = vmatprep.subr.mxu0 0.0
    %8991 = vmatpush1.msra.mxu0 %v8919
    %8992 = vmatprep.subr.mxu0 0.0
    %8993 = vmatpush1.msra.mxu0 %v8918
    %8994 = vmatprep.subr.mxu0 0.0
    %8995 = vmatpush1.msra.mxu0 %v8917
    %8996 = vmatprep.subr.mxu0 0.0
    %8997 = vmatpush1.msra.mxu0 %v8916
    %8998 = vmatprep.subr.mxu0 0.0
    %8999 = vmatpush1.msra.mxu0 %v8915
    %9000 = vmatprep.subr.mxu0 0.0
    %9001 = vmatpush1.msra.mxu0 %v8914
    %9002 = vmatprep.subr.mxu0 0.0
    %9003 = vmatpush1.msra.mxu0 %v8913
    %9004 = vmatprep.subr.mxu0 0.0
    %9005 = vmatpush2.msra.mxu0 %v8944
    %9006 = vmatprep.subr.mxu0 0.0
    %9007 = vmatpush2.msra.mxu0 %v8943
    %9008 = vmatprep.subr.mxu0 0.0
    %9009 = vmatpush2.msra.mxu0 %v8942
    %9010 = vmatprep.subr.mxu0 0.0
    %9011 = vmatpush2.msra.mxu0 %v8941
    %9012 = vmatprep.subr.mxu0 0.0
    %9013 = vmatpush2.msra.mxu0 %v8940
    %9014 = vmatprep.subr.mxu0 0.0
    %9015 = vmatpush2.msra.mxu0 %v8939
    %9016 = vmatprep.subr.mxu0 0.0
    %9017 = vmatpush2.msra.mxu0 %v8938
    %9018 = vmatprep.subr.mxu0 0.0
    %9019 = vmatpush2.msra.mxu0 %v8937
    %9020 = vmatprep.subr.mxu0 0.0
    %9021 = vmatpush2.msra.mxu0 %v8936
    %9022 = vmatprep.subr.mxu0 0.0
    %9023 = vmatpush2.msra.mxu0 %v8935
    %9024 = vmatprep.subr.mxu0 0.0
    %9025 = vmatpush2.msra.mxu0 %v8934
    %9026 = vmatprep.subr.mxu0 0.0
    %9027 = vmatpush2.msra.mxu0 %v8933
    %9028 = vmatprep.subr.mxu0 0.0
    %9029 = vmatpush2.msra.mxu0 %v8932
    %9030 = vmatprep.subr.mxu0 0.0
    %9031 = vmatpush2.msra.mxu0 %v8931
    %9032 = vmatprep.subr.mxu0 0.0
    %9033 = vmatpush2.msra.mxu0 %v8930
    %9034 = vmatprep.subr.mxu0 0.0
    %9035 = vmatpush2.msra.mxu0 %v8929
    %9036 = vmatprep.mubr.f32.mxu0 %v8909
    %9037 = vmatmul.mubr.f32.gmra.mxu0 %v8908
    %v9038 = vpop.f32.mrf.mxu0
    %v9039 = vadd.f32 0.0, %v9038
    %v9040 = vpop.f32.mrf.mxu0
    %9041 = vdwg.mxu0
    %9042 = vmatprep.subr.mxu0 0.0
    %9043 = vmatpush1.msra.mxu0 %v8960
    %9044 = vmatprep.subr.mxu0 0.0
    %9045 = vmatpush1.msra.mxu0 %v8959
    %9046 = vmatprep.subr.mxu0 0.0
    %9047 = vmatpush1.msra.mxu0 %v8958
    %9048 = vmatprep.subr.mxu0 0.0
    %9049 = vmatpush1.msra.mxu0 %v8957
    %9050 = vmatprep.subr.mxu0 0.0
    %9051 = vmatpush1.msra.mxu0 %v8956
    %9052 = vmatprep.subr.mxu0 0.0
    %9053 = vmatpush1.msra.mxu0 %v8955
    %9054 = vmatprep.subr.mxu0 0.0
    %9055 = vmatpush1.msra.mxu0 %v8954
    %9056 = vmatprep.subr.mxu0 0.0
    %9057 = vmatpush1.msra.mxu0 %v8953
    %9058 = vmatprep.subr.mxu0 0.0
    %9059 = vmatpush1.msra.mxu0 %v8952
    %9060 = vmatprep.subr.mxu0 0.0
    %9061 = vmatpush1.msra.mxu0 %v8951
    %9062 = vmatprep.subr.mxu0 0.0
    %9063 = vmatpush1.msra.mxu0 %v8950
    %9064 = vmatprep.subr.mxu0 0.0
    %9065 = vmatpush1.msra.mxu0 %v8949
    %9066 = vmatprep.subr.mxu0 0.0
    %9067 = vmatpush1.msra.mxu0 %v8948
    %9068 = vmatprep.subr.mxu0 0.0
    %9069 = vmatpush1.msra.mxu0 %v8947
    %9070 = vmatprep.subr.mxu0 0.0
    %9071 = vmatpush1.msra.mxu0 %v8946
    %9072 = vmatprep.subr.mxu0 0.0
    %9073 = vmatpush1.msra.mxu0 %v8945
    %9074 = vmatprep.subr.mxu0 0.0
    %9075 = vmatpush2.msra.mxu0 0.0
    %9076 = vmatprep.subr.mxu0 0.0
    %9077 = vmatpush2.msra.mxu0 0.0
    %9078 = vmatprep.subr.mxu0 0.0
    %9079 = vmatpush2.msra.mxu0 0.0
    %9080 = vmatprep.subr.mxu0 0.0
    %9081 = vmatpush2.msra.mxu0 0.0
    %9082 = vmatprep.subr.mxu0 0.0
    %9083 = vmatpush2.msra.mxu0 0.0
    %9084 = vmatprep.subr.mxu0 0.0
    %9085 = vmatpush2.msra.mxu0 0.0
    %9086 = vmatprep.subr.mxu0 0.0
    %9087 = vmatpush2.msra.mxu0 0.0
    %9088 = vmatprep.subr.mxu0 0.0
    %9089 = vmatpush2.msra.mxu0 0.0
    %9090 = vmatprep.subr.mxu0 0.0
    %9091 = vmatpush2.msra.mxu0 %v8968
    %9092 = vmatprep.subr.mxu0 0.0
    %9093 = vmatpush2.msra.mxu0 %v8967
    %9094 = vmatprep.subr.mxu0 0.0
    %9095 = vmatpush2.msra.mxu0 %v8966
    %9096 = vmatprep.subr.mxu0 0.0
    %9097 = vmatpush2.msra.mxu0 %v8965
    %9098 = vmatprep.subr.mxu0 0.0
    %9099 = vmatpush2.msra.mxu0 %v8964
    %9100 = vmatprep.subr.mxu0 0.0
    %9101 = vmatpush2.msra.mxu0 %v8963
    %9102 = vmatprep.subr.mxu0 0.0
    %9103 = vmatpush2.msra.mxu0 %v8962
    %9104 = vmatprep.subr.mxu0 0.0
    %9105 = vmatpush2.msra.mxu0 %v8961
    %9106 = vmatprep.mubr.f32.mxu0 %v8970
    %9107 = vmatmul.mubr.f32.gmra.mxu0 %v8910
    %v9108 = vpop.f32.mrf.mxu0
    %v9109 = vadd.f32 %v9039, %v9108
    %v9110 = vpop.f32.mrf.mxu0
    %9111 = vdwg.mxu0
    %v9112 = vadd.f32 %v8347, %v9109
    %v9113 = vld [vmem:[%s2025] sm:$0xf]
    %v9116 = vunpack.c.l.s4 1966171168
    %v9117 = vunpack.c.0.s8 %v9116
    %v9118 = vlaneseq
    %v9119 = vshrl.u32 %v9118, 7
    %v9120 = vsub.s32 %v9117, %v9119
    %v9121 = vrot.slane %v9113, %v9120
    %v9122 = vcombine.high %v9121, %v9121
    %v9124 = vunpack.c.l.s4 1966171168
    %v9125 = vunpack.c.0.s8 %v9124
    %v9126 = vlaneseq
    %v9127 = vshrl.u32 %v9126, 7
    %v9128 = vsub.s32 %v9125, %v9127
    %v9129 = vrot.slane %v9121, %v9128
    %v9131 = vunpack.c.l.s4 1966171168
    %v9132 = vunpack.c.0.s8 %v9131
    %v9133 = vlaneseq
    %v9134 = vshrl.u32 %v9133, 7
    %v9135 = vsub.s32 %v9132, %v9134
    %v9136 = vrot.slane %v9122, %v9135
    %v9137 = vcombine.high %v9129, %v9129
    %v9138 = vcombine.high %v9136, %v9136
    %9143 = vmatprep.subr.bf16.mxu0 %v2869
    %9144 = vmatpush1.bf16.msra.mxu0 %v2868
    %9145 = vmatprep.subr.bf16.mxu0 %v2865
    %9146 = vmatpush1.bf16.msra.mxu0 %v2864
    %9147 = vmatprep.subr.bf16.mxu0 %v2861
    %9148 = vmatpush1.bf16.msra.mxu0 %v2860
    %9149 = vmatprep.subr.bf16.mxu0 %v2857
    %9150 = vmatpush1.bf16.msra.mxu0 %v2856
    %9151 = vmatprep.subr.bf16.mxu0 %v2853
    %9152 = vmatpush1.bf16.msra.mxu0 %v2852
    %9153 = vmatprep.subr.bf16.mxu0 %v2849
    %9154 = vmatpush1.bf16.msra.mxu0 %v2848
    %9155 = vmatprep.subr.bf16.mxu0 %v2845
    %9156 = vmatpush1.bf16.msra.mxu0 %v2844
    %9157 = vmatprep.subr.bf16.mxu0 %v2841
    %9158 = vmatpush1.bf16.msra.mxu0 %v2840
    %9159 = vmatprep.subr.bf16.mxu0 %v2901
    %9160 = vmatpush2.bf16.msra.mxu0 %v2900
    %9161 = vmatprep.subr.bf16.mxu0 %v2897
    %9162 = vmatpush2.bf16.msra.mxu0 %v2896
    %9163 = vmatprep.subr.bf16.mxu0 %v2893
    %9164 = vmatpush2.bf16.msra.mxu0 %v2892
    %9165 = vmatprep.subr.bf16.mxu0 %v2889
    %9166 = vmatpush2.bf16.msra.mxu0 %v2888
    %9167 = vmatprep.subr.bf16.mxu0 %v2885
    %9168 = vmatpush2.bf16.msra.mxu0 %v2884
    %9169 = vmatprep.subr.bf16.mxu0 %v2881
    %9170 = vmatpush2.bf16.msra.mxu0 %v2880
    %9171 = vmatprep.subr.bf16.mxu0 %v2877
    %9172 = vmatpush2.bf16.msra.mxu0 %v2876
    %9173 = vmatprep.subr.bf16.mxu0 %v2873
    %9174 = vmatpush2.bf16.msra.mxu0 %v2872
    %9175 = vmatprep.mubr.bf16.mxu0 %v9136
    %9176 = vmatmul.mubr.bf16.gmra.mxu0 %v9129
    %v9177 = vpop.f32.mrf.mxu0
    %v9178 = vadd.f32 0.0, %v9177
    %v9179 = vpop.f32.mrf.mxu0
    %v9180 = vadd.f32 0.0, %v9179
    %v9181 = vpop.f32.mrf.mxu0
    %v9182 = vpop.f32.mrf.mxu0
    %9183 = vdwg.mxu0
    %9184 = vmatprep.subr.bf16.mxu0 %v2933
    %9185 = vmatpush1.bf16.msra.mxu0 %v2932
    %9186 = vmatprep.subr.bf16.mxu0 %v2929
    %9187 = vmatpush1.bf16.msra.mxu0 %v2928
    %9188 = vmatprep.subr.bf16.mxu0 %v2925
    %9189 = vmatpush1.bf16.msra.mxu0 %v2924
    %9190 = vmatprep.subr.bf16.mxu0 %v2921
    %9191 = vmatpush1.bf16.msra.mxu0 %v2920
    %9192 = vmatprep.subr.bf16.mxu0 %v2917
    %9193 = vmatpush1.bf16.msra.mxu0 %v2916
    %9194 = vmatprep.subr.bf16.mxu0 %v2913
    %9195 = vmatpush1.bf16.msra.mxu0 %v2912
    %9196 = vmatprep.subr.bf16.mxu0 %v2909
    %9197 = vmatpush1.bf16.msra.mxu0 %v2908
    %9198 = vmatprep.subr.bf16.mxu0 %v2905
    %9199 = vmatpush1.bf16.msra.mxu0 %v2904
    %9200 = vmatprep.subr.bf16.mxu0 %v2965
    %9201 = vmatpush2.bf16.msra.mxu0 %v2964
    %9202 = vmatprep.subr.bf16.mxu0 %v2961
    %9203 = vmatpush2.bf16.msra.mxu0 %v2960
    %9204 = vmatprep.subr.bf16.mxu0 %v2957
    %9205 = vmatpush2.bf16.msra.mxu0 %v2956
    %9206 = vmatprep.subr.bf16.mxu0 %v2953
    %9207 = vmatpush2.bf16.msra.mxu0 %v2952
    %9208 = vmatprep.subr.bf16.mxu0 %v2949
    %9209 = vmatpush2.bf16.msra.mxu0 %v2948
    %9210 = vmatprep.subr.bf16.mxu0 %v2945
    %9211 = vmatpush2.bf16.msra.mxu0 %v2944
    %9212 = vmatprep.subr.bf16.mxu0 %v2941
    %9213 = vmatpush2.bf16.msra.mxu0 %v2940
    %9214 = vmatprep.subr.bf16.mxu0 %v2937
    %9215 = vmatpush2.bf16.msra.mxu0 %v2936
    %9216 = vmatprep.mubr.bf16.mxu0 %v9138
    %9217 = vmatmul.mubr.bf16.gmra.mxu0 %v9137
    %v9218 = vpop.f32.mrf.mxu0
    %v9219 = vadd.f32 %v9178, %v9218
    %v9220 = vpop.f32.mrf.mxu0
    %v9221 = vadd.f32 %v9180, %v9220
    %v9222 = vpop.f32.mrf.mxu0
    %v9223 = vpop.f32.mrf.mxu0
    %9224 = vdwg.mxu0
    %9225 = vmatprep.subr.bf16.mxu0 %v2871
    %9226 = vmatpush1.bf16.msra.mxu0 %v2870
    %9227 = vmatprep.subr.bf16.mxu0 %v2867
    %9228 = vmatpush1.bf16.msra.mxu0 %v2866
    %9229 = vmatprep.subr.bf16.mxu0 %v2863
    %9230 = vmatpush1.bf16.msra.mxu0 %v2862
    %9231 = vmatprep.subr.bf16.mxu0 %v2859
    %9232 = vmatpush1.bf16.msra.mxu0 %v2858
    %9233 = vmatprep.subr.bf16.mxu0 %v2855
    %9234 = vmatpush1.bf16.msra.mxu0 %v2854
    %9235 = vmatprep.subr.bf16.mxu0 %v2851
    %9236 = vmatpush1.bf16.msra.mxu0 %v2850
    %9237 = vmatprep.subr.bf16.mxu0 %v2847
    %9238 = vmatpush1.bf16.msra.mxu0 %v2846
    %9239 = vmatprep.subr.bf16.mxu0 %v2843
    %9240 = vmatpush1.bf16.msra.mxu0 %v2842
    %9241 = vmatprep.subr.bf16.mxu0 %v2903
    %9242 = vmatpush2.bf16.msra.mxu0 %v2902
    %9243 = vmatprep.subr.bf16.mxu0 %v2899
    %9244 = vmatpush2.bf16.msra.mxu0 %v2898
    %9245 = vmatprep.subr.bf16.mxu0 %v2895
    %9246 = vmatpush2.bf16.msra.mxu0 %v2894
    %9247 = vmatprep.subr.bf16.mxu0 %v2891
    %9248 = vmatpush2.bf16.msra.mxu0 %v2890
    %9249 = vmatprep.subr.bf16.mxu0 %v2887
    %9250 = vmatpush2.bf16.msra.mxu0 %v2886
    %9251 = vmatprep.subr.bf16.mxu0 %v2883
    %9252 = vmatpush2.bf16.msra.mxu0 %v2882
    %9253 = vmatprep.subr.bf16.mxu0 %v2879
    %9254 = vmatpush2.bf16.msra.mxu0 %v2878
    %9255 = vmatprep.subr.bf16.mxu0 %v2875
    %9256 = vmatpush2.bf16.msra.mxu0 %v2874
    %9257 = vmatprep.mubr.bf16.mxu0 %v9136
    %9258 = vmatmul.mubr.bf16.gmra.mxu0 %v9129
    %v9259 = vpop.f32.mrf.mxu0
    %v9260 = vadd.f32 0.0, %v9259
    %v9261 = vpop.f32.mrf.mxu0
    %v9262 = vadd.f32 0.0, %v9261
    %v9263 = vpop.f32.mrf.mxu0
    %v9264 = vpop.f32.mrf.mxu0
    %9265 = vdwg.mxu0
    %9266 = vmatprep.subr.bf16.mxu0 %v2935
    %9267 = vmatpush1.bf16.msra.mxu0 %v2934
    %9268 = vmatprep.subr.bf16.mxu0 %v2931
    %9269 = vmatpush1.bf16.msra.mxu0 %v2930
    %9270 = vmatprep.subr.bf16.mxu0 %v2927
    %9271 = vmatpush1.bf16.msra.mxu0 %v2926
    %9272 = vmatprep.subr.bf16.mxu0 %v2923
    %9273 = vmatpush1.bf16.msra.mxu0 %v2922
    %9274 = vmatprep.subr.bf16.mxu0 %v2919
    %9275 = vmatpush1.bf16.msra.mxu0 %v2918
    %9276 = vmatprep.subr.bf16.mxu0 %v2915
    %9277 = vmatpush1.bf16.msra.mxu0 %v2914
    %9278 = vmatprep.subr.bf16.mxu0 %v2911
    %9279 = vmatpush1.bf16.msra.mxu0 %v2910
    %9280 = vmatprep.subr.bf16.mxu0 %v2907
    %9281 = vmatpush1.bf16.msra.mxu0 %v2906
    %9282 = vmatprep.subr.bf16.mxu0 %v2967
    %9283 = vmatpush2.bf16.msra.mxu0 %v2966
    %9284 = vmatprep.subr.bf16.mxu0 %v2963
    %9285 = vmatpush2.bf16.msra.mxu0 %v2962
    %9286 = vmatprep.subr.bf16.mxu0 %v2959
    %9287 = vmatpush2.bf16.msra.mxu0 %v2958
    %9288 = vmatprep.subr.bf16.mxu0 %v2955
    %9289 = vmatpush2.bf16.msra.mxu0 %v2954
    %9290 = vmatprep.subr.bf16.mxu0 %v2951
    %9291 = vmatpush2.bf16.msra.mxu0 %v2950
    %9292 = vmatprep.subr.bf16.mxu0 %v2947
    %9293 = vmatpush2.bf16.msra.mxu0 %v2946
    %9294 = vmatprep.subr.bf16.mxu0 %v2943
    %9295 = vmatpush2.bf16.msra.mxu0 %v2942
    %9296 = vmatprep.subr.bf16.mxu0 %v2939
    %9297 = vmatpush2.bf16.msra.mxu0 %v2938
    %9298 = vmatprep.mubr.bf16.mxu0 %v9138
    %9299 = vmatmul.mubr.bf16.gmra.mxu0 %v9137
    %v9300 = vpop.f32.mrf.mxu0
    %v9301 = vadd.f32 %v9260, %v9300
    %v9302 = vpop.f32.mrf.mxu0
    %v9303 = vadd.f32 %v9262, %v9302
    %v9304 = vpop.f32.mrf.mxu0
    %v9305 = vpop.f32.mrf.mxu0
    %9306 = vdwg.mxu0
    %9307 = vmatprep.subr.bf16.mxu0 %v3702
    %9308 = vmatpush1.bf16.msra.mxu0 %v3701
    %9309 = vmatprep.subr.bf16.mxu0 %v3698
    %9310 = vmatpush1.bf16.msra.mxu0 %v3697
    %9311 = vmatprep.subr.bf16.mxu0 %v3694
    %9312 = vmatpush1.bf16.msra.mxu0 %v3693
    %9313 = vmatprep.subr.bf16.mxu0 %v3690
    %9314 = vmatpush1.bf16.msra.mxu0 %v3689
    %9315 = vmatprep.subr.bf16.mxu0 %v3686
    %9316 = vmatpush1.bf16.msra.mxu0 %v3685
    %9317 = vmatprep.subr.bf16.mxu0 %v3682
    %9318 = vmatpush1.bf16.msra.mxu0 %v3681
    %9319 = vmatprep.subr.bf16.mxu0 %v3678
    %9320 = vmatpush1.bf16.msra.mxu0 %v3677
    %9321 = vmatprep.subr.bf16.mxu0 %v3674
    %9322 = vmatpush1.bf16.msra.mxu0 %v3673
    %9323 = vmatprep.subr.bf16.mxu0 %v3734
    %9324 = vmatpush2.bf16.msra.mxu0 %v3733
    %9325 = vmatprep.subr.bf16.mxu0 %v3730
    %9326 = vmatpush2.bf16.msra.mxu0 %v3729
    %9327 = vmatprep.subr.bf16.mxu0 %v3726
    %9328 = vmatpush2.bf16.msra.mxu0 %v3725
    %9329 = vmatprep.subr.bf16.mxu0 %v3722
    %9330 = vmatpush2.bf16.msra.mxu0 %v3721
    %9331 = vmatprep.subr.bf16.mxu0 %v3718
    %9332 = vmatpush2.bf16.msra.mxu0 %v3717
    %9333 = vmatprep.subr.bf16.mxu0 %v3714
    %9334 = vmatpush2.bf16.msra.mxu0 %v3713
    %9335 = vmatprep.subr.bf16.mxu0 %v3710
    %9336 = vmatpush2.bf16.msra.mxu0 %v3709
    %9337 = vmatprep.subr.bf16.mxu0 %v3706
    %9338 = vmatpush2.bf16.msra.mxu0 %v3705
    %9339 = vmatprep.mubr.bf16.mxu0 %v8729
    %9340 = vmatmul.mubr.bf16.gmra.mxu0 %v8722
    %v9341 = vpop.f32.mrf.mxu0
    %v9342 = vadd.f32 %v9219, %v9341
    %v9343 = vpop.f32.mrf.mxu0
    %v9344 = vadd.f32 %v9221, %v9343
    %v9345 = vpop.f32.mrf.mxu0
    %v9346 = vpop.f32.mrf.mxu0
    %9347 = vdwg.mxu0
    %9348 = vmatprep.subr.bf16.mxu0 %v3766
    %9349 = vmatpush1.bf16.msra.mxu0 %v3765
    %9350 = vmatprep.subr.bf16.mxu0 %v3762
    %9351 = vmatpush1.bf16.msra.mxu0 %v3761
    %9352 = vmatprep.subr.bf16.mxu0 %v3758
    %9353 = vmatpush1.bf16.msra.mxu0 %v3757
    %9354 = vmatprep.subr.bf16.mxu0 %v3754
    %9355 = vmatpush1.bf16.msra.mxu0 %v3753
    %9356 = vmatprep.subr.bf16.mxu0 %v3750
    %9357 = vmatpush1.bf16.msra.mxu0 %v3749
    %9358 = vmatprep.subr.bf16.mxu0 %v3746
    %9359 = vmatpush1.bf16.msra.mxu0 %v3745
    %9360 = vmatprep.subr.bf16.mxu0 %v3742
    %9361 = vmatpush1.bf16.msra.mxu0 %v3741
    %9362 = vmatprep.subr.bf16.mxu0 %v3738
    %9363 = vmatpush1.bf16.msra.mxu0 %v3737
    %9364 = vmatprep.subr.bf16.mxu0 %v3798
    %9365 = vmatpush2.bf16.msra.mxu0 %v3797
    %9366 = vmatprep.subr.bf16.mxu0 %v3794
    %9367 = vmatpush2.bf16.msra.mxu0 %v3793
    %9368 = vmatprep.subr.bf16.mxu0 %v3790
    %9369 = vmatpush2.bf16.msra.mxu0 %v3789
    %9370 = vmatprep.subr.bf16.mxu0 %v3786
    %9371 = vmatpush2.bf16.msra.mxu0 %v3785
    %9372 = vmatprep.subr.bf16.mxu0 %v3782
    %9373 = vmatpush2.bf16.msra.mxu0 %v3781
    %9374 = vmatprep.subr.bf16.mxu0 %v3778
    %9375 = vmatpush2.bf16.msra.mxu0 %v3777
    %9376 = vmatprep.subr.bf16.mxu0 %v3774
    %9377 = vmatpush2.bf16.msra.mxu0 %v3773
    %9378 = vmatprep.subr.bf16.mxu0 %v3770
    %9379 = vmatpush2.bf16.msra.mxu0 %v3769
    %9380 = vmatprep.mubr.bf16.mxu0 %v8731
    %9381 = vmatmul.mubr.bf16.gmra.mxu0 %v8730
    %v9382 = vpop.f32.mrf.mxu0
    %v9383 = vadd.f32 %v9342, %v9382
    %v9384 = vpop.f32.mrf.mxu0
    %v9385 = vadd.f32 %v9344, %v9384
    %v9386 = vpop.f32.mrf.mxu0
    %v9387 = vpop.f32.mrf.mxu0
    %9388 = vdwg.mxu0
    %9389 = vmatprep.subr.bf16.mxu0 %v3704
    %9390 = vmatpush1.bf16.msra.mxu0 %v3703
    %9391 = vmatprep.subr.bf16.mxu0 %v3700
    %9392 = vmatpush1.bf16.msra.mxu0 %v3699
    %9393 = vmatprep.subr.bf16.mxu0 %v3696
    %9394 = vmatpush1.bf16.msra.mxu0 %v3695
    %9395 = vmatprep.subr.bf16.mxu0 %v3692
    %9396 = vmatpush1.bf16.msra.mxu0 %v3691
    %9397 = vmatprep.subr.bf16.mxu0 %v3688
    %9398 = vmatpush1.bf16.msra.mxu0 %v3687
    %9399 = vmatprep.subr.bf16.mxu0 %v3684
    %9400 = vmatpush1.bf16.msra.mxu0 %v3683
    %9401 = vmatprep.subr.bf16.mxu0 %v3680
    %9402 = vmatpush1.bf16.msra.mxu0 %v3679
    %9403 = vmatprep.subr.bf16.mxu0 %v3676
    %9404 = vmatpush1.bf16.msra.mxu0 %v3675
    %9405 = vmatprep.subr.bf16.mxu0 %v3736
    %9406 = vmatpush2.bf16.msra.mxu0 %v3735
    %9407 = vmatprep.subr.bf16.mxu0 %v3732
    %9408 = vmatpush2.bf16.msra.mxu0 %v3731
    %9409 = vmatprep.subr.bf16.mxu0 %v3728
    %9410 = vmatpush2.bf16.msra.mxu0 %v3727
    %9411 = vmatprep.subr.bf16.mxu0 %v3724
    %9412 = vmatpush2.bf16.msra.mxu0 %v3723
    %9413 = vmatprep.subr.bf16.mxu0 %v3720
    %9414 = vmatpush2.bf16.msra.mxu0 %v3719
    %9415 = vmatprep.subr.bf16.mxu0 %v3716
    %9416 = vmatpush2.bf16.msra.mxu0 %v3715
    %9417 = vmatprep.subr.bf16.mxu0 %v3712
    %9418 = vmatpush2.bf16.msra.mxu0 %v3711
    %9419 = vmatprep.subr.bf16.mxu0 %v3708
    %9420 = vmatpush2.bf16.msra.mxu0 %v3707
    %9421 = vmatprep.mubr.bf16.mxu0 %v8729
    %9422 = vmatmul.mubr.bf16.gmra.mxu0 %v8722
    %v9423 = vpop.f32.mrf.mxu0
    %v9424 = vadd.f32 %v9301, %v9423
    %v9425 = vpop.f32.mrf.mxu0
    %v9426 = vadd.f32 %v9303, %v9425
    %v9427 = vpop.f32.mrf.mxu0
    %v9428 = vpop.f32.mrf.mxu0
    %9429 = vdwg.mxu0
    %9430 = vmatprep.subr.bf16.mxu0 %v3768
    %9431 = vmatpush1.bf16.msra.mxu0 %v3767
    %9432 = vmatprep.subr.bf16.mxu0 %v3764
    %9433 = vmatpush1.bf16.msra.mxu0 %v3763
    %9434 = vmatprep.subr.bf16.mxu0 %v3760
    %9435 = vmatpush1.bf16.msra.mxu0 %v3759
    %9436 = vmatprep.subr.bf16.mxu0 %v3756
    %9437 = vmatpush1.bf16.msra.mxu0 %v3755
    %9438 = vmatprep.subr.bf16.mxu0 %v3752
    %9439 = vmatpush1.bf16.msra.mxu0 %v3751
    %9440 = vmatprep.subr.bf16.mxu0 %v3748
    %9441 = vmatpush1.bf16.msra.mxu0 %v3747
    %9442 = vmatprep.subr.bf16.mxu0 %v3744
    %9443 = vmatpush1.bf16.msra.mxu0 %v3743
    %9444 = vmatprep.subr.bf16.mxu0 %v3740
    %9445 = vmatpush1.bf16.msra.mxu0 %v3739
    %9446 = vmatprep.subr.bf16.mxu0 %v3800
    %9447 = vmatpush2.bf16.msra.mxu0 %v3799
    %9448 = vmatprep.subr.bf16.mxu0 %v3796
    %9449 = vmatpush2.bf16.msra.mxu0 %v3795
    %9450 = vmatprep.subr.bf16.mxu0 %v3792
    %9451 = vmatpush2.bf16.msra.mxu0 %v3791
    %9452 = vmatprep.subr.bf16.mxu0 %v3788
    %9453 = vmatpush2.bf16.msra.mxu0 %v3787
    %9454 = vmatprep.subr.bf16.mxu0 %v3784
    %9455 = vmatpush2.bf16.msra.mxu0 %v3783
    %9456 = vmatprep.subr.bf16.mxu0 %v3780
    %9457 = vmatpush2.bf16.msra.mxu0 %v3779
    %9458 = vmatprep.subr.bf16.mxu0 %v3776
    %9459 = vmatpush2.bf16.msra.mxu0 %v3775
    %9460 = vmatprep.subr.bf16.mxu0 %v3772
    %9461 = vmatpush2.bf16.msra.mxu0 %v3771
    %9462 = vmatprep.mubr.bf16.mxu0 %v8731
    %9463 = vmatmul.mubr.bf16.gmra.mxu0 %v8730
    %v9464 = vpop.f32.mrf.mxu0
    %v9465 = vadd.f32 %v9424, %v9464
    %v9466 = vpop.f32.mrf.mxu0
    %v9467 = vadd.f32 %v9426, %v9466
    %v9468 = vpop.f32.mrf.mxu0
    %v9469 = vpop.f32.mrf.mxu0
    %9470 = vdwg.mxu0
    %v9471 = vld [vmem:[%s2165] sm:$0xf]
    %v9474 = vunpack.c.l.s4 1966171168
    %v9475 = vunpack.c.0.s8 %v9474
    %v9476 = vlaneseq
    %v9477 = vshrl.u32 %v9476, 7
    %v9478 = vsub.s32 %v9475, %v9477
    %v9479 = vrot.slane %v9471, %v9478
    %v9480 = vcombine.high %v9479, %v9479
    %v9482 = vunpack.c.l.s4 1966171168
    %v9483 = vunpack.c.0.s8 %v9482
    %v9484 = vlaneseq
    %v9485 = vshrl.u32 %v9484, 7
    %v9486 = vsub.s32 %v9483, %v9485
    %v9487 = vrot.slane %v9479, %v9486
    %v9489 = vunpack.c.l.s4 1966171168
    %v9490 = vunpack.c.0.s8 %v9489
    %v9491 = vlaneseq
    %v9492 = vshrl.u32 %v9491, 7
    %v9493 = vsub.s32 %v9490, %v9492
    %v9494 = vrot.slane %v9480, %v9493
    %v9495 = vcombine.high %v9487, %v9487
    %v9496 = vcombine.high %v9494, %v9494
    %9501 = vmatprep.subr.bf16.mxu0 %v4665
    %9502 = vmatpush1.bf16.msra.mxu0 %v4664
    %9503 = vmatprep.subr.bf16.mxu0 %v4661
    %9504 = vmatpush1.bf16.msra.mxu0 %v4660
    %9505 = vmatprep.subr.bf16.mxu0 %v4657
    %9506 = vmatpush1.bf16.msra.mxu0 %v4656
    %9507 = vmatprep.subr.bf16.mxu0 %v4653
    %9508 = vmatpush1.bf16.msra.mxu0 %v4652
    %9509 = vmatprep.subr.bf16.mxu0 %v4649
    %9510 = vmatpush1.bf16.msra.mxu0 %v4648
    %9511 = vmatprep.subr.bf16.mxu0 %v4645
    %9512 = vmatpush1.bf16.msra.mxu0 %v4644
    %9513 = vmatprep.subr.bf16.mxu0 %v4641
    %9514 = vmatpush1.bf16.msra.mxu0 %v4640
    %9515 = vmatprep.subr.bf16.mxu0 %v4637
    %9516 = vmatpush1.bf16.msra.mxu0 %v4636
    %9517 = vmatprep.subr.bf16.mxu0 %v4697
    %9518 = vmatpush2.bf16.msra.mxu0 %v4696
    %9519 = vmatprep.subr.bf16.mxu0 %v4693
    %9520 = vmatpush2.bf16.msra.mxu0 %v4692
    %9521 = vmatprep.subr.bf16.mxu0 %v4689
    %9522 = vmatpush2.bf16.msra.mxu0 %v4688
    %9523 = vmatprep.subr.bf16.mxu0 %v4685
    %9524 = vmatpush2.bf16.msra.mxu0 %v4684
    %9525 = vmatprep.subr.bf16.mxu0 %v4681
    %9526 = vmatpush2.bf16.msra.mxu0 %v4680
    %9527 = vmatprep.subr.bf16.mxu0 %v4677
    %9528 = vmatpush2.bf16.msra.mxu0 %v4676
    %9529 = vmatprep.subr.bf16.mxu0 %v4673
    %9530 = vmatpush2.bf16.msra.mxu0 %v4672
    %9531 = vmatprep.subr.bf16.mxu0 %v4669
    %9532 = vmatpush2.bf16.msra.mxu0 %v4668
    %9533 = vmatprep.mubr.bf16.mxu0 %v9494
    %9534 = vmatmul.mubr.bf16.gmra.mxu0 %v9487
    %v9535 = vpop.f32.mrf.mxu0
    %v9536 = vadd.f32 0.0, %v9535
    %v9537 = vpop.f32.mrf.mxu0
    %v9538 = vadd.f32 0.0, %v9537
    %v9539 = vpop.f32.mrf.mxu0
    %v9540 = vpop.f32.mrf.mxu0
    %9541 = vdwg.mxu0
    %9542 = vmatprep.subr.bf16.mxu0 %v4729
    %9543 = vmatpush1.bf16.msra.mxu0 %v4728
    %9544 = vmatprep.subr.bf16.mxu0 %v4725
    %9545 = vmatpush1.bf16.msra.mxu0 %v4724
    %9546 = vmatprep.subr.bf16.mxu0 %v4721
    %9547 = vmatpush1.bf16.msra.mxu0 %v4720
    %9548 = vmatprep.subr.bf16.mxu0 %v4717
    %9549 = vmatpush1.bf16.msra.mxu0 %v4716
    %9550 = vmatprep.subr.bf16.mxu0 %v4713
    %9551 = vmatpush1.bf16.msra.mxu0 %v4712
    %9552 = vmatprep.subr.bf16.mxu0 %v4709
    %9553 = vmatpush1.bf16.msra.mxu0 %v4708
    %9554 = vmatprep.subr.bf16.mxu0 %v4705
    %9555 = vmatpush1.bf16.msra.mxu0 %v4704
    %9556 = vmatprep.subr.bf16.mxu0 %v4701
    %9557 = vmatpush1.bf16.msra.mxu0 %v4700
    %9558 = vmatprep.subr.bf16.mxu0 %v4761
    %9559 = vmatpush2.bf16.msra.mxu0 %v4760
    %9560 = vmatprep.subr.bf16.mxu0 %v4757
    %9561 = vmatpush2.bf16.msra.mxu0 %v4756
    %9562 = vmatprep.subr.bf16.mxu0 %v4753
    %9563 = vmatpush2.bf16.msra.mxu0 %v4752
    %9564 = vmatprep.subr.bf16.mxu0 %v4749
    %9565 = vmatpush2.bf16.msra.mxu0 %v4748
    %9566 = vmatprep.subr.bf16.mxu0 %v4745
    %9567 = vmatpush2.bf16.msra.mxu0 %v4744
    %9568 = vmatprep.subr.bf16.mxu0 %v4741
    %9569 = vmatpush2.bf16.msra.mxu0 %v4740
    %9570 = vmatprep.subr.bf16.mxu0 %v4737
    %9571 = vmatpush2.bf16.msra.mxu0 %v4736
    %9572 = vmatprep.subr.bf16.mxu0 %v4733
    %9573 = vmatpush2.bf16.msra.mxu0 %v4732
    %9574 = vmatprep.mubr.bf16.mxu0 %v9496
    %9575 = vmatmul.mubr.bf16.gmra.mxu0 %v9495
    %v9576 = vpop.f32.mrf.mxu0
    %v9577 = vadd.f32 %v9536, %v9576
    %v9578 = vpop.f32.mrf.mxu0
    %v9579 = vadd.f32 %v9538, %v9578
    %v9580 = vpop.f32.mrf.mxu0
    %v9581 = vpop.f32.mrf.mxu0
    %9582 = vdwg.mxu0
    %9583 = vmatprep.subr.bf16.mxu0 %v4667
    %9584 = vmatpush1.bf16.msra.mxu0 %v4666
    %9585 = vmatprep.subr.bf16.mxu0 %v4663
    %9586 = vmatpush1.bf16.msra.mxu0 %v4662
    %9587 = vmatprep.subr.bf16.mxu0 %v4659
    %9588 = vmatpush1.bf16.msra.mxu0 %v4658
    %9589 = vmatprep.subr.bf16.mxu0 %v4655
    %9590 = vmatpush1.bf16.msra.mxu0 %v4654
    %9591 = vmatprep.subr.bf16.mxu0 %v4651
    %9592 = vmatpush1.bf16.msra.mxu0 %v4650
    %9593 = vmatprep.subr.bf16.mxu0 %v4647
    %9594 = vmatpush1.bf16.msra.mxu0 %v4646
    %9595 = vmatprep.subr.bf16.mxu0 %v4643
    %9596 = vmatpush1.bf16.msra.mxu0 %v4642
    %9597 = vmatprep.subr.bf16.mxu0 %v4639
    %9598 = vmatpush1.bf16.msra.mxu0 %v4638
    %9599 = vmatprep.subr.bf16.mxu0 %v4699
    %9600 = vmatpush2.bf16.msra.mxu0 %v4698
    %9601 = vmatprep.subr.bf16.mxu0 %v4695
    %9602 = vmatpush2.bf16.msra.mxu0 %v4694
    %9603 = vmatprep.subr.bf16.mxu0 %v4691
    %9604 = vmatpush2.bf16.msra.mxu0 %v4690
    %9605 = vmatprep.subr.bf16.mxu0 %v4687
    %9606 = vmatpush2.bf16.msra.mxu0 %v4686
    %9607 = vmatprep.subr.bf16.mxu0 %v4683
    %9608 = vmatpush2.bf16.msra.mxu0 %v4682
    %9609 = vmatprep.subr.bf16.mxu0 %v4679
    %9610 = vmatpush2.bf16.msra.mxu0 %v4678
    %9611 = vmatprep.subr.bf16.mxu0 %v4675
    %9612 = vmatpush2.bf16.msra.mxu0 %v4674
    %9613 = vmatprep.subr.bf16.mxu0 %v4671
    %9614 = vmatpush2.bf16.msra.mxu0 %v4670
    %9615 = vmatprep.mubr.bf16.mxu0 %v9494
    %9616 = vmatmul.mubr.bf16.gmra.mxu0 %v9487
    %v9617 = vpop.f32.mrf.mxu0
    %v9618 = vadd.f32 0.0, %v9617
    %v9619 = vpop.f32.mrf.mxu0
    %v9620 = vadd.f32 0.0, %v9619
    %v9621 = vpop.f32.mrf.mxu0
    %v9622 = vpop.f32.mrf.mxu0
    %9623 = vdwg.mxu0
    %9624 = vmatprep.subr.bf16.mxu0 %v4731
    %9625 = vmatpush1.bf16.msra.mxu0 %v4730
    %9626 = vmatprep.subr.bf16.mxu0 %v4727
    %9627 = vmatpush1.bf16.msra.mxu0 %v4726
    %9628 = vmatprep.subr.bf16.mxu0 %v4723
    %9629 = vmatpush1.bf16.msra.mxu0 %v4722
    %9630 = vmatprep.subr.bf16.mxu0 %v4719
    %9631 = vmatpush1.bf16.msra.mxu0 %v4718
    %9632 = vmatprep.subr.bf16.mxu0 %v4715
    %9633 = vmatpush1.bf16.msra.mxu0 %v4714
    %9634 = vmatprep.subr.bf16.mxu0 %v4711
    %9635 = vmatpush1.bf16.msra.mxu0 %v4710
    %9636 = vmatprep.subr.bf16.mxu0 %v4707
    %9637 = vmatpush1.bf16.msra.mxu0 %v4706
    %9638 = vmatprep.subr.bf16.mxu0 %v4703
    %9639 = vmatpush1.bf16.msra.mxu0 %v4702
    %9640 = vmatprep.subr.bf16.mxu0 %v4763
    %9641 = vmatpush2.bf16.msra.mxu0 %v4762
    %9642 = vmatprep.subr.bf16.mxu0 %v4759
    %9643 = vmatpush2.bf16.msra.mxu0 %v4758
    %9644 = vmatprep.subr.bf16.mxu0 %v4755
    %9645 = vmatpush2.bf16.msra.mxu0 %v4754
    %9646 = vmatprep.subr.bf16.mxu0 %v4751
    %9647 = vmatpush2.bf16.msra.mxu0 %v4750
    %9648 = vmatprep.subr.bf16.mxu0 %v4747
    %9649 = vmatpush2.bf16.msra.mxu0 %v4746
    %9650 = vmatprep.subr.bf16.mxu0 %v4743
    %9651 = vmatpush2.bf16.msra.mxu0 %v4742
    %9652 = vmatprep.subr.bf16.mxu0 %v4739
    %9653 = vmatpush2.bf16.msra.mxu0 %v4738
    %9654 = vmatprep.subr.bf16.mxu0 %v4735
    %9655 = vmatpush2.bf16.msra.mxu0 %v4734
    %9656 = vmatprep.mubr.bf16.mxu0 %v9496
    %9657 = vmatmul.mubr.bf16.gmra.mxu0 %v9495
    %v9658 = vpop.f32.mrf.mxu0
    %v9659 = vadd.f32 %v9618, %v9658
    %v9660 = vpop.f32.mrf.mxu0
    %v9661 = vadd.f32 %v9620, %v9660
    %v9662 = vpop.f32.mrf.mxu0
    %v9663 = vpop.f32.mrf.mxu0
    %9664 = vdwg.mxu0
    %v9665 = vadd.f32 %v9383, %v9577
    %v9666 = vadd.f32 %v9385, %v9579
    %v9667 = vadd.f32 %v9465, %v9659
    %v9668 = vadd.f32 %v9467, %v9661
    %v9669 = vadd.f32 %v9665, %v5064
    %v9670 = vadd.f32 %v9666, %v5068
    %v9671 = vadd.f32 %v9667, %v5072
    %v9672 = vadd.f32 %v9668, %v5076
    %v9673 = vmax.f32 %v9669, 0.0
    %v9674 = vmax.f32 %v9670, 0.0
    %v9675 = vmax.f32 %v9671, 0.0
    %v9676 = vmax.f32 %v9672, 0.0
    %s9677 = scalar_lea.vmem %s5, 2688
    %v9678 = vld [vmem:[%s9677] sm:$0xff]
    %v9679 = vld [vmem:[%s9677 + $0x8] sm:$0xff]
    %v9680 = vld [vmem:[%s9677 + $0x10] sm:$0xff]
    %v9681 = vld [vmem:[%s9677 + $0x18] sm:$0xff]
    %v9682 = vld [vmem:[%s9677 + $0x20] sm:$0xff]
    %v9683 = vld [vmem:[%s9677 + $0x28] sm:$0xff]
    %v9684 = vld [vmem:[%s9677 + $0x30] sm:$0xff]
    %v9685 = vld [vmem:[%s9677 + $0x38] sm:$0xff]
    %v9686 = vld [vmem:[%s9677 + $0x40] sm:$0xff]
    %v9687 = vld [vmem:[%s9677 + $0x48] sm:$0xff]
    %v9688 = vld [vmem:[%s9677 + $0x50] sm:$0xff]
    %v9689 = vld [vmem:[%s9677 + $0x58] sm:$0xff]
    %v9690 = vld [vmem:[%s9677 + $0x60] sm:$0xff]
    %v9691 = vld [vmem:[%s9677 + $0x68] sm:$0xff]
    %v9692 = vld [vmem:[%s9677 + $0x70] sm:$0xff]
    %v9693 = vld [vmem:[%s9677 + $0x78] sm:$0xff]
    %v9694 = vld [vmem:[%s9677 + $0x80] sm:$0xff]
    %v9695 = vld [vmem:[%s9677 + $0x88] sm:$0xff]
    %v9696 = vld [vmem:[%s9677 + $0x90] sm:$0xff]
    %v9697 = vld [vmem:[%s9677 + $0x98] sm:$0xff]
    %v9698 = vld [vmem:[%s9677 + $0xa0] sm:$0xff]
    %v9699 = vld [vmem:[%s9677 + $0xa8] sm:$0xff]
    %v9700 = vld [vmem:[%s9677 + $0xb0] sm:$0xff]
    %v9701 = vld [vmem:[%s9677 + $0xb8] sm:$0xff]
    %v9702 = vld [vmem:[%s9677 + $0xc0] sm:$0xff]
    %v9703 = vld [vmem:[%s9677 + $0xc8] sm:$0xff]
    %v9704 = vld [vmem:[%s9677 + $0xd0] sm:$0xff]
    %v9705 = vld [vmem:[%s9677 + $0xd8] sm:$0xff]
    %v9706 = vld [vmem:[%s9677 + $0xe0] sm:$0xff]
    %v9707 = vld [vmem:[%s9677 + $0xe8] sm:$0xff]
    %v9708 = vld [vmem:[%s9677 + $0xf0] sm:$0xff]
    %v9709 = vld [vmem:[%s9677 + $0xf8] sm:$0xff]
    %v9710 = vld [vmem:[%s9677 + $0x100] sm:$0xff]
    %v9711 = vld [vmem:[%s9677 + $0x108] sm:$0xff]
    %v9712 = vld [vmem:[%s9677 + $0x110] sm:$0xff]
    %v9713 = vld [vmem:[%s9677 + $0x118] sm:$0xff]
    %v9714 = vld [vmem:[%s9677 + $0x120] sm:$0xff]
    %v9715 = vld [vmem:[%s9677 + $0x128] sm:$0xff]
    %v9716 = vld [vmem:[%s9677 + $0x130] sm:$0xff]
    %v9717 = vld [vmem:[%s9677 + $0x138] sm:$0xff]
    %v9718 = vld [vmem:[%s9677 + $0x140] sm:$0xff]
    %v9719 = vld [vmem:[%s9677 + $0x148] sm:$0xff]
    %v9720 = vld [vmem:[%s9677 + $0x150] sm:$0xff]
    %v9721 = vld [vmem:[%s9677 + $0x158] sm:$0xff]
    %v9722 = vld [vmem:[%s9677 + $0x160] sm:$0xff]
    %v9723 = vld [vmem:[%s9677 + $0x168] sm:$0xff]
    %v9724 = vld [vmem:[%s9677 + $0x170] sm:$0xff]
    %v9725 = vld [vmem:[%s9677 + $0x178] sm:$0xff]
    %v9726 = vld [vmem:[%s9677 + $0x180] sm:$0xff]
    %v9727 = vld [vmem:[%s9677 + $0x188] sm:$0xff]
    %v9728 = vld [vmem:[%s9677 + $0x190] sm:$0xff]
    %v9729 = vld [vmem:[%s9677 + $0x198] sm:$0xff]
    %v9730 = vld [vmem:[%s9677 + $0x1a0] sm:$0xff]
    %v9731 = vld [vmem:[%s9677 + $0x1a8] sm:$0xff]
    %v9732 = vld [vmem:[%s9677 + $0x1b0] sm:$0xff]
    %v9733 = vld [vmem:[%s9677 + $0x1b8] sm:$0xff]
    %v9735 = vsel %vm5766, %v9676, 0
    %9737 = vmatprep.subr.mxu0 0.0
    %9738 = vmatpush1.msra.mxu0 %v9693
    %9739 = vmatprep.subr.mxu0 0.0
    %9740 = vmatpush1.msra.mxu0 %v9692
    %9741 = vmatprep.subr.mxu0 0.0
    %9742 = vmatpush1.msra.mxu0 %v9691
    %9743 = vmatprep.subr.mxu0 0.0
    %9744 = vmatpush1.msra.mxu0 %v9690
    %9745 = vmatprep.subr.mxu0 0.0
    %9746 = vmatpush1.msra.mxu0 %v9689
    %9747 = vmatprep.subr.mxu0 0.0
    %9748 = vmatpush1.msra.mxu0 %v9688
    %9749 = vmatprep.subr.mxu0 0.0
    %9750 = vmatpush1.msra.mxu0 %v9687
    %9751 = vmatprep.subr.mxu0 0.0
    %9752 = vmatpush1.msra.mxu0 %v9686
    %9753 = vmatprep.subr.mxu0 0.0
    %9754 = vmatpush1.msra.mxu0 %v9685
    %9755 = vmatprep.subr.mxu0 0.0
    %9756 = vmatpush1.msra.mxu0 %v9684
    %9757 = vmatprep.subr.mxu0 0.0
    %9758 = vmatpush1.msra.mxu0 %v9683
    %9759 = vmatprep.subr.mxu0 0.0
    %9760 = vmatpush1.msra.mxu0 %v9682
    %9761 = vmatprep.subr.mxu0 0.0
    %9762 = vmatpush1.msra.mxu0 %v9681
    %9763 = vmatprep.subr.mxu0 0.0
    %9764 = vmatpush1.msra.mxu0 %v9680
    %9765 = vmatprep.subr.mxu0 0.0
    %9766 = vmatpush1.msra.mxu0 %v9679
    %9767 = vmatprep.subr.mxu0 0.0
    %9768 = vmatpush1.msra.mxu0 %v9678
    %9769 = vmatprep.subr.mxu0 0.0
    %9770 = vmatpush2.msra.mxu0 %v9709
    %9771 = vmatprep.subr.mxu0 0.0
    %9772 = vmatpush2.msra.mxu0 %v9708
    %9773 = vmatprep.subr.mxu0 0.0
    %9774 = vmatpush2.msra.mxu0 %v9707
    %9775 = vmatprep.subr.mxu0 0.0
    %9776 = vmatpush2.msra.mxu0 %v9706
    %9777 = vmatprep.subr.mxu0 0.0
    %9778 = vmatpush2.msra.mxu0 %v9705
    %9779 = vmatprep.subr.mxu0 0.0
    %9780 = vmatpush2.msra.mxu0 %v9704
    %9781 = vmatprep.subr.mxu0 0.0
    %9782 = vmatpush2.msra.mxu0 %v9703
    %9783 = vmatprep.subr.mxu0 0.0
    %9784 = vmatpush2.msra.mxu0 %v9702
    %9785 = vmatprep.subr.mxu0 0.0
    %9786 = vmatpush2.msra.mxu0 %v9701
    %9787 = vmatprep.subr.mxu0 0.0
    %9788 = vmatpush2.msra.mxu0 %v9700
    %9789 = vmatprep.subr.mxu0 0.0
    %9790 = vmatpush2.msra.mxu0 %v9699
    %9791 = vmatprep.subr.mxu0 0.0
    %9792 = vmatpush2.msra.mxu0 %v9698
    %9793 = vmatprep.subr.mxu0 0.0
    %9794 = vmatpush2.msra.mxu0 %v9697
    %9795 = vmatprep.subr.mxu0 0.0
    %9796 = vmatpush2.msra.mxu0 %v9696
    %9797 = vmatprep.subr.mxu0 0.0
    %9798 = vmatpush2.msra.mxu0 %v9695
    %9799 = vmatprep.subr.mxu0 0.0
    %9800 = vmatpush2.msra.mxu0 %v9694
    %9801 = vmatprep.mubr.f32.mxu0 %v9674
    %9802 = vmatmul.mubr.f32.gmra.mxu0 %v9673
    %v9803 = vpop.f32.mrf.mxu0
    %v9804 = vadd.f32 0.0, %v9803
    %v9805 = vpop.f32.mrf.mxu0
    %9806 = vdwg.mxu0
    %9807 = vmatprep.subr.mxu0 0.0
    %9808 = vmatpush1.msra.mxu0 %v9725
    %9809 = vmatprep.subr.mxu0 0.0
    %9810 = vmatpush1.msra.mxu0 %v9724
    %9811 = vmatprep.subr.mxu0 0.0
    %9812 = vmatpush1.msra.mxu0 %v9723
    %9813 = vmatprep.subr.mxu0 0.0
    %9814 = vmatpush1.msra.mxu0 %v9722
    %9815 = vmatprep.subr.mxu0 0.0
    %9816 = vmatpush1.msra.mxu0 %v9721
    %9817 = vmatprep.subr.mxu0 0.0
    %9818 = vmatpush1.msra.mxu0 %v9720
    %9819 = vmatprep.subr.mxu0 0.0
    %9820 = vmatpush1.msra.mxu0 %v9719
    %9821 = vmatprep.subr.mxu0 0.0
    %9822 = vmatpush1.msra.mxu0 %v9718
    %9823 = vmatprep.subr.mxu0 0.0
    %9824 = vmatpush1.msra.mxu0 %v9717
    %9825 = vmatprep.subr.mxu0 0.0
    %9826 = vmatpush1.msra.mxu0 %v9716
    %9827 = vmatprep.subr.mxu0 0.0
    %9828 = vmatpush1.msra.mxu0 %v9715
    %9829 = vmatprep.subr.mxu0 0.0
    %9830 = vmatpush1.msra.mxu0 %v9714
    %9831 = vmatprep.subr.mxu0 0.0
    %9832 = vmatpush1.msra.mxu0 %v9713
    %9833 = vmatprep.subr.mxu0 0.0
    %9834 = vmatpush1.msra.mxu0 %v9712
    %9835 = vmatprep.subr.mxu0 0.0
    %9836 = vmatpush1.msra.mxu0 %v9711
    %9837 = vmatprep.subr.mxu0 0.0
    %9838 = vmatpush1.msra.mxu0 %v9710
    %9839 = vmatprep.subr.mxu0 0.0
    %9840 = vmatpush2.msra.mxu0 0.0
    %9841 = vmatprep.subr.mxu0 0.0
    %9842 = vmatpush2.msra.mxu0 0.0
    %9843 = vmatprep.subr.mxu0 0.0
    %9844 = vmatpush2.msra.mxu0 0.0
    %9845 = vmatprep.subr.mxu0 0.0
    %9846 = vmatpush2.msra.mxu0 0.0
    %9847 = vmatprep.subr.mxu0 0.0
    %9848 = vmatpush2.msra.mxu0 0.0
    %9849 = vmatprep.subr.mxu0 0.0
    %9850 = vmatpush2.msra.mxu0 0.0
    %9851 = vmatprep.subr.mxu0 0.0
    %9852 = vmatpush2.msra.mxu0 0.0
    %9853 = vmatprep.subr.mxu0 0.0
    %9854 = vmatpush2.msra.mxu0 0.0
    %9855 = vmatprep.subr.mxu0 0.0
    %9856 = vmatpush2.msra.mxu0 %v9733
    %9857 = vmatprep.subr.mxu0 0.0
    %9858 = vmatpush2.msra.mxu0 %v9732
    %9859 = vmatprep.subr.mxu0 0.0
    %9860 = vmatpush2.msra.mxu0 %v9731
    %9861 = vmatprep.subr.mxu0 0.0
    %9862 = vmatpush2.msra.mxu0 %v9730
    %9863 = vmatprep.subr.mxu0 0.0
    %9864 = vmatpush2.msra.mxu0 %v9729
    %9865 = vmatprep.subr.mxu0 0.0
    %9866 = vmatpush2.msra.mxu0 %v9728
    %9867 = vmatprep.subr.mxu0 0.0
    %9868 = vmatpush2.msra.mxu0 %v9727
    %9869 = vmatprep.subr.mxu0 0.0
    %9870 = vmatpush2.msra.mxu0 %v9726
    %9871 = vmatprep.mubr.f32.mxu0 %v9735
    %9872 = vmatmul.mubr.f32.gmra.mxu0 %v9675
    %v9873 = vpop.f32.mrf.mxu0
    %v9874 = vadd.f32 %v9804, %v9873
    %v9875 = vpop.f32.mrf.mxu0
    %9876 = vdwg.mxu0
    %v9877 = vadd.f32 %v9112, %v9874
    %v9878 = vld [vmem:[%s6] sm:$0x1]
    %v9880 = vlaneseq
    %v9881 = vshrl.u32 %v9880, 7
    %v9882 = vsub.s32 0, %v9881
    %v9883 = vrot.slane %v9878, %v9882
    %v9885 = vadd.f32 %v9877, %v9883
    %vm9886 = vcmask 254976
    %9887 = vst.msk [vmem:[#allocation3] sm:$0x3] %vm9886, %v9885
    // Predicated region
    $region30: #{encoder_forward.1} parent=1 // pred_check
      _
    $region31: #{encoder_forward.1} parent=1 // pred_check_branch
      %9889 = sbr.rel (0) target = $region33
    $region32: #{encoder_forward.1} parent=1 // pred_region
      %s9891 = ssub.s32 32, 32
      %9892 = vsyncadd [#allocation4], %s9891
      %s9894 = sshll.u32 [#allocation3], 4
      %s9895 = int_to_ptr.vmem [resolvable:$true] %s9894
      %9897 = dma.vmem_to_hbm [thread:$0]  %s9895, 32, %s7, [#allocation4]
    $region33: #{encoder_forward.1} parent=1 // pred_fallthru
      _
    // Predicated region
    $region34: #{encoder_forward.1} parent=1 // pred_check
      _
    $region35: #{encoder_forward.1} parent=1 // pred_check_branch
      %9899 = sbr.rel (0) target = $region37
    $region36: #{encoder_forward.1} parent=1 // pred_region
      %9900 = dma.done [#allocation4], 32
    $region37: #{encoder_forward.1} parent=1 // pred_fallthru
      _
    %9901 = vsyncpa [#allocation4], 1

</llo_original>
